<compile_context>
chip_gen: v7x
topology: tpu7x:2x2x1
jax: 0.10.0
libtpu: 0.0.40
codegen_flags: <defaults>
</compile_context>

<pallas_src>
import functools

import numpy as np
import jax
import jax.numpy as jnp
from jax import lax
from jax.experimental import pallas as pl
from jax.experimental.pallas import tpu as pltpu


_NUM_CLASSES = 10
_OUT_PAD = 128          # fc2 output padded to a full lane group (lane-dense store)


# ------------------------------ Pallas kernel ------------------------------ #

def _fused_cnn_kernel(x_ref, m1_ref, b1_ref, m2_ref, b2_ref,
                      e1_ref, s1_ref, e2_ref, s2_ref,
                      wfc1_ref, bfc1_ref, wfc2_ref, bfc2_ref,
                      o_ref, p1pad_ref, *, batch_tile):
    f32 = jnp.float32
    # Rows 0 and 15 of the conv2 input buffer are the zero row-padding; they are
    # never written inside the sample loop, so zero the buffer once per grid step.
    p1pad_ref[...] = jnp.zeros_like(p1pad_ref)

    for s in range(batch_tile):
        xs = x_ref[s]                                       # (30, 28) row-padded sample

        # ---- conv1 (1->16, 3x3, pad 1) + bias + ReLU:  (28, 28*16) ----
        y1 = jnp.dot(xs[0:28, :], m1_ref[0], preferred_element_type=f32)
        y1 = y1 + jnp.dot(xs[1:29, :], m1_ref[1], preferred_element_type=f32)
        y1 = y1 + jnp.dot(xs[2:30, :], m1_ref[2], preferred_element_type=f32)
        y1 = jnp.maximum(y1 + b1_ref[...], 0.0)

        # ---- 2x2 max pool -> (14, 14*16) ----
        yh = jnp.maximum(jnp.dot(e1_ref[0], y1, preferred_element_type=f32),
                         jnp.dot(e1_ref[1], y1, preferred_element_type=f32))
        p1 = jnp.maximum(jnp.dot(yh, s1_ref[0], preferred_element_type=f32),
                         jnp.dot(yh, s1_ref[1], preferred_element_type=f32))

        # ---- conv2 (16->32, 3x3, pad 1) + bias + ReLU: (14, 14*32) ----
        p1pad_ref[1:15, :] = p1
        xp = p1pad_ref[...]                                 # (16, 224) row-padded
        y2 = jnp.dot(xp[0:14, :], m2_ref[0], preferred_element_type=f32)
        y2 = y2 + jnp.dot(xp[1:15, :], m2_ref[1], preferred_element_type=f32)
        y2 = y2 + jnp.dot(xp[2:16, :], m2_ref[2], preferred_element_type=f32)
        y2 = jnp.maximum(y2 + b2_ref[...], 0.0)

        # ---- 2x2 max pool -> (7, 7*32) ----
        y2h = jnp.maximum(jnp.dot(e2_ref[0], y2, preferred_element_type=f32),
                          jnp.dot(e2_ref[1], y2, preferred_element_type=f32))
        p2 = jnp.maximum(jnp.dot(y2h, s2_ref[0], preferred_element_type=f32),
                         jnp.dot(y2h, s2_ref[1], preferred_element_type=f32))

        # ---- fc1 (1568->128) + ReLU, fc2 (128->10, zero-padded to 128) ----
        h = bfc1_ref[...]                                   # (1, 128)
        for y in range(7):
            h = h + jnp.dot(p2[y:y + 1, :], wfc1_ref[y], preferred_element_type=f32)
        h = jnp.maximum(h, 0.0)
        out = jnp.dot(h, wfc2_ref[...], preferred_element_type=f32) + bfc2_ref[...]
        o_ref[s:s + 1, :] = out.astype(o_ref.dtype)


# --------------------- one-time host-side weight repack --------------------- #

def _band_matrices(w, width):
    """w: (3, 3, Cin, Cout) -> (3, width*Cin, width*Cout) banded conv matrices."""
    _, _, cin, cout = w.shape
    m = np.zeros((3, width * cin, width * cout), np.float32)
    for kh in range(3):
        for kw in range(3):
            for xo in range(width):
                xi = xo + kw - 1
                if 0 <= xi < width:
                    m[kh, xi * cin:(xi + 1) * cin, xo * cout:(xo + 1) * cout] = w[kh, kw]
    return m


def _row_select(height):
    e = np.zeros((2, height // 2, height), np.float32)
    for p in range(2):
        for i in range(height // 2):
            e[p, i, 2 * i + p] = 1.0
    return e


def _lane_select(width, channels):
    s = np.zeros((2, width * channels, (width // 2) * channels), np.float32)
    eye = np.eye(channels, dtype=np.float32)
    for p in range(2):
        for xo in range(width // 2):
            xi = 2 * xo + p
            s[p, xi * channels:(xi + 1) * channels,
              xo * channels:(xo + 1) * channels] = eye
    return s


def prepare_fused_params(params):
    """One-time host-side repack of the PyTorch-style parameters for the kernel."""
    w1 = np.asarray(params["w1"], np.float32)        # (3,3,1,16)
    b1 = np.asarray(params["b1"], np.float32)
    w2 = np.asarray(params["w2"], np.float32)        # (3,3,16,32)
    b2 = np.asarray(params["b2"], np.float32)
    wfc1 = np.asarray(params["wfc1"], np.float32)    # (1568, 128), torch NCHW row order
    bfc1 = np.asarray(params["bfc1"], np.float32)
    wfc2 = np.asarray(params["wfc2"], np.float32)    # (128, 10)
    bfc2 = np.asarray(params["bfc2"], np.float32)

    # fc1 rows re-ordered from torch's (c, y, x) flatten to the kernel's (y, x, c).
    y_i, x_i, c_i = np.meshgrid(np.arange(7), np.arange(7), np.arange(32), indexing="ij")
    perm = (c_i * 49 + y_i * 7 + x_i).reshape(-1)
    wfc1_p = wfc1[perm].reshape(7, 7 * 32, 128)      # (7, 224, 128)

    wfc2_p = np.zeros((128, _OUT_PAD), np.float32)
    wfc2_p[:, :_NUM_CLASSES] = wfc2
    bfc2_p = np.zeros((1, _OUT_PAD), np.float32)
    bfc2_p[0, :_NUM_CLASSES] = bfc2

    fused = {
        "m1": _band_matrices(w1, 28),                # (3, 28, 448)
        "b1": np.tile(b1, 28).reshape(1, 448),
        "m2": _band_matrices(w2, 14),                # (3, 224, 448)
        "b2": np.tile(b2, 14).reshape(1, 448),
        "e1": _row_select(28),                       # (2, 14, 28)
        "s1": _lane_select(28, 16),                  # (2, 448, 224)
        "e2": _row_select(14),                       # (2, 7, 14)
        "s2": _lane_select(14, 32),                  # (2, 448, 224)
        "wfc1": wfc1_p,                              # (7, 224, 128)
        "bfc1": bfc1.reshape(1, 128),
        "wfc2": wfc2_p,                              # (128, 128)
        "bfc2": bfc2_p,                              # (1, 128)
    }
    return {k: jnp.asarray(v) for k, v in fused.items()}


# --------------------------------- wrapper ---------------------------------- #

def simple_cnn_forward(x_nchw, fused, *, batch_tile=8):
    n = x_nchw.shape[0]
    x = x_nchw[:, 0, :, :].astype(jnp.float32)               # (N, 28, 28)
    xpad = jnp.pad(x, ((0, 0), (1, 1), (0, 0)))              # (N, 30, 28) row padding

    tb = n if n <= batch_tile else batch_tile
    npad = ((n + tb - 1) // tb) * tb
    if npad != n:
        xpad = jnp.pad(xpad, ((0, npad - n), (0, 0), (0, 0)))

    def const_spec(arr):
        nd = arr.ndim
        return pl.BlockSpec(arr.shape, lambda i, nd=nd: (0,) * nd)

    weight_names = ["m1", "b1", "m2", "b2", "e1", "s1", "e2", "s2",
                    "wfc1", "bfc1", "wfc2", "bfc2"]
    weights = [fused[k] for k in weight_names]

    kernel = functools.partial(_fused_cnn_kernel, batch_tile=tb)
    out = pl.pallas_call(
        kernel,
        out_shape=jax.ShapeDtypeStruct((npad, _OUT_PAD), jnp.float32),
        grid=(npad // tb,),
        in_specs=[pl.BlockSpec((tb, 30, 28), lambda i: (i, 0, 0))]
                 + [const_spec(w) for w in weights],
        out_specs=pl.BlockSpec((tb, _OUT_PAD), lambda i: (i, 0)),
        scratch_shapes=[pltpu.VMEM((16, 14 * 16), jnp.float32)],
        compiler_params=pltpu.CompilerParams(dimension_semantics=("parallel",)),
    )(xpad, *weights)
    return out[:n, :_NUM_CLASSES]


# ------------------------------ pure-JAX check ------------------------------ #

def reference_forward(x_nchw, params):
    """Pure-JAX reference with identical semantics (NCHW conv + reduce_window pool)."""
    def conv(x, w, b):
        w_oihw = jnp.transpose(w, (3, 2, 0, 1))
        y = lax.conv_general_dilated(
            x, w_oihw, window_strides=(1, 1), padding=((1, 1), (1, 1)),
            dimension_numbers=("NCHW", "OIHW", "NCHW"))
        return y + b.reshape(1, -1, 1, 1)

    def pool(x):
        return lax.reduce_window(x, -jnp.inf, lax.max, (1, 1, 2, 2), (1, 1, 2, 2), "VALID")

    x = pool(jnp.maximum(conv(x_nchw, params["w1"], params["b1"]), 0.0))
    x = pool(jnp.maximum(conv(x, params["w2"], params["b2"]), 0.0))
    x = x.reshape(x.shape[0], -1)
    x = jnp.maximum(x @ params["wfc1"] + params["bfc1"], 0.0)
    return x @ params["wfc2"] + params["bfc2"]


# ----------------------------------- main ----------------------------------- #

if __name__ == "__main__":
    key = jax.random.PRNGKey(0)
    kx, *kp = jax.random.split(key, 10)

    def uniform(k, shape, fan_in):
        bound = float(fan_in) ** -0.5
        return jax.random.uniform(k, shape, jnp.float32, -bound, bound)

    # Deterministic parameter init (shapes implied by the nn.Module __init__).
    params = {
        "w1": uniform(kp[0], (3, 3, 1, 16), 1 * 9),          # conv1 (kh,kw,Cin,Cout)
        "b1": uniform(kp[1], (16,), 1 * 9),
        "w2": uniform(kp[2], (3, 3, 16, 32), 16 * 9),        # conv2
        "b2": uniform(kp[3], (32,), 16 * 9),
        "wfc1": uniform(kp[4], (32 * 7 * 7, 128), 32 * 7 * 7),  # fc1 (in, out)
        "bfc1": uniform(kp[5], (128,), 32 * 7 * 7),
        "wfc2": uniform(kp[6], (128, 10), 128),              # fc2 (in, out)
        "bfc2": uniform(kp[7], (10,), 128),
    }

    fused = prepare_fused_params(params)     # one-time host-side weight repack

    # MNIST-shaped input (NCHW, as the PyTorch module expects): batch=2, 1x28x28.
    x = jax.random.normal(kx, (2, 1, 28, 28), jnp.float32)

    fwd = jax.jit(simple_cnn_forward)
    out = jax.block_until_ready(fwd(x, fused))
    assert out.shape == (2, 10), out.shape

    ref = jax.block_until_ready(reference_forward(x, params))
    assert bool(jnp.allclose(out, ref, rtol=1e-3, atol=1e-3)), "mismatch vs JAX reference"

    print("KERNEL_OK")
</pallas_src>

<mosaic_0001>
module attributes {stable_mosaic.version = 11 : i64} {
  func.func @_fused_cnn_kernel(%arg0: i32, %arg1: memref<2x30x28xf32, #tpu.memory_space<vmem>>, %arg2: memref<3x28x448xf32, #tpu.memory_space<vmem>>, %arg3: memref<1x448xf32, #tpu.memory_space<vmem>>, %arg4: memref<3x224x448xf32, #tpu.memory_space<vmem>>, %arg5: memref<1x448xf32, #tpu.memory_space<vmem>>, %arg6: memref<2x14x28xf32, #tpu.memory_space<vmem>>, %arg7: memref<2x448x224xf32, #tpu.memory_space<vmem>>, %arg8: memref<2x7x14xf32, #tpu.memory_space<vmem>>, %arg9: memref<2x448x224xf32, #tpu.memory_space<vmem>>, %arg10: memref<7x224x128xf32, #tpu.memory_space<vmem>>, %arg11: memref<1x128xf32, #tpu.memory_space<vmem>>, %arg12: memref<128x128xf32, #tpu.memory_space<vmem>>, %arg13: memref<1x128xf32, #tpu.memory_space<vmem>>, %arg14: memref<2x128xf32, #tpu.memory_space<vmem>>, %arg15: memref<16x224xf32, #tpu.memory_space<vmem>>) attributes {dimension_semantics = [#tpu.dimension_semantics<parallel>], iteration_bounds = array<i64: 1>, scalar_prefetch = 0 : i64, scratch_operands = 1 : i64, tpu.core_type = #tpu.core_type<tc>, window_params = [{transform_indices = @transform_0, window_bounds = array<i64: 2, 30, 28>}, {pipeline_mode = #tpu.pipeline_mode<synchronous>, transform_indices = @transform_1, window_bounds = array<i64: 3, 28, 448>}, {pipeline_mode = #tpu.pipeline_mode<synchronous>, transform_indices = @transform_2, window_bounds = array<i64: 1, 448>}, {pipeline_mode = #tpu.pipeline_mode<synchronous>, transform_indices = @transform_3, window_bounds = array<i64: 3, 224, 448>}, {pipeline_mode = #tpu.pipeline_mode<synchronous>, transform_indices = @transform_4, window_bounds = array<i64: 1, 448>}, {pipeline_mode = #tpu.pipeline_mode<synchronous>, transform_indices = @transform_5, window_bounds = array<i64: 2, 14, 28>}, {pipeline_mode = #tpu.pipeline_mode<synchronous>, transform_indices = @transform_6, window_bounds = array<i64: 2, 448, 224>}, {pipeline_mode = #tpu.pipeline_mode<synchronous>, transform_indices = @transform_7, window_bounds = array<i64: 2, 7, 14>}, {pipeline_mode = #tpu.pipeline_mode<synchronous>, transform_indices = @transform_8, window_bounds = array<i64: 2, 448, 224>}, {pipeline_mode = #tpu.pipeline_mode<synchronous>, transform_indices = @transform_9, window_bounds = array<i64: 7, 224, 128>}, {pipeline_mode = #tpu.pipeline_mode<synchronous>, transform_indices = @transform_10, window_bounds = array<i64: 1, 128>}, {pipeline_mode = #tpu.pipeline_mode<synchronous>, transform_indices = @transform_11, window_bounds = array<i64: 128, 128>}, {pipeline_mode = #tpu.pipeline_mode<synchronous>, transform_indices = @transform_12, window_bounds = array<i64: 1, 128>}, {transform_indices = @transform_13, window_bounds = array<i64: 2, 128>}]} {
    %cst = arith.constant 0.000000e+00 : f32
    %0 = vector.broadcast %cst : f32 to vector<16x224xf32>
    %c0 = arith.constant 0 : index
    %c0_0 = arith.constant 0 : index
    %1 = vector.load %arg15[%c0, %c0_0] : memref<16x224xf32, #tpu.memory_space<vmem>>, vector<16x224xf32>
    tpu.vector_store %arg15[%c0, %c0_0], %0 {strides = array<i32>} : memref<16x224xf32, #tpu.memory_space<vmem>>, vector<16x224xf32>,
    %c0_1 = arith.constant 0 : index
    %c0_2 = arith.constant 0 : index
    %c0_3 = arith.constant 0 : index
    %2 = vector.load %arg1[%c0_1, %c0_2, %c0_3] : memref<2x30x28xf32, #tpu.memory_space<vmem>>, vector<1x30x28xf32>
    %3 = vector.shape_cast %2 : vector<1x30x28xf32> to vector<30x28xf32>
    %4 = vector.extract_strided_slice %3 {offsets = [0, 0], sizes = [28, 28], strides = [1, 1]} : vector<30x28xf32> to vector<28x28xf32>
    %c0_4 = arith.constant 0 : index
    %c0_5 = arith.constant 0 : index
    %c0_6 = arith.constant 0 : index
    %5 = vector.load %arg2[%c0_4, %c0_5, %c0_6] : memref<3x28x448xf32, #tpu.memory_space<vmem>>, vector<1x28x448xf32>
    %6 = vector.shape_cast %5 : vector<1x28x448xf32> to vector<28x448xf32>
    %cst_7 = arith.constant dense<0.000000e+00> : vector<28x448xf32>
    %7 = tpu.matmul %4, %6, %cst_7 {dimension_numbers = #tpu.dot_dimension_numbers<[1], [0], [0], [1], [0, 0, 1, 1], [], []>} : vector<28x28xf32>, vector<28x448xf32>, vector<28x448xf32> -> vector<28x448xf32>
    %8 = vector.extract_strided_slice %3 {offsets = [1, 0], sizes = [28, 28], strides = [1, 1]} : vector<30x28xf32> to vector<28x28xf32>
    %c1 = arith.constant 1 : index
    %c0_8 = arith.constant 0 : index
    %c0_9 = arith.constant 0 : index
    %9 = vector.load %arg2[%c1, %c0_8, %c0_9] : memref<3x28x448xf32, #tpu.memory_space<vmem>>, vector<1x28x448xf32>
    %10 = vector.shape_cast %9 : vector<1x28x448xf32> to vector<28x448xf32>
    %cst_10 = arith.constant dense<0.000000e+00> : vector<28x448xf32>
    %11 = tpu.matmul %8, %10, %cst_10 {dimension_numbers = #tpu.dot_dimension_numbers<[1], [0], [0], [1], [0, 0, 1, 1], [], []>} : vector<28x28xf32>, vector<28x448xf32>, vector<28x448xf32> -> vector<28x448xf32>
    %12 = arith.addf %7, %11 : vector<28x448xf32>
    %13 = vector.extract_strided_slice %3 {offsets = [2, 0], sizes = [28, 28], strides = [1, 1]} : vector<30x28xf32> to vector<28x28xf32>
    %c2 = arith.constant 2 : index
    %c0_11 = arith.constant 0 : index
    %c0_12 = arith.constant 0 : index
    %14 = vector.load %arg2[%c2, %c0_11, %c0_12] : memref<3x28x448xf32, #tpu.memory_space<vmem>>, vector<1x28x448xf32>
    %15 = vector.shape_cast %14 : vector<1x28x448xf32> to vector<28x448xf32>
    %cst_13 = arith.constant dense<0.000000e+00> : vector<28x448xf32>
    %16 = tpu.matmul %13, %15, %cst_13 {dimension_numbers = #tpu.dot_dimension_numbers<[1], [0], [0], [1], [0, 0, 1, 1], [], []>} : vector<28x28xf32>, vector<28x448xf32>, vector<28x448xf32> -> vector<28x448xf32>
    %17 = arith.addf %12, %16 : vector<28x448xf32>
    %c0_14 = arith.constant 0 : index
    %c0_15 = arith.constant 0 : index
    %18 = vector.load %arg3[%c0_14, %c0_15] : memref<1x448xf32, #tpu.memory_space<vmem>>, vector<1x448xf32>
    %19 = vector.broadcast %18 : vector<1x448xf32> to vector<28x448xf32>
    %20 = arith.addf %17, %19 : vector<28x448xf32>
    %cst_16 = arith.constant 0.000000e+00 : f32
    %21 = vector.broadcast %cst_16 : f32 to vector<28x448xf32>
    %22 = arith.maximumf %20, %21 : vector<28x448xf32>
    %c0_17 = arith.constant 0 : index
    %c0_18 = arith.constant 0 : index
    %c0_19 = arith.constant 0 : index
    %23 = vector.load %arg6[%c0_17, %c0_18, %c0_19] : memref<2x14x28xf32, #tpu.memory_space<vmem>>, vector<1x14x28xf32>
    %24 = vector.shape_cast %23 : vector<1x14x28xf32> to vector<14x28xf32>
    %cst_20 = arith.constant dense<0.000000e+00> : vector<14x448xf32>
    %25 = tpu.matmul %24, %22, %cst_20 {dimension_numbers = #tpu.dot_dimension_numbers<[1], [0], [0], [1], [0, 0, 1, 1], [], []>} : vector<14x28xf32>, vector<28x448xf32>, vector<14x448xf32> -> vector<14x448xf32>
    %c1_21 = arith.constant 1 : index
    %c0_22 = arith.constant 0 : index
    %c0_23 = arith.constant 0 : index
    %26 = vector.load %arg6[%c1_21, %c0_22, %c0_23] : memref<2x14x28xf32, #tpu.memory_space<vmem>>, vector<1x14x28xf32>
    %27 = vector.shape_cast %26 : vector<1x14x28xf32> to vector<14x28xf32>
    %cst_24 = arith.constant dense<0.000000e+00> : vector<14x448xf32>
    %28 = tpu.matmul %27, %22, %cst_24 {dimension_numbers = #tpu.dot_dimension_numbers<[1], [0], [0], [1], [0, 0, 1, 1], [], []>} : vector<14x28xf32>, vector<28x448xf32>, vector<14x448xf32> -> vector<14x448xf32>
    %29 = arith.maximumf %25, %28 : vector<14x448xf32>
    %c0_25 = arith.constant 0 : index
    %c0_26 = arith.constant 0 : index
    %c0_27 = arith.constant 0 : index
    %30 = vector.load %arg7[%c0_25, %c0_26, %c0_27] : memref<2x448x224xf32, #tpu.memory_space<vmem>>, vector<1x448x224xf32>
    %31 = vector.shape_cast %30 : vector<1x448x224xf32> to vector<448x224xf32>
    %cst_28 = arith.constant dense<0.000000e+00> : vector<14x224xf32>
    %32 = tpu.matmul %29, %31, %cst_28 {dimension_numbers = #tpu.dot_dimension_numbers<[1], [0], [0], [1], [0, 0, 1, 1], [], []>} : vector<14x448xf32>, vector<448x224xf32>, vector<14x224xf32> -> vector<14x224xf32>
    %c1_29 = arith.constant 1 : index
    %c0_30 = arith.constant 0 : index
    %c0_31 = arith.constant 0 : index
    %33 = vector.load %arg7[%c1_29, %c0_30, %c0_31] : memref<2x448x224xf32, #tpu.memory_space<vmem>>, vector<1x448x224xf32>
    %34 = vector.shape_cast %33 : vector<1x448x224xf32> to vector<448x224xf32>
    %cst_32 = arith.constant dense<0.000000e+00> : vector<14x224xf32>
    %35 = tpu.matmul %29, %34, %cst_32 {dimension_numbers = #tpu.dot_dimension_numbers<[1], [0], [0], [1], [0, 0, 1, 1], [], []>} : vector<14x448xf32>, vector<448x224xf32>, vector<14x224xf32> -> vector<14x224xf32>
    %36 = arith.maximumf %32, %35 : vector<14x224xf32>
    %c1_33 = arith.constant 1 : index
    %c0_34 = arith.constant 0 : index
    %37 = vector.load %arg15[%c1_33, %c0_34] : memref<16x224xf32, #tpu.memory_space<vmem>>, vector<14x224xf32>
    tpu.vector_store %arg15[%c1_33, %c0_34], %36 {strides = array<i32>} : memref<16x224xf32, #tpu.memory_space<vmem>>, vector<14x224xf32>,
    %c0_35 = arith.constant 0 : index
    %c0_36 = arith.constant 0 : index
    %38 = vector.load %arg15[%c0_35, %c0_36] : memref<16x224xf32, #tpu.memory_space<vmem>>, vector<16x224xf32>
    %39 = vector.extract_strided_slice %38 {offsets = [0, 0], sizes = [14, 224], strides = [1, 1]} : vector<16x224xf32> to vector<14x224xf32>
    %c0_37 = arith.constant 0 : index
    %c0_38 = arith.constant 0 : index
    %c0_39 = arith.constant 0 : index
    %40 = vector.load %arg4[%c0_37, %c0_38, %c0_39] : memref<3x224x448xf32, #tpu.memory_space<vmem>>, vector<1x224x448xf32>
    %41 = vector.shape_cast %40 : vector<1x224x448xf32> to vector<224x448xf32>
    %cst_40 = arith.constant dense<0.000000e+00> : vector<14x448xf32>
    %42 = tpu.matmul %39, %41, %cst_40 {dimension_numbers = #tpu.dot_dimension_numbers<[1], [0], [0], [1], [0, 0, 1, 1], [], []>} : vector<14x224xf32>, vector<224x448xf32>, vector<14x448xf32> -> vector<14x448xf32>
    %43 = vector.extract_strided_slice %38 {offsets = [1, 0], sizes = [14, 224], strides = [1, 1]} : vector<16x224xf32> to vector<14x224xf32>
    %c1_41 = arith.constant 1 : index
    %c0_42 = arith.constant 0 : index
    %c0_43 = arith.constant 0 : index
    %44 = vector.load %arg4[%c1_41, %c0_42, %c0_43] : memref<3x224x448xf32, #tpu.memory_space<vmem>>, vector<1x224x448xf32>
    %45 = vector.shape_cast %44 : vector<1x224x448xf32> to vector<224x448xf32>
    %cst_44 = arith.constant dense<0.000000e+00> : vector<14x448xf32>
    %46 = tpu.matmul %43, %45, %cst_44 {dimension_numbers = #tpu.dot_dimension_numbers<[1], [0], [0], [1], [0, 0, 1, 1], [], []>} : vector<14x224xf32>, vector<224x448xf32>, vector<14x448xf32> -> vector<14x448xf32>
    %47 = arith.addf %42, %46 : vector<14x448xf32>
    %48 = vector.extract_strided_slice %38 {offsets = [2, 0], sizes = [14, 224], strides = [1, 1]} : vector<16x224xf32> to vector<14x224xf32>
    %c2_45 = arith.constant 2 : index
    %c0_46 = arith.constant 0 : index
    %c0_47 = arith.constant 0 : index
    %49 = vector.load %arg4[%c2_45, %c0_46, %c0_47] : memref<3x224x448xf32, #tpu.memory_space<vmem>>, vector<1x224x448xf32>
    %50 = vector.shape_cast %49 : vector<1x224x448xf32> to vector<224x448xf32>
    %cst_48 = arith.constant dense<0.000000e+00> : vector<14x448xf32>
    %51 = tpu.matmul %48, %50, %cst_48 {dimension_numbers = #tpu.dot_dimension_numbers<[1], [0], [0], [1], [0, 0, 1, 1], [], []>} : vector<14x224xf32>, vector<224x448xf32>, vector<14x448xf32> -> vector<14x448xf32>
    %52 = arith.addf %47, %51 : vector<14x448xf32>
    %c0_49 = arith.constant 0 : index
    %c0_50 = arith.constant 0 : index
    %53 = vector.load %arg5[%c0_49, %c0_50] : memref<1x448xf32, #tpu.memory_space<vmem>>, vector<1x448xf32>
    %54 = vector.broadcast %53 : vector<1x448xf32> to vector<14x448xf32>
    %55 = arith.addf %52, %54 : vector<14x448xf32>
    %cst_51 = arith.constant 0.000000e+00 : f32
    %56 = vector.broadcast %cst_51 : f32 to vector<14x448xf32>
    %57 = arith.maximumf %55, %56 : vector<14x448xf32>
    %c0_52 = arith.constant 0 : index
    %c0_53 = arith.constant 0 : index
    %c0_54 = arith.constant 0 : index
    %58 = vector.load %arg8[%c0_52, %c0_53, %c0_54] : memref<2x7x14xf32, #tpu.memory_space<vmem>>, vector<1x7x14xf32>
    %59 = vector.shape_cast %58 : vector<1x7x14xf32> to vector<7x14xf32>
    %cst_55 = arith.constant dense<0.000000e+00> : vector<7x448xf32>
    %60 = tpu.matmul %59, %57, %cst_55 {dimension_numbers = #tpu.dot_dimension_numbers<[1], [0], [0], [1], [0, 0, 1, 1], [], []>} : vector<7x14xf32>, vector<14x448xf32>, vector<7x448xf32> -> vector<7x448xf32>
    %c1_56 = arith.constant 1 : index
    %c0_57 = arith.constant 0 : index
    %c0_58 = arith.constant 0 : index
    %61 = vector.load %arg8[%c1_56, %c0_57, %c0_58] : memref<2x7x14xf32, #tpu.memory_space<vmem>>, vector<1x7x14xf32>
    %62 = vector.shape_cast %61 : vector<1x7x14xf32> to vector<7x14xf32>
    %cst_59 = arith.constant dense<0.000000e+00> : vector<7x448xf32>
    %63 = tpu.matmul %62, %57, %cst_59 {dimension_numbers = #tpu.dot_dimension_numbers<[1], [0], [0], [1], [0, 0, 1, 1], [], []>} : vector<7x14xf32>, vector<14x448xf32>, vector<7x448xf32> -> vector<7x448xf32>
    %64 = arith.maximumf %60, %63 : vector<7x448xf32>
    %c0_60 = arith.constant 0 : index
    %c0_61 = arith.constant 0 : index
    %c0_62 = arith.constant 0 : index
    %65 = vector.load %arg9[%c0_60, %c0_61, %c0_62] : memref<2x448x224xf32, #tpu.memory_space<vmem>>, vector<1x448x224xf32>
    %66 = vector.shape_cast %65 : vector<1x448x224xf32> to vector<448x224xf32>
    %cst_63 = arith.constant dense<0.000000e+00> : vector<7x224xf32>
    %67 = tpu.matmul %64, %66, %cst_63 {dimension_numbers = #tpu.dot_dimension_numbers<[1], [0], [0], [1], [0, 0, 1, 1], [], []>} : vector<7x448xf32>, vector<448x224xf32>, vector<7x224xf32> -> vector<7x224xf32>
    %c1_64 = arith.constant 1 : index
    %c0_65 = arith.constant 0 : index
    %c0_66 = arith.constant 0 : index
    %68 = vector.load %arg9[%c1_64, %c0_65, %c0_66] : memref<2x448x224xf32, #tpu.memory_space<vmem>>, vector<1x448x224xf32>
    %69 = vector.shape_cast %68 : vector<1x448x224xf32> to vector<448x224xf32>
    %cst_67 = arith.constant dense<0.000000e+00> : vector<7x224xf32>
    %70 = tpu.matmul %64, %69, %cst_67 {dimension_numbers = #tpu.dot_dimension_numbers<[1], [0], [0], [1], [0, 0, 1, 1], [], []>} : vector<7x448xf32>, vector<448x224xf32>, vector<7x224xf32> -> vector<7x224xf32>
    %71 = arith.maximumf %67, %70 : vector<7x224xf32>
    %c0_68 = arith.constant 0 : index
    %c0_69 = arith.constant 0 : index
    %72 = vector.load %arg11[%c0_68, %c0_69] : memref<1x128xf32, #tpu.memory_space<vmem>>, vector<1x128xf32>
    %73 = vector.extract_strided_slice %71 {offsets = [0, 0], sizes = [1, 224], strides = [1, 1]} : vector<7x224xf32> to vector<1x224xf32>
    %c0_70 = arith.constant 0 : index
    %c0_71 = arith.constant 0 : index
    %c0_72 = arith.constant 0 : index
    %74 = vector.load %arg10[%c0_70, %c0_71, %c0_72] : memref<7x224x128xf32, #tpu.memory_space<vmem>>, vector<1x224x128xf32>
    %75 = vector.shape_cast %74 : vector<1x224x128xf32> to vector<224x128xf32>
    %cst_73 = arith.constant dense<0.000000e+00> : vector<1x128xf32>
    %76 = tpu.matmul %73, %75, %cst_73 {dimension_numbers = #tpu.dot_dimension_numbers<[1], [0], [0], [1], [0, 0, 1, 1], [], []>} : vector<1x224xf32>, vector<224x128xf32>, vector<1x128xf32> -> vector<1x128xf32>
    %77 = arith.addf %72, %76 : vector<1x128xf32>
    %78 = vector.extract_strided_slice %71 {offsets = [1, 0], sizes = [1, 224], strides = [1, 1]} : vector<7x224xf32> to vector<1x224xf32>
    %c1_74 = arith.constant 1 : index
    %c0_75 = arith.constant 0 : index
    %c0_76 = arith.constant 0 : index
    %79 = vector.load %arg10[%c1_74, %c0_75, %c0_76] : memref<7x224x128xf32, #tpu.memory_space<vmem>>, vector<1x224x128xf32>
    %80 = vector.shape_cast %79 : vector<1x224x128xf32> to vector<224x128xf32>
    %cst_77 = arith.constant dense<0.000000e+00> : vector<1x128xf32>
    %81 = tpu.matmul %78, %80, %cst_77 {dimension_numbers = #tpu.dot_dimension_numbers<[1], [0], [0], [1], [0, 0, 1, 1], [], []>} : vector<1x224xf32>, vector<224x128xf32>, vector<1x128xf32> -> vector<1x128xf32>
    %82 = arith.addf %77, %81 : vector<1x128xf32>
    %83 = vector.extract_strided_slice %71 {offsets = [2, 0], sizes = [1, 224], strides = [1, 1]} : vector<7x224xf32> to vector<1x224xf32>
    %c2_78 = arith.constant 2 : index
    %c0_79 = arith.constant 0 : index
    %c0_80 = arith.constant 0 : index
    %84 = vector.load %arg10[%c2_78, %c0_79, %c0_80] : memref<7x224x128xf32, #tpu.memory_space<vmem>>, vector<1x224x128xf32>
    %85 = vector.shape_cast %84 : vector<1x224x128xf32> to vector<224x128xf32>
    %cst_81 = arith.constant dense<0.000000e+00> : vector<1x128xf32>
    %86 = tpu.matmul %83, %85, %cst_81 {dimension_numbers = #tpu.dot_dimension_numbers<[1], [0], [0], [1], [0, 0, 1, 1], [], []>} : vector<1x224xf32>, vector<224x128xf32>, vector<1x128xf32> -> vector<1x128xf32>
    %87 = arith.addf %82, %86 : vector<1x128xf32>
    %88 = vector.extract_strided_slice %71 {offsets = [3, 0], sizes = [1, 224], strides = [1, 1]} : vector<7x224xf32> to vector<1x224xf32>
    %c3 = arith.constant 3 : index
    %c0_82 = arith.constant 0 : index
    %c0_83 = arith.constant 0 : index
    %89 = vector.load %arg10[%c3, %c0_82, %c0_83] : memref<7x224x128xf32, #tpu.memory_space<vmem>>, vector<1x224x128xf32>
    %90 = vector.shape_cast %89 : vector<1x224x128xf32> to vector<224x128xf32>
    %cst_84 = arith.constant dense<0.000000e+00> : vector<1x128xf32>
    %91 = tpu.matmul %88, %90, %cst_84 {dimension_numbers = #tpu.dot_dimension_numbers<[1], [0], [0], [1], [0, 0, 1, 1], [], []>} : vector<1x224xf32>, vector<224x128xf32>, vector<1x128xf32> -> vector<1x128xf32>
    %92 = arith.addf %87, %91 : vector<1x128xf32>
    %93 = vector.extract_strided_slice %71 {offsets = [4, 0], sizes = [1, 224], strides = [1, 1]} : vector<7x224xf32> to vector<1x224xf32>
    %c4 = arith.constant 4 : index
    %c0_85 = arith.constant 0 : index
    %c0_86 = arith.constant 0 : index
    %94 = vector.load %arg10[%c4, %c0_85, %c0_86] : memref<7x224x128xf32, #tpu.memory_space<vmem>>, vector<1x224x128xf32>
    %95 = vector.shape_cast %94 : vector<1x224x128xf32> to vector<224x128xf32>
    %cst_87 = arith.constant dense<0.000000e+00> : vector<1x128xf32>
    %96 = tpu.matmul %93, %95, %cst_87 {dimension_numbers = #tpu.dot_dimension_numbers<[1], [0], [0], [1], [0, 0, 1, 1], [], []>} : vector<1x224xf32>, vector<224x128xf32>, vector<1x128xf32> -> vector<1x128xf32>
    %97 = arith.addf %92, %96 : vector<1x128xf32>
    %98 = vector.extract_strided_slice %71 {offsets = [5, 0], sizes = [1, 224], strides = [1, 1]} : vector<7x224xf32> to vector<1x224xf32>
    %c5 = arith.constant 5 : index
    %c0_88 = arith.constant 0 : index
    %c0_89 = arith.constant 0 : index
    %99 = vector.load %arg10[%c5, %c0_88, %c0_89] : memref<7x224x128xf32, #tpu.memory_space<vmem>>, vector<1x224x128xf32>
    %100 = vector.shape_cast %99 : vector<1x224x128xf32> to vector<224x128xf32>
    %cst_90 = arith.constant dense<0.000000e+00> : vector<1x128xf32>
    %101 = tpu.matmul %98, %100, %cst_90 {dimension_numbers = #tpu.dot_dimension_numbers<[1], [0], [0], [1], [0, 0, 1, 1], [], []>} : vector<1x224xf32>, vector<224x128xf32>, vector<1x128xf32> -> vector<1x128xf32>
    %102 = arith.addf %97, %101 : vector<1x128xf32>
    %103 = vector.extract_strided_slice %71 {offsets = [6, 0], sizes = [1, 224], strides = [1, 1]} : vector<7x224xf32> to vector<1x224xf32>
    %c6 = arith.constant 6 : index
    %c0_91 = arith.constant 0 : index
    %c0_92 = arith.constant 0 : index
    %104 = vector.load %arg10[%c6, %c0_91, %c0_92] : memref<7x224x128xf32, #tpu.memory_space<vmem>>, vector<1x224x128xf32>
    %105 = vector.shape_cast %104 : vector<1x224x128xf32> to vector<224x128xf32>
    %cst_93 = arith.constant dense<0.000000e+00> : vector<1x128xf32>
    %106 = tpu.matmul %103, %105, %cst_93 {dimension_numbers = #tpu.dot_dimension_numbers<[1], [0], [0], [1], [0, 0, 1, 1], [], []>} : vector<1x224xf32>, vector<224x128xf32>, vector<1x128xf32> -> vector<1x128xf32>
    %107 = arith.addf %102, %106 : vector<1x128xf32>
    %cst_94 = arith.constant 0.000000e+00 : f32
    %108 = vector.broadcast %cst_94 : f32 to vector<1x128xf32>
    %109 = arith.maximumf %107, %108 : vector<1x128xf32>
    %c0_95 = arith.constant 0 : index
    %c0_96 = arith.constant 0 : index
    %110 = vector.load %arg12[%c0_95, %c0_96] : memref<128x128xf32, #tpu.memory_space<vmem>>, vector<128x128xf32>
    %cst_97 = arith.constant dense<0.000000e+00> : vector<1x128xf32>
    %111 = tpu.matmul %109, %110, %cst_97 {dimension_numbers = #tpu.dot_dimension_numbers<[1], [0], [0], [1], [0, 0, 1, 1], [], []>} : vector<1x128xf32>, vector<128x128xf32>, vector<1x128xf32> -> vector<1x128xf32>
    %c0_98 = arith.constant 0 : index
    %c0_99 = arith.constant 0 : index
    %112 = vector.load %arg13[%c0_98, %c0_99] : memref<1x128xf32, #tpu.memory_space<vmem>>, vector<1x128xf32>
    %113 = arith.addf %111, %112 : vector<1x128xf32>
    %c0_100 = arith.constant 0 : index
    %c0_101 = arith.constant 0 : index
    %114 = vector.load %arg14[%c0_100, %c0_101] : memref<2x128xf32, #tpu.memory_space<vmem>>, vector<1x128xf32>
    tpu.vector_store %arg14[%c0_100, %c0_101], %113 {strides = array<i32>} : memref<2x128xf32, #tpu.memory_space<vmem>>, vector<1x128xf32>,
    %c1_102 = arith.constant 1 : index
    %c0_103 = arith.constant 0 : index
    %c0_104 = arith.constant 0 : index
    %115 = vector.load %arg1[%c1_102, %c0_103, %c0_104] : memref<2x30x28xf32, #tpu.memory_space<vmem>>, vector<1x30x28xf32>
    %116 = vector.shape_cast %115 : vector<1x30x28xf32> to vector<30x28xf32>
    %117 = vector.extract_strided_slice %116 {offsets = [0, 0], sizes = [28, 28], strides = [1, 1]} : vector<30x28xf32> to vector<28x28xf32>
    %c0_105 = arith.constant 0 : index
    %c0_106 = arith.constant 0 : index
    %c0_107 = arith.constant 0 : index
    %118 = vector.load %arg2[%c0_105, %c0_106, %c0_107] : memref<3x28x448xf32, #tpu.memory_space<vmem>>, vector<1x28x448xf32>
    %119 = vector.shape_cast %118 : vector<1x28x448xf32> to vector<28x448xf32>
    %cst_108 = arith.constant dense<0.000000e+00> : vector<28x448xf32>
    %120 = tpu.matmul %117, %119, %cst_108 {dimension_numbers = #tpu.dot_dimension_numbers<[1], [0], [0], [1], [0, 0, 1, 1], [], []>} : vector<28x28xf32>, vector<28x448xf32>, vector<28x448xf32> -> vector<28x448xf32>
    %121 = vector.extract_strided_slice %116 {offsets = [1, 0], sizes = [28, 28], strides = [1, 1]} : vector<30x28xf32> to vector<28x28xf32>
    %c1_109 = arith.constant 1 : index
    %c0_110 = arith.constant 0 : index
    %c0_111 = arith.constant 0 : index
    %122 = vector.load %arg2[%c1_109, %c0_110, %c0_111] : memref<3x28x448xf32, #tpu.memory_space<vmem>>, vector<1x28x448xf32>
    %123 = vector.shape_cast %122 : vector<1x28x448xf32> to vector<28x448xf32>
    %cst_112 = arith.constant dense<0.000000e+00> : vector<28x448xf32>
    %124 = tpu.matmul %121, %123, %cst_112 {dimension_numbers = #tpu.dot_dimension_numbers<[1], [0], [0], [1], [0, 0, 1, 1], [], []>} : vector<28x28xf32>, vector<28x448xf32>, vector<28x448xf32> -> vector<28x448xf32>
    %125 = arith.addf %120, %124 : vector<28x448xf32>
    %126 = vector.extract_strided_slice %116 {offsets = [2, 0], sizes = [28, 28], strides = [1, 1]} : vector<30x28xf32> to vector<28x28xf32>
    %c2_113 = arith.constant 2 : index
    %c0_114 = arith.constant 0 : index
    %c0_115 = arith.constant 0 : index
    %127 = vector.load %arg2[%c2_113, %c0_114, %c0_115] : memref<3x28x448xf32, #tpu.memory_space<vmem>>, vector<1x28x448xf32>
    %128 = vector.shape_cast %127 : vector<1x28x448xf32> to vector<28x448xf32>
    %cst_116 = arith.constant dense<0.000000e+00> : vector<28x448xf32>
    %129 = tpu.matmul %126, %128, %cst_116 {dimension_numbers = #tpu.dot_dimension_numbers<[1], [0], [0], [1], [0, 0, 1, 1], [], []>} : vector<28x28xf32>, vector<28x448xf32>, vector<28x448xf32> -> vector<28x448xf32>
    %130 = arith.addf %125, %129 : vector<28x448xf32>
    %c0_117 = arith.constant 0 : index
    %c0_118 = arith.constant 0 : index
    %131 = vector.load %arg3[%c0_117, %c0_118] : memref<1x448xf32, #tpu.memory_space<vmem>>, vector<1x448xf32>
    %132 = vector.broadcast %131 : vector<1x448xf32> to vector<28x448xf32>
    %133 = arith.addf %130, %132 : vector<28x448xf32>
    %cst_119 = arith.constant 0.000000e+00 : f32
    %134 = vector.broadcast %cst_119 : f32 to vector<28x448xf32>
    %135 = arith.maximumf %133, %134 : vector<28x448xf32>
    %c0_120 = arith.constant 0 : index
    %c0_121 = arith.constant 0 : index
    %c0_122 = arith.constant 0 : index
    %136 = vector.load %arg6[%c0_120, %c0_121, %c0_122] : memref<2x14x28xf32, #tpu.memory_space<vmem>>, vector<1x14x28xf32>
    %137 = vector.shape_cast %136 : vector<1x14x28xf32> to vector<14x28xf32>
    %cst_123 = arith.constant dense<0.000000e+00> : vector<14x448xf32>
    %138 = tpu.matmul %137, %135, %cst_123 {dimension_numbers = #tpu.dot_dimension_numbers<[1], [0], [0], [1], [0, 0, 1, 1], [], []>} : vector<14x28xf32>, vector<28x448xf32>, vector<14x448xf32> -> vector<14x448xf32>
    %c1_124 = arith.constant 1 : index
    %c0_125 = arith.constant 0 : index
    %c0_126 = arith.constant 0 : index
    %139 = vector.load %arg6[%c1_124, %c0_125, %c0_126] : memref<2x14x28xf32, #tpu.memory_space<vmem>>, vector<1x14x28xf32>
    %140 = vector.shape_cast %139 : vector<1x14x28xf32> to vector<14x28xf32>
    %cst_127 = arith.constant dense<0.000000e+00> : vector<14x448xf32>
    %141 = tpu.matmul %140, %135, %cst_127 {dimension_numbers = #tpu.dot_dimension_numbers<[1], [0], [0], [1], [0, 0, 1, 1], [], []>} : vector<14x28xf32>, vector<28x448xf32>, vector<14x448xf32> -> vector<14x448xf32>
    %142 = arith.maximumf %138, %141 : vector<14x448xf32>
    %c0_128 = arith.constant 0 : index
    %c0_129 = arith.constant 0 : index
    %c0_130 = arith.constant 0 : index
    %143 = vector.load %arg7[%c0_128, %c0_129, %c0_130] : memref<2x448x224xf32, #tpu.memory_space<vmem>>, vector<1x448x224xf32>
    %144 = vector.shape_cast %143 : vector<1x448x224xf32> to vector<448x224xf32>
    %cst_131 = arith.constant dense<0.000000e+00> : vector<14x224xf32>
    %145 = tpu.matmul %142, %144, %cst_131 {dimension_numbers = #tpu.dot_dimension_numbers<[1], [0], [0], [1], [0, 0, 1, 1], [], []>} : vector<14x448xf32>, vector<448x224xf32>, vector<14x224xf32> -> vector<14x224xf32>
    %c1_132 = arith.constant 1 : index
    %c0_133 = arith.constant 0 : index
    %c0_134 = arith.constant 0 : index
    %146 = vector.load %arg7[%c1_132, %c0_133, %c0_134] : memref<2x448x224xf32, #tpu.memory_space<vmem>>, vector<1x448x224xf32>
    %147 = vector.shape_cast %146 : vector<1x448x224xf32> to vector<448x224xf32>
    %cst_135 = arith.constant dense<0.000000e+00> : vector<14x224xf32>
    %148 = tpu.matmul %142, %147, %cst_135 {dimension_numbers = #tpu.dot_dimension_numbers<[1], [0], [0], [1], [0, 0, 1, 1], [], []>} : vector<14x448xf32>, vector<448x224xf32>, vector<14x224xf32> -> vector<14x224xf32>
    %149 = arith.maximumf %145, %148 : vector<14x224xf32>
    %c1_136 = arith.constant 1 : index
    %c0_137 = arith.constant 0 : index
    %150 = vector.load %arg15[%c1_136, %c0_137] : memref<16x224xf32, #tpu.memory_space<vmem>>, vector<14x224xf32>
    tpu.vector_store %arg15[%c1_136, %c0_137], %149 {strides = array<i32>} : memref<16x224xf32, #tpu.memory_space<vmem>>, vector<14x224xf32>,
    %c0_138 = arith.constant 0 : index
    %c0_139 = arith.constant 0 : index
    %151 = vector.load %arg15[%c0_138, %c0_139] : memref<16x224xf32, #tpu.memory_space<vmem>>, vector<16x224xf32>
    %152 = vector.extract_strided_slice %151 {offsets = [0, 0], sizes = [14, 224], strides = [1, 1]} : vector<16x224xf32> to vector<14x224xf32>
    %c0_140 = arith.constant 0 : index
    %c0_141 = arith.constant 0 : index
    %c0_142 = arith.constant 0 : index
    %153 = vector.load %arg4[%c0_140, %c0_141, %c0_142] : memref<3x224x448xf32, #tpu.memory_space<vmem>>, vector<1x224x448xf32>
    %154 = vector.shape_cast %153 : vector<1x224x448xf32> to vector<224x448xf32>
    %cst_143 = arith.constant dense<0.000000e+00> : vector<14x448xf32>
    %155 = tpu.matmul %152, %154, %cst_143 {dimension_numbers = #tpu.dot_dimension_numbers<[1], [0], [0], [1], [0, 0, 1, 1], [], []>} : vector<14x224xf32>, vector<224x448xf32>, vector<14x448xf32> -> vector<14x448xf32>
    %156 = vector.extract_strided_slice %151 {offsets = [1, 0], sizes = [14, 224], strides = [1, 1]} : vector<16x224xf32> to vector<14x224xf32>
    %c1_144 = arith.constant 1 : index
    %c0_145 = arith.constant 0 : index
    %c0_146 = arith.constant 0 : index
    %157 = vector.load %arg4[%c1_144, %c0_145, %c0_146] : memref<3x224x448xf32, #tpu.memory_space<vmem>>, vector<1x224x448xf32>
    %158 = vector.shape_cast %157 : vector<1x224x448xf32> to vector<224x448xf32>
    %cst_147 = arith.constant dense<0.000000e+00> : vector<14x448xf32>
    %159 = tpu.matmul %156, %158, %cst_147 {dimension_numbers = #tpu.dot_dimension_numbers<[1], [0], [0], [1], [0, 0, 1, 1], [], []>} : vector<14x224xf32>, vector<224x448xf32>, vector<14x448xf32> -> vector<14x448xf32>
    %160 = arith.addf %155, %159 : vector<14x448xf32>
    %161 = vector.extract_strided_slice %151 {offsets = [2, 0], sizes = [14, 224], strides = [1, 1]} : vector<16x224xf32> to vector<14x224xf32>
    %c2_148 = arith.constant 2 : index
    %c0_149 = arith.constant 0 : index
    %c0_150 = arith.constant 0 : index
    %162 = vector.load %arg4[%c2_148, %c0_149, %c0_150] : memref<3x224x448xf32, #tpu.memory_space<vmem>>, vector<1x224x448xf32>
    %163 = vector.shape_cast %162 : vector<1x224x448xf32> to vector<224x448xf32>
    %cst_151 = arith.constant dense<0.000000e+00> : vector<14x448xf32>
    %164 = tpu.matmul %161, %163, %cst_151 {dimension_numbers = #tpu.dot_dimension_numbers<[1], [0], [0], [1], [0, 0, 1, 1], [], []>} : vector<14x224xf32>, vector<224x448xf32>, vector<14x448xf32> -> vector<14x448xf32>
    %165 = arith.addf %160, %164 : vector<14x448xf32>
    %c0_152 = arith.constant 0 : index
    %c0_153 = arith.constant 0 : index
    %166 = vector.load %arg5[%c0_152, %c0_153] : memref<1x448xf32, #tpu.memory_space<vmem>>, vector<1x448xf32>
    %167 = vector.broadcast %166 : vector<1x448xf32> to vector<14x448xf32>
    %168 = arith.addf %165, %167 : vector<14x448xf32>
    %cst_154 = arith.constant 0.000000e+00 : f32
    %169 = vector.broadcast %cst_154 : f32 to vector<14x448xf32>
    %170 = arith.maximumf %168, %169 : vector<14x448xf32>
    %c0_155 = arith.constant 0 : index
    %c0_156 = arith.constant 0 : index
    %c0_157 = arith.constant 0 : index
    %171 = vector.load %arg8[%c0_155, %c0_156, %c0_157] : memref<2x7x14xf32, #tpu.memory_space<vmem>>, vector<1x7x14xf32>
    %172 = vector.shape_cast %171 : vector<1x7x14xf32> to vector<7x14xf32>
    %cst_158 = arith.constant dense<0.000000e+00> : vector<7x448xf32>
    %173 = tpu.matmul %172, %170, %cst_158 {dimension_numbers = #tpu.dot_dimension_numbers<[1], [0], [0], [1], [0, 0, 1, 1], [], []>} : vector<7x14xf32>, vector<14x448xf32>, vector<7x448xf32> -> vector<7x448xf32>
    %c1_159 = arith.constant 1 : index
    %c0_160 = arith.constant 0 : index
    %c0_161 = arith.constant 0 : index
    %174 = vector.load %arg8[%c1_159, %c0_160, %c0_161] : memref<2x7x14xf32, #tpu.memory_space<vmem>>, vector<1x7x14xf32>
    %175 = vector.shape_cast %174 : vector<1x7x14xf32> to vector<7x14xf32>
    %cst_162 = arith.constant dense<0.000000e+00> : vector<7x448xf32>
    %176 = tpu.matmul %175, %170, %cst_162 {dimension_numbers = #tpu.dot_dimension_numbers<[1], [0], [0], [1], [0, 0, 1, 1], [], []>} : vector<7x14xf32>, vector<14x448xf32>, vector<7x448xf32> -> vector<7x448xf32>
    %177 = arith.maximumf %173, %176 : vector<7x448xf32>
    %c0_163 = arith.constant 0 : index
    %c0_164 = arith.constant 0 : index
    %c0_165 = arith.constant 0 : index
    %178 = vector.load %arg9[%c0_163, %c0_164, %c0_165] : memref<2x448x224xf32, #tpu.memory_space<vmem>>, vector<1x448x224xf32>
    %179 = vector.shape_cast %178 : vector<1x448x224xf32> to vector<448x224xf32>
    %cst_166 = arith.constant dense<0.000000e+00> : vector<7x224xf32>
    %180 = tpu.matmul %177, %179, %cst_166 {dimension_numbers = #tpu.dot_dimension_numbers<[1], [0], [0], [1], [0, 0, 1, 1], [], []>} : vector<7x448xf32>, vector<448x224xf32>, vector<7x224xf32> -> vector<7x224xf32>
    %c1_167 = arith.constant 1 : index
    %c0_168 = arith.constant 0 : index
    %c0_169 = arith.constant 0 : index
    %181 = vector.load %arg9[%c1_167, %c0_168, %c0_169] : memref<2x448x224xf32, #tpu.memory_space<vmem>>, vector<1x448x224xf32>
    %182 = vector.shape_cast %181 : vector<1x448x224xf32> to vector<448x224xf32>
    %cst_170 = arith.constant dense<0.000000e+00> : vector<7x224xf32>
    %183 = tpu.matmul %177, %182, %cst_170 {dimension_numbers = #tpu.dot_dimension_numbers<[1], [0], [0], [1], [0, 0, 1, 1], [], []>} : vector<7x448xf32>, vector<448x224xf32>, vector<7x224xf32> -> vector<7x224xf32>
    %184 = arith.maximumf %180, %183 : vector<7x224xf32>
    %c0_171 = arith.constant 0 : index
    %c0_172 = arith.constant 0 : index
    %185 = vector.load %arg11[%c0_171, %c0_172] : memref<1x128xf32, #tpu.memory_space<vmem>>, vector<1x128xf32>
    %186 = vector.extract_strided_slice %184 {offsets = [0, 0], sizes = [1, 224], strides = [1, 1]} : vector<7x224xf32> to vector<1x224xf32>
    %c0_173 = arith.constant 0 : index
    %c0_174 = arith.constant 0 : index
    %c0_175 = arith.constant 0 : index
    %187 = vector.load %arg10[%c0_173, %c0_174, %c0_175] : memref<7x224x128xf32, #tpu.memory_space<vmem>>, vector<1x224x128xf32>
    %188 = vector.shape_cast %187 : vector<1x224x128xf32> to vector<224x128xf32>
    %cst_176 = arith.constant dense<0.000000e+00> : vector<1x128xf32>
    %189 = tpu.matmul %186, %188, %cst_176 {dimension_numbers = #tpu.dot_dimension_numbers<[1], [0], [0], [1], [0, 0, 1, 1], [], []>} : vector<1x224xf32>, vector<224x128xf32>, vector<1x128xf32> -> vector<1x128xf32>
    %190 = arith.addf %185, %189 : vector<1x128xf32>
    %191 = vector.extract_strided_slice %184 {offsets = [1, 0], sizes = [1, 224], strides = [1, 1]} : vector<7x224xf32> to vector<1x224xf32>
    %c1_177 = arith.constant 1 : index
    %c0_178 = arith.constant 0 : index
    %c0_179 = arith.constant 0 : index
    %192 = vector.load %arg10[%c1_177, %c0_178, %c0_179] : memref<7x224x128xf32, #tpu.memory_space<vmem>>, vector<1x224x128xf32>
    %193 = vector.shape_cast %192 : vector<1x224x128xf32> to vector<224x128xf32>
    %cst_180 = arith.constant dense<0.000000e+00> : vector<1x128xf32>
    %194 = tpu.matmul %191, %193, %cst_180 {dimension_numbers = #tpu.dot_dimension_numbers<[1], [0], [0], [1], [0, 0, 1, 1], [], []>} : vector<1x224xf32>, vector<224x128xf32>, vector<1x128xf32> -> vector<1x128xf32>
    %195 = arith.addf %190, %194 : vector<1x128xf32>
    %196 = vector.extract_strided_slice %184 {offsets = [2, 0], sizes = [1, 224], strides = [1, 1]} : vector<7x224xf32> to vector<1x224xf32>
    %c2_181 = arith.constant 2 : index
    %c0_182 = arith.constant 0 : index
    %c0_183 = arith.constant 0 : index
    %197 = vector.load %arg10[%c2_181, %c0_182, %c0_183] : memref<7x224x128xf32, #tpu.memory_space<vmem>>, vector<1x224x128xf32>
    %198 = vector.shape_cast %197 : vector<1x224x128xf32> to vector<224x128xf32>
    %cst_184 = arith.constant dense<0.000000e+00> : vector<1x128xf32>
    %199 = tpu.matmul %196, %198, %cst_184 {dimension_numbers = #tpu.dot_dimension_numbers<[1], [0], [0], [1], [0, 0, 1, 1], [], []>} : vector<1x224xf32>, vector<224x128xf32>, vector<1x128xf32> -> vector<1x128xf32>
    %200 = arith.addf %195, %199 : vector<1x128xf32>
    %201 = vector.extract_strided_slice %184 {offsets = [3, 0], sizes = [1, 224], strides = [1, 1]} : vector<7x224xf32> to vector<1x224xf32>
    %c3_185 = arith.constant 3 : index
    %c0_186 = arith.constant 0 : index
    %c0_187 = arith.constant 0 : index
    %202 = vector.load %arg10[%c3_185, %c0_186, %c0_187] : memref<7x224x128xf32, #tpu.memory_space<vmem>>, vector<1x224x128xf32>
    %203 = vector.shape_cast %202 : vector<1x224x128xf32> to vector<224x128xf32>
    %cst_188 = arith.constant dense<0.000000e+00> : vector<1x128xf32>
    %204 = tpu.matmul %201, %203, %cst_188 {dimension_numbers = #tpu.dot_dimension_numbers<[1], [0], [0], [1], [0, 0, 1, 1], [], []>} : vector<1x224xf32>, vector<224x128xf32>, vector<1x128xf32> -> vector<1x128xf32>
    %205 = arith.addf %200, %204 : vector<1x128xf32>
    %206 = vector.extract_strided_slice %184 {offsets = [4, 0], sizes = [1, 224], strides = [1, 1]} : vector<7x224xf32> to vector<1x224xf32>
    %c4_189 = arith.constant 4 : index
    %c0_190 = arith.constant 0 : index
    %c0_191 = arith.constant 0 : index
    %207 = vector.load %arg10[%c4_189, %c0_190, %c0_191] : memref<7x224x128xf32, #tpu.memory_space<vmem>>, vector<1x224x128xf32>
    %208 = vector.shape_cast %207 : vector<1x224x128xf32> to vector<224x128xf32>
    %cst_192 = arith.constant dense<0.000000e+00> : vector<1x128xf32>
    %209 = tpu.matmul %206, %208, %cst_192 {dimension_numbers = #tpu.dot_dimension_numbers<[1], [0], [0], [1], [0, 0, 1, 1], [], []>} : vector<1x224xf32>, vector<224x128xf32>, vector<1x128xf32> -> vector<1x128xf32>
    %210 = arith.addf %205, %209 : vector<1x128xf32>
    %211 = vector.extract_strided_slice %184 {offsets = [5, 0], sizes = [1, 224], strides = [1, 1]} : vector<7x224xf32> to vector<1x224xf32>
    %c5_193 = arith.constant 5 : index
    %c0_194 = arith.constant 0 : index
    %c0_195 = arith.constant 0 : index
    %212 = vector.load %arg10[%c5_193, %c0_194, %c0_195] : memref<7x224x128xf32, #tpu.memory_space<vmem>>, vector<1x224x128xf32>
    %213 = vector.shape_cast %212 : vector<1x224x128xf32> to vector<224x128xf32>
    %cst_196 = arith.constant dense<0.000000e+00> : vector<1x128xf32>
    %214 = tpu.matmul %211, %213, %cst_196 {dimension_numbers = #tpu.dot_dimension_numbers<[1], [0], [0], [1], [0, 0, 1, 1], [], []>} : vector<1x224xf32>, vector<224x128xf32>, vector<1x128xf32> -> vector<1x128xf32>
    %215 = arith.addf %210, %214 : vector<1x128xf32>
    %216 = vector.extract_strided_slice %184 {offsets = [6, 0], sizes = [1, 224], strides = [1, 1]} : vector<7x224xf32> to vector<1x224xf32>
    %c6_197 = arith.constant 6 : index
    %c0_198 = arith.constant 0 : index
    %c0_199 = arith.constant 0 : index
    %217 = vector.load %arg10[%c6_197, %c0_198, %c0_199] : memref<7x224x128xf32, #tpu.memory_space<vmem>>, vector<1x224x128xf32>
    %218 = vector.shape_cast %217 : vector<1x224x128xf32> to vector<224x128xf32>
    %cst_200 = arith.constant dense<0.000000e+00> : vector<1x128xf32>
    %219 = tpu.matmul %216, %218, %cst_200 {dimension_numbers = #tpu.dot_dimension_numbers<[1], [0], [0], [1], [0, 0, 1, 1], [], []>} : vector<1x224xf32>, vector<224x128xf32>, vector<1x128xf32> -> vector<1x128xf32>
    %220 = arith.addf %215, %219 : vector<1x128xf32>
    %cst_201 = arith.constant 0.000000e+00 : f32
    %221 = vector.broadcast %cst_201 : f32 to vector<1x128xf32>
    %222 = arith.maximumf %220, %221 : vector<1x128xf32>
    %c0_202 = arith.constant 0 : index
    %c0_203 = arith.constant 0 : index
    %223 = vector.load %arg12[%c0_202, %c0_203] : memref<128x128xf32, #tpu.memory_space<vmem>>, vector<128x128xf32>
    %cst_204 = arith.constant dense<0.000000e+00> : vector<1x128xf32>
    %224 = tpu.matmul %222, %223, %cst_204 {dimension_numbers = #tpu.dot_dimension_numbers<[1], [0], [0], [1], [0, 0, 1, 1], [], []>} : vector<1x128xf32>, vector<128x128xf32>, vector<1x128xf32> -> vector<1x128xf32>
    %c0_205 = arith.constant 0 : index
    %c0_206 = arith.constant 0 : index
    %225 = vector.load %arg13[%c0_205, %c0_206] : memref<1x128xf32, #tpu.memory_space<vmem>>, vector<1x128xf32>
    %226 = arith.addf %224, %225 : vector<1x128xf32>
    %c1_207 = arith.constant 1 : index
    %c0_208 = arith.constant 0 : index
    %227 = vector.load %arg14[%c1_207, %c0_208] : memref<2x128xf32, #tpu.memory_space<vmem>>, vector<1x128xf32>
    tpu.vector_store %arg14[%c1_207, %c0_208], %226 {strides = array<i32>} : memref<2x128xf32, #tpu.memory_space<vmem>>, vector<1x128xf32>,
    return
  }
  func.func @transform_0(%arg0: i32) -> (i32, i32, i32) {
    %c0_i32 = arith.constant 0 : i32
    %c0_i32_0 = arith.constant 0 : i32
    %c0_i32_1 = arith.constant 0 : i32
    return %arg0, %c0_i32, %c0_i32_0 : i32, i32, i32
  }
  func.func @transform_1(%arg0: i32) -> (i32, i32, i32) {
    %c0_i32 = arith.constant 0 : i32
    %c0_i32_0 = arith.constant 0 : i32
    %c0_i32_1 = arith.constant 0 : i32
    %c0_i32_2 = arith.constant 0 : i32
    return %c0_i32, %c0_i32_0, %c0_i32_1 : i32, i32, i32
  }
  func.func @transform_2(%arg0: i32) -> (i32, i32) {
    %c0_i32 = arith.constant 0 : i32
    %c0_i32_0 = arith.constant 0 : i32
    %c0_i32_1 = arith.constant 0 : i32
    return %c0_i32, %c0_i32_0 : i32, i32
  }
  func.func @transform_3(%arg0: i32) -> (i32, i32, i32) {
    %c0_i32 = arith.constant 0 : i32
    %c0_i32_0 = arith.constant 0 : i32
    %c0_i32_1 = arith.constant 0 : i32
    %c0_i32_2 = arith.constant 0 : i32
    return %c0_i32, %c0_i32_0, %c0_i32_1 : i32, i32, i32
  }
  func.func @transform_4(%arg0: i32) -> (i32, i32) {
    %c0_i32 = arith.constant 0 : i32
    %c0_i32_0 = arith.constant 0 : i32
    %c0_i32_1 = arith.constant 0 : i32
    return %c0_i32, %c0_i32_0 : i32, i32
  }
  func.func @transform_5(%arg0: i32) -> (i32, i32, i32) {
    %c0_i32 = arith.constant 0 : i32
    %c0_i32_0 = arith.constant 0 : i32
    %c0_i32_1 = arith.constant 0 : i32
    %c0_i32_2 = arith.constant 0 : i32
    return %c0_i32, %c0_i32_0, %c0_i32_1 : i32, i32, i32
  }
  func.func @transform_6(%arg0: i32) -> (i32, i32, i32) {
    %c0_i32 = arith.constant 0 : i32
    %c0_i32_0 = arith.constant 0 : i32
    %c0_i32_1 = arith.constant 0 : i32
    %c0_i32_2 = arith.constant 0 : i32
    return %c0_i32, %c0_i32_0, %c0_i32_1 : i32, i32, i32
  }
  func.func @transform_7(%arg0: i32) -> (i32, i32, i32) {
    %c0_i32 = arith.constant 0 : i32
    %c0_i32_0 = arith.constant 0 : i32
    %c0_i32_1 = arith.constant 0 : i32
    %c0_i32_2 = arith.constant 0 : i32
    return %c0_i32, %c0_i32_0, %c0_i32_1 : i32, i32, i32
  }
  func.func @transform_8(%arg0: i32) -> (i32, i32, i32) {
    %c0_i32 = arith.constant 0 : i32
    %c0_i32_0 = arith.constant 0 : i32
    %c0_i32_1 = arith.constant 0 : i32
    %c0_i32_2 = arith.constant 0 : i32
    return %c0_i32, %c0_i32_0, %c0_i32_1 : i32, i32, i32
  }
  func.func @transform_9(%arg0: i32) -> (i32, i32, i32) {
    %c0_i32 = arith.constant 0 : i32
    %c0_i32_0 = arith.constant 0 : i32
    %c0_i32_1 = arith.constant 0 : i32
    %c0_i32_2 = arith.constant 0 : i32
    return %c0_i32, %c0_i32_0, %c0_i32_1 : i32, i32, i32
  }
  func.func @transform_10(%arg0: i32) -> (i32, i32) {
    %c0_i32 = arith.constant 0 : i32
    %c0_i32_0 = arith.constant 0 : i32
    %c0_i32_1 = arith.constant 0 : i32
    return %c0_i32, %c0_i32_0 : i32, i32
  }
  func.func @transform_11(%arg0: i32) -> (i32, i32) {
    %c0_i32 = arith.constant 0 : i32
    %c0_i32_0 = arith.constant 0 : i32
    %c0_i32_1 = arith.constant 0 : i32
    return %c0_i32, %c0_i32_0 : i32, i32
  }
  func.func @transform_12(%arg0: i32) -> (i32, i32) {
    %c0_i32 = arith.constant 0 : i32
    %c0_i32_0 = arith.constant 0 : i32
    %c0_i32_1 = arith.constant 0 : i32
    return %c0_i32, %c0_i32_0 : i32, i32
  }
  func.func @transform_13(%arg0: i32) -> (i32, i32) {
    %c0_i32 = arith.constant 0 : i32
    %c0_i32_0 = arith.constant 0 : i32
    return %arg0, %c0_i32 : i32, i32
  }
}

</mosaic_0001>

<llo_original>
// kernel: simple_cnn_forward.1
$region0: #{simple_cnn_forward.1}
  #allocation0 [shape = 'u32[]', space=smem, size = 0x4, offset = 0x4, fixed_abs, tag = 'smem constant byte address 0x4 - core index']
  #allocation1 [shape = 'u32[144,128]{1,0:T(1,128)}', space=vmem, size = 0x12000, scoped, tag = 'internal scratch']
  #allocation2 [shape = 'f32[16,224]{1,0:T(8,128)}', space=vmem, size = 0x4000, scoped, tag = 'scratch operand']
  %s0 = inlined_call_operand.vmem [shape: f32[2,30,28], index: 0, kind: input, shape index: {}]
  %s1 = inlined_call_operand.hbm [shape: f32[3,28,448], index: 1, kind: input, shape index: {}]
  %s2 = inlined_call_operand.hbm [shape: f32[1,448], index: 2, kind: input, shape index: {}]
  %s3 = inlined_call_operand.hbm [shape: f32[3,224,448], index: 3, kind: input, shape index: {}]
  %s4 = inlined_call_operand.hbm [shape: f32[1,448], index: 4, kind: input, shape index: {}]
  %s5 = inlined_call_operand.vmem [shape: f32[2,14,28], index: 5, kind: input, shape index: {}]
  %s6 = inlined_call_operand.hbm [shape: f32[2,448,224], index: 6, kind: input, shape index: {}]
  %s7 = inlined_call_operand.vmem [shape: f32[2,7,14], index: 7, kind: input, shape index: {}]
  %s8 = inlined_call_operand.hbm [shape: f32[2,448,224], index: 8, kind: input, shape index: {}]
  %s9 = inlined_call_operand.hbm [shape: f32[7,224,128], index: 9, kind: input, shape index: {}]
  %s10 = inlined_call_operand.hbm [shape: f32[1,128], index: 10, kind: input, shape index: {}]
  %s11 = inlined_call_operand.hbm [shape: f32[128,128], index: 11, kind: input, shape index: {}]
  %s12 = inlined_call_operand.hbm [shape: f32[1,128], index: 12, kind: input, shape index: {}]
  %s13 = inlined_call_operand.hbm [shape: f32[2,128], index: 13, kind: output, shape index: {}]
  %s14 = sld [smem:[#allocation0]]
  $region102: #{simple_cnn_forward.1} parent=0
    _
  %s16 = ssub.s32 1, %s14
  %s17 = scalar_select 0, %s16, %s14
  $region1: #{simple_cnn_forward.1} parent=0
    #allocation3 [shape = 'u8[196608]{0}', space=vmem, size = 0x30000, scoped, tag = 'input window, operand 1, single buffered']
    #allocation4 [shape = 's32[1]{0}', space=sflag, size = 0x4, scoped, tag = 'scoped memory for simple_cnn_forward.1']
    #allocation5 [shape = 's32[1]{0}', space=sflag, size = 0x4, scoped, tag = 'scoped memory for simple_cnn_forward.1']
    #allocation6 [shape = 'u8[2048]{0}', space=vmem, size = 0x800, scoped, tag = 'input window, operand 2, single buffered']
    #allocation7 [shape = 's32[1]{0}', space=sflag, size = 0x4, scoped, tag = 'scoped memory for simple_cnn_forward.1']
    #allocation8 [shape = 'u8[1376256]{0}', space=vmem, size = 0x150000, scoped, tag = 'input window, operand 3, single buffered']
    #allocation9 [shape = 'u8[2048]{0}', space=vmem, size = 0x800, scoped, tag = 'input window, operand 4, single buffered']
    #allocation10 [shape = 's32[1]{0}', space=sflag, size = 0x4, scoped, tag = 'scoped memory for simple_cnn_forward.1']
    #allocation11 [shape = 'u8[917504]{0}', space=vmem, size = 0xe0000, scoped, tag = 'input window, operand 6, single buffered']
    #allocation12 [shape = 'u8[917504]{0}', space=vmem, size = 0xe0000, scoped, tag = 'input window, operand 8, single buffered']
    #allocation13 [shape = 's32[1]{0}', space=sflag, size = 0x4, scoped, tag = 'scoped memory for simple_cnn_forward.1']
    #allocation14 [shape = 'u8[802816]{0}', space=vmem, size = 0xc4000, scoped, tag = 'input window, operand 9, single buffered']
    #allocation15 [shape = 'u8[512]{0}', space=vmem, size = 0x400, scoped, tag = 'input window, operand 10, single buffered']
    #allocation16 [shape = 's32[1]{0}', space=sflag, size = 0x4, scoped, tag = 'scoped memory for simple_cnn_forward.1']
    #allocation17 [shape = 'u8[65536]{0}', space=vmem, size = 0x10000, scoped, tag = 'input window, operand 11, single buffered']
    #allocation18 [shape = 'u8[512]{0}', space=vmem, size = 0x400, scoped, tag = 'input window, operand 12, single buffered']
    #allocation19 [shape = 's32[1]{0}', space=sflag, size = 0x4, scoped, tag = 'scoped memory for simple_cnn_forward.1']
    #allocation20 [shape = 'u8[1024]{0}', space=vmem, size = 0x400, scoped, tag = 'output window, operand 0, single buffered']
    %18 = vsyncpa [#allocation4], 0
    %19 = vsyncpa [#allocation7], 0
    %20 = vsyncpa [#allocation10], 0
    %21 = vsyncpa [#allocation13], 0
    %22 = vsyncpa [#allocation16], 0
    %23 = vsyncpa [#allocation19], 0
    %24 = vsyncpa [#allocation5], 0
    // Predicated region
    $region2: #{simple_cnn_forward.1} parent=1 // pred_check
      _
    $region3: #{simple_cnn_forward.1} parent=1 // pred_check_branch
      %26 = sbr.rel (0) target = $region5
    $region4: #{simple_cnn_forward.1} parent=1 // pred_region
      _
    $region5: #{simple_cnn_forward.1} parent=1 // pred_fallthru
      _
    // Predicated region
    $region6: #{simple_cnn_forward.1} parent=1 // pred_check
      _
    $region7: #{simple_cnn_forward.1} parent=1 // pred_check_branch
      %28 = sbr.rel (0) target = $region9
    $region8: #{simple_cnn_forward.1} parent=1 // pred_region
      %s30 = ssub.s32 6144, 6144
      %31 = vsyncadd [#allocation4], %s30
      %s32 = sshll.u32 [#allocation3], 4
      %s33 = int_to_ptr.vmem [resolvable:$true] %s32
      %38 = dma.hbm_to_vmem [thread:$0]  %s1, 6144, %s33, [#allocation4], 512, 512, 32
    $region9: #{simple_cnn_forward.1} parent=1 // pred_fallthru
      _
    // Predicated region
    $region10: #{simple_cnn_forward.1} parent=1 // pred_check
      _
    $region11: #{simple_cnn_forward.1} parent=1 // pred_check_branch
      %40 = sbr.rel (0) target = $region13
    $region12: #{simple_cnn_forward.1} parent=1 // pred_region
      %s42 = ssub.s32 64, 64
      %43 = vsyncadd [#allocation7], %s42
      %s45 = sshll.u32 [#allocation6], 4
      %s46 = int_to_ptr.vmem [resolvable:$true] %s45
      %48 = dma.hbm_to_vmem [thread:$0]  %s2, 64, %s46, [#allocation7]
    $region13: #{simple_cnn_forward.1} parent=1 // pred_fallthru
      _
    // Predicated region
    $region14: #{simple_cnn_forward.1} parent=1 // pred_check
      _
    $region15: #{simple_cnn_forward.1} parent=1 // pred_check_branch
      %50 = sbr.rel (0) target = $region17
    $region16: #{simple_cnn_forward.1} parent=1 // pred_region
      %s52 = ssub.s32 43008, 43008
      %53 = vsyncadd [#allocation7], %s52
      %s54 = sshll.u32 [#allocation8], 4
      %s55 = int_to_ptr.vmem [resolvable:$true] %s54
      %60 = dma.hbm_to_vmem [thread:$0]  %s3, 43008, %s55, [#allocation7], 512, 512, 32
    $region17: #{simple_cnn_forward.1} parent=1 // pred_fallthru
      _
    // Predicated region
    $region18: #{simple_cnn_forward.1} parent=1 // pred_check
      _
    $region19: #{simple_cnn_forward.1} parent=1 // pred_check_branch
      %62 = sbr.rel (0) target = $region21
    $region20: #{simple_cnn_forward.1} parent=1 // pred_region
      %s64 = ssub.s32 64, 64
      %65 = vsyncadd [#allocation10], %s64
      %s67 = sshll.u32 [#allocation9], 4
      %s68 = int_to_ptr.vmem [resolvable:$true] %s67
      %70 = dma.hbm_to_vmem [thread:$0]  %s4, 64, %s68, [#allocation10]
    $region21: #{simple_cnn_forward.1} parent=1 // pred_fallthru
      _
    // Predicated region
    $region22: #{simple_cnn_forward.1} parent=1 // pred_check
      _
    $region23: #{simple_cnn_forward.1} parent=1 // pred_check_branch
      %72 = sbr.rel (0) target = $region25
    $region24: #{simple_cnn_forward.1} parent=1 // pred_region
      _
    $region25: #{simple_cnn_forward.1} parent=1 // pred_fallthru
      _
    // Predicated region
    $region26: #{simple_cnn_forward.1} parent=1 // pred_check
      _
    $region27: #{simple_cnn_forward.1} parent=1 // pred_check_branch
      %74 = sbr.rel (0) target = $region29
    $region28: #{simple_cnn_forward.1} parent=1 // pred_region
      %s76 = ssub.s32 28672, 28672
      %77 = vsyncadd [#allocation10], %s76
      %s78 = sshll.u32 [#allocation11], 4
      %s79 = int_to_ptr.vmem [resolvable:$true] %s78
      %84 = dma.hbm_to_vmem [thread:$0]  %s6, 28672, %s79, [#allocation10], 256, 256, 16
    $region29: #{simple_cnn_forward.1} parent=1 // pred_fallthru
      _
    // Predicated region
    $region30: #{simple_cnn_forward.1} parent=1 // pred_check
      _
    $region31: #{simple_cnn_forward.1} parent=1 // pred_check_branch
      %86 = sbr.rel (0) target = $region33
    $region32: #{simple_cnn_forward.1} parent=1 // pred_region
      _
    $region33: #{simple_cnn_forward.1} parent=1 // pred_fallthru
      _
    // Predicated region
    $region34: #{simple_cnn_forward.1} parent=1 // pred_check
      _
    $region35: #{simple_cnn_forward.1} parent=1 // pred_check_branch
      %88 = sbr.rel (0) target = $region37
    $region36: #{simple_cnn_forward.1} parent=1 // pred_region
      %s90 = ssub.s32 28672, 28672
      %91 = vsyncadd [#allocation13], %s90
      %s92 = sshll.u32 [#allocation12], 4
      %s93 = int_to_ptr.vmem [resolvable:$true] %s92
      %98 = dma.hbm_to_vmem [thread:$0]  %s8, 28672, %s93, [#allocation13], 256, 256, 16
    $region37: #{simple_cnn_forward.1} parent=1 // pred_fallthru
      _
    // Predicated region
    $region38: #{simple_cnn_forward.1} parent=1 // pred_check
      _
    $region39: #{simple_cnn_forward.1} parent=1 // pred_check_branch
      %100 = sbr.rel (0) target = $region41
    $region40: #{simple_cnn_forward.1} parent=1 // pred_region
      %s102 = ssub.s32 25088, 25088
      %103 = vsyncadd [#allocation13], %s102
      %s104 = sshll.u32 [#allocation14], 4
      %s105 = int_to_ptr.vmem [resolvable:$true] %s104
      %110 = dma.hbm_to_vmem [thread:$0]  %s9, 25088, %s105, [#allocation13], 128, 128, 8
    $region41: #{simple_cnn_forward.1} parent=1 // pred_fallthru
      _
    // Predicated region
    $region42: #{simple_cnn_forward.1} parent=1 // pred_check
      _
    $region43: #{simple_cnn_forward.1} parent=1 // pred_check_branch
      %112 = sbr.rel (0) target = $region45
    $region44: #{simple_cnn_forward.1} parent=1 // pred_region
      %s114 = ssub.s32 16, 16
      %115 = vsyncadd [#allocation16], %s114
      %s117 = sshll.u32 [#allocation15], 4
      %s118 = int_to_ptr.vmem [resolvable:$true] %s117
      %120 = dma.hbm_to_vmem [thread:$0]  %s10, 16, %s118, [#allocation16]
    $region45: #{simple_cnn_forward.1} parent=1 // pred_fallthru
      _
    // Predicated region
    $region46: #{simple_cnn_forward.1} parent=1 // pred_check
      _
    $region47: #{simple_cnn_forward.1} parent=1 // pred_check_branch
      %122 = sbr.rel (0) target = $region49
    $region48: #{simple_cnn_forward.1} parent=1 // pred_region
      %s124 = ssub.s32 2048, 2048
      %125 = vsyncadd [#allocation16], %s124
      %s126 = sshll.u32 [#allocation17], 4
      %s127 = int_to_ptr.vmem [resolvable:$true] %s126
      %132 = dma.hbm_to_vmem [thread:$0]  %s11, 2048, %s127, [#allocation16], 128, 128, 8
    $region49: #{simple_cnn_forward.1} parent=1 // pred_fallthru
      _
    // Predicated region
    $region50: #{simple_cnn_forward.1} parent=1 // pred_check
      _
    $region51: #{simple_cnn_forward.1} parent=1 // pred_check_branch
      %134 = sbr.rel (0) target = $region53
    $region52: #{simple_cnn_forward.1} parent=1 // pred_region
      %s136 = ssub.s32 16, 16
      %137 = vsyncadd [#allocation19], %s136
      %s139 = sshll.u32 [#allocation18], 4
      %s140 = int_to_ptr.vmem [resolvable:$true] %s139
      %142 = dma.hbm_to_vmem [thread:$0]  %s12, 16, %s140, [#allocation19]
    $region53: #{simple_cnn_forward.1} parent=1 // pred_fallthru
      _
    // Predicated region
    $region54: #{simple_cnn_forward.1} parent=1 // pred_check
      _
    $region55: #{simple_cnn_forward.1} parent=1 // pred_check_branch
      %144 = sbr.rel (0) target = $region57
    $region56: #{simple_cnn_forward.1} parent=1 // pred_region
      %145 = dma.done [#allocation4], 6144
    $region57: #{simple_cnn_forward.1} parent=1 // pred_fallthru
      _
    // Predicated region
    $region58: #{simple_cnn_forward.1} parent=1 // pred_check
      _
    $region59: #{simple_cnn_forward.1} parent=1 // pred_check_branch
      %147 = sbr.rel (0) target = $region61
    $region60: #{simple_cnn_forward.1} parent=1 // pred_region
      %148 = dma.done [#allocation7], 64
    $region61: #{simple_cnn_forward.1} parent=1 // pred_fallthru
      _
    // Predicated region
    $region62: #{simple_cnn_forward.1} parent=1 // pred_check
      _
    $region63: #{simple_cnn_forward.1} parent=1 // pred_check_branch
      %150 = sbr.rel (0) target = $region65
    $region64: #{simple_cnn_forward.1} parent=1 // pred_region
      %151 = dma.done [#allocation7], 43008
    $region65: #{simple_cnn_forward.1} parent=1 // pred_fallthru
      _
    // Predicated region
    $region66: #{simple_cnn_forward.1} parent=1 // pred_check
      _
    $region67: #{simple_cnn_forward.1} parent=1 // pred_check_branch
      %153 = sbr.rel (0) target = $region69
    $region68: #{simple_cnn_forward.1} parent=1 // pred_region
      %154 = dma.done [#allocation10], 64
    $region69: #{simple_cnn_forward.1} parent=1 // pred_fallthru
      _
    // Predicated region
    $region70: #{simple_cnn_forward.1} parent=1 // pred_check
      _
    $region71: #{simple_cnn_forward.1} parent=1 // pred_check_branch
      %156 = sbr.rel (0) target = $region73
    $region72: #{simple_cnn_forward.1} parent=1 // pred_region
      %157 = dma.done [#allocation10], 28672
    $region73: #{simple_cnn_forward.1} parent=1 // pred_fallthru
      _
    // Predicated region
    $region74: #{simple_cnn_forward.1} parent=1 // pred_check
      _
    $region75: #{simple_cnn_forward.1} parent=1 // pred_check_branch
      %159 = sbr.rel (0) target = $region77
    $region76: #{simple_cnn_forward.1} parent=1 // pred_region
      %160 = dma.done [#allocation13], 28672
    $region77: #{simple_cnn_forward.1} parent=1 // pred_fallthru
      _
    // Predicated region
    $region78: #{simple_cnn_forward.1} parent=1 // pred_check
      _
    $region79: #{simple_cnn_forward.1} parent=1 // pred_check_branch
      %162 = sbr.rel (0) target = $region81
    $region80: #{simple_cnn_forward.1} parent=1 // pred_region
      %163 = dma.done [#allocation13], 25088
    $region81: #{simple_cnn_forward.1} parent=1 // pred_fallthru
      _
    // Predicated region
    $region82: #{simple_cnn_forward.1} parent=1 // pred_check
      _
    $region83: #{simple_cnn_forward.1} parent=1 // pred_check_branch
      %165 = sbr.rel (0) target = $region85
    $region84: #{simple_cnn_forward.1} parent=1 // pred_region
      %166 = dma.done [#allocation16], 16
    $region85: #{simple_cnn_forward.1} parent=1 // pred_fallthru
      _
    // Predicated region
    $region86: #{simple_cnn_forward.1} parent=1 // pred_check
      _
    $region87: #{simple_cnn_forward.1} parent=1 // pred_check_branch
      %168 = sbr.rel (0) target = $region89
    $region88: #{simple_cnn_forward.1} parent=1 // pred_region
      %169 = dma.done [#allocation16], 2048
    $region89: #{simple_cnn_forward.1} parent=1 // pred_fallthru
      _
    // Predicated region
    $region90: #{simple_cnn_forward.1} parent=1 // pred_check
      _
    $region91: #{simple_cnn_forward.1} parent=1 // pred_check_branch
      %171 = sbr.rel (0) target = $region93
    $region92: #{simple_cnn_forward.1} parent=1 // pred_region
      %172 = dma.done [#allocation19], 16
    $region93: #{simple_cnn_forward.1} parent=1 // pred_fallthru
      _
    %173 = vst [vmem:[#allocation2] sm:$0xff] 0.0
    %vm174 = vcmask 785408
    %175 = vst.msk [vmem:[#allocation2 + $0x8] sm:$0xff] %vm174, 0.0
    %176 = vst [vmem:[#allocation2 + $0x10] sm:$0xff] 0.0
    %177 = vst.msk [vmem:[#allocation2 + $0x18] sm:$0xff] %vm174, 0.0
    %v178 = vld [vmem:[%s0] sm:$0xff]
    %v179 = vld [vmem:[%s0 + $0x8] sm:$0xff]
    %v180 = vld [vmem:[%s0 + $0x10] sm:$0xff]
    %v181 = vld [vmem:[%s0 + $0x18] sm:$0x3f]
    %v182 = vld [vmem:[#allocation3] sm:$0xff]
    %v183 = vld [vmem:[#allocation3 + $0x8] sm:$0xff]
    %v184 = vld [vmem:[#allocation3 + $0x10] sm:$0xff]
    %v185 = vld [vmem:[#allocation3 + $0x18] sm:$0xff]
    %v186 = vld [vmem:[#allocation3 + $0x20] sm:$0xff]
    %v187 = vld [vmem:[#allocation3 + $0x28] sm:$0xff]
    %v188 = vld [vmem:[#allocation3 + $0x30] sm:$0xff]
    %v189 = vld [vmem:[#allocation3 + $0x38] sm:$0xff]
    %v190 = vld [vmem:[#allocation3 + $0x40] sm:$0xff]
    %v191 = vld [vmem:[#allocation3 + $0x48] sm:$0xff]
    %v192 = vld [vmem:[#allocation3 + $0x50] sm:$0xff]
    %v193 = vld [vmem:[#allocation3 + $0x58] sm:$0xff]
    %v194 = vld [vmem:[#allocation3 + $0x60] sm:$0xf]
    %v195 = vld [vmem:[#allocation3 + $0x68] sm:$0xf]
    %v196 = vld [vmem:[#allocation3 + $0x70] sm:$0xf]
    %v197 = vld [vmem:[#allocation3 + $0x78] sm:$0xf]
    %s198 = scalar_lea.vmem [#allocation3], 128
    %v199 = vld [vmem:[%s198] sm:$0xff]
    %v200 = vld [vmem:[%s198 + $0x8] sm:$0xff]
    %v201 = vld [vmem:[%s198 + $0x10] sm:$0xff]
    %v202 = vld [vmem:[%s198 + $0x18] sm:$0xff]
    %v203 = vld [vmem:[%s198 + $0x20] sm:$0xff]
    %v204 = vld [vmem:[%s198 + $0x28] sm:$0xff]
    %v205 = vld [vmem:[%s198 + $0x30] sm:$0xff]
    %v206 = vld [vmem:[%s198 + $0x38] sm:$0xff]
    %v207 = vld [vmem:[%s198 + $0x40] sm:$0xff]
    %v208 = vld [vmem:[%s198 + $0x48] sm:$0xff]
    %v209 = vld [vmem:[%s198 + $0x50] sm:$0xff]
    %v210 = vld [vmem:[%s198 + $0x58] sm:$0xff]
    %v211 = vld [vmem:[%s198 + $0x60] sm:$0xf]
    %v212 = vld [vmem:[%s198 + $0x68] sm:$0xf]
    %v213 = vld [vmem:[%s198 + $0x70] sm:$0xf]
    %v214 = vld [vmem:[%s198 + $0x78] sm:$0xf]
    %vm219 = vcmask 1046528
    %v220 = vrot.slane %v178, 1
    %v221 = vrot.slane %v179, 1
    %v222 = vsel %vm219, %v220, %v221
    %v223 = vrot.slane %v180, 1
    %v224 = vsel %vm219, %v221, %v223
    %v225 = vrot.slane %v181, 1
    %v226 = vsel %vm219, %v223, %v225
    %vm227 = vcmask 228352
    %v228 = vsel %vm227, %v222, 0
    %v230 = vsel %vm227, %v224, 0
    %v232 = vsel %vm227, %v226, 0
    %v234 = vsel %vm227, %v225, 0
    %vm236 = vcmask 1043456
    %v238 = vsel %vm236, %v211, 0
    %v241 = vsel %vm236, %v212, 0
    %v244 = vsel %vm236, %v213, 0
    %v247 = vsel %vm236, %v214, 0
    %249 = vmatprep.subr.mxu0 %v200
    %250 = vmatpush1.msra.mxu0 %v199
    %251 = vmatprep.subr.mxu0 %v204
    %252 = vmatpush1.msra.mxu0 %v203
    %253 = vmatprep.subr.mxu0 %v208
    %254 = vmatpush1.msra.mxu0 %v207
    %255 = vmatprep.subr.mxu0 %v241
    %256 = vmatpush1.msra.mxu0 %v238
    %257 = vmatprep.subr.mxu0 0.0
    %258 = vmatpush1.msra.mxu0 0.0
    %259 = vmatprep.subr.mxu0 0.0
    %260 = vmatpush1.msra.mxu0 0.0
    %261 = vmatprep.subr.mxu0 0.0
    %262 = vmatpush1.msra.mxu0 0.0
    %263 = vmatprep.subr.mxu0 0.0
    %264 = vmatpush1.msra.mxu0 0.0
    %265 = vmatprep.subr.mxu0 0.0
    %266 = vmatpush1.msra.mxu0 0.0
    %267 = vmatprep.subr.mxu0 0.0
    %268 = vmatpush1.msra.mxu0 0.0
    %269 = vmatprep.subr.mxu0 0.0
    %270 = vmatpush1.msra.mxu0 0.0
    %271 = vmatprep.subr.mxu0 0.0
    %272 = vmatpush1.msra.mxu0 0.0
    %273 = vmatprep.subr.mxu0 0.0
    %274 = vmatpush1.msra.mxu0 0.0
    %275 = vmatprep.subr.mxu0 0.0
    %276 = vmatpush1.msra.mxu0 0.0
    %277 = vmatprep.subr.mxu0 0.0
    %278 = vmatpush1.msra.mxu0 0.0
    %279 = vmatprep.subr.mxu0 0.0
    %280 = vmatpush1.msra.mxu0 0.0
    %281 = vmatprep.subr.mxu0 0.0
    %282 = vmatpush1.msra.mxu0 0.0
    %283 = vmatprep.subr.mxu0 0.0
    %284 = vmatpush1.msra.mxu0 0.0
    %285 = vmatprep.subr.mxu0 0.0
    %286 = vmatpush1.msra.mxu0 0.0
    %287 = vmatprep.subr.mxu0 0.0
    %288 = vmatpush1.msra.mxu0 0.0
    %289 = vmatprep.subr.mxu0 0.0
    %290 = vmatpush1.msra.mxu0 0.0
    %291 = vmatprep.subr.mxu0 0.0
    %292 = vmatpush1.msra.mxu0 0.0
    %293 = vmatprep.subr.mxu0 0.0
    %294 = vmatpush1.msra.mxu0 0.0
    %295 = vmatprep.subr.mxu0 0.0
    %296 = vmatpush1.msra.mxu0 0.0
    %297 = vmatprep.subr.mxu0 0.0
    %298 = vmatpush1.msra.mxu0 0.0
    %299 = vmatprep.subr.mxu0 0.0
    %300 = vmatpush1.msra.mxu0 0.0
    %301 = vmatprep.subr.mxu0 0.0
    %302 = vmatpush1.msra.mxu0 0.0
    %303 = vmatprep.subr.mxu0 0.0
    %304 = vmatpush1.msra.mxu0 0.0
    %305 = vmatprep.subr.mxu0 0.0
    %306 = vmatpush1.msra.mxu0 0.0
    %307 = vmatprep.subr.mxu0 0.0
    %308 = vmatpush1.msra.mxu0 0.0
    %309 = vmatprep.subr.mxu0 0.0
    %310 = vmatpush1.msra.mxu0 0.0
    %311 = vmatprep.subr.mxu0 0.0
    %312 = vmatpush1.msra.mxu0 0.0
    %313 = vmatprep.mubr.f32.mxu0 0.0
    %314 = vmatmul.mubr.f32.gmra.mrb[0].mxu0 %v228
    %v315 = vpop.f32.mrb[0].mxu0
    %v316 = vadd.f32 0.0, %v315
    %v317 = vpop.f32.mrb[0].mxu0
    %v318 = vadd.f32 0.0, %v317
    %319 = vmatprep.mubr.f32.mxu0 0.0
    %320 = vmatmul.mubr.f32.gmra.mrb[0].mxu0 %v230
    %v321 = vpop.f32.mrb[0].mxu0
    %v322 = vadd.f32 0.0, %v321
    %v323 = vpop.f32.mrb[0].mxu0
    %v324 = vadd.f32 0.0, %v323
    %325 = vmatprep.mubr.f32.mxu0 0.0
    %326 = vmatmul.mubr.f32.gmra.mrb[0].mxu0 %v232
    %v327 = vpop.f32.mrb[0].mxu0
    %v328 = vadd.f32 0.0, %v327
    %v329 = vpop.f32.mrb[0].mxu0
    %v330 = vadd.f32 0.0, %v329
    %331 = vmatprep.mubr.f32.mxu0 0.0
    %332 = vmatmul.mubr.f32.gmra.mrb[0].mxu0 %v234
    %v333 = vpop.f32.mrb[0].mxu0
    %v334 = vadd.f32 0.0, %v333
    %v335 = vpop.f32.mrb[0].mxu0
    %v336 = vadd.f32 0.0, %v335
    %337 = vdwg.mxu0
    %338 = vmatprep.subr.mxu0 %v202
    %339 = vmatpush1.msra.mxu0 %v201
    %340 = vmatprep.subr.mxu0 %v206
    %341 = vmatpush1.msra.mxu0 %v205
    %342 = vmatprep.subr.mxu0 %v210
    %343 = vmatpush1.msra.mxu0 %v209
    %344 = vmatprep.subr.mxu0 %v247
    %345 = vmatpush1.msra.mxu0 %v244
    %346 = vmatprep.subr.mxu0 0.0
    %347 = vmatpush1.msra.mxu0 0.0
    %348 = vmatprep.subr.mxu0 0.0
    %349 = vmatpush1.msra.mxu0 0.0
    %350 = vmatprep.subr.mxu0 0.0
    %351 = vmatpush1.msra.mxu0 0.0
    %352 = vmatprep.subr.mxu0 0.0
    %353 = vmatpush1.msra.mxu0 0.0
    %354 = vmatprep.subr.mxu0 0.0
    %355 = vmatpush1.msra.mxu0 0.0
    %356 = vmatprep.subr.mxu0 0.0
    %357 = vmatpush1.msra.mxu0 0.0
    %358 = vmatprep.subr.mxu0 0.0
    %359 = vmatpush1.msra.mxu0 0.0
    %360 = vmatprep.subr.mxu0 0.0
    %361 = vmatpush1.msra.mxu0 0.0
    %362 = vmatprep.subr.mxu0 0.0
    %363 = vmatpush1.msra.mxu0 0.0
    %364 = vmatprep.subr.mxu0 0.0
    %365 = vmatpush1.msra.mxu0 0.0
    %366 = vmatprep.subr.mxu0 0.0
    %367 = vmatpush1.msra.mxu0 0.0
    %368 = vmatprep.subr.mxu0 0.0
    %369 = vmatpush1.msra.mxu0 0.0
    %370 = vmatprep.subr.mxu0 0.0
    %371 = vmatpush1.msra.mxu0 0.0
    %372 = vmatprep.subr.mxu0 0.0
    %373 = vmatpush1.msra.mxu0 0.0
    %374 = vmatprep.subr.mxu0 0.0
    %375 = vmatpush1.msra.mxu0 0.0
    %376 = vmatprep.subr.mxu0 0.0
    %377 = vmatpush1.msra.mxu0 0.0
    %378 = vmatprep.subr.mxu0 0.0
    %379 = vmatpush1.msra.mxu0 0.0
    %380 = vmatprep.subr.mxu0 0.0
    %381 = vmatpush1.msra.mxu0 0.0
    %382 = vmatprep.subr.mxu0 0.0
    %383 = vmatpush1.msra.mxu0 0.0
    %384 = vmatprep.subr.mxu0 0.0
    %385 = vmatpush1.msra.mxu0 0.0
    %386 = vmatprep.subr.mxu0 0.0
    %387 = vmatpush1.msra.mxu0 0.0
    %388 = vmatprep.subr.mxu0 0.0
    %389 = vmatpush1.msra.mxu0 0.0
    %390 = vmatprep.subr.mxu0 0.0
    %391 = vmatpush1.msra.mxu0 0.0
    %392 = vmatprep.subr.mxu0 0.0
    %393 = vmatpush1.msra.mxu0 0.0
    %394 = vmatprep.subr.mxu0 0.0
    %395 = vmatpush1.msra.mxu0 0.0
    %396 = vmatprep.subr.mxu0 0.0
    %397 = vmatpush1.msra.mxu0 0.0
    %398 = vmatprep.subr.mxu0 0.0
    %399 = vmatpush1.msra.mxu0 0.0
    %400 = vmatprep.subr.mxu0 0.0
    %401 = vmatpush1.msra.mxu0 0.0
    %402 = vmatprep.mubr.f32.mxu0 0.0
    %403 = vmatmul.mubr.f32.gmra.mrb[0].mxu0 %v228
    %v404 = vpop.f32.mrb[0].mxu0
    %v405 = vadd.f32 0.0, %v404
    %v406 = vpop.f32.mrb[0].mxu0
    %v407 = vadd.f32 0.0, %v406
    %408 = vmatprep.mubr.f32.mxu0 0.0
    %409 = vmatmul.mubr.f32.gmra.mrb[0].mxu0 %v230
    %v410 = vpop.f32.mrb[0].mxu0
    %v411 = vadd.f32 0.0, %v410
    %v412 = vpop.f32.mrb[0].mxu0
    %v413 = vadd.f32 0.0, %v412
    %414 = vmatprep.mubr.f32.mxu0 0.0
    %415 = vmatmul.mubr.f32.gmra.mrb[0].mxu0 %v232
    %v416 = vpop.f32.mrb[0].mxu0
    %v417 = vadd.f32 0.0, %v416
    %v418 = vpop.f32.mrb[0].mxu0
    %v419 = vadd.f32 0.0, %v418
    %420 = vmatprep.mubr.f32.mxu0 0.0
    %421 = vmatmul.mubr.f32.gmra.mrb[0].mxu0 %v234
    %v422 = vpop.f32.mrb[0].mxu0
    %v423 = vadd.f32 0.0, %v422
    %v424 = vpop.f32.mrb[0].mxu0
    %v425 = vadd.f32 0.0, %v424
    %426 = vdwg.mxu0
    %v427 = vsel %vm227, %v178, 0
    %v429 = vsel %vm227, %v179, 0
    %v431 = vsel %vm227, %v180, 0
    %v433 = vsel %vm227, %v181, 0
    %v436 = vsel %vm236, %v194, 0
    %v439 = vsel %vm236, %v195, 0
    %v442 = vsel %vm236, %v196, 0
    %v445 = vsel %vm236, %v197, 0
    %447 = vmatprep.subr.mxu0 %v183
    %448 = vmatpush1.msra.mxu0 %v182
    %449 = vmatprep.subr.mxu0 %v187
    %450 = vmatpush1.msra.mxu0 %v186
    %451 = vmatprep.subr.mxu0 %v191
    %452 = vmatpush1.msra.mxu0 %v190
    %453 = vmatprep.subr.mxu0 %v439
    %454 = vmatpush1.msra.mxu0 %v436
    %455 = vmatprep.subr.mxu0 0.0
    %456 = vmatpush1.msra.mxu0 0.0
    %457 = vmatprep.subr.mxu0 0.0
    %458 = vmatpush1.msra.mxu0 0.0
    %459 = vmatprep.subr.mxu0 0.0
    %460 = vmatpush1.msra.mxu0 0.0
    %461 = vmatprep.subr.mxu0 0.0
    %462 = vmatpush1.msra.mxu0 0.0
    %463 = vmatprep.subr.mxu0 0.0
    %464 = vmatpush1.msra.mxu0 0.0
    %465 = vmatprep.subr.mxu0 0.0
    %466 = vmatpush1.msra.mxu0 0.0
    %467 = vmatprep.subr.mxu0 0.0
    %468 = vmatpush1.msra.mxu0 0.0
    %469 = vmatprep.subr.mxu0 0.0
    %470 = vmatpush1.msra.mxu0 0.0
    %471 = vmatprep.subr.mxu0 0.0
    %472 = vmatpush1.msra.mxu0 0.0
    %473 = vmatprep.subr.mxu0 0.0
    %474 = vmatpush1.msra.mxu0 0.0
    %475 = vmatprep.subr.mxu0 0.0
    %476 = vmatpush1.msra.mxu0 0.0
    %477 = vmatprep.subr.mxu0 0.0
    %478 = vmatpush1.msra.mxu0 0.0
    %479 = vmatprep.subr.mxu0 0.0
    %480 = vmatpush1.msra.mxu0 0.0
    %481 = vmatprep.subr.mxu0 0.0
    %482 = vmatpush1.msra.mxu0 0.0
    %483 = vmatprep.subr.mxu0 0.0
    %484 = vmatpush1.msra.mxu0 0.0
    %485 = vmatprep.subr.mxu0 0.0
    %486 = vmatpush1.msra.mxu0 0.0
    %487 = vmatprep.subr.mxu0 0.0
    %488 = vmatpush1.msra.mxu0 0.0
    %489 = vmatprep.subr.mxu0 0.0
    %490 = vmatpush1.msra.mxu0 0.0
    %491 = vmatprep.subr.mxu0 0.0
    %492 = vmatpush1.msra.mxu0 0.0
    %493 = vmatprep.subr.mxu0 0.0
    %494 = vmatpush1.msra.mxu0 0.0
    %495 = vmatprep.subr.mxu0 0.0
    %496 = vmatpush1.msra.mxu0 0.0
    %497 = vmatprep.subr.mxu0 0.0
    %498 = vmatpush1.msra.mxu0 0.0
    %499 = vmatprep.subr.mxu0 0.0
    %500 = vmatpush1.msra.mxu0 0.0
    %501 = vmatprep.subr.mxu0 0.0
    %502 = vmatpush1.msra.mxu0 0.0
    %503 = vmatprep.subr.mxu0 0.0
    %504 = vmatpush1.msra.mxu0 0.0
    %505 = vmatprep.subr.mxu0 0.0
    %506 = vmatpush1.msra.mxu0 0.0
    %507 = vmatprep.subr.mxu0 0.0
    %508 = vmatpush1.msra.mxu0 0.0
    %509 = vmatprep.subr.mxu0 0.0
    %510 = vmatpush1.msra.mxu0 0.0
    %511 = vmatprep.mubr.f32.mxu0 0.0
    %512 = vmatmul.mubr.f32.gmra.mrb[0].mxu0 %v427
    %v513 = vpop.f32.mrb[0].mxu0
    %v514 = vadd.f32 %v316, %v513
    %v515 = vpop.f32.mrb[0].mxu0
    %v516 = vadd.f32 %v318, %v515
    %517 = vmatprep.mubr.f32.mxu0 0.0
    %518 = vmatmul.mubr.f32.gmra.mrb[0].mxu0 %v429
    %v519 = vpop.f32.mrb[0].mxu0
    %v520 = vadd.f32 %v322, %v519
    %v521 = vpop.f32.mrb[0].mxu0
    %v522 = vadd.f32 %v324, %v521
    %523 = vmatprep.mubr.f32.mxu0 0.0
    %524 = vmatmul.mubr.f32.gmra.mrb[0].mxu0 %v431
    %v525 = vpop.f32.mrb[0].mxu0
    %v526 = vadd.f32 %v328, %v525
    %v527 = vpop.f32.mrb[0].mxu0
    %v528 = vadd.f32 %v330, %v527
    %529 = vmatprep.mubr.f32.mxu0 0.0
    %530 = vmatmul.mubr.f32.gmra.mrb[0].mxu0 %v433
    %v531 = vpop.f32.mrb[0].mxu0
    %v532 = vadd.f32 %v334, %v531
    %v533 = vpop.f32.mrb[0].mxu0
    %v534 = vadd.f32 %v336, %v533
    %535 = vdwg.mxu0
    %536 = vmatprep.subr.mxu0 %v185
    %537 = vmatpush1.msra.mxu0 %v184
    %538 = vmatprep.subr.mxu0 %v189
    %539 = vmatpush1.msra.mxu0 %v188
    %540 = vmatprep.subr.mxu0 %v193
    %541 = vmatpush1.msra.mxu0 %v192
    %542 = vmatprep.subr.mxu0 %v445
    %543 = vmatpush1.msra.mxu0 %v442
    %544 = vmatprep.subr.mxu0 0.0
    %545 = vmatpush1.msra.mxu0 0.0
    %546 = vmatprep.subr.mxu0 0.0
    %547 = vmatpush1.msra.mxu0 0.0
    %548 = vmatprep.subr.mxu0 0.0
    %549 = vmatpush1.msra.mxu0 0.0
    %550 = vmatprep.subr.mxu0 0.0
    %551 = vmatpush1.msra.mxu0 0.0
    %552 = vmatprep.subr.mxu0 0.0
    %553 = vmatpush1.msra.mxu0 0.0
    %554 = vmatprep.subr.mxu0 0.0
    %555 = vmatpush1.msra.mxu0 0.0
    %556 = vmatprep.subr.mxu0 0.0
    %557 = vmatpush1.msra.mxu0 0.0
    %558 = vmatprep.subr.mxu0 0.0
    %559 = vmatpush1.msra.mxu0 0.0
    %560 = vmatprep.subr.mxu0 0.0
    %561 = vmatpush1.msra.mxu0 0.0
    %562 = vmatprep.subr.mxu0 0.0
    %563 = vmatpush1.msra.mxu0 0.0
    %564 = vmatprep.subr.mxu0 0.0
    %565 = vmatpush1.msra.mxu0 0.0
    %566 = vmatprep.subr.mxu0 0.0
    %567 = vmatpush1.msra.mxu0 0.0
    %568 = vmatprep.subr.mxu0 0.0
    %569 = vmatpush1.msra.mxu0 0.0
    %570 = vmatprep.subr.mxu0 0.0
    %571 = vmatpush1.msra.mxu0 0.0
    %572 = vmatprep.subr.mxu0 0.0
    %573 = vmatpush1.msra.mxu0 0.0
    %574 = vmatprep.subr.mxu0 0.0
    %575 = vmatpush1.msra.mxu0 0.0
    %576 = vmatprep.subr.mxu0 0.0
    %577 = vmatpush1.msra.mxu0 0.0
    %578 = vmatprep.subr.mxu0 0.0
    %579 = vmatpush1.msra.mxu0 0.0
    %580 = vmatprep.subr.mxu0 0.0
    %581 = vmatpush1.msra.mxu0 0.0
    %582 = vmatprep.subr.mxu0 0.0
    %583 = vmatpush1.msra.mxu0 0.0
    %584 = vmatprep.subr.mxu0 0.0
    %585 = vmatpush1.msra.mxu0 0.0
    %586 = vmatprep.subr.mxu0 0.0
    %587 = vmatpush1.msra.mxu0 0.0
    %588 = vmatprep.subr.mxu0 0.0
    %589 = vmatpush1.msra.mxu0 0.0
    %590 = vmatprep.subr.mxu0 0.0
    %591 = vmatpush1.msra.mxu0 0.0
    %592 = vmatprep.subr.mxu0 0.0
    %593 = vmatpush1.msra.mxu0 0.0
    %594 = vmatprep.subr.mxu0 0.0
    %595 = vmatpush1.msra.mxu0 0.0
    %596 = vmatprep.subr.mxu0 0.0
    %597 = vmatpush1.msra.mxu0 0.0
    %598 = vmatprep.subr.mxu0 0.0
    %599 = vmatpush1.msra.mxu0 0.0
    %600 = vmatprep.mubr.f32.mxu0 0.0
    %601 = vmatmul.mubr.f32.gmra.mrb[0].mxu0 %v427
    %v602 = vpop.f32.mrb[0].mxu0
    %v603 = vadd.f32 %v405, %v602
    %v604 = vpop.f32.mrb[0].mxu0
    %v605 = vadd.f32 %v407, %v604
    %606 = vmatprep.mubr.f32.mxu0 0.0
    %607 = vmatmul.mubr.f32.gmra.mrb[0].mxu0 %v429
    %v608 = vpop.f32.mrb[0].mxu0
    %v609 = vadd.f32 %v411, %v608
    %v610 = vpop.f32.mrb[0].mxu0
    %v611 = vadd.f32 %v413, %v610
    %612 = vmatprep.mubr.f32.mxu0 0.0
    %613 = vmatmul.mubr.f32.gmra.mrb[0].mxu0 %v431
    %v614 = vpop.f32.mrb[0].mxu0
    %v615 = vadd.f32 %v417, %v614
    %v616 = vpop.f32.mrb[0].mxu0
    %v617 = vadd.f32 %v419, %v616
    %618 = vmatprep.mubr.f32.mxu0 0.0
    %619 = vmatmul.mubr.f32.gmra.mrb[0].mxu0 %v433
    %v620 = vpop.f32.mrb[0].mxu0
    %v621 = vadd.f32 %v423, %v620
    %v622 = vpop.f32.mrb[0].mxu0
    %v623 = vadd.f32 %v425, %v622
    %624 = vdwg.mxu0
    %s625 = scalar_lea.vmem [#allocation3], 256
    %v626 = vld [vmem:[%s625] sm:$0xff]
    %v627 = vld [vmem:[%s625 + $0x8] sm:$0xff]
    %v628 = vld [vmem:[%s625 + $0x10] sm:$0xff]
    %v629 = vld [vmem:[%s625 + $0x18] sm:$0xff]
    %v630 = vld [vmem:[%s625 + $0x20] sm:$0xff]
    %v631 = vld [vmem:[%s625 + $0x28] sm:$0xff]
    %v632 = vld [vmem:[%s625 + $0x30] sm:$0xff]
    %v633 = vld [vmem:[%s625 + $0x38] sm:$0xff]
    %v634 = vld [vmem:[%s625 + $0x40] sm:$0xff]
    %v635 = vld [vmem:[%s625 + $0x48] sm:$0xff]
    %v636 = vld [vmem:[%s625 + $0x50] sm:$0xff]
    %v637 = vld [vmem:[%s625 + $0x58] sm:$0xff]
    %v638 = vld [vmem:[%s625 + $0x60] sm:$0xf]
    %v639 = vld [vmem:[%s625 + $0x68] sm:$0xf]
    %v640 = vld [vmem:[%s625 + $0x70] sm:$0xf]
    %v641 = vld [vmem:[%s625 + $0x78] sm:$0xf]
    %vm642 = vcmask 1045504
    %v643 = vrot.slane %v178, 2
    %v644 = vrot.slane %v179, 2
    %v645 = vsel %vm642, %v643, %v644
    %v646 = vrot.slane %v180, 2
    %v647 = vsel %vm642, %v644, %v646
    %v648 = vrot.slane %v181, 2
    %v649 = vsel %vm642, %v646, %v648
    %v650 = vsel %vm227, %v645, 0
    %v652 = vsel %vm227, %v647, 0
    %v654 = vsel %vm227, %v649, 0
    %v656 = vsel %vm227, %v648, 0
    %v659 = vsel %vm236, %v638, 0
    %v662 = vsel %vm236, %v639, 0
    %v665 = vsel %vm236, %v640, 0
    %v668 = vsel %vm236, %v641, 0
    %670 = vmatprep.subr.mxu0 %v627
    %671 = vmatpush1.msra.mxu0 %v626
    %672 = vmatprep.subr.mxu0 %v631
    %673 = vmatpush1.msra.mxu0 %v630
    %674 = vmatprep.subr.mxu0 %v635
    %675 = vmatpush1.msra.mxu0 %v634
    %676 = vmatprep.subr.mxu0 %v662
    %677 = vmatpush1.msra.mxu0 %v659
    %678 = vmatprep.subr.mxu0 0.0
    %679 = vmatpush1.msra.mxu0 0.0
    %680 = vmatprep.subr.mxu0 0.0
    %681 = vmatpush1.msra.mxu0 0.0
    %682 = vmatprep.subr.mxu0 0.0
    %683 = vmatpush1.msra.mxu0 0.0
    %684 = vmatprep.subr.mxu0 0.0
    %685 = vmatpush1.msra.mxu0 0.0
    %686 = vmatprep.subr.mxu0 0.0
    %687 = vmatpush1.msra.mxu0 0.0
    %688 = vmatprep.subr.mxu0 0.0
    %689 = vmatpush1.msra.mxu0 0.0
    %690 = vmatprep.subr.mxu0 0.0
    %691 = vmatpush1.msra.mxu0 0.0
    %692 = vmatprep.subr.mxu0 0.0
    %693 = vmatpush1.msra.mxu0 0.0
    %694 = vmatprep.subr.mxu0 0.0
    %695 = vmatpush1.msra.mxu0 0.0
    %696 = vmatprep.subr.mxu0 0.0
    %697 = vmatpush1.msra.mxu0 0.0
    %698 = vmatprep.subr.mxu0 0.0
    %699 = vmatpush1.msra.mxu0 0.0
    %700 = vmatprep.subr.mxu0 0.0
    %701 = vmatpush1.msra.mxu0 0.0
    %702 = vmatprep.subr.mxu0 0.0
    %703 = vmatpush1.msra.mxu0 0.0
    %704 = vmatprep.subr.mxu0 0.0
    %705 = vmatpush1.msra.mxu0 0.0
    %706 = vmatprep.subr.mxu0 0.0
    %707 = vmatpush1.msra.mxu0 0.0
    %708 = vmatprep.subr.mxu0 0.0
    %709 = vmatpush1.msra.mxu0 0.0
    %710 = vmatprep.subr.mxu0 0.0
    %711 = vmatpush1.msra.mxu0 0.0
    %712 = vmatprep.subr.mxu0 0.0
    %713 = vmatpush1.msra.mxu0 0.0
    %714 = vmatprep.subr.mxu0 0.0
    %715 = vmatpush1.msra.mxu0 0.0
    %716 = vmatprep.subr.mxu0 0.0
    %717 = vmatpush1.msra.mxu0 0.0
    %718 = vmatprep.subr.mxu0 0.0
    %719 = vmatpush1.msra.mxu0 0.0
    %720 = vmatprep.subr.mxu0 0.0
    %721 = vmatpush1.msra.mxu0 0.0
    %722 = vmatprep.subr.mxu0 0.0
    %723 = vmatpush1.msra.mxu0 0.0
    %724 = vmatprep.subr.mxu0 0.0
    %725 = vmatpush1.msra.mxu0 0.0
    %726 = vmatprep.subr.mxu0 0.0
    %727 = vmatpush1.msra.mxu0 0.0
    %728 = vmatprep.subr.mxu0 0.0
    %729 = vmatpush1.msra.mxu0 0.0
    %730 = vmatprep.subr.mxu0 0.0
    %731 = vmatpush1.msra.mxu0 0.0
    %732 = vmatprep.subr.mxu0 0.0
    %733 = vmatpush1.msra.mxu0 0.0
    %734 = vmatprep.mubr.f32.mxu0 0.0
    %735 = vmatmul.mubr.f32.gmra.mrb[0].mxu0 %v650
    %v736 = vpop.f32.mrb[0].mxu0
    %v737 = vadd.f32 0.0, %v736
    %v738 = vpop.f32.mrb[0].mxu0
    %v739 = vadd.f32 0.0, %v738
    %740 = vmatprep.mubr.f32.mxu0 0.0
    %741 = vmatmul.mubr.f32.gmra.mrb[0].mxu0 %v652
    %v742 = vpop.f32.mrb[0].mxu0
    %v743 = vadd.f32 0.0, %v742
    %v744 = vpop.f32.mrb[0].mxu0
    %v745 = vadd.f32 0.0, %v744
    %746 = vmatprep.mubr.f32.mxu0 0.0
    %747 = vmatmul.mubr.f32.gmra.mrb[0].mxu0 %v654
    %v748 = vpop.f32.mrb[0].mxu0
    %v749 = vadd.f32 0.0, %v748
    %v750 = vpop.f32.mrb[0].mxu0
    %v751 = vadd.f32 0.0, %v750
    %752 = vmatprep.mubr.f32.mxu0 0.0
    %753 = vmatmul.mubr.f32.gmra.mrb[0].mxu0 %v656
    %v754 = vpop.f32.mrb[0].mxu0
    %v755 = vadd.f32 0.0, %v754
    %v756 = vpop.f32.mrb[0].mxu0
    %v757 = vadd.f32 0.0, %v756
    %758 = vdwg.mxu0
    %759 = vmatprep.subr.mxu0 %v629
    %760 = vmatpush1.msra.mxu0 %v628
    %761 = vmatprep.subr.mxu0 %v633
    %762 = vmatpush1.msra.mxu0 %v632
    %763 = vmatprep.subr.mxu0 %v637
    %764 = vmatpush1.msra.mxu0 %v636
    %765 = vmatprep.subr.mxu0 %v668
    %766 = vmatpush1.msra.mxu0 %v665
    %767 = vmatprep.subr.mxu0 0.0
    %768 = vmatpush1.msra.mxu0 0.0
    %769 = vmatprep.subr.mxu0 0.0
    %770 = vmatpush1.msra.mxu0 0.0
    %771 = vmatprep.subr.mxu0 0.0
    %772 = vmatpush1.msra.mxu0 0.0
    %773 = vmatprep.subr.mxu0 0.0
    %774 = vmatpush1.msra.mxu0 0.0
    %775 = vmatprep.subr.mxu0 0.0
    %776 = vmatpush1.msra.mxu0 0.0
    %777 = vmatprep.subr.mxu0 0.0
    %778 = vmatpush1.msra.mxu0 0.0
    %779 = vmatprep.subr.mxu0 0.0
    %780 = vmatpush1.msra.mxu0 0.0
    %781 = vmatprep.subr.mxu0 0.0
    %782 = vmatpush1.msra.mxu0 0.0
    %783 = vmatprep.subr.mxu0 0.0
    %784 = vmatpush1.msra.mxu0 0.0
    %785 = vmatprep.subr.mxu0 0.0
    %786 = vmatpush1.msra.mxu0 0.0
    %787 = vmatprep.subr.mxu0 0.0
    %788 = vmatpush1.msra.mxu0 0.0
    %789 = vmatprep.subr.mxu0 0.0
    %790 = vmatpush1.msra.mxu0 0.0
    %791 = vmatprep.subr.mxu0 0.0
    %792 = vmatpush1.msra.mxu0 0.0
    %793 = vmatprep.subr.mxu0 0.0
    %794 = vmatpush1.msra.mxu0 0.0
    %795 = vmatprep.subr.mxu0 0.0
    %796 = vmatpush1.msra.mxu0 0.0
    %797 = vmatprep.subr.mxu0 0.0
    %798 = vmatpush1.msra.mxu0 0.0
    %799 = vmatprep.subr.mxu0 0.0
    %800 = vmatpush1.msra.mxu0 0.0
    %801 = vmatprep.subr.mxu0 0.0
    %802 = vmatpush1.msra.mxu0 0.0
    %803 = vmatprep.subr.mxu0 0.0
    %804 = vmatpush1.msra.mxu0 0.0
    %805 = vmatprep.subr.mxu0 0.0
    %806 = vmatpush1.msra.mxu0 0.0
    %807 = vmatprep.subr.mxu0 0.0
    %808 = vmatpush1.msra.mxu0 0.0
    %809 = vmatprep.subr.mxu0 0.0
    %810 = vmatpush1.msra.mxu0 0.0
    %811 = vmatprep.subr.mxu0 0.0
    %812 = vmatpush1.msra.mxu0 0.0
    %813 = vmatprep.subr.mxu0 0.0
    %814 = vmatpush1.msra.mxu0 0.0
    %815 = vmatprep.subr.mxu0 0.0
    %816 = vmatpush1.msra.mxu0 0.0
    %817 = vmatprep.subr.mxu0 0.0
    %818 = vmatpush1.msra.mxu0 0.0
    %819 = vmatprep.subr.mxu0 0.0
    %820 = vmatpush1.msra.mxu0 0.0
    %821 = vmatprep.subr.mxu0 0.0
    %822 = vmatpush1.msra.mxu0 0.0
    %823 = vmatprep.mubr.f32.mxu0 0.0
    %824 = vmatmul.mubr.f32.gmra.mrb[0].mxu0 %v650
    %v825 = vpop.f32.mrb[0].mxu0
    %v826 = vadd.f32 0.0, %v825
    %v827 = vpop.f32.mrb[0].mxu0
    %v828 = vadd.f32 0.0, %v827
    %829 = vmatprep.mubr.f32.mxu0 0.0
    %830 = vmatmul.mubr.f32.gmra.mrb[0].mxu0 %v652
    %v831 = vpop.f32.mrb[0].mxu0
    %v832 = vadd.f32 0.0, %v831
    %v833 = vpop.f32.mrb[0].mxu0
    %v834 = vadd.f32 0.0, %v833
    %835 = vmatprep.mubr.f32.mxu0 0.0
    %836 = vmatmul.mubr.f32.gmra.mrb[0].mxu0 %v654
    %v837 = vpop.f32.mrb[0].mxu0
    %v838 = vadd.f32 0.0, %v837
    %v839 = vpop.f32.mrb[0].mxu0
    %v840 = vadd.f32 0.0, %v839
    %841 = vmatprep.mubr.f32.mxu0 0.0
    %842 = vmatmul.mubr.f32.gmra.mrb[0].mxu0 %v656
    %v843 = vpop.f32.mrb[0].mxu0
    %v844 = vadd.f32 0.0, %v843
    %v845 = vpop.f32.mrb[0].mxu0
    %v846 = vadd.f32 0.0, %v845
    %847 = vdwg.mxu0
    %v848 = vadd.f32 %v514, %v737
    %v849 = vadd.f32 %v516, %v739
    %v850 = vadd.f32 %v603, %v826
    %v851 = vadd.f32 %v605, %v828
    %v852 = vadd.f32 %v520, %v743
    %v853 = vadd.f32 %v522, %v745
    %v854 = vadd.f32 %v609, %v832
    %v855 = vadd.f32 %v611, %v834
    %v856 = vadd.f32 %v526, %v749
    %v857 = vadd.f32 %v528, %v751
    %v858 = vadd.f32 %v615, %v838
    %v859 = vadd.f32 %v617, %v840
    %v860 = vadd.f32 %v532, %v755
    %v861 = vadd.f32 %v534, %v757
    %v862 = vadd.f32 %v621, %v844
    %v863 = vadd.f32 %v623, %v846
    %v864 = vld [vmem:[#allocation6] sm:$0xf]
    %v866 = vlaneseq
    %v867 = vshrl.u32 %v866, 7
    %v868 = vsub.s32 0, %v867
    %v869 = vrot.slane %v864, %v868
    %v870 = vlaneseq
    %v871 = vshrl.u32 %v870, 7
    %v872 = vsub.s32 1, %v871
    %v873 = vrot.slane %v864, %v872
    %v874 = vlaneseq
    %v875 = vshrl.u32 %v874, 7
    %v876 = vsub.s32 2, %v875
    %v877 = vrot.slane %v864, %v876
    %v878 = vlaneseq
    %v879 = vshrl.u32 %v878, 7
    %v880 = vsub.s32 3, %v879
    %v881 = vrot.slane %v864, %v880
    %v886 = vadd.f32 %v848, %v869
    %v887 = vadd.f32 %v849, %v873
    %v888 = vadd.f32 %v850, %v877
    %v889 = vadd.f32 %v851, %v881
    %v890 = vadd.f32 %v852, %v869
    %v891 = vadd.f32 %v853, %v873
    %v892 = vadd.f32 %v854, %v877
    %v893 = vadd.f32 %v855, %v881
    %v894 = vadd.f32 %v856, %v869
    %v895 = vadd.f32 %v857, %v873
    %v896 = vadd.f32 %v858, %v877
    %v897 = vadd.f32 %v859, %v881
    %v898 = vadd.f32 %v860, %v869
    %v899 = vadd.f32 %v861, %v873
    %v900 = vadd.f32 %v862, %v877
    %v901 = vadd.f32 %v863, %v881
    %v902 = vmax.f32 %v886, 0.0
    %v903 = vmax.f32 %v887, 0.0
    %v904 = vmax.f32 %v888, 0.0
    %v905 = vmax.f32 %v889, 0.0
    %v906 = vmax.f32 %v890, 0.0
    %v907 = vmax.f32 %v891, 0.0
    %v908 = vmax.f32 %v892, 0.0
    %v909 = vmax.f32 %v893, 0.0
    %v910 = vmax.f32 %v894, 0.0
    %v911 = vmax.f32 %v895, 0.0
    %v912 = vmax.f32 %v896, 0.0
    %v913 = vmax.f32 %v897, 0.0
    %v914 = vmax.f32 %v898, 0.0
    %v915 = vmax.f32 %v899, 0.0
    %v916 = vmax.f32 %v900, 0.0
    %v917 = vmax.f32 %v901, 0.0
    %v918 = vld [vmem:[%s5] sm:$0xff]
    %v919 = vld [vmem:[%s5 + $0x8] sm:$0x3f]
    %v921 = vsel %vm227, %v918, 0
    %v924 = vsel %vm227, %v919, 0
    %v927 = vsel %vm236, %v914, 0
    %v930 = vsel %vm236, %v915, 0
    %v933 = vsel %vm236, %v916, 0
    %v936 = vsel %vm236, %v917, 0
    %938 = vmatprep.subr.mxu0 %v903
    %939 = vmatpush1.msra.mxu0 %v902
    %940 = vmatprep.subr.mxu0 %v907
    %941 = vmatpush1.msra.mxu0 %v906
    %942 = vmatprep.subr.mxu0 %v911
    %943 = vmatpush1.msra.mxu0 %v910
    %944 = vmatprep.subr.mxu0 %v930
    %945 = vmatpush1.msra.mxu0 %v927
    %946 = vmatprep.subr.mxu0 0.0
    %947 = vmatpush1.msra.mxu0 0.0
    %948 = vmatprep.subr.mxu0 0.0
    %949 = vmatpush1.msra.mxu0 0.0
    %950 = vmatprep.subr.mxu0 0.0
    %951 = vmatpush1.msra.mxu0 0.0
    %952 = vmatprep.subr.mxu0 0.0
    %953 = vmatpush1.msra.mxu0 0.0
    %954 = vmatprep.subr.mxu0 0.0
    %955 = vmatpush1.msra.mxu0 0.0
    %956 = vmatprep.subr.mxu0 0.0
    %957 = vmatpush1.msra.mxu0 0.0
    %958 = vmatprep.subr.mxu0 0.0
    %959 = vmatpush1.msra.mxu0 0.0
    %960 = vmatprep.subr.mxu0 0.0
    %961 = vmatpush1.msra.mxu0 0.0
    %962 = vmatprep.subr.mxu0 0.0
    %963 = vmatpush1.msra.mxu0 0.0
    %964 = vmatprep.subr.mxu0 0.0
    %965 = vmatpush1.msra.mxu0 0.0
    %966 = vmatprep.subr.mxu0 0.0
    %967 = vmatpush1.msra.mxu0 0.0
    %968 = vmatprep.subr.mxu0 0.0
    %969 = vmatpush1.msra.mxu0 0.0
    %970 = vmatprep.subr.mxu0 0.0
    %971 = vmatpush1.msra.mxu0 0.0
    %972 = vmatprep.subr.mxu0 0.0
    %973 = vmatpush1.msra.mxu0 0.0
    %974 = vmatprep.subr.mxu0 0.0
    %975 = vmatpush1.msra.mxu0 0.0
    %976 = vmatprep.subr.mxu0 0.0
    %977 = vmatpush1.msra.mxu0 0.0
    %978 = vmatprep.subr.mxu0 0.0
    %979 = vmatpush1.msra.mxu0 0.0
    %980 = vmatprep.subr.mxu0 0.0
    %981 = vmatpush1.msra.mxu0 0.0
    %982 = vmatprep.subr.mxu0 0.0
    %983 = vmatpush1.msra.mxu0 0.0
    %984 = vmatprep.subr.mxu0 0.0
    %985 = vmatpush1.msra.mxu0 0.0
    %986 = vmatprep.subr.mxu0 0.0
    %987 = vmatpush1.msra.mxu0 0.0
    %988 = vmatprep.subr.mxu0 0.0
    %989 = vmatpush1.msra.mxu0 0.0
    %990 = vmatprep.subr.mxu0 0.0
    %991 = vmatpush1.msra.mxu0 0.0
    %992 = vmatprep.subr.mxu0 0.0
    %993 = vmatpush1.msra.mxu0 0.0
    %994 = vmatprep.subr.mxu0 0.0
    %995 = vmatpush1.msra.mxu0 0.0
    %996 = vmatprep.subr.mxu0 0.0
    %997 = vmatpush1.msra.mxu0 0.0
    %998 = vmatprep.subr.mxu0 0.0
    %999 = vmatpush1.msra.mxu0 0.0
    %1000 = vmatprep.subr.mxu0 0.0
    %1001 = vmatpush1.msra.mxu0 0.0
    %1002 = vmatprep.mubr.f32.mxu0 0.0
    %1003 = vmatmul.mubr.f32.gmra.mrb[0].mxu0 %v921
    %v1004 = vpop.f32.mrb[0].mxu0
    %v1005 = vadd.f32 0.0, %v1004
    %v1006 = vpop.f32.mrb[0].mxu0
    %v1007 = vadd.f32 0.0, %v1006
    %1008 = vmatprep.mubr.f32.mxu0 0.0
    %1009 = vmatmul.mubr.f32.gmra.mrb[0].mxu0 %v924
    %v1010 = vpop.f32.mrb[0].mxu0
    %v1011 = vadd.f32 0.0, %v1010
    %v1012 = vpop.f32.mrb[0].mxu0
    %v1013 = vadd.f32 0.0, %v1012
    %1014 = vdwg.mxu0
    %1015 = vmatprep.subr.mxu0 %v905
    %1016 = vmatpush1.msra.mxu0 %v904
    %1017 = vmatprep.subr.mxu0 %v909
    %1018 = vmatpush1.msra.mxu0 %v908
    %1019 = vmatprep.subr.mxu0 %v913
    %1020 = vmatpush1.msra.mxu0 %v912
    %1021 = vmatprep.subr.mxu0 %v936
    %1022 = vmatpush1.msra.mxu0 %v933
    %1023 = vmatprep.subr.mxu0 0.0
    %1024 = vmatpush1.msra.mxu0 0.0
    %1025 = vmatprep.subr.mxu0 0.0
    %1026 = vmatpush1.msra.mxu0 0.0
    %1027 = vmatprep.subr.mxu0 0.0
    %1028 = vmatpush1.msra.mxu0 0.0
    %1029 = vmatprep.subr.mxu0 0.0
    %1030 = vmatpush1.msra.mxu0 0.0
    %1031 = vmatprep.subr.mxu0 0.0
    %1032 = vmatpush1.msra.mxu0 0.0
    %1033 = vmatprep.subr.mxu0 0.0
    %1034 = vmatpush1.msra.mxu0 0.0
    %1035 = vmatprep.subr.mxu0 0.0
    %1036 = vmatpush1.msra.mxu0 0.0
    %1037 = vmatprep.subr.mxu0 0.0
    %1038 = vmatpush1.msra.mxu0 0.0
    %1039 = vmatprep.subr.mxu0 0.0
    %1040 = vmatpush1.msra.mxu0 0.0
    %1041 = vmatprep.subr.mxu0 0.0
    %1042 = vmatpush1.msra.mxu0 0.0
    %1043 = vmatprep.subr.mxu0 0.0
    %1044 = vmatpush1.msra.mxu0 0.0
    %1045 = vmatprep.subr.mxu0 0.0
    %1046 = vmatpush1.msra.mxu0 0.0
    %1047 = vmatprep.subr.mxu0 0.0
    %1048 = vmatpush1.msra.mxu0 0.0
    %1049 = vmatprep.subr.mxu0 0.0
    %1050 = vmatpush1.msra.mxu0 0.0
    %1051 = vmatprep.subr.mxu0 0.0
    %1052 = vmatpush1.msra.mxu0 0.0
    %1053 = vmatprep.subr.mxu0 0.0
    %1054 = vmatpush1.msra.mxu0 0.0
    %1055 = vmatprep.subr.mxu0 0.0
    %1056 = vmatpush1.msra.mxu0 0.0
    %1057 = vmatprep.subr.mxu0 0.0
    %1058 = vmatpush1.msra.mxu0 0.0
    %1059 = vmatprep.subr.mxu0 0.0
    %1060 = vmatpush1.msra.mxu0 0.0
    %1061 = vmatprep.subr.mxu0 0.0
    %1062 = vmatpush1.msra.mxu0 0.0
    %1063 = vmatprep.subr.mxu0 0.0
    %1064 = vmatpush1.msra.mxu0 0.0
    %1065 = vmatprep.subr.mxu0 0.0
    %1066 = vmatpush1.msra.mxu0 0.0
    %1067 = vmatprep.subr.mxu0 0.0
    %1068 = vmatpush1.msra.mxu0 0.0
    %1069 = vmatprep.subr.mxu0 0.0
    %1070 = vmatpush1.msra.mxu0 0.0
    %1071 = vmatprep.subr.mxu0 0.0
    %1072 = vmatpush1.msra.mxu0 0.0
    %1073 = vmatprep.subr.mxu0 0.0
    %1074 = vmatpush1.msra.mxu0 0.0
    %1075 = vmatprep.subr.mxu0 0.0
    %1076 = vmatpush1.msra.mxu0 0.0
    %1077 = vmatprep.subr.mxu0 0.0
    %1078 = vmatpush1.msra.mxu0 0.0
    %1079 = vmatprep.mubr.f32.mxu0 0.0
    %1080 = vmatmul.mubr.f32.gmra.mrb[0].mxu0 %v921
    %v1081 = vpop.f32.mrb[0].mxu0
    %v1082 = vadd.f32 0.0, %v1081
    %v1083 = vpop.f32.mrb[0].mxu0
    %v1084 = vadd.f32 0.0, %v1083
    %1085 = vmatprep.mubr.f32.mxu0 0.0
    %1086 = vmatmul.mubr.f32.gmra.mrb[0].mxu0 %v924
    %v1087 = vpop.f32.mrb[0].mxu0
    %v1088 = vadd.f32 0.0, %v1087
    %v1089 = vpop.f32.mrb[0].mxu0
    %v1090 = vadd.f32 0.0, %v1089
    %1091 = vdwg.mxu0
    %s1092 = scalar_lea.vmem %s5, 16
    %v1093 = vld [vmem:[%s1092] sm:$0xff]
    %v1094 = vld [vmem:[%s1092 + $0x8] sm:$0x3f]
    %v1096 = vsel %vm227, %v1093, 0
    %v1099 = vsel %vm227, %v1094, 0
    %1101 = vmatprep.subr.mxu0 %v903
    %1102 = vmatpush1.msra.mxu0 %v902
    %1103 = vmatprep.subr.mxu0 %v907
    %1104 = vmatpush1.msra.mxu0 %v906
    %1105 = vmatprep.subr.mxu0 %v911
    %1106 = vmatpush1.msra.mxu0 %v910
    %1107 = vmatprep.subr.mxu0 %v930
    %1108 = vmatpush1.msra.mxu0 %v927
    %1109 = vmatprep.subr.mxu0 0.0
    %1110 = vmatpush1.msra.mxu0 0.0
    %1111 = vmatprep.subr.mxu0 0.0
    %1112 = vmatpush1.msra.mxu0 0.0
    %1113 = vmatprep.subr.mxu0 0.0
    %1114 = vmatpush1.msra.mxu0 0.0
    %1115 = vmatprep.subr.mxu0 0.0
    %1116 = vmatpush1.msra.mxu0 0.0
    %1117 = vmatprep.subr.mxu0 0.0
    %1118 = vmatpush1.msra.mxu0 0.0
    %1119 = vmatprep.subr.mxu0 0.0
    %1120 = vmatpush1.msra.mxu0 0.0
    %1121 = vmatprep.subr.mxu0 0.0
    %1122 = vmatpush1.msra.mxu0 0.0
    %1123 = vmatprep.subr.mxu0 0.0
    %1124 = vmatpush1.msra.mxu0 0.0
    %1125 = vmatprep.subr.mxu0 0.0
    %1126 = vmatpush1.msra.mxu0 0.0
    %1127 = vmatprep.subr.mxu0 0.0
    %1128 = vmatpush1.msra.mxu0 0.0
    %1129 = vmatprep.subr.mxu0 0.0
    %1130 = vmatpush1.msra.mxu0 0.0
    %1131 = vmatprep.subr.mxu0 0.0
    %1132 = vmatpush1.msra.mxu0 0.0
    %1133 = vmatprep.subr.mxu0 0.0
    %1134 = vmatpush1.msra.mxu0 0.0
    %1135 = vmatprep.subr.mxu0 0.0
    %1136 = vmatpush1.msra.mxu0 0.0
    %1137 = vmatprep.subr.mxu0 0.0
    %1138 = vmatpush1.msra.mxu0 0.0
    %1139 = vmatprep.subr.mxu0 0.0
    %1140 = vmatpush1.msra.mxu0 0.0
    %1141 = vmatprep.subr.mxu0 0.0
    %1142 = vmatpush1.msra.mxu0 0.0
    %1143 = vmatprep.subr.mxu0 0.0
    %1144 = vmatpush1.msra.mxu0 0.0
    %1145 = vmatprep.subr.mxu0 0.0
    %1146 = vmatpush1.msra.mxu0 0.0
    %1147 = vmatprep.subr.mxu0 0.0
    %1148 = vmatpush1.msra.mxu0 0.0
    %1149 = vmatprep.subr.mxu0 0.0
    %1150 = vmatpush1.msra.mxu0 0.0
    %1151 = vmatprep.subr.mxu0 0.0
    %1152 = vmatpush1.msra.mxu0 0.0
    %1153 = vmatprep.subr.mxu0 0.0
    %1154 = vmatpush1.msra.mxu0 0.0
    %1155 = vmatprep.subr.mxu0 0.0
    %1156 = vmatpush1.msra.mxu0 0.0
    %1157 = vmatprep.subr.mxu0 0.0
    %1158 = vmatpush1.msra.mxu0 0.0
    %1159 = vmatprep.subr.mxu0 0.0
    %1160 = vmatpush1.msra.mxu0 0.0
    %1161 = vmatprep.subr.mxu0 0.0
    %1162 = vmatpush1.msra.mxu0 0.0
    %1163 = vmatprep.subr.mxu0 0.0
    %1164 = vmatpush1.msra.mxu0 0.0
    %1165 = vmatprep.mubr.f32.mxu0 0.0
    %1166 = vmatmul.mubr.f32.gmra.mrb[0].mxu0 %v1096
    %v1167 = vpop.f32.mrb[0].mxu0
    %v1168 = vadd.f32 0.0, %v1167
    %v1169 = vpop.f32.mrb[0].mxu0
    %v1170 = vadd.f32 0.0, %v1169
    %1171 = vmatprep.mubr.f32.mxu0 0.0
    %1172 = vmatmul.mubr.f32.gmra.mrb[0].mxu0 %v1099
    %v1173 = vpop.f32.mrb[0].mxu0
    %v1174 = vadd.f32 0.0, %v1173
    %v1175 = vpop.f32.mrb[0].mxu0
    %v1176 = vadd.f32 0.0, %v1175
    %1177 = vdwg.mxu0
    %1178 = vmatprep.subr.mxu0 %v905
    %1179 = vmatpush1.msra.mxu0 %v904
    %1180 = vmatprep.subr.mxu0 %v909
    %1181 = vmatpush1.msra.mxu0 %v908
    %1182 = vmatprep.subr.mxu0 %v913
    %1183 = vmatpush1.msra.mxu0 %v912
    %1184 = vmatprep.subr.mxu0 %v936
    %1185 = vmatpush1.msra.mxu0 %v933
    %1186 = vmatprep.subr.mxu0 0.0
    %1187 = vmatpush1.msra.mxu0 0.0
    %1188 = vmatprep.subr.mxu0 0.0
    %1189 = vmatpush1.msra.mxu0 0.0
    %1190 = vmatprep.subr.mxu0 0.0
    %1191 = vmatpush1.msra.mxu0 0.0
    %1192 = vmatprep.subr.mxu0 0.0
    %1193 = vmatpush1.msra.mxu0 0.0
    %1194 = vmatprep.subr.mxu0 0.0
    %1195 = vmatpush1.msra.mxu0 0.0
    %1196 = vmatprep.subr.mxu0 0.0
    %1197 = vmatpush1.msra.mxu0 0.0
    %1198 = vmatprep.subr.mxu0 0.0
    %1199 = vmatpush1.msra.mxu0 0.0
    %1200 = vmatprep.subr.mxu0 0.0
    %1201 = vmatpush1.msra.mxu0 0.0
    %1202 = vmatprep.subr.mxu0 0.0
    %1203 = vmatpush1.msra.mxu0 0.0
    %1204 = vmatprep.subr.mxu0 0.0
    %1205 = vmatpush1.msra.mxu0 0.0
    %1206 = vmatprep.subr.mxu0 0.0
    %1207 = vmatpush1.msra.mxu0 0.0
    %1208 = vmatprep.subr.mxu0 0.0
    %1209 = vmatpush1.msra.mxu0 0.0
    %1210 = vmatprep.subr.mxu0 0.0
    %1211 = vmatpush1.msra.mxu0 0.0
    %1212 = vmatprep.subr.mxu0 0.0
    %1213 = vmatpush1.msra.mxu0 0.0
    %1214 = vmatprep.subr.mxu0 0.0
    %1215 = vmatpush1.msra.mxu0 0.0
    %1216 = vmatprep.subr.mxu0 0.0
    %1217 = vmatpush1.msra.mxu0 0.0
    %1218 = vmatprep.subr.mxu0 0.0
    %1219 = vmatpush1.msra.mxu0 0.0
    %1220 = vmatprep.subr.mxu0 0.0
    %1221 = vmatpush1.msra.mxu0 0.0
    %1222 = vmatprep.subr.mxu0 0.0
    %1223 = vmatpush1.msra.mxu0 0.0
    %1224 = vmatprep.subr.mxu0 0.0
    %1225 = vmatpush1.msra.mxu0 0.0
    %1226 = vmatprep.subr.mxu0 0.0
    %1227 = vmatpush1.msra.mxu0 0.0
    %1228 = vmatprep.subr.mxu0 0.0
    %1229 = vmatpush1.msra.mxu0 0.0
    %1230 = vmatprep.subr.mxu0 0.0
    %1231 = vmatpush1.msra.mxu0 0.0
    %1232 = vmatprep.subr.mxu0 0.0
    %1233 = vmatpush1.msra.mxu0 0.0
    %1234 = vmatprep.subr.mxu0 0.0
    %1235 = vmatpush1.msra.mxu0 0.0
    %1236 = vmatprep.subr.mxu0 0.0
    %1237 = vmatpush1.msra.mxu0 0.0
    %1238 = vmatprep.subr.mxu0 0.0
    %1239 = vmatpush1.msra.mxu0 0.0
    %1240 = vmatprep.subr.mxu0 0.0
    %1241 = vmatpush1.msra.mxu0 0.0
    %1242 = vmatprep.mubr.f32.mxu0 0.0
    %1243 = vmatmul.mubr.f32.gmra.mrb[0].mxu0 %v1096
    %v1244 = vpop.f32.mrb[0].mxu0
    %v1245 = vadd.f32 0.0, %v1244
    %v1246 = vpop.f32.mrb[0].mxu0
    %v1247 = vadd.f32 0.0, %v1246
    %1248 = vmatprep.mubr.f32.mxu0 0.0
    %1249 = vmatmul.mubr.f32.gmra.mrb[0].mxu0 %v1099
    %v1250 = vpop.f32.mrb[0].mxu0
    %v1251 = vadd.f32 0.0, %v1250
    %v1252 = vpop.f32.mrb[0].mxu0
    %v1253 = vadd.f32 0.0, %v1252
    %1254 = vdwg.mxu0
    %v1255 = vmax.f32 %v1005, %v1168
    %v1256 = vmax.f32 %v1007, %v1170
    %v1257 = vmax.f32 %v1082, %v1245
    %v1258 = vmax.f32 %v1084, %v1247
    %v1259 = vmax.f32 %v1011, %v1174
    %v1260 = vmax.f32 %v1013, %v1176
    %v1261 = vmax.f32 %v1088, %v1251
    %v1262 = vmax.f32 %v1090, %v1253
    %v1263 = vld [vmem:[#allocation11] sm:$0xff]
    %v1264 = vld [vmem:[#allocation11 + $0x8] sm:$0xff]
    %v1265 = vld [vmem:[#allocation11 + $0x10] sm:$0xff]
    %v1266 = vld [vmem:[#allocation11 + $0x18] sm:$0xff]
    %v1267 = vld [vmem:[#allocation11 + $0x20] sm:$0xff]
    %v1268 = vld [vmem:[#allocation11 + $0x28] sm:$0xff]
    %v1269 = vld [vmem:[#allocation11 + $0x30] sm:$0xff]
    %v1270 = vld [vmem:[#allocation11 + $0x38] sm:$0xff]
    %v1271 = vld [vmem:[#allocation11 + $0x40] sm:$0xff]
    %v1272 = vld [vmem:[#allocation11 + $0x48] sm:$0xff]
    %v1273 = vld [vmem:[#allocation11 + $0x50] sm:$0xff]
    %v1274 = vld [vmem:[#allocation11 + $0x58] sm:$0xff]
    %v1275 = vld [vmem:[#allocation11 + $0x60] sm:$0xff]
    %v1276 = vld [vmem:[#allocation11 + $0x68] sm:$0xff]
    %v1277 = vld [vmem:[#allocation11 + $0x70] sm:$0xff]
    %v1278 = vld [vmem:[#allocation11 + $0x78] sm:$0xff]
    %v1279 = vld [vmem:[#allocation11 + $0x80] sm:$0xff]
    %v1280 = vld [vmem:[#allocation11 + $0x88] sm:$0xff]
    %v1281 = vld [vmem:[#allocation11 + $0x90] sm:$0xff]
    %v1282 = vld [vmem:[#allocation11 + $0x98] sm:$0xff]
    %v1283 = vld [vmem:[#allocation11 + $0xa0] sm:$0xff]
    %v1284 = vld [vmem:[#allocation11 + $0xa8] sm:$0xff]
    %v1285 = vld [vmem:[#allocation11 + $0xb0] sm:$0xff]
    %v1286 = vld [vmem:[#allocation11 + $0xb8] sm:$0xff]
    %v1287 = vld [vmem:[#allocation11 + $0xc0] sm:$0xff]
    %v1288 = vld [vmem:[#allocation11 + $0xc8] sm:$0xff]
    %v1289 = vld [vmem:[#allocation11 + $0xd0] sm:$0xff]
    %v1290 = vld [vmem:[#allocation11 + $0xd8] sm:$0xff]
    %v1291 = vld [vmem:[#allocation11 + $0xe0] sm:$0xff]
    %v1292 = vld [vmem:[#allocation11 + $0xe8] sm:$0xff]
    %v1293 = vld [vmem:[#allocation11 + $0xf0] sm:$0xff]
    %v1294 = vld [vmem:[#allocation11 + $0xf8] sm:$0xff]
    %v1295 = vld [vmem:[#allocation11 + $0x100] sm:$0xff]
    %v1296 = vld [vmem:[#allocation11 + $0x108] sm:$0xff]
    %v1297 = vld [vmem:[#allocation11 + $0x110] sm:$0xff]
    %v1298 = vld [vmem:[#allocation11 + $0x118] sm:$0xff]
    %v1299 = vld [vmem:[#allocation11 + $0x120] sm:$0xff]
    %v1300 = vld [vmem:[#allocation11 + $0x128] sm:$0xff]
    %v1301 = vld [vmem:[#allocation11 + $0x130] sm:$0xff]
    %v1302 = vld [vmem:[#allocation11 + $0x138] sm:$0xff]
    %v1303 = vld [vmem:[#allocation11 + $0x140] sm:$0xff]
    %v1304 = vld [vmem:[#allocation11 + $0x148] sm:$0xff]
    %v1305 = vld [vmem:[#allocation11 + $0x150] sm:$0xff]
    %v1306 = vld [vmem:[#allocation11 + $0x158] sm:$0xff]
    %v1307 = vld [vmem:[#allocation11 + $0x160] sm:$0xff]
    %v1308 = vld [vmem:[#allocation11 + $0x168] sm:$0xff]
    %v1309 = vld [vmem:[#allocation11 + $0x170] sm:$0xff]
    %v1310 = vld [vmem:[#allocation11 + $0x178] sm:$0xff]
    %v1311 = vld [vmem:[#allocation11 + $0x180] sm:$0xff]
    %v1312 = vld [vmem:[#allocation11 + $0x188] sm:$0xff]
    %v1313 = vld [vmem:[#allocation11 + $0x190] sm:$0xff]
    %v1314 = vld [vmem:[#allocation11 + $0x198] sm:$0xff]
    %v1315 = vld [vmem:[#allocation11 + $0x1a0] sm:$0xff]
    %v1316 = vld [vmem:[#allocation11 + $0x1a8] sm:$0xff]
    %v1317 = vld [vmem:[#allocation11 + $0x1b0] sm:$0xff]
    %v1318 = vld [vmem:[#allocation11 + $0x1b8] sm:$0xff]
    %v1319 = vld [vmem:[#allocation11 + $0x1c0] sm:$0xff]
    %v1320 = vld [vmem:[#allocation11 + $0x1c8] sm:$0xff]
    %v1321 = vld [vmem:[#allocation11 + $0x1d0] sm:$0xff]
    %v1322 = vld [vmem:[#allocation11 + $0x1d8] sm:$0xff]
    %v1323 = vld [vmem:[#allocation11 + $0x1e0] sm:$0xff]
    %v1324 = vld [vmem:[#allocation11 + $0x1e8] sm:$0xff]
    %v1325 = vld [vmem:[#allocation11 + $0x1f0] sm:$0xff]
    %v1326 = vld [vmem:[#allocation11 + $0x1f8] sm:$0xff]
    %v1327 = vld [vmem:[#allocation11 + $0x200] sm:$0xff]
    %v1328 = vld [vmem:[#allocation11 + $0x208] sm:$0xff]
    %v1329 = vld [vmem:[#allocation11 + $0x210] sm:$0xff]
    %v1330 = vld [vmem:[#allocation11 + $0x218] sm:$0xff]
    %v1331 = vld [vmem:[#allocation11 + $0x220] sm:$0xff]
    %v1332 = vld [vmem:[#allocation11 + $0x228] sm:$0xff]
    %v1333 = vld [vmem:[#allocation11 + $0x230] sm:$0xff]
    %v1334 = vld [vmem:[#allocation11 + $0x238] sm:$0xff]
    %v1335 = vld [vmem:[#allocation11 + $0x240] sm:$0xff]
    %v1336 = vld [vmem:[#allocation11 + $0x248] sm:$0xff]
    %v1337 = vld [vmem:[#allocation11 + $0x250] sm:$0xff]
    %v1338 = vld [vmem:[#allocation11 + $0x258] sm:$0xff]
    %v1339 = vld [vmem:[#allocation11 + $0x260] sm:$0xff]
    %v1340 = vld [vmem:[#allocation11 + $0x268] sm:$0xff]
    %v1341 = vld [vmem:[#allocation11 + $0x270] sm:$0xff]
    %v1342 = vld [vmem:[#allocation11 + $0x278] sm:$0xff]
    %v1343 = vld [vmem:[#allocation11 + $0x280] sm:$0xff]
    %v1344 = vld [vmem:[#allocation11 + $0x288] sm:$0xff]
    %v1345 = vld [vmem:[#allocation11 + $0x290] sm:$0xff]
    %v1346 = vld [vmem:[#allocation11 + $0x298] sm:$0xff]
    %v1347 = vld [vmem:[#allocation11 + $0x2a0] sm:$0xff]
    %v1348 = vld [vmem:[#allocation11 + $0x2a8] sm:$0xff]
    %v1349 = vld [vmem:[#allocation11 + $0x2b0] sm:$0xff]
    %v1350 = vld [vmem:[#allocation11 + $0x2b8] sm:$0xff]
    %v1351 = vld [vmem:[#allocation11 + $0x2c0] sm:$0xff]
    %v1352 = vld [vmem:[#allocation11 + $0x2c8] sm:$0xff]
    %v1353 = vld [vmem:[#allocation11 + $0x2d0] sm:$0xff]
    %v1354 = vld [vmem:[#allocation11 + $0x2d8] sm:$0xff]
    %v1355 = vld [vmem:[#allocation11 + $0x2e0] sm:$0xff]
    %v1356 = vld [vmem:[#allocation11 + $0x2e8] sm:$0xff]
    %v1357 = vld [vmem:[#allocation11 + $0x2f0] sm:$0xff]
    %v1358 = vld [vmem:[#allocation11 + $0x2f8] sm:$0xff]
    %v1359 = vld [vmem:[#allocation11 + $0x300] sm:$0xff]
    %v1360 = vld [vmem:[#allocation11 + $0x308] sm:$0xff]
    %v1361 = vld [vmem:[#allocation11 + $0x310] sm:$0xff]
    %v1362 = vld [vmem:[#allocation11 + $0x318] sm:$0xff]
    %v1363 = vld [vmem:[#allocation11 + $0x320] sm:$0xff]
    %v1364 = vld [vmem:[#allocation11 + $0x328] sm:$0xff]
    %v1365 = vld [vmem:[#allocation11 + $0x330] sm:$0xff]
    %v1366 = vld [vmem:[#allocation11 + $0x338] sm:$0xff]
    %v1367 = vld [vmem:[#allocation11 + $0x340] sm:$0xff]
    %v1368 = vld [vmem:[#allocation11 + $0x348] sm:$0xff]
    %v1369 = vld [vmem:[#allocation11 + $0x350] sm:$0xff]
    %v1370 = vld [vmem:[#allocation11 + $0x358] sm:$0xff]
    %v1371 = vld [vmem:[#allocation11 + $0x360] sm:$0xff]
    %v1372 = vld [vmem:[#allocation11 + $0x368] sm:$0xff]
    %v1373 = vld [vmem:[#allocation11 + $0x370] sm:$0xff]
    %v1374 = vld [vmem:[#allocation11 + $0x378] sm:$0xff]
    %vm1375 = vcmask 523264
    %v1377 = vsel %vm1375, %v1258, 0
    %v1380 = vsel %vm1375, %v1262, 0
    %1382 = vmatprep.subr.mxu0 %v1264
    %1383 = vmatpush1.msra.mxu0 %v1263
    %1384 = vmatprep.subr.mxu0 %v1266
    %1385 = vmatpush1.msra.mxu0 %v1265
    %1386 = vmatprep.subr.mxu0 %v1268
    %1387 = vmatpush1.msra.mxu0 %v1267
    %1388 = vmatprep.subr.mxu0 %v1270
    %1389 = vmatpush1.msra.mxu0 %v1269
    %1390 = vmatprep.subr.mxu0 %v1272
    %1391 = vmatpush1.msra.mxu0 %v1271
    %1392 = vmatprep.subr.mxu0 %v1274
    %1393 = vmatpush1.msra.mxu0 %v1273
    %1394 = vmatprep.subr.mxu0 %v1276
    %1395 = vmatpush1.msra.mxu0 %v1275
    %1396 = vmatprep.subr.mxu0 %v1278
    %1397 = vmatpush1.msra.mxu0 %v1277
    %1398 = vmatprep.subr.mxu0 %v1280
    %1399 = vmatpush1.msra.mxu0 %v1279
    %1400 = vmatprep.subr.mxu0 %v1282
    %1401 = vmatpush1.msra.mxu0 %v1281
    %1402 = vmatprep.subr.mxu0 %v1284
    %1403 = vmatpush1.msra.mxu0 %v1283
    %1404 = vmatprep.subr.mxu0 %v1286
    %1405 = vmatpush1.msra.mxu0 %v1285
    %1406 = vmatprep.subr.mxu0 %v1288
    %1407 = vmatpush1.msra.mxu0 %v1287
    %1408 = vmatprep.subr.mxu0 %v1290
    %1409 = vmatpush1.msra.mxu0 %v1289
    %1410 = vmatprep.subr.mxu0 %v1292
    %1411 = vmatpush1.msra.mxu0 %v1291
    %1412 = vmatprep.subr.mxu0 %v1294
    %1413 = vmatpush1.msra.mxu0 %v1293
    %1414 = vmatprep.subr.mxu0 %v1296
    %1415 = vmatpush1.msra.mxu0 %v1295
    %1416 = vmatprep.subr.mxu0 %v1298
    %1417 = vmatpush1.msra.mxu0 %v1297
    %1418 = vmatprep.subr.mxu0 %v1300
    %1419 = vmatpush1.msra.mxu0 %v1299
    %1420 = vmatprep.subr.mxu0 %v1302
    %1421 = vmatpush1.msra.mxu0 %v1301
    %1422 = vmatprep.subr.mxu0 %v1304
    %1423 = vmatpush1.msra.mxu0 %v1303
    %1424 = vmatprep.subr.mxu0 %v1306
    %1425 = vmatpush1.msra.mxu0 %v1305
    %1426 = vmatprep.subr.mxu0 %v1308
    %1427 = vmatpush1.msra.mxu0 %v1307
    %1428 = vmatprep.subr.mxu0 %v1310
    %1429 = vmatpush1.msra.mxu0 %v1309
    %1430 = vmatprep.subr.mxu0 %v1312
    %1431 = vmatpush1.msra.mxu0 %v1311
    %1432 = vmatprep.subr.mxu0 %v1314
    %1433 = vmatpush1.msra.mxu0 %v1313
    %1434 = vmatprep.subr.mxu0 %v1316
    %1435 = vmatpush1.msra.mxu0 %v1315
    %1436 = vmatprep.subr.mxu0 %v1318
    %1437 = vmatpush1.msra.mxu0 %v1317
    %1438 = vmatprep.subr.mxu0 %v1320
    %1439 = vmatpush1.msra.mxu0 %v1319
    %1440 = vmatprep.subr.mxu0 %v1322
    %1441 = vmatpush1.msra.mxu0 %v1321
    %1442 = vmatprep.subr.mxu0 %v1324
    %1443 = vmatpush1.msra.mxu0 %v1323
    %1444 = vmatprep.subr.mxu0 %v1326
    %1445 = vmatpush1.msra.mxu0 %v1325
    %1446 = vmatprep.mubr.f32.mxu0 %v1256
    %1447 = vmatmul.mubr.f32.gmra.mrb[0].mxu0 %v1255
    %v1448 = vpop.f32.mrb[0].mxu0
    %v1449 = vadd.f32 0.0, %v1448
    %v1450 = vpop.f32.mrb[0].mxu0
    %v1451 = vadd.f32 0.0, %v1450
    %1452 = vmatprep.mubr.f32.mxu0 %v1260
    %1453 = vmatmul.mubr.f32.gmra.mrb[0].mxu0 %v1259
    %v1454 = vpop.f32.mrb[0].mxu0
    %v1455 = vadd.f32 0.0, %v1454
    %v1456 = vpop.f32.mrb[0].mxu0
    %v1457 = vadd.f32 0.0, %v1456
    %1458 = vdwg.mxu0
    %1459 = vmatprep.subr.mxu0 %v1328
    %1460 = vmatpush1.msra.mxu0 %v1327
    %1461 = vmatprep.subr.mxu0 %v1330
    %1462 = vmatpush1.msra.mxu0 %v1329
    %1463 = vmatprep.subr.mxu0 %v1332
    %1464 = vmatpush1.msra.mxu0 %v1331
    %1465 = vmatprep.subr.mxu0 %v1334
    %1466 = vmatpush1.msra.mxu0 %v1333
    %1467 = vmatprep.subr.mxu0 %v1336
    %1468 = vmatpush1.msra.mxu0 %v1335
    %1469 = vmatprep.subr.mxu0 %v1338
    %1470 = vmatpush1.msra.mxu0 %v1337
    %1471 = vmatprep.subr.mxu0 %v1340
    %1472 = vmatpush1.msra.mxu0 %v1339
    %1473 = vmatprep.subr.mxu0 %v1342
    %1474 = vmatpush1.msra.mxu0 %v1341
    %1475 = vmatprep.subr.mxu0 %v1344
    %1476 = vmatpush1.msra.mxu0 %v1343
    %1477 = vmatprep.subr.mxu0 %v1346
    %1478 = vmatpush1.msra.mxu0 %v1345
    %1479 = vmatprep.subr.mxu0 %v1348
    %1480 = vmatpush1.msra.mxu0 %v1347
    %1481 = vmatprep.subr.mxu0 %v1350
    %1482 = vmatpush1.msra.mxu0 %v1349
    %1483 = vmatprep.subr.mxu0 %v1352
    %1484 = vmatpush1.msra.mxu0 %v1351
    %1485 = vmatprep.subr.mxu0 %v1354
    %1486 = vmatpush1.msra.mxu0 %v1353
    %1487 = vmatprep.subr.mxu0 %v1356
    %1488 = vmatpush1.msra.mxu0 %v1355
    %1489 = vmatprep.subr.mxu0 %v1358
    %1490 = vmatpush1.msra.mxu0 %v1357
    %1491 = vmatprep.subr.mxu0 %v1360
    %1492 = vmatpush1.msra.mxu0 %v1359
    %1493 = vmatprep.subr.mxu0 %v1362
    %1494 = vmatpush1.msra.mxu0 %v1361
    %1495 = vmatprep.subr.mxu0 %v1364
    %1496 = vmatpush1.msra.mxu0 %v1363
    %1497 = vmatprep.subr.mxu0 %v1366
    %1498 = vmatpush1.msra.mxu0 %v1365
    %1499 = vmatprep.subr.mxu0 %v1368
    %1500 = vmatpush1.msra.mxu0 %v1367
    %1501 = vmatprep.subr.mxu0 %v1370
    %1502 = vmatpush1.msra.mxu0 %v1369
    %1503 = vmatprep.subr.mxu0 %v1372
    %1504 = vmatpush1.msra.mxu0 %v1371
    %1505 = vmatprep.subr.mxu0 %v1374
    %1506 = vmatpush1.msra.mxu0 %v1373
    %1507 = vmatprep.subr.mxu0 0.0
    %1508 = vmatpush1.msra.mxu0 0.0
    %1509 = vmatprep.subr.mxu0 0.0
    %1510 = vmatpush1.msra.mxu0 0.0
    %1511 = vmatprep.subr.mxu0 0.0
    %1512 = vmatpush1.msra.mxu0 0.0
    %1513 = vmatprep.subr.mxu0 0.0
    %1514 = vmatpush1.msra.mxu0 0.0
    %1515 = vmatprep.subr.mxu0 0.0
    %1516 = vmatpush1.msra.mxu0 0.0
    %1517 = vmatprep.subr.mxu0 0.0
    %1518 = vmatpush1.msra.mxu0 0.0
    %1519 = vmatprep.subr.mxu0 0.0
    %1520 = vmatpush1.msra.mxu0 0.0
    %1521 = vmatprep.subr.mxu0 0.0
    %1522 = vmatpush1.msra.mxu0 0.0
    %1523 = vmatprep.mubr.f32.mxu0 %v1377
    %1524 = vmatmul.mubr.f32.gmra.mrb[0].mxu0 %v1257
    %v1525 = vpop.f32.mrb[0].mxu0
    %v1526 = vadd.f32 %v1449, %v1525
    %v1527 = vpop.f32.mrb[0].mxu0
    %v1528 = vadd.f32 %v1451, %v1527
    %1529 = vmatprep.mubr.f32.mxu0 %v1380
    %1530 = vmatmul.mubr.f32.gmra.mrb[0].mxu0 %v1261
    %v1531 = vpop.f32.mrb[0].mxu0
    %v1532 = vadd.f32 %v1455, %v1531
    %v1533 = vpop.f32.mrb[0].mxu0
    %v1534 = vadd.f32 %v1457, %v1533
    %1535 = vdwg.mxu0
    %s1536 = scalar_lea.vmem [#allocation11], 896
    %v1537 = vld [vmem:[%s1536] sm:$0xff]
    %v1538 = vld [vmem:[%s1536 + $0x8] sm:$0xff]
    %v1539 = vld [vmem:[%s1536 + $0x10] sm:$0xff]
    %v1540 = vld [vmem:[%s1536 + $0x18] sm:$0xff]
    %v1541 = vld [vmem:[%s1536 + $0x20] sm:$0xff]
    %v1542 = vld [vmem:[%s1536 + $0x28] sm:$0xff]
    %v1543 = vld [vmem:[%s1536 + $0x30] sm:$0xff]
    %v1544 = vld [vmem:[%s1536 + $0x38] sm:$0xff]
    %v1545 = vld [vmem:[%s1536 + $0x40] sm:$0xff]
    %v1546 = vld [vmem:[%s1536 + $0x48] sm:$0xff]
    %v1547 = vld [vmem:[%s1536 + $0x50] sm:$0xff]
    %v1548 = vld [vmem:[%s1536 + $0x58] sm:$0xff]
    %v1549 = vld [vmem:[%s1536 + $0x60] sm:$0xff]
    %v1550 = vld [vmem:[%s1536 + $0x68] sm:$0xff]
    %v1551 = vld [vmem:[%s1536 + $0x70] sm:$0xff]
    %v1552 = vld [vmem:[%s1536 + $0x78] sm:$0xff]
    %v1553 = vld [vmem:[%s1536 + $0x80] sm:$0xff]
    %v1554 = vld [vmem:[%s1536 + $0x88] sm:$0xff]
    %v1555 = vld [vmem:[%s1536 + $0x90] sm:$0xff]
    %v1556 = vld [vmem:[%s1536 + $0x98] sm:$0xff]
    %v1557 = vld [vmem:[%s1536 + $0xa0] sm:$0xff]
    %v1558 = vld [vmem:[%s1536 + $0xa8] sm:$0xff]
    %v1559 = vld [vmem:[%s1536 + $0xb0] sm:$0xff]
    %v1560 = vld [vmem:[%s1536 + $0xb8] sm:$0xff]
    %v1561 = vld [vmem:[%s1536 + $0xc0] sm:$0xff]
    %v1562 = vld [vmem:[%s1536 + $0xc8] sm:$0xff]
    %v1563 = vld [vmem:[%s1536 + $0xd0] sm:$0xff]
    %v1564 = vld [vmem:[%s1536 + $0xd8] sm:$0xff]
    %v1565 = vld [vmem:[%s1536 + $0xe0] sm:$0xff]
    %v1566 = vld [vmem:[%s1536 + $0xe8] sm:$0xff]
    %v1567 = vld [vmem:[%s1536 + $0xf0] sm:$0xff]
    %v1568 = vld [vmem:[%s1536 + $0xf8] sm:$0xff]
    %v1569 = vld [vmem:[%s1536 + $0x100] sm:$0xff]
    %v1570 = vld [vmem:[%s1536 + $0x108] sm:$0xff]
    %v1571 = vld [vmem:[%s1536 + $0x110] sm:$0xff]
    %v1572 = vld [vmem:[%s1536 + $0x118] sm:$0xff]
    %v1573 = vld [vmem:[%s1536 + $0x120] sm:$0xff]
    %v1574 = vld [vmem:[%s1536 + $0x128] sm:$0xff]
    %v1575 = vld [vmem:[%s1536 + $0x130] sm:$0xff]
    %v1576 = vld [vmem:[%s1536 + $0x138] sm:$0xff]
    %v1577 = vld [vmem:[%s1536 + $0x140] sm:$0xff]
    %v1578 = vld [vmem:[%s1536 + $0x148] sm:$0xff]
    %v1579 = vld [vmem:[%s1536 + $0x150] sm:$0xff]
    %v1580 = vld [vmem:[%s1536 + $0x158] sm:$0xff]
    %v1581 = vld [vmem:[%s1536 + $0x160] sm:$0xff]
    %v1582 = vld [vmem:[%s1536 + $0x168] sm:$0xff]
    %v1583 = vld [vmem:[%s1536 + $0x170] sm:$0xff]
    %v1584 = vld [vmem:[%s1536 + $0x178] sm:$0xff]
    %v1585 = vld [vmem:[%s1536 + $0x180] sm:$0xff]
    %v1586 = vld [vmem:[%s1536 + $0x188] sm:$0xff]
    %v1587 = vld [vmem:[%s1536 + $0x190] sm:$0xff]
    %v1588 = vld [vmem:[%s1536 + $0x198] sm:$0xff]
    %v1589 = vld [vmem:[%s1536 + $0x1a0] sm:$0xff]
    %v1590 = vld [vmem:[%s1536 + $0x1a8] sm:$0xff]
    %v1591 = vld [vmem:[%s1536 + $0x1b0] sm:$0xff]
    %v1592 = vld [vmem:[%s1536 + $0x1b8] sm:$0xff]
    %v1593 = vld [vmem:[%s1536 + $0x1c0] sm:$0xff]
    %v1594 = vld [vmem:[%s1536 + $0x1c8] sm:$0xff]
    %v1595 = vld [vmem:[%s1536 + $0x1d0] sm:$0xff]
    %v1596 = vld [vmem:[%s1536 + $0x1d8] sm:$0xff]
    %v1597 = vld [vmem:[%s1536 + $0x1e0] sm:$0xff]
    %v1598 = vld [vmem:[%s1536 + $0x1e8] sm:$0xff]
    %v1599 = vld [vmem:[%s1536 + $0x1f0] sm:$0xff]
    %v1600 = vld [vmem:[%s1536 + $0x1f8] sm:$0xff]
    %v1601 = vld [vmem:[%s1536 + $0x200] sm:$0xff]
    %v1602 = vld [vmem:[%s1536 + $0x208] sm:$0xff]
    %v1603 = vld [vmem:[%s1536 + $0x210] sm:$0xff]
    %v1604 = vld [vmem:[%s1536 + $0x218] sm:$0xff]
    %v1605 = vld [vmem:[%s1536 + $0x220] sm:$0xff]
    %v1606 = vld [vmem:[%s1536 + $0x228] sm:$0xff]
    %v1607 = vld [vmem:[%s1536 + $0x230] sm:$0xff]
    %v1608 = vld [vmem:[%s1536 + $0x238] sm:$0xff]
    %v1609 = vld [vmem:[%s1536 + $0x240] sm:$0xff]
    %v1610 = vld [vmem:[%s1536 + $0x248] sm:$0xff]
    %v1611 = vld [vmem:[%s1536 + $0x250] sm:$0xff]
    %v1612 = vld [vmem:[%s1536 + $0x258] sm:$0xff]
    %v1613 = vld [vmem:[%s1536 + $0x260] sm:$0xff]
    %v1614 = vld [vmem:[%s1536 + $0x268] sm:$0xff]
    %v1615 = vld [vmem:[%s1536 + $0x270] sm:$0xff]
    %v1616 = vld [vmem:[%s1536 + $0x278] sm:$0xff]
    %v1617 = vld [vmem:[%s1536 + $0x280] sm:$0xff]
    %v1618 = vld [vmem:[%s1536 + $0x288] sm:$0xff]
    %v1619 = vld [vmem:[%s1536 + $0x290] sm:$0xff]
    %v1620 = vld [vmem:[%s1536 + $0x298] sm:$0xff]
    %v1621 = vld [vmem:[%s1536 + $0x2a0] sm:$0xff]
    %v1622 = vld [vmem:[%s1536 + $0x2a8] sm:$0xff]
    %v1623 = vld [vmem:[%s1536 + $0x2b0] sm:$0xff]
    %v1624 = vld [vmem:[%s1536 + $0x2b8] sm:$0xff]
    %v1625 = vld [vmem:[%s1536 + $0x2c0] sm:$0xff]
    %v1626 = vld [vmem:[%s1536 + $0x2c8] sm:$0xff]
    %v1627 = vld [vmem:[%s1536 + $0x2d0] sm:$0xff]
    %v1628 = vld [vmem:[%s1536 + $0x2d8] sm:$0xff]
    %v1629 = vld [vmem:[%s1536 + $0x2e0] sm:$0xff]
    %v1630 = vld [vmem:[%s1536 + $0x2e8] sm:$0xff]
    %v1631 = vld [vmem:[%s1536 + $0x2f0] sm:$0xff]
    %v1632 = vld [vmem:[%s1536 + $0x2f8] sm:$0xff]
    %v1633 = vld [vmem:[%s1536 + $0x300] sm:$0xff]
    %v1634 = vld [vmem:[%s1536 + $0x308] sm:$0xff]
    %v1635 = vld [vmem:[%s1536 + $0x310] sm:$0xff]
    %v1636 = vld [vmem:[%s1536 + $0x318] sm:$0xff]
    %v1637 = vld [vmem:[%s1536 + $0x320] sm:$0xff]
    %v1638 = vld [vmem:[%s1536 + $0x328] sm:$0xff]
    %v1639 = vld [vmem:[%s1536 + $0x330] sm:$0xff]
    %v1640 = vld [vmem:[%s1536 + $0x338] sm:$0xff]
    %v1641 = vld [vmem:[%s1536 + $0x340] sm:$0xff]
    %v1642 = vld [vmem:[%s1536 + $0x348] sm:$0xff]
    %v1643 = vld [vmem:[%s1536 + $0x350] sm:$0xff]
    %v1644 = vld [vmem:[%s1536 + $0x358] sm:$0xff]
    %v1645 = vld [vmem:[%s1536 + $0x360] sm:$0xff]
    %v1646 = vld [vmem:[%s1536 + $0x368] sm:$0xff]
    %v1647 = vld [vmem:[%s1536 + $0x370] sm:$0xff]
    %v1648 = vld [vmem:[%s1536 + $0x378] sm:$0xff]
    %1649 = vmatprep.subr.mxu0 %v1538
    %1650 = vmatpush1.msra.mxu0 %v1537
    %1651 = vmatprep.subr.mxu0 %v1540
    %1652 = vmatpush1.msra.mxu0 %v1539
    %1653 = vmatprep.subr.mxu0 %v1542
    %1654 = vmatpush1.msra.mxu0 %v1541
    %1655 = vmatprep.subr.mxu0 %v1544
    %1656 = vmatpush1.msra.mxu0 %v1543
    %1657 = vmatprep.subr.mxu0 %v1546
    %1658 = vmatpush1.msra.mxu0 %v1545
    %1659 = vmatprep.subr.mxu0 %v1548
    %1660 = vmatpush1.msra.mxu0 %v1547
    %1661 = vmatprep.subr.mxu0 %v1550
    %1662 = vmatpush1.msra.mxu0 %v1549
    %1663 = vmatprep.subr.mxu0 %v1552
    %1664 = vmatpush1.msra.mxu0 %v1551
    %1665 = vmatprep.subr.mxu0 %v1554
    %1666 = vmatpush1.msra.mxu0 %v1553
    %1667 = vmatprep.subr.mxu0 %v1556
    %1668 = vmatpush1.msra.mxu0 %v1555
    %1669 = vmatprep.subr.mxu0 %v1558
    %1670 = vmatpush1.msra.mxu0 %v1557
    %1671 = vmatprep.subr.mxu0 %v1560
    %1672 = vmatpush1.msra.mxu0 %v1559
    %1673 = vmatprep.subr.mxu0 %v1562
    %1674 = vmatpush1.msra.mxu0 %v1561
    %1675 = vmatprep.subr.mxu0 %v1564
    %1676 = vmatpush1.msra.mxu0 %v1563
    %1677 = vmatprep.subr.mxu0 %v1566
    %1678 = vmatpush1.msra.mxu0 %v1565
    %1679 = vmatprep.subr.mxu0 %v1568
    %1680 = vmatpush1.msra.mxu0 %v1567
    %1681 = vmatprep.subr.mxu0 %v1570
    %1682 = vmatpush1.msra.mxu0 %v1569
    %1683 = vmatprep.subr.mxu0 %v1572
    %1684 = vmatpush1.msra.mxu0 %v1571
    %1685 = vmatprep.subr.mxu0 %v1574
    %1686 = vmatpush1.msra.mxu0 %v1573
    %1687 = vmatprep.subr.mxu0 %v1576
    %1688 = vmatpush1.msra.mxu0 %v1575
    %1689 = vmatprep.subr.mxu0 %v1578
    %1690 = vmatpush1.msra.mxu0 %v1577
    %1691 = vmatprep.subr.mxu0 %v1580
    %1692 = vmatpush1.msra.mxu0 %v1579
    %1693 = vmatprep.subr.mxu0 %v1582
    %1694 = vmatpush1.msra.mxu0 %v1581
    %1695 = vmatprep.subr.mxu0 %v1584
    %1696 = vmatpush1.msra.mxu0 %v1583
    %1697 = vmatprep.subr.mxu0 %v1586
    %1698 = vmatpush1.msra.mxu0 %v1585
    %1699 = vmatprep.subr.mxu0 %v1588
    %1700 = vmatpush1.msra.mxu0 %v1587
    %1701 = vmatprep.subr.mxu0 %v1590
    %1702 = vmatpush1.msra.mxu0 %v1589
    %1703 = vmatprep.subr.mxu0 %v1592
    %1704 = vmatpush1.msra.mxu0 %v1591
    %1705 = vmatprep.subr.mxu0 %v1594
    %1706 = vmatpush1.msra.mxu0 %v1593
    %1707 = vmatprep.subr.mxu0 %v1596
    %1708 = vmatpush1.msra.mxu0 %v1595
    %1709 = vmatprep.subr.mxu0 %v1598
    %1710 = vmatpush1.msra.mxu0 %v1597
    %1711 = vmatprep.subr.mxu0 %v1600
    %1712 = vmatpush1.msra.mxu0 %v1599
    %1713 = vmatprep.mubr.f32.mxu0 %v1256
    %1714 = vmatmul.mubr.f32.gmra.mrb[0].mxu0 %v1255
    %v1715 = vpop.f32.mrb[0].mxu0
    %v1716 = vadd.f32 0.0, %v1715
    %v1717 = vpop.f32.mrb[0].mxu0
    %v1718 = vadd.f32 0.0, %v1717
    %1719 = vmatprep.mubr.f32.mxu0 %v1260
    %1720 = vmatmul.mubr.f32.gmra.mrb[0].mxu0 %v1259
    %v1721 = vpop.f32.mrb[0].mxu0
    %v1722 = vadd.f32 0.0, %v1721
    %v1723 = vpop.f32.mrb[0].mxu0
    %v1724 = vadd.f32 0.0, %v1723
    %1725 = vdwg.mxu0
    %1726 = vmatprep.subr.mxu0 %v1602
    %1727 = vmatpush1.msra.mxu0 %v1601
    %1728 = vmatprep.subr.mxu0 %v1604
    %1729 = vmatpush1.msra.mxu0 %v1603
    %1730 = vmatprep.subr.mxu0 %v1606
    %1731 = vmatpush1.msra.mxu0 %v1605
    %1732 = vmatprep.subr.mxu0 %v1608
    %1733 = vmatpush1.msra.mxu0 %v1607
    %1734 = vmatprep.subr.mxu0 %v1610
    %1735 = vmatpush1.msra.mxu0 %v1609
    %1736 = vmatprep.subr.mxu0 %v1612
    %1737 = vmatpush1.msra.mxu0 %v1611
    %1738 = vmatprep.subr.mxu0 %v1614
    %1739 = vmatpush1.msra.mxu0 %v1613
    %1740 = vmatprep.subr.mxu0 %v1616
    %1741 = vmatpush1.msra.mxu0 %v1615
    %1742 = vmatprep.subr.mxu0 %v1618
    %1743 = vmatpush1.msra.mxu0 %v1617
    %1744 = vmatprep.subr.mxu0 %v1620
    %1745 = vmatpush1.msra.mxu0 %v1619
    %1746 = vmatprep.subr.mxu0 %v1622
    %1747 = vmatpush1.msra.mxu0 %v1621
    %1748 = vmatprep.subr.mxu0 %v1624
    %1749 = vmatpush1.msra.mxu0 %v1623
    %1750 = vmatprep.subr.mxu0 %v1626
    %1751 = vmatpush1.msra.mxu0 %v1625
    %1752 = vmatprep.subr.mxu0 %v1628
    %1753 = vmatpush1.msra.mxu0 %v1627
    %1754 = vmatprep.subr.mxu0 %v1630
    %1755 = vmatpush1.msra.mxu0 %v1629
    %1756 = vmatprep.subr.mxu0 %v1632
    %1757 = vmatpush1.msra.mxu0 %v1631
    %1758 = vmatprep.subr.mxu0 %v1634
    %1759 = vmatpush1.msra.mxu0 %v1633
    %1760 = vmatprep.subr.mxu0 %v1636
    %1761 = vmatpush1.msra.mxu0 %v1635
    %1762 = vmatprep.subr.mxu0 %v1638
    %1763 = vmatpush1.msra.mxu0 %v1637
    %1764 = vmatprep.subr.mxu0 %v1640
    %1765 = vmatpush1.msra.mxu0 %v1639
    %1766 = vmatprep.subr.mxu0 %v1642
    %1767 = vmatpush1.msra.mxu0 %v1641
    %1768 = vmatprep.subr.mxu0 %v1644
    %1769 = vmatpush1.msra.mxu0 %v1643
    %1770 = vmatprep.subr.mxu0 %v1646
    %1771 = vmatpush1.msra.mxu0 %v1645
    %1772 = vmatprep.subr.mxu0 %v1648
    %1773 = vmatpush1.msra.mxu0 %v1647
    %1774 = vmatprep.subr.mxu0 0.0
    %1775 = vmatpush1.msra.mxu0 0.0
    %1776 = vmatprep.subr.mxu0 0.0
    %1777 = vmatpush1.msra.mxu0 0.0
    %1778 = vmatprep.subr.mxu0 0.0
    %1779 = vmatpush1.msra.mxu0 0.0
    %1780 = vmatprep.subr.mxu0 0.0
    %1781 = vmatpush1.msra.mxu0 0.0
    %1782 = vmatprep.subr.mxu0 0.0
    %1783 = vmatpush1.msra.mxu0 0.0
    %1784 = vmatprep.subr.mxu0 0.0
    %1785 = vmatpush1.msra.mxu0 0.0
    %1786 = vmatprep.subr.mxu0 0.0
    %1787 = vmatpush1.msra.mxu0 0.0
    %1788 = vmatprep.subr.mxu0 0.0
    %1789 = vmatpush1.msra.mxu0 0.0
    %1790 = vmatprep.mubr.f32.mxu0 %v1377
    %1791 = vmatmul.mubr.f32.gmra.mrb[0].mxu0 %v1257
    %v1792 = vpop.f32.mrb[0].mxu0
    %v1793 = vadd.f32 %v1716, %v1792
    %v1794 = vpop.f32.mrb[0].mxu0
    %v1795 = vadd.f32 %v1718, %v1794
    %1796 = vmatprep.mubr.f32.mxu0 %v1380
    %1797 = vmatmul.mubr.f32.gmra.mrb[0].mxu0 %v1261
    %v1798 = vpop.f32.mrb[0].mxu0
    %v1799 = vadd.f32 %v1722, %v1798
    %v1800 = vpop.f32.mrb[0].mxu0
    %v1801 = vadd.f32 %v1724, %v1800
    %1802 = vdwg.mxu0
    %v1803 = vmax.f32 %v1526, %v1793
    %v1804 = vmax.f32 %v1528, %v1795
    %v1805 = vmax.f32 %v1532, %v1799
    %v1806 = vmax.f32 %v1534, %v1801
    %vm1811 = vcmask 1040384
    %v1812 = vrot.slane %v1803, 7
    %v1813 = vrot.slane %v1804, 7
    %v1814 = vrot.slane %v1805, 7
    %v1815 = vsel %vm1811, %v1812, %v1814
    %v1816 = vrot.slane %v1806, 7
    %v1817 = vsel %vm1811, %v1813, %v1816
    %1822 = vst [vmem:[#allocation2] sm:$0xfe] %v1812
    %vm1823 = vcmask 785409
    %1824 = vst.msk [vmem:[#allocation2 + $0x8] sm:$0xfe] %vm1823, %v1813
    %1825 = vst [vmem:[#allocation2 + $0x10] sm:$0x7f] %v1815
    %vm1826 = vcmask 784384
    %1827 = vst.msk [vmem:[#allocation2 + $0x18] sm:$0x7f] %vm1826, %v1817
    %v1828 = vld [vmem:[#allocation2] sm:$0xff]
    %v1829 = vld [vmem:[#allocation2 + $0x8] sm:$0xff]
    %v1830 = vld [vmem:[#allocation2 + $0x10] sm:$0xff]
    %v1831 = vld [vmem:[#allocation2 + $0x18] sm:$0xff]
    %v1832 = vld [vmem:[#allocation8] sm:$0xff]
    %v1833 = vld [vmem:[#allocation8 + $0x8] sm:$0xff]
    %v1834 = vld [vmem:[#allocation8 + $0x10] sm:$0xff]
    %v1835 = vld [vmem:[#allocation8 + $0x18] sm:$0xff]
    %v1836 = vld [vmem:[#allocation8 + $0x20] sm:$0xff]
    %v1837 = vld [vmem:[#allocation8 + $0x28] sm:$0xff]
    %v1838 = vld [vmem:[#allocation8 + $0x30] sm:$0xff]
    %v1839 = vld [vmem:[#allocation8 + $0x38] sm:$0xff]
    %v1840 = vld [vmem:[#allocation8 + $0x40] sm:$0xff]
    %v1841 = vld [vmem:[#allocation8 + $0x48] sm:$0xff]
    %v1842 = vld [vmem:[#allocation8 + $0x50] sm:$0xff]
    %v1843 = vld [vmem:[#allocation8 + $0x58] sm:$0xff]
    %v1844 = vld [vmem:[#allocation8 + $0x60] sm:$0xff]
    %v1845 = vld [vmem:[#allocation8 + $0x68] sm:$0xff]
    %v1846 = vld [vmem:[#allocation8 + $0x70] sm:$0xff]
    %v1847 = vld [vmem:[#allocation8 + $0x78] sm:$0xff]
    %v1848 = vld [vmem:[#allocation8 + $0x80] sm:$0xff]
    %v1849 = vld [vmem:[#allocation8 + $0x88] sm:$0xff]
    %v1850 = vld [vmem:[#allocation8 + $0x90] sm:$0xff]
    %v1851 = vld [vmem:[#allocation8 + $0x98] sm:$0xff]
    %v1852 = vld [vmem:[#allocation8 + $0xa0] sm:$0xff]
    %v1853 = vld [vmem:[#allocation8 + $0xa8] sm:$0xff]
    %v1854 = vld [vmem:[#allocation8 + $0xb0] sm:$0xff]
    %v1855 = vld [vmem:[#allocation8 + $0xb8] sm:$0xff]
    %v1856 = vld [vmem:[#allocation8 + $0xc0] sm:$0xff]
    %v1857 = vld [vmem:[#allocation8 + $0xc8] sm:$0xff]
    %v1858 = vld [vmem:[#allocation8 + $0xd0] sm:$0xff]
    %v1859 = vld [vmem:[#allocation8 + $0xd8] sm:$0xff]
    %v1860 = vld [vmem:[#allocation8 + $0xe0] sm:$0xff]
    %v1861 = vld [vmem:[#allocation8 + $0xe8] sm:$0xff]
    %v1862 = vld [vmem:[#allocation8 + $0xf0] sm:$0xff]
    %v1863 = vld [vmem:[#allocation8 + $0xf8] sm:$0xff]
    %v1864 = vld [vmem:[#allocation8 + $0x100] sm:$0xff]
    %v1865 = vld [vmem:[#allocation8 + $0x108] sm:$0xff]
    %v1866 = vld [vmem:[#allocation8 + $0x110] sm:$0xff]
    %v1867 = vld [vmem:[#allocation8 + $0x118] sm:$0xff]
    %v1868 = vld [vmem:[#allocation8 + $0x120] sm:$0xff]
    %v1869 = vld [vmem:[#allocation8 + $0x128] sm:$0xff]
    %v1870 = vld [vmem:[#allocation8 + $0x130] sm:$0xff]
    %v1871 = vld [vmem:[#allocation8 + $0x138] sm:$0xff]
    %v1872 = vld [vmem:[#allocation8 + $0x140] sm:$0xff]
    %v1873 = vld [vmem:[#allocation8 + $0x148] sm:$0xff]
    %v1874 = vld [vmem:[#allocation8 + $0x150] sm:$0xff]
    %v1875 = vld [vmem:[#allocation8 + $0x158] sm:$0xff]
    %v1876 = vld [vmem:[#allocation8 + $0x160] sm:$0xff]
    %v1877 = vld [vmem:[#allocation8 + $0x168] sm:$0xff]
    %v1878 = vld [vmem:[#allocation8 + $0x170] sm:$0xff]
    %v1879 = vld [vmem:[#allocation8 + $0x178] sm:$0xff]
    %v1880 = vld [vmem:[#allocation8 + $0x180] sm:$0xff]
    %v1881 = vld [vmem:[#allocation8 + $0x188] sm:$0xff]
    %v1882 = vld [vmem:[#allocation8 + $0x190] sm:$0xff]
    %v1883 = vld [vmem:[#allocation8 + $0x198] sm:$0xff]
    %v1884 = vld [vmem:[#allocation8 + $0x1a0] sm:$0xff]
    %v1885 = vld [vmem:[#allocation8 + $0x1a8] sm:$0xff]
    %v1886 = vld [vmem:[#allocation8 + $0x1b0] sm:$0xff]
    %v1887 = vld [vmem:[#allocation8 + $0x1b8] sm:$0xff]
    %v1888 = vld [vmem:[#allocation8 + $0x1c0] sm:$0xff]
    %v1889 = vld [vmem:[#allocation8 + $0x1c8] sm:$0xff]
    %v1890 = vld [vmem:[#allocation8 + $0x1d0] sm:$0xff]
    %v1891 = vld [vmem:[#allocation8 + $0x1d8] sm:$0xff]
    %v1892 = vld [vmem:[#allocation8 + $0x1e0] sm:$0xff]
    %v1893 = vld [vmem:[#allocation8 + $0x1e8] sm:$0xff]
    %v1894 = vld [vmem:[#allocation8 + $0x1f0] sm:$0xff]
    %v1895 = vld [vmem:[#allocation8 + $0x1f8] sm:$0xff]
    %v1896 = vld [vmem:[#allocation8 + $0x200] sm:$0xff]
    %v1897 = vld [vmem:[#allocation8 + $0x208] sm:$0xff]
    %v1898 = vld [vmem:[#allocation8 + $0x210] sm:$0xff]
    %v1899 = vld [vmem:[#allocation8 + $0x218] sm:$0xff]
    %v1900 = vld [vmem:[#allocation8 + $0x220] sm:$0xff]
    %v1901 = vld [vmem:[#allocation8 + $0x228] sm:$0xff]
    %v1902 = vld [vmem:[#allocation8 + $0x230] sm:$0xff]
    %v1903 = vld [vmem:[#allocation8 + $0x238] sm:$0xff]
    %v1904 = vld [vmem:[#allocation8 + $0x240] sm:$0xff]
    %v1905 = vld [vmem:[#allocation8 + $0x248] sm:$0xff]
    %v1906 = vld [vmem:[#allocation8 + $0x250] sm:$0xff]
    %v1907 = vld [vmem:[#allocation8 + $0x258] sm:$0xff]
    %v1908 = vld [vmem:[#allocation8 + $0x260] sm:$0xff]
    %v1909 = vld [vmem:[#allocation8 + $0x268] sm:$0xff]
    %v1910 = vld [vmem:[#allocation8 + $0x270] sm:$0xff]
    %v1911 = vld [vmem:[#allocation8 + $0x278] sm:$0xff]
    %v1912 = vld [vmem:[#allocation8 + $0x280] sm:$0xff]
    %v1913 = vld [vmem:[#allocation8 + $0x288] sm:$0xff]
    %v1914 = vld [vmem:[#allocation8 + $0x290] sm:$0xff]
    %v1915 = vld [vmem:[#allocation8 + $0x298] sm:$0xff]
    %v1916 = vld [vmem:[#allocation8 + $0x2a0] sm:$0xff]
    %v1917 = vld [vmem:[#allocation8 + $0x2a8] sm:$0xff]
    %v1918 = vld [vmem:[#allocation8 + $0x2b0] sm:$0xff]
    %v1919 = vld [vmem:[#allocation8 + $0x2b8] sm:$0xff]
    %v1920 = vld [vmem:[#allocation8 + $0x2c0] sm:$0xff]
    %v1921 = vld [vmem:[#allocation8 + $0x2c8] sm:$0xff]
    %v1922 = vld [vmem:[#allocation8 + $0x2d0] sm:$0xff]
    %v1923 = vld [vmem:[#allocation8 + $0x2d8] sm:$0xff]
    %v1924 = vld [vmem:[#allocation8 + $0x2e0] sm:$0xff]
    %v1925 = vld [vmem:[#allocation8 + $0x2e8] sm:$0xff]
    %v1926 = vld [vmem:[#allocation8 + $0x2f0] sm:$0xff]
    %v1927 = vld [vmem:[#allocation8 + $0x2f8] sm:$0xff]
    %v1928 = vld [vmem:[#allocation8 + $0x300] sm:$0xff]
    %v1929 = vld [vmem:[#allocation8 + $0x308] sm:$0xff]
    %v1930 = vld [vmem:[#allocation8 + $0x310] sm:$0xff]
    %v1931 = vld [vmem:[#allocation8 + $0x318] sm:$0xff]
    %v1932 = vld [vmem:[#allocation8 + $0x320] sm:$0xff]
    %v1933 = vld [vmem:[#allocation8 + $0x328] sm:$0xff]
    %v1934 = vld [vmem:[#allocation8 + $0x330] sm:$0xff]
    %v1935 = vld [vmem:[#allocation8 + $0x338] sm:$0xff]
    %v1936 = vld [vmem:[#allocation8 + $0x340] sm:$0xff]
    %v1937 = vld [vmem:[#allocation8 + $0x348] sm:$0xff]
    %v1938 = vld [vmem:[#allocation8 + $0x350] sm:$0xff]
    %v1939 = vld [vmem:[#allocation8 + $0x358] sm:$0xff]
    %v1940 = vld [vmem:[#allocation8 + $0x360] sm:$0xff]
    %v1941 = vld [vmem:[#allocation8 + $0x368] sm:$0xff]
    %v1942 = vld [vmem:[#allocation8 + $0x370] sm:$0xff]
    %v1943 = vld [vmem:[#allocation8 + $0x378] sm:$0xff]
    %s1944 = scalar_lea.vmem [#allocation8], 896
    %v1945 = vld [vmem:[%s1944] sm:$0xff]
    %v1946 = vld [vmem:[%s1944 + $0x8] sm:$0xff]
    %v1947 = vld [vmem:[%s1944 + $0x10] sm:$0xff]
    %v1948 = vld [vmem:[%s1944 + $0x18] sm:$0xff]
    %v1949 = vld [vmem:[%s1944 + $0x20] sm:$0xff]
    %v1950 = vld [vmem:[%s1944 + $0x28] sm:$0xff]
    %v1951 = vld [vmem:[%s1944 + $0x30] sm:$0xff]
    %v1952 = vld [vmem:[%s1944 + $0x38] sm:$0xff]
    %v1953 = vld [vmem:[%s1944 + $0x40] sm:$0xff]
    %v1954 = vld [vmem:[%s1944 + $0x48] sm:$0xff]
    %v1955 = vld [vmem:[%s1944 + $0x50] sm:$0xff]
    %v1956 = vld [vmem:[%s1944 + $0x58] sm:$0xff]
    %v1957 = vld [vmem:[%s1944 + $0x60] sm:$0xff]
    %v1958 = vld [vmem:[%s1944 + $0x68] sm:$0xff]
    %v1959 = vld [vmem:[%s1944 + $0x70] sm:$0xff]
    %v1960 = vld [vmem:[%s1944 + $0x78] sm:$0xff]
    %v1961 = vld [vmem:[%s1944 + $0x80] sm:$0xff]
    %v1962 = vld [vmem:[%s1944 + $0x88] sm:$0xff]
    %v1963 = vld [vmem:[%s1944 + $0x90] sm:$0xff]
    %v1964 = vld [vmem:[%s1944 + $0x98] sm:$0xff]
    %v1965 = vld [vmem:[%s1944 + $0xa0] sm:$0xff]
    %v1966 = vld [vmem:[%s1944 + $0xa8] sm:$0xff]
    %v1967 = vld [vmem:[%s1944 + $0xb0] sm:$0xff]
    %v1968 = vld [vmem:[%s1944 + $0xb8] sm:$0xff]
    %v1969 = vld [vmem:[%s1944 + $0xc0] sm:$0xff]
    %v1970 = vld [vmem:[%s1944 + $0xc8] sm:$0xff]
    %v1971 = vld [vmem:[%s1944 + $0xd0] sm:$0xff]
    %v1972 = vld [vmem:[%s1944 + $0xd8] sm:$0xff]
    %v1973 = vld [vmem:[%s1944 + $0xe0] sm:$0xff]
    %v1974 = vld [vmem:[%s1944 + $0xe8] sm:$0xff]
    %v1975 = vld [vmem:[%s1944 + $0xf0] sm:$0xff]
    %v1976 = vld [vmem:[%s1944 + $0xf8] sm:$0xff]
    %v1977 = vld [vmem:[%s1944 + $0x100] sm:$0xff]
    %v1978 = vld [vmem:[%s1944 + $0x108] sm:$0xff]
    %v1979 = vld [vmem:[%s1944 + $0x110] sm:$0xff]
    %v1980 = vld [vmem:[%s1944 + $0x118] sm:$0xff]
    %v1981 = vld [vmem:[%s1944 + $0x120] sm:$0xff]
    %v1982 = vld [vmem:[%s1944 + $0x128] sm:$0xff]
    %v1983 = vld [vmem:[%s1944 + $0x130] sm:$0xff]
    %v1984 = vld [vmem:[%s1944 + $0x138] sm:$0xff]
    %v1985 = vld [vmem:[%s1944 + $0x140] sm:$0xff]
    %v1986 = vld [vmem:[%s1944 + $0x148] sm:$0xff]
    %v1987 = vld [vmem:[%s1944 + $0x150] sm:$0xff]
    %v1988 = vld [vmem:[%s1944 + $0x158] sm:$0xff]
    %v1989 = vld [vmem:[%s1944 + $0x160] sm:$0xff]
    %v1990 = vld [vmem:[%s1944 + $0x168] sm:$0xff]
    %v1991 = vld [vmem:[%s1944 + $0x170] sm:$0xff]
    %v1992 = vld [vmem:[%s1944 + $0x178] sm:$0xff]
    %v1993 = vld [vmem:[%s1944 + $0x180] sm:$0xff]
    %v1994 = vld [vmem:[%s1944 + $0x188] sm:$0xff]
    %v1995 = vld [vmem:[%s1944 + $0x190] sm:$0xff]
    %v1996 = vld [vmem:[%s1944 + $0x198] sm:$0xff]
    %v1997 = vld [vmem:[%s1944 + $0x1a0] sm:$0xff]
    %v1998 = vld [vmem:[%s1944 + $0x1a8] sm:$0xff]
    %v1999 = vld [vmem:[%s1944 + $0x1b0] sm:$0xff]
    %v2000 = vld [vmem:[%s1944 + $0x1b8] sm:$0xff]
    %v2001 = vld [vmem:[%s1944 + $0x1c0] sm:$0xff]
    %v2002 = vld [vmem:[%s1944 + $0x1c8] sm:$0xff]
    %v2003 = vld [vmem:[%s1944 + $0x1d0] sm:$0xff]
    %v2004 = vld [vmem:[%s1944 + $0x1d8] sm:$0xff]
    %v2005 = vld [vmem:[%s1944 + $0x1e0] sm:$0xff]
    %v2006 = vld [vmem:[%s1944 + $0x1e8] sm:$0xff]
    %v2007 = vld [vmem:[%s1944 + $0x1f0] sm:$0xff]
    %v2008 = vld [vmem:[%s1944 + $0x1f8] sm:$0xff]
    %v2009 = vld [vmem:[%s1944 + $0x200] sm:$0xff]
    %v2010 = vld [vmem:[%s1944 + $0x208] sm:$0xff]
    %v2011 = vld [vmem:[%s1944 + $0x210] sm:$0xff]
    %v2012 = vld [vmem:[%s1944 + $0x218] sm:$0xff]
    %v2013 = vld [vmem:[%s1944 + $0x220] sm:$0xff]
    %v2014 = vld [vmem:[%s1944 + $0x228] sm:$0xff]
    %v2015 = vld [vmem:[%s1944 + $0x230] sm:$0xff]
    %v2016 = vld [vmem:[%s1944 + $0x238] sm:$0xff]
    %v2017 = vld [vmem:[%s1944 + $0x240] sm:$0xff]
    %v2018 = vld [vmem:[%s1944 + $0x248] sm:$0xff]
    %v2019 = vld [vmem:[%s1944 + $0x250] sm:$0xff]
    %v2020 = vld [vmem:[%s1944 + $0x258] sm:$0xff]
    %v2021 = vld [vmem:[%s1944 + $0x260] sm:$0xff]
    %v2022 = vld [vmem:[%s1944 + $0x268] sm:$0xff]
    %v2023 = vld [vmem:[%s1944 + $0x270] sm:$0xff]
    %v2024 = vld [vmem:[%s1944 + $0x278] sm:$0xff]
    %v2025 = vld [vmem:[%s1944 + $0x280] sm:$0xff]
    %v2026 = vld [vmem:[%s1944 + $0x288] sm:$0xff]
    %v2027 = vld [vmem:[%s1944 + $0x290] sm:$0xff]
    %v2028 = vld [vmem:[%s1944 + $0x298] sm:$0xff]
    %v2029 = vld [vmem:[%s1944 + $0x2a0] sm:$0xff]
    %v2030 = vld [vmem:[%s1944 + $0x2a8] sm:$0xff]
    %v2031 = vld [vmem:[%s1944 + $0x2b0] sm:$0xff]
    %v2032 = vld [vmem:[%s1944 + $0x2b8] sm:$0xff]
    %v2033 = vld [vmem:[%s1944 + $0x2c0] sm:$0xff]
    %v2034 = vld [vmem:[%s1944 + $0x2c8] sm:$0xff]
    %v2035 = vld [vmem:[%s1944 + $0x2d0] sm:$0xff]
    %v2036 = vld [vmem:[%s1944 + $0x2d8] sm:$0xff]
    %v2037 = vld [vmem:[%s1944 + $0x2e0] sm:$0xff]
    %v2038 = vld [vmem:[%s1944 + $0x2e8] sm:$0xff]
    %v2039 = vld [vmem:[%s1944 + $0x2f0] sm:$0xff]
    %v2040 = vld [vmem:[%s1944 + $0x2f8] sm:$0xff]
    %v2041 = vld [vmem:[%s1944 + $0x300] sm:$0xff]
    %v2042 = vld [vmem:[%s1944 + $0x308] sm:$0xff]
    %v2043 = vld [vmem:[%s1944 + $0x310] sm:$0xff]
    %v2044 = vld [vmem:[%s1944 + $0x318] sm:$0xff]
    %v2045 = vld [vmem:[%s1944 + $0x320] sm:$0xff]
    %v2046 = vld [vmem:[%s1944 + $0x328] sm:$0xff]
    %v2047 = vld [vmem:[%s1944 + $0x330] sm:$0xff]
    %v2048 = vld [vmem:[%s1944 + $0x338] sm:$0xff]
    %v2049 = vld [vmem:[%s1944 + $0x340] sm:$0xff]
    %v2050 = vld [vmem:[%s1944 + $0x348] sm:$0xff]
    %v2051 = vld [vmem:[%s1944 + $0x350] sm:$0xff]
    %v2052 = vld [vmem:[%s1944 + $0x358] sm:$0xff]
    %v2053 = vld [vmem:[%s1944 + $0x360] sm:$0xff]
    %v2054 = vld [vmem:[%s1944 + $0x368] sm:$0xff]
    %v2055 = vld [vmem:[%s1944 + $0x370] sm:$0xff]
    %v2056 = vld [vmem:[%s1944 + $0x378] sm:$0xff]
    %v2061 = vrot.slane %v1828, 1
    %v2062 = vrot.slane %v1830, 1
    %v2063 = vsel %vm219, %v2061, %v2062
    %v2064 = vrot.slane %v1829, 1
    %v2065 = vrot.slane %v1831, 1
    %v2066 = vsel %vm219, %v2064, %v2065
    %v2069 = vsel %vm174, %v2066, 0
    %v2071 = vsel %vm174, %v2065, 0
    %2073 = vmatprep.subr.mxu0 %v1946
    %2074 = vmatpush1.msra.mxu0 %v1945
    %2075 = vmatprep.subr.mxu0 %v1950
    %2076 = vmatpush1.msra.mxu0 %v1949
    %2077 = vmatprep.subr.mxu0 %v1954
    %2078 = vmatpush1.msra.mxu0 %v1953
    %2079 = vmatprep.subr.mxu0 %v1958
    %2080 = vmatpush1.msra.mxu0 %v1957
    %2081 = vmatprep.subr.mxu0 %v1962
    %2082 = vmatpush1.msra.mxu0 %v1961
    %2083 = vmatprep.subr.mxu0 %v1966
    %2084 = vmatpush1.msra.mxu0 %v1965
    %2085 = vmatprep.subr.mxu0 %v1970
    %2086 = vmatpush1.msra.mxu0 %v1969
    %2087 = vmatprep.subr.mxu0 %v1974
    %2088 = vmatpush1.msra.mxu0 %v1973
    %2089 = vmatprep.subr.mxu0 %v1978
    %2090 = vmatpush1.msra.mxu0 %v1977
    %2091 = vmatprep.subr.mxu0 %v1982
    %2092 = vmatpush1.msra.mxu0 %v1981
    %2093 = vmatprep.subr.mxu0 %v1986
    %2094 = vmatpush1.msra.mxu0 %v1985
    %2095 = vmatprep.subr.mxu0 %v1990
    %2096 = vmatpush1.msra.mxu0 %v1989
    %2097 = vmatprep.subr.mxu0 %v1994
    %2098 = vmatpush1.msra.mxu0 %v1993
    %2099 = vmatprep.subr.mxu0 %v1998
    %2100 = vmatpush1.msra.mxu0 %v1997
    %2101 = vmatprep.subr.mxu0 %v2002
    %2102 = vmatpush1.msra.mxu0 %v2001
    %2103 = vmatprep.subr.mxu0 %v2006
    %2104 = vmatpush1.msra.mxu0 %v2005
    %2105 = vmatprep.subr.mxu0 %v2010
    %2106 = vmatpush1.msra.mxu0 %v2009
    %2107 = vmatprep.subr.mxu0 %v2014
    %2108 = vmatpush1.msra.mxu0 %v2013
    %2109 = vmatprep.subr.mxu0 %v2018
    %2110 = vmatpush1.msra.mxu0 %v2017
    %2111 = vmatprep.subr.mxu0 %v2022
    %2112 = vmatpush1.msra.mxu0 %v2021
    %2113 = vmatprep.subr.mxu0 %v2026
    %2114 = vmatpush1.msra.mxu0 %v2025
    %2115 = vmatprep.subr.mxu0 %v2030
    %2116 = vmatpush1.msra.mxu0 %v2029
    %2117 = vmatprep.subr.mxu0 %v2034
    %2118 = vmatpush1.msra.mxu0 %v2033
    %2119 = vmatprep.subr.mxu0 %v2038
    %2120 = vmatpush1.msra.mxu0 %v2037
    %2121 = vmatprep.subr.mxu0 %v2042
    %2122 = vmatpush1.msra.mxu0 %v2041
    %2123 = vmatprep.subr.mxu0 %v2046
    %2124 = vmatpush1.msra.mxu0 %v2045
    %2125 = vmatprep.subr.mxu0 %v2050
    %2126 = vmatpush1.msra.mxu0 %v2049
    %2127 = vmatprep.subr.mxu0 %v2054
    %2128 = vmatpush1.msra.mxu0 %v2053
    %2129 = vmatprep.subr.mxu0 0.0
    %2130 = vmatpush1.msra.mxu0 0.0
    %2131 = vmatprep.subr.mxu0 0.0
    %2132 = vmatpush1.msra.mxu0 0.0
    %2133 = vmatprep.subr.mxu0 0.0
    %2134 = vmatpush1.msra.mxu0 0.0
    %2135 = vmatprep.subr.mxu0 0.0
    %2136 = vmatpush1.msra.mxu0 0.0
    %2137 = vmatprep.mubr.f32.mxu0 %v2069
    %2138 = vmatmul.mubr.f32.gmra.mrb[0].mxu0 %v2063
    %v2139 = vpop.f32.mrb[0].mxu0
    %v2140 = vadd.f32 0.0, %v2139
    %v2141 = vpop.f32.mrb[0].mxu0
    %v2142 = vadd.f32 0.0, %v2141
    %2143 = vmatprep.mubr.f32.mxu0 %v2071
    %2144 = vmatmul.mubr.f32.gmra.mrb[0].mxu0 %v2062
    %v2145 = vpop.f32.mrb[0].mxu0
    %v2146 = vadd.f32 0.0, %v2145
    %v2147 = vpop.f32.mrb[0].mxu0
    %v2148 = vadd.f32 0.0, %v2147
    %2149 = vdwg.mxu0
    %2150 = vmatprep.subr.mxu0 %v1948
    %2151 = vmatpush1.msra.mxu0 %v1947
    %2152 = vmatprep.subr.mxu0 %v1952
    %2153 = vmatpush1.msra.mxu0 %v1951
    %2154 = vmatprep.subr.mxu0 %v1956
    %2155 = vmatpush1.msra.mxu0 %v1955
    %2156 = vmatprep.subr.mxu0 %v1960
    %2157 = vmatpush1.msra.mxu0 %v1959
    %2158 = vmatprep.subr.mxu0 %v1964
    %2159 = vmatpush1.msra.mxu0 %v1963
    %2160 = vmatprep.subr.mxu0 %v1968
    %2161 = vmatpush1.msra.mxu0 %v1967
    %2162 = vmatprep.subr.mxu0 %v1972
    %2163 = vmatpush1.msra.mxu0 %v1971
    %2164 = vmatprep.subr.mxu0 %v1976
    %2165 = vmatpush1.msra.mxu0 %v1975
    %2166 = vmatprep.subr.mxu0 %v1980
    %2167 = vmatpush1.msra.mxu0 %v1979
    %2168 = vmatprep.subr.mxu0 %v1984
    %2169 = vmatpush1.msra.mxu0 %v1983
    %2170 = vmatprep.subr.mxu0 %v1988
    %2171 = vmatpush1.msra.mxu0 %v1987
    %2172 = vmatprep.subr.mxu0 %v1992
    %2173 = vmatpush1.msra.mxu0 %v1991
    %2174 = vmatprep.subr.mxu0 %v1996
    %2175 = vmatpush1.msra.mxu0 %v1995
    %2176 = vmatprep.subr.mxu0 %v2000
    %2177 = vmatpush1.msra.mxu0 %v1999
    %2178 = vmatprep.subr.mxu0 %v2004
    %2179 = vmatpush1.msra.mxu0 %v2003
    %2180 = vmatprep.subr.mxu0 %v2008
    %2181 = vmatpush1.msra.mxu0 %v2007
    %2182 = vmatprep.subr.mxu0 %v2012
    %2183 = vmatpush1.msra.mxu0 %v2011
    %2184 = vmatprep.subr.mxu0 %v2016
    %2185 = vmatpush1.msra.mxu0 %v2015
    %2186 = vmatprep.subr.mxu0 %v2020
    %2187 = vmatpush1.msra.mxu0 %v2019
    %2188 = vmatprep.subr.mxu0 %v2024
    %2189 = vmatpush1.msra.mxu0 %v2023
    %2190 = vmatprep.subr.mxu0 %v2028
    %2191 = vmatpush1.msra.mxu0 %v2027
    %2192 = vmatprep.subr.mxu0 %v2032
    %2193 = vmatpush1.msra.mxu0 %v2031
    %2194 = vmatprep.subr.mxu0 %v2036
    %2195 = vmatpush1.msra.mxu0 %v2035
    %2196 = vmatprep.subr.mxu0 %v2040
    %2197 = vmatpush1.msra.mxu0 %v2039
    %2198 = vmatprep.subr.mxu0 %v2044
    %2199 = vmatpush1.msra.mxu0 %v2043
    %2200 = vmatprep.subr.mxu0 %v2048
    %2201 = vmatpush1.msra.mxu0 %v2047
    %2202 = vmatprep.subr.mxu0 %v2052
    %2203 = vmatpush1.msra.mxu0 %v2051
    %2204 = vmatprep.subr.mxu0 %v2056
    %2205 = vmatpush1.msra.mxu0 %v2055
    %2206 = vmatprep.subr.mxu0 0.0
    %2207 = vmatpush1.msra.mxu0 0.0
    %2208 = vmatprep.subr.mxu0 0.0
    %2209 = vmatpush1.msra.mxu0 0.0
    %2210 = vmatprep.subr.mxu0 0.0
    %2211 = vmatpush1.msra.mxu0 0.0
    %2212 = vmatprep.subr.mxu0 0.0
    %2213 = vmatpush1.msra.mxu0 0.0
    %2214 = vmatprep.mubr.f32.mxu0 %v2069
    %2215 = vmatmul.mubr.f32.gmra.mrb[0].mxu0 %v2063
    %v2216 = vpop.f32.mrb[0].mxu0
    %v2217 = vadd.f32 0.0, %v2216
    %v2218 = vpop.f32.mrb[0].mxu0
    %v2219 = vadd.f32 0.0, %v2218
    %2220 = vmatprep.mubr.f32.mxu0 %v2071
    %2221 = vmatmul.mubr.f32.gmra.mrb[0].mxu0 %v2062
    %v2222 = vpop.f32.mrb[0].mxu0
    %v2223 = vadd.f32 0.0, %v2222
    %v2224 = vpop.f32.mrb[0].mxu0
    %v2225 = vadd.f32 0.0, %v2224
    %2226 = vdwg.mxu0
    %v2227 = vsel %vm174, %v1829, 0
    %v2229 = vsel %vm174, %v1831, 0
    %2231 = vmatprep.subr.mxu0 %v1833
    %2232 = vmatpush1.msra.mxu0 %v1832
    %2233 = vmatprep.subr.mxu0 %v1837
    %2234 = vmatpush1.msra.mxu0 %v1836
    %2235 = vmatprep.subr.mxu0 %v1841
    %2236 = vmatpush1.msra.mxu0 %v1840
    %2237 = vmatprep.subr.mxu0 %v1845
    %2238 = vmatpush1.msra.mxu0 %v1844
    %2239 = vmatprep.subr.mxu0 %v1849
    %2240 = vmatpush1.msra.mxu0 %v1848
    %2241 = vmatprep.subr.mxu0 %v1853
    %2242 = vmatpush1.msra.mxu0 %v1852
    %2243 = vmatprep.subr.mxu0 %v1857
    %2244 = vmatpush1.msra.mxu0 %v1856
    %2245 = vmatprep.subr.mxu0 %v1861
    %2246 = vmatpush1.msra.mxu0 %v1860
    %2247 = vmatprep.subr.mxu0 %v1865
    %2248 = vmatpush1.msra.mxu0 %v1864
    %2249 = vmatprep.subr.mxu0 %v1869
    %2250 = vmatpush1.msra.mxu0 %v1868
    %2251 = vmatprep.subr.mxu0 %v1873
    %2252 = vmatpush1.msra.mxu0 %v1872
    %2253 = vmatprep.subr.mxu0 %v1877
    %2254 = vmatpush1.msra.mxu0 %v1876
    %2255 = vmatprep.subr.mxu0 %v1881
    %2256 = vmatpush1.msra.mxu0 %v1880
    %2257 = vmatprep.subr.mxu0 %v1885
    %2258 = vmatpush1.msra.mxu0 %v1884
    %2259 = vmatprep.subr.mxu0 %v1889
    %2260 = vmatpush1.msra.mxu0 %v1888
    %2261 = vmatprep.subr.mxu0 %v1893
    %2262 = vmatpush1.msra.mxu0 %v1892
    %2263 = vmatprep.subr.mxu0 %v1897
    %2264 = vmatpush1.msra.mxu0 %v1896
    %2265 = vmatprep.subr.mxu0 %v1901
    %2266 = vmatpush1.msra.mxu0 %v1900
    %2267 = vmatprep.subr.mxu0 %v1905
    %2268 = vmatpush1.msra.mxu0 %v1904
    %2269 = vmatprep.subr.mxu0 %v1909
    %2270 = vmatpush1.msra.mxu0 %v1908
    %2271 = vmatprep.subr.mxu0 %v1913
    %2272 = vmatpush1.msra.mxu0 %v1912
    %2273 = vmatprep.subr.mxu0 %v1917
    %2274 = vmatpush1.msra.mxu0 %v1916
    %2275 = vmatprep.subr.mxu0 %v1921
    %2276 = vmatpush1.msra.mxu0 %v1920
    %2277 = vmatprep.subr.mxu0 %v1925
    %2278 = vmatpush1.msra.mxu0 %v1924
    %2279 = vmatprep.subr.mxu0 %v1929
    %2280 = vmatpush1.msra.mxu0 %v1928
    %2281 = vmatprep.subr.mxu0 %v1933
    %2282 = vmatpush1.msra.mxu0 %v1932
    %2283 = vmatprep.subr.mxu0 %v1937
    %2284 = vmatpush1.msra.mxu0 %v1936
    %2285 = vmatprep.subr.mxu0 %v1941
    %2286 = vmatpush1.msra.mxu0 %v1940
    %2287 = vmatprep.subr.mxu0 0.0
    %2288 = vmatpush1.msra.mxu0 0.0
    %2289 = vmatprep.subr.mxu0 0.0
    %2290 = vmatpush1.msra.mxu0 0.0
    %2291 = vmatprep.subr.mxu0 0.0
    %2292 = vmatpush1.msra.mxu0 0.0
    %2293 = vmatprep.subr.mxu0 0.0
    %2294 = vmatpush1.msra.mxu0 0.0
    %2295 = vmatprep.mubr.f32.mxu0 %v2227
    %2296 = vmatmul.mubr.f32.gmra.mrb[0].mxu0 %v1828
    %v2297 = vpop.f32.mrb[0].mxu0
    %v2298 = vadd.f32 %v2140, %v2297
    %v2299 = vpop.f32.mrb[0].mxu0
    %v2300 = vadd.f32 %v2142, %v2299
    %2301 = vmatprep.mubr.f32.mxu0 %v2229
    %2302 = vmatmul.mubr.f32.gmra.mrb[0].mxu0 %v1830
    %v2303 = vpop.f32.mrb[0].mxu0
    %v2304 = vadd.f32 %v2146, %v2303
    %v2305 = vpop.f32.mrb[0].mxu0
    %v2306 = vadd.f32 %v2148, %v2305
    %2307 = vdwg.mxu0
    %2308 = vmatprep.subr.mxu0 %v1835
    %2309 = vmatpush1.msra.mxu0 %v1834
    %2310 = vmatprep.subr.mxu0 %v1839
    %2311 = vmatpush1.msra.mxu0 %v1838
    %2312 = vmatprep.subr.mxu0 %v1843
    %2313 = vmatpush1.msra.mxu0 %v1842
    %2314 = vmatprep.subr.mxu0 %v1847
    %2315 = vmatpush1.msra.mxu0 %v1846
    %2316 = vmatprep.subr.mxu0 %v1851
    %2317 = vmatpush1.msra.mxu0 %v1850
    %2318 = vmatprep.subr.mxu0 %v1855
    %2319 = vmatpush1.msra.mxu0 %v1854
    %2320 = vmatprep.subr.mxu0 %v1859
    %2321 = vmatpush1.msra.mxu0 %v1858
    %2322 = vmatprep.subr.mxu0 %v1863
    %2323 = vmatpush1.msra.mxu0 %v1862
    %2324 = vmatprep.subr.mxu0 %v1867
    %2325 = vmatpush1.msra.mxu0 %v1866
    %2326 = vmatprep.subr.mxu0 %v1871
    %2327 = vmatpush1.msra.mxu0 %v1870
    %2328 = vmatprep.subr.mxu0 %v1875
    %2329 = vmatpush1.msra.mxu0 %v1874
    %2330 = vmatprep.subr.mxu0 %v1879
    %2331 = vmatpush1.msra.mxu0 %v1878
    %2332 = vmatprep.subr.mxu0 %v1883
    %2333 = vmatpush1.msra.mxu0 %v1882
    %2334 = vmatprep.subr.mxu0 %v1887
    %2335 = vmatpush1.msra.mxu0 %v1886
    %2336 = vmatprep.subr.mxu0 %v1891
    %2337 = vmatpush1.msra.mxu0 %v1890
    %2338 = vmatprep.subr.mxu0 %v1895
    %2339 = vmatpush1.msra.mxu0 %v1894
    %2340 = vmatprep.subr.mxu0 %v1899
    %2341 = vmatpush1.msra.mxu0 %v1898
    %2342 = vmatprep.subr.mxu0 %v1903
    %2343 = vmatpush1.msra.mxu0 %v1902
    %2344 = vmatprep.subr.mxu0 %v1907
    %2345 = vmatpush1.msra.mxu0 %v1906
    %2346 = vmatprep.subr.mxu0 %v1911
    %2347 = vmatpush1.msra.mxu0 %v1910
    %2348 = vmatprep.subr.mxu0 %v1915
    %2349 = vmatpush1.msra.mxu0 %v1914
    %2350 = vmatprep.subr.mxu0 %v1919
    %2351 = vmatpush1.msra.mxu0 %v1918
    %2352 = vmatprep.subr.mxu0 %v1923
    %2353 = vmatpush1.msra.mxu0 %v1922
    %2354 = vmatprep.subr.mxu0 %v1927
    %2355 = vmatpush1.msra.mxu0 %v1926
    %2356 = vmatprep.subr.mxu0 %v1931
    %2357 = vmatpush1.msra.mxu0 %v1930
    %2358 = vmatprep.subr.mxu0 %v1935
    %2359 = vmatpush1.msra.mxu0 %v1934
    %2360 = vmatprep.subr.mxu0 %v1939
    %2361 = vmatpush1.msra.mxu0 %v1938
    %2362 = vmatprep.subr.mxu0 %v1943
    %2363 = vmatpush1.msra.mxu0 %v1942
    %2364 = vmatprep.subr.mxu0 0.0
    %2365 = vmatpush1.msra.mxu0 0.0
    %2366 = vmatprep.subr.mxu0 0.0
    %2367 = vmatpush1.msra.mxu0 0.0
    %2368 = vmatprep.subr.mxu0 0.0
    %2369 = vmatpush1.msra.mxu0 0.0
    %2370 = vmatprep.subr.mxu0 0.0
    %2371 = vmatpush1.msra.mxu0 0.0
    %2372 = vmatprep.mubr.f32.mxu0 %v2227
    %2373 = vmatmul.mubr.f32.gmra.mrb[0].mxu0 %v1828
    %v2374 = vpop.f32.mrb[0].mxu0
    %v2375 = vadd.f32 %v2217, %v2374
    %v2376 = vpop.f32.mrb[0].mxu0
    %v2377 = vadd.f32 %v2219, %v2376
    %2378 = vmatprep.mubr.f32.mxu0 %v2229
    %2379 = vmatmul.mubr.f32.gmra.mrb[0].mxu0 %v1830
    %v2380 = vpop.f32.mrb[0].mxu0
    %v2381 = vadd.f32 %v2223, %v2380
    %v2382 = vpop.f32.mrb[0].mxu0
    %v2383 = vadd.f32 %v2225, %v2382
    %2384 = vdwg.mxu0
    %s2385 = scalar_lea.vmem [#allocation8], 1792
    %v2386 = vld [vmem:[%s2385] sm:$0xff]
    %v2387 = vld [vmem:[%s2385 + $0x8] sm:$0xff]
    %v2388 = vld [vmem:[%s2385 + $0x10] sm:$0xff]
    %v2389 = vld [vmem:[%s2385 + $0x18] sm:$0xff]
    %v2390 = vld [vmem:[%s2385 + $0x20] sm:$0xff]
    %v2391 = vld [vmem:[%s2385 + $0x28] sm:$0xff]
    %v2392 = vld [vmem:[%s2385 + $0x30] sm:$0xff]
    %v2393 = vld [vmem:[%s2385 + $0x38] sm:$0xff]
    %v2394 = vld [vmem:[%s2385 + $0x40] sm:$0xff]
    %v2395 = vld [vmem:[%s2385 + $0x48] sm:$0xff]
    %v2396 = vld [vmem:[%s2385 + $0x50] sm:$0xff]
    %v2397 = vld [vmem:[%s2385 + $0x58] sm:$0xff]
    %v2398 = vld [vmem:[%s2385 + $0x60] sm:$0xff]
    %v2399 = vld [vmem:[%s2385 + $0x68] sm:$0xff]
    %v2400 = vld [vmem:[%s2385 + $0x70] sm:$0xff]
    %v2401 = vld [vmem:[%s2385 + $0x78] sm:$0xff]
    %v2402 = vld [vmem:[%s2385 + $0x80] sm:$0xff]
    %v2403 = vld [vmem:[%s2385 + $0x88] sm:$0xff]
    %v2404 = vld [vmem:[%s2385 + $0x90] sm:$0xff]
    %v2405 = vld [vmem:[%s2385 + $0x98] sm:$0xff]
    %v2406 = vld [vmem:[%s2385 + $0xa0] sm:$0xff]
    %v2407 = vld [vmem:[%s2385 + $0xa8] sm:$0xff]
    %v2408 = vld [vmem:[%s2385 + $0xb0] sm:$0xff]
    %v2409 = vld [vmem:[%s2385 + $0xb8] sm:$0xff]
    %v2410 = vld [vmem:[%s2385 + $0xc0] sm:$0xff]
    %v2411 = vld [vmem:[%s2385 + $0xc8] sm:$0xff]
    %v2412 = vld [vmem:[%s2385 + $0xd0] sm:$0xff]
    %v2413 = vld [vmem:[%s2385 + $0xd8] sm:$0xff]
    %v2414 = vld [vmem:[%s2385 + $0xe0] sm:$0xff]
    %v2415 = vld [vmem:[%s2385 + $0xe8] sm:$0xff]
    %v2416 = vld [vmem:[%s2385 + $0xf0] sm:$0xff]
    %v2417 = vld [vmem:[%s2385 + $0xf8] sm:$0xff]
    %v2418 = vld [vmem:[%s2385 + $0x100] sm:$0xff]
    %v2419 = vld [vmem:[%s2385 + $0x108] sm:$0xff]
    %v2420 = vld [vmem:[%s2385 + $0x110] sm:$0xff]
    %v2421 = vld [vmem:[%s2385 + $0x118] sm:$0xff]
    %v2422 = vld [vmem:[%s2385 + $0x120] sm:$0xff]
    %v2423 = vld [vmem:[%s2385 + $0x128] sm:$0xff]
    %v2424 = vld [vmem:[%s2385 + $0x130] sm:$0xff]
    %v2425 = vld [vmem:[%s2385 + $0x138] sm:$0xff]
    %v2426 = vld [vmem:[%s2385 + $0x140] sm:$0xff]
    %v2427 = vld [vmem:[%s2385 + $0x148] sm:$0xff]
    %v2428 = vld [vmem:[%s2385 + $0x150] sm:$0xff]
    %v2429 = vld [vmem:[%s2385 + $0x158] sm:$0xff]
    %v2430 = vld [vmem:[%s2385 + $0x160] sm:$0xff]
    %v2431 = vld [vmem:[%s2385 + $0x168] sm:$0xff]
    %v2432 = vld [vmem:[%s2385 + $0x170] sm:$0xff]
    %v2433 = vld [vmem:[%s2385 + $0x178] sm:$0xff]
    %v2434 = vld [vmem:[%s2385 + $0x180] sm:$0xff]
    %v2435 = vld [vmem:[%s2385 + $0x188] sm:$0xff]
    %v2436 = vld [vmem:[%s2385 + $0x190] sm:$0xff]
    %v2437 = vld [vmem:[%s2385 + $0x198] sm:$0xff]
    %v2438 = vld [vmem:[%s2385 + $0x1a0] sm:$0xff]
    %v2439 = vld [vmem:[%s2385 + $0x1a8] sm:$0xff]
    %v2440 = vld [vmem:[%s2385 + $0x1b0] sm:$0xff]
    %v2441 = vld [vmem:[%s2385 + $0x1b8] sm:$0xff]
    %v2442 = vld [vmem:[%s2385 + $0x1c0] sm:$0xff]
    %v2443 = vld [vmem:[%s2385 + $0x1c8] sm:$0xff]
    %v2444 = vld [vmem:[%s2385 + $0x1d0] sm:$0xff]
    %v2445 = vld [vmem:[%s2385 + $0x1d8] sm:$0xff]
    %v2446 = vld [vmem:[%s2385 + $0x1e0] sm:$0xff]
    %v2447 = vld [vmem:[%s2385 + $0x1e8] sm:$0xff]
    %v2448 = vld [vmem:[%s2385 + $0x1f0] sm:$0xff]
    %v2449 = vld [vmem:[%s2385 + $0x1f8] sm:$0xff]
    %v2450 = vld [vmem:[%s2385 + $0x200] sm:$0xff]
    %v2451 = vld [vmem:[%s2385 + $0x208] sm:$0xff]
    %v2452 = vld [vmem:[%s2385 + $0x210] sm:$0xff]
    %v2453 = vld [vmem:[%s2385 + $0x218] sm:$0xff]
    %v2454 = vld [vmem:[%s2385 + $0x220] sm:$0xff]
    %v2455 = vld [vmem:[%s2385 + $0x228] sm:$0xff]
    %v2456 = vld [vmem:[%s2385 + $0x230] sm:$0xff]
    %v2457 = vld [vmem:[%s2385 + $0x238] sm:$0xff]
    %v2458 = vld [vmem:[%s2385 + $0x240] sm:$0xff]
    %v2459 = vld [vmem:[%s2385 + $0x248] sm:$0xff]
    %v2460 = vld [vmem:[%s2385 + $0x250] sm:$0xff]
    %v2461 = vld [vmem:[%s2385 + $0x258] sm:$0xff]
    %v2462 = vld [vmem:[%s2385 + $0x260] sm:$0xff]
    %v2463 = vld [vmem:[%s2385 + $0x268] sm:$0xff]
    %v2464 = vld [vmem:[%s2385 + $0x270] sm:$0xff]
    %v2465 = vld [vmem:[%s2385 + $0x278] sm:$0xff]
    %v2466 = vld [vmem:[%s2385 + $0x280] sm:$0xff]
    %v2467 = vld [vmem:[%s2385 + $0x288] sm:$0xff]
    %v2468 = vld [vmem:[%s2385 + $0x290] sm:$0xff]
    %v2469 = vld [vmem:[%s2385 + $0x298] sm:$0xff]
    %v2470 = vld [vmem:[%s2385 + $0x2a0] sm:$0xff]
    %v2471 = vld [vmem:[%s2385 + $0x2a8] sm:$0xff]
    %v2472 = vld [vmem:[%s2385 + $0x2b0] sm:$0xff]
    %v2473 = vld [vmem:[%s2385 + $0x2b8] sm:$0xff]
    %v2474 = vld [vmem:[%s2385 + $0x2c0] sm:$0xff]
    %v2475 = vld [vmem:[%s2385 + $0x2c8] sm:$0xff]
    %v2476 = vld [vmem:[%s2385 + $0x2d0] sm:$0xff]
    %v2477 = vld [vmem:[%s2385 + $0x2d8] sm:$0xff]
    %v2478 = vld [vmem:[%s2385 + $0x2e0] sm:$0xff]
    %v2479 = vld [vmem:[%s2385 + $0x2e8] sm:$0xff]
    %v2480 = vld [vmem:[%s2385 + $0x2f0] sm:$0xff]
    %v2481 = vld [vmem:[%s2385 + $0x2f8] sm:$0xff]
    %v2482 = vld [vmem:[%s2385 + $0x300] sm:$0xff]
    %v2483 = vld [vmem:[%s2385 + $0x308] sm:$0xff]
    %v2484 = vld [vmem:[%s2385 + $0x310] sm:$0xff]
    %v2485 = vld [vmem:[%s2385 + $0x318] sm:$0xff]
    %v2486 = vld [vmem:[%s2385 + $0x320] sm:$0xff]
    %v2487 = vld [vmem:[%s2385 + $0x328] sm:$0xff]
    %v2488 = vld [vmem:[%s2385 + $0x330] sm:$0xff]
    %v2489 = vld [vmem:[%s2385 + $0x338] sm:$0xff]
    %v2490 = vld [vmem:[%s2385 + $0x340] sm:$0xff]
    %v2491 = vld [vmem:[%s2385 + $0x348] sm:$0xff]
    %v2492 = vld [vmem:[%s2385 + $0x350] sm:$0xff]
    %v2493 = vld [vmem:[%s2385 + $0x358] sm:$0xff]
    %v2494 = vld [vmem:[%s2385 + $0x360] sm:$0xff]
    %v2495 = vld [vmem:[%s2385 + $0x368] sm:$0xff]
    %v2496 = vld [vmem:[%s2385 + $0x370] sm:$0xff]
    %v2497 = vld [vmem:[%s2385 + $0x378] sm:$0xff]
    %v2498 = vrot.slane %v1828, 2
    %v2499 = vrot.slane %v1830, 2
    %v2500 = vsel %vm642, %v2498, %v2499
    %v2501 = vrot.slane %v1829, 2
    %v2502 = vrot.slane %v1831, 2
    %v2503 = vsel %vm642, %v2501, %v2502
    %v2506 = vsel %vm174, %v2503, 0
    %v2508 = vsel %vm174, %v2502, 0
    %2510 = vmatprep.subr.mxu0 %v2387
    %2511 = vmatpush1.msra.mxu0 %v2386
    %2512 = vmatprep.subr.mxu0 %v2391
    %2513 = vmatpush1.msra.mxu0 %v2390
    %2514 = vmatprep.subr.mxu0 %v2395
    %2515 = vmatpush1.msra.mxu0 %v2394
    %2516 = vmatprep.subr.mxu0 %v2399
    %2517 = vmatpush1.msra.mxu0 %v2398
    %2518 = vmatprep.subr.mxu0 %v2403
    %2519 = vmatpush1.msra.mxu0 %v2402
    %2520 = vmatprep.subr.mxu0 %v2407
    %2521 = vmatpush1.msra.mxu0 %v2406
    %2522 = vmatprep.subr.mxu0 %v2411
    %2523 = vmatpush1.msra.mxu0 %v2410
    %2524 = vmatprep.subr.mxu0 %v2415
    %2525 = vmatpush1.msra.mxu0 %v2414
    %2526 = vmatprep.subr.mxu0 %v2419
    %2527 = vmatpush1.msra.mxu0 %v2418
    %2528 = vmatprep.subr.mxu0 %v2423
    %2529 = vmatpush1.msra.mxu0 %v2422
    %2530 = vmatprep.subr.mxu0 %v2427
    %2531 = vmatpush1.msra.mxu0 %v2426
    %2532 = vmatprep.subr.mxu0 %v2431
    %2533 = vmatpush1.msra.mxu0 %v2430
    %2534 = vmatprep.subr.mxu0 %v2435
    %2535 = vmatpush1.msra.mxu0 %v2434
    %2536 = vmatprep.subr.mxu0 %v2439
    %2537 = vmatpush1.msra.mxu0 %v2438
    %2538 = vmatprep.subr.mxu0 %v2443
    %2539 = vmatpush1.msra.mxu0 %v2442
    %2540 = vmatprep.subr.mxu0 %v2447
    %2541 = vmatpush1.msra.mxu0 %v2446
    %2542 = vmatprep.subr.mxu0 %v2451
    %2543 = vmatpush1.msra.mxu0 %v2450
    %2544 = vmatprep.subr.mxu0 %v2455
    %2545 = vmatpush1.msra.mxu0 %v2454
    %2546 = vmatprep.subr.mxu0 %v2459
    %2547 = vmatpush1.msra.mxu0 %v2458
    %2548 = vmatprep.subr.mxu0 %v2463
    %2549 = vmatpush1.msra.mxu0 %v2462
    %2550 = vmatprep.subr.mxu0 %v2467
    %2551 = vmatpush1.msra.mxu0 %v2466
    %2552 = vmatprep.subr.mxu0 %v2471
    %2553 = vmatpush1.msra.mxu0 %v2470
    %2554 = vmatprep.subr.mxu0 %v2475
    %2555 = vmatpush1.msra.mxu0 %v2474
    %2556 = vmatprep.subr.mxu0 %v2479
    %2557 = vmatpush1.msra.mxu0 %v2478
    %2558 = vmatprep.subr.mxu0 %v2483
    %2559 = vmatpush1.msra.mxu0 %v2482
    %2560 = vmatprep.subr.mxu0 %v2487
    %2561 = vmatpush1.msra.mxu0 %v2486
    %2562 = vmatprep.subr.mxu0 %v2491
    %2563 = vmatpush1.msra.mxu0 %v2490
    %2564 = vmatprep.subr.mxu0 %v2495
    %2565 = vmatpush1.msra.mxu0 %v2494
    %2566 = vmatprep.subr.mxu0 0.0
    %2567 = vmatpush1.msra.mxu0 0.0
    %2568 = vmatprep.subr.mxu0 0.0
    %2569 = vmatpush1.msra.mxu0 0.0
    %2570 = vmatprep.subr.mxu0 0.0
    %2571 = vmatpush1.msra.mxu0 0.0
    %2572 = vmatprep.subr.mxu0 0.0
    %2573 = vmatpush1.msra.mxu0 0.0
    %2574 = vmatprep.mubr.f32.mxu0 %v2506
    %2575 = vmatmul.mubr.f32.gmra.mrb[0].mxu0 %v2500
    %v2576 = vpop.f32.mrb[0].mxu0
    %v2577 = vadd.f32 0.0, %v2576
    %v2578 = vpop.f32.mrb[0].mxu0
    %v2579 = vadd.f32 0.0, %v2578
    %2580 = vmatprep.mubr.f32.mxu0 %v2508
    %2581 = vmatmul.mubr.f32.gmra.mrb[0].mxu0 %v2499
    %v2582 = vpop.f32.mrb[0].mxu0
    %v2583 = vadd.f32 0.0, %v2582
    %v2584 = vpop.f32.mrb[0].mxu0
    %v2585 = vadd.f32 0.0, %v2584
    %2586 = vdwg.mxu0
    %2587 = vmatprep.subr.mxu0 %v2389
    %2588 = vmatpush1.msra.mxu0 %v2388
    %2589 = vmatprep.subr.mxu0 %v2393
    %2590 = vmatpush1.msra.mxu0 %v2392
    %2591 = vmatprep.subr.mxu0 %v2397
    %2592 = vmatpush1.msra.mxu0 %v2396
    %2593 = vmatprep.subr.mxu0 %v2401
    %2594 = vmatpush1.msra.mxu0 %v2400
    %2595 = vmatprep.subr.mxu0 %v2405
    %2596 = vmatpush1.msra.mxu0 %v2404
    %2597 = vmatprep.subr.mxu0 %v2409
    %2598 = vmatpush1.msra.mxu0 %v2408
    %2599 = vmatprep.subr.mxu0 %v2413
    %2600 = vmatpush1.msra.mxu0 %v2412
    %2601 = vmatprep.subr.mxu0 %v2417
    %2602 = vmatpush1.msra.mxu0 %v2416
    %2603 = vmatprep.subr.mxu0 %v2421
    %2604 = vmatpush1.msra.mxu0 %v2420
    %2605 = vmatprep.subr.mxu0 %v2425
    %2606 = vmatpush1.msra.mxu0 %v2424
    %2607 = vmatprep.subr.mxu0 %v2429
    %2608 = vmatpush1.msra.mxu0 %v2428
    %2609 = vmatprep.subr.mxu0 %v2433
    %2610 = vmatpush1.msra.mxu0 %v2432
    %2611 = vmatprep.subr.mxu0 %v2437
    %2612 = vmatpush1.msra.mxu0 %v2436
    %2613 = vmatprep.subr.mxu0 %v2441
    %2614 = vmatpush1.msra.mxu0 %v2440
    %2615 = vmatprep.subr.mxu0 %v2445
    %2616 = vmatpush1.msra.mxu0 %v2444
    %2617 = vmatprep.subr.mxu0 %v2449
    %2618 = vmatpush1.msra.mxu0 %v2448
    %2619 = vmatprep.subr.mxu0 %v2453
    %2620 = vmatpush1.msra.mxu0 %v2452
    %2621 = vmatprep.subr.mxu0 %v2457
    %2622 = vmatpush1.msra.mxu0 %v2456
    %2623 = vmatprep.subr.mxu0 %v2461
    %2624 = vmatpush1.msra.mxu0 %v2460
    %2625 = vmatprep.subr.mxu0 %v2465
    %2626 = vmatpush1.msra.mxu0 %v2464
    %2627 = vmatprep.subr.mxu0 %v2469
    %2628 = vmatpush1.msra.mxu0 %v2468
    %2629 = vmatprep.subr.mxu0 %v2473
    %2630 = vmatpush1.msra.mxu0 %v2472
    %2631 = vmatprep.subr.mxu0 %v2477
    %2632 = vmatpush1.msra.mxu0 %v2476
    %2633 = vmatprep.subr.mxu0 %v2481
    %2634 = vmatpush1.msra.mxu0 %v2480
    %2635 = vmatprep.subr.mxu0 %v2485
    %2636 = vmatpush1.msra.mxu0 %v2484
    %2637 = vmatprep.subr.mxu0 %v2489
    %2638 = vmatpush1.msra.mxu0 %v2488
    %2639 = vmatprep.subr.mxu0 %v2493
    %2640 = vmatpush1.msra.mxu0 %v2492
    %2641 = vmatprep.subr.mxu0 %v2497
    %2642 = vmatpush1.msra.mxu0 %v2496
    %2643 = vmatprep.subr.mxu0 0.0
    %2644 = vmatpush1.msra.mxu0 0.0
    %2645 = vmatprep.subr.mxu0 0.0
    %2646 = vmatpush1.msra.mxu0 0.0
    %2647 = vmatprep.subr.mxu0 0.0
    %2648 = vmatpush1.msra.mxu0 0.0
    %2649 = vmatprep.subr.mxu0 0.0
    %2650 = vmatpush1.msra.mxu0 0.0
    %2651 = vmatprep.mubr.f32.mxu0 %v2506
    %2652 = vmatmul.mubr.f32.gmra.mrb[0].mxu0 %v2500
    %v2653 = vpop.f32.mrb[0].mxu0
    %v2654 = vadd.f32 0.0, %v2653
    %v2655 = vpop.f32.mrb[0].mxu0
    %v2656 = vadd.f32 0.0, %v2655
    %2657 = vmatprep.mubr.f32.mxu0 %v2508
    %2658 = vmatmul.mubr.f32.gmra.mrb[0].mxu0 %v2499
    %v2659 = vpop.f32.mrb[0].mxu0
    %v2660 = vadd.f32 0.0, %v2659
    %v2661 = vpop.f32.mrb[0].mxu0
    %v2662 = vadd.f32 0.0, %v2661
    %2663 = vdwg.mxu0
    %v2664 = vadd.f32 %v2298, %v2577
    %v2665 = vadd.f32 %v2300, %v2579
    %v2666 = vadd.f32 %v2375, %v2654
    %v2667 = vadd.f32 %v2377, %v2656
    %v2668 = vadd.f32 %v2304, %v2583
    %v2669 = vadd.f32 %v2306, %v2585
    %v2670 = vadd.f32 %v2381, %v2660
    %v2671 = vadd.f32 %v2383, %v2662
    %v2672 = vld [vmem:[#allocation9] sm:$0xf]
    %v2674 = vlaneseq
    %v2675 = vshrl.u32 %v2674, 7
    %v2676 = vsub.s32 0, %v2675
    %v2677 = vrot.slane %v2672, %v2676
    %v2678 = vlaneseq
    %v2679 = vshrl.u32 %v2678, 7
    %v2680 = vsub.s32 1, %v2679
    %v2681 = vrot.slane %v2672, %v2680
    %v2682 = vlaneseq
    %v2683 = vshrl.u32 %v2682, 7
    %v2684 = vsub.s32 2, %v2683
    %v2685 = vrot.slane %v2672, %v2684
    %v2686 = vlaneseq
    %v2687 = vshrl.u32 %v2686, 7
    %v2688 = vsub.s32 3, %v2687
    %v2689 = vrot.slane %v2672, %v2688
    %v2694 = vadd.f32 %v2664, %v2677
    %v2695 = vadd.f32 %v2665, %v2681
    %v2696 = vadd.f32 %v2666, %v2685
    %v2697 = vadd.f32 %v2667, %v2689
    %v2698 = vadd.f32 %v2668, %v2677
    %v2699 = vadd.f32 %v2669, %v2681
    %v2700 = vadd.f32 %v2670, %v2685
    %v2701 = vadd.f32 %v2671, %v2689
    %v2702 = vmax.f32 %v2694, 0.0
    %v2703 = vmax.f32 %v2695, 0.0
    %v2704 = vmax.f32 %v2696, 0.0
    %v2705 = vmax.f32 %v2697, 0.0
    %v2706 = vmax.f32 %v2698, 0.0
    %v2707 = vmax.f32 %v2699, 0.0
    %v2708 = vmax.f32 %v2700, 0.0
    %v2709 = vmax.f32 %v2701, 0.0
    %v2710 = vld [vmem:[%s7] sm:$0x7f]
    %vm2711 = vcmask 113664
    %v2713 = vsel %vm2711, %v2710, 0
    %v2716 = vsel %vm642, %v2706, 0
    %v2719 = vsel %vm642, %v2707, 0
    %v2722 = vsel %vm642, %v2708, 0
    %v2725 = vsel %vm642, %v2709, 0
    %2727 = vmatprep.subr.mxu0 %v2703
    %2728 = vmatpush1.msra.mxu0 %v2702
    %2729 = vmatprep.subr.mxu0 %v2719
    %2730 = vmatpush1.msra.mxu0 %v2716
    %2731 = vmatprep.subr.mxu0 0.0
    %2732 = vmatpush1.msra.mxu0 0.0
    %2733 = vmatprep.subr.mxu0 0.0
    %2734 = vmatpush1.msra.mxu0 0.0
    %2735 = vmatprep.subr.mxu0 0.0
    %2736 = vmatpush1.msra.mxu0 0.0
    %2737 = vmatprep.subr.mxu0 0.0
    %2738 = vmatpush1.msra.mxu0 0.0
    %2739 = vmatprep.subr.mxu0 0.0
    %2740 = vmatpush1.msra.mxu0 0.0
    %2741 = vmatprep.subr.mxu0 0.0
    %2742 = vmatpush1.msra.mxu0 0.0
    %2743 = vmatprep.subr.mxu0 0.0
    %2744 = vmatpush1.msra.mxu0 0.0
    %2745 = vmatprep.subr.mxu0 0.0
    %2746 = vmatpush1.msra.mxu0 0.0
    %2747 = vmatprep.subr.mxu0 0.0
    %2748 = vmatpush1.msra.mxu0 0.0
    %2749 = vmatprep.subr.mxu0 0.0
    %2750 = vmatpush1.msra.mxu0 0.0
    %2751 = vmatprep.subr.mxu0 0.0
    %2752 = vmatpush1.msra.mxu0 0.0
    %2753 = vmatprep.subr.mxu0 0.0
    %2754 = vmatpush1.msra.mxu0 0.0
    %2755 = vmatprep.subr.mxu0 0.0
    %2756 = vmatpush1.msra.mxu0 0.0
    %2757 = vmatprep.subr.mxu0 0.0
    %2758 = vmatpush1.msra.mxu0 0.0
    %2759 = vmatprep.subr.mxu0 0.0
    %2760 = vmatpush1.msra.mxu0 0.0
    %2761 = vmatprep.subr.mxu0 0.0
    %2762 = vmatpush1.msra.mxu0 0.0
    %2763 = vmatprep.subr.mxu0 0.0
    %2764 = vmatpush1.msra.mxu0 0.0
    %2765 = vmatprep.subr.mxu0 0.0
    %2766 = vmatpush1.msra.mxu0 0.0
    %2767 = vmatprep.subr.mxu0 0.0
    %2768 = vmatpush1.msra.mxu0 0.0
    %2769 = vmatprep.subr.mxu0 0.0
    %2770 = vmatpush1.msra.mxu0 0.0
    %2771 = vmatprep.subr.mxu0 0.0
    %2772 = vmatpush1.msra.mxu0 0.0
    %2773 = vmatprep.subr.mxu0 0.0
    %2774 = vmatpush1.msra.mxu0 0.0
    %2775 = vmatprep.subr.mxu0 0.0
    %2776 = vmatpush1.msra.mxu0 0.0
    %2777 = vmatprep.subr.mxu0 0.0
    %2778 = vmatpush1.msra.mxu0 0.0
    %2779 = vmatprep.subr.mxu0 0.0
    %2780 = vmatpush1.msra.mxu0 0.0
    %2781 = vmatprep.subr.mxu0 0.0
    %2782 = vmatpush1.msra.mxu0 0.0
    %2783 = vmatprep.subr.mxu0 0.0
    %2784 = vmatpush1.msra.mxu0 0.0
    %2785 = vmatprep.subr.mxu0 0.0
    %2786 = vmatpush1.msra.mxu0 0.0
    %2787 = vmatprep.subr.mxu0 0.0
    %2788 = vmatpush1.msra.mxu0 0.0
    %2789 = vmatprep.subr.mxu0 0.0
    %2790 = vmatpush1.msra.mxu0 0.0
    %2791 = vmatprep.mubr.f32.mxu0 0.0
    %2792 = vmatmul.mubr.f32.gmra.mrb[0].mxu0 %v2713
    %v2793 = vpop.f32.mrb[0].mxu0
    %v2794 = vadd.f32 0.0, %v2793
    %v2795 = vpop.f32.mrb[0].mxu0
    %v2796 = vadd.f32 0.0, %v2795
    %2797 = vdwg.mxu0
    %2798 = vmatprep.subr.mxu0 %v2705
    %2799 = vmatpush1.msra.mxu0 %v2704
    %2800 = vmatprep.subr.mxu0 %v2725
    %2801 = vmatpush1.msra.mxu0 %v2722
    %2802 = vmatprep.subr.mxu0 0.0
    %2803 = vmatpush1.msra.mxu0 0.0
    %2804 = vmatprep.subr.mxu0 0.0
    %2805 = vmatpush1.msra.mxu0 0.0
    %2806 = vmatprep.subr.mxu0 0.0
    %2807 = vmatpush1.msra.mxu0 0.0
    %2808 = vmatprep.subr.mxu0 0.0
    %2809 = vmatpush1.msra.mxu0 0.0
    %2810 = vmatprep.subr.mxu0 0.0
    %2811 = vmatpush1.msra.mxu0 0.0
    %2812 = vmatprep.subr.mxu0 0.0
    %2813 = vmatpush1.msra.mxu0 0.0
    %2814 = vmatprep.subr.mxu0 0.0
    %2815 = vmatpush1.msra.mxu0 0.0
    %2816 = vmatprep.subr.mxu0 0.0
    %2817 = vmatpush1.msra.mxu0 0.0
    %2818 = vmatprep.subr.mxu0 0.0
    %2819 = vmatpush1.msra.mxu0 0.0
    %2820 = vmatprep.subr.mxu0 0.0
    %2821 = vmatpush1.msra.mxu0 0.0
    %2822 = vmatprep.subr.mxu0 0.0
    %2823 = vmatpush1.msra.mxu0 0.0
    %2824 = vmatprep.subr.mxu0 0.0
    %2825 = vmatpush1.msra.mxu0 0.0
    %2826 = vmatprep.subr.mxu0 0.0
    %2827 = vmatpush1.msra.mxu0 0.0
    %2828 = vmatprep.subr.mxu0 0.0
    %2829 = vmatpush1.msra.mxu0 0.0
    %2830 = vmatprep.subr.mxu0 0.0
    %2831 = vmatpush1.msra.mxu0 0.0
    %2832 = vmatprep.subr.mxu0 0.0
    %2833 = vmatpush1.msra.mxu0 0.0
    %2834 = vmatprep.subr.mxu0 0.0
    %2835 = vmatpush1.msra.mxu0 0.0
    %2836 = vmatprep.subr.mxu0 0.0
    %2837 = vmatpush1.msra.mxu0 0.0
    %2838 = vmatprep.subr.mxu0 0.0
    %2839 = vmatpush1.msra.mxu0 0.0
    %2840 = vmatprep.subr.mxu0 0.0
    %2841 = vmatpush1.msra.mxu0 0.0
    %2842 = vmatprep.subr.mxu0 0.0
    %2843 = vmatpush1.msra.mxu0 0.0
    %2844 = vmatprep.subr.mxu0 0.0
    %2845 = vmatpush1.msra.mxu0 0.0
    %2846 = vmatprep.subr.mxu0 0.0
    %2847 = vmatpush1.msra.mxu0 0.0
    %2848 = vmatprep.subr.mxu0 0.0
    %2849 = vmatpush1.msra.mxu0 0.0
    %2850 = vmatprep.subr.mxu0 0.0
    %2851 = vmatpush1.msra.mxu0 0.0
    %2852 = vmatprep.subr.mxu0 0.0
    %2853 = vmatpush1.msra.mxu0 0.0
    %2854 = vmatprep.subr.mxu0 0.0
    %2855 = vmatpush1.msra.mxu0 0.0
    %2856 = vmatprep.subr.mxu0 0.0
    %2857 = vmatpush1.msra.mxu0 0.0
    %2858 = vmatprep.subr.mxu0 0.0
    %2859 = vmatpush1.msra.mxu0 0.0
    %2860 = vmatprep.subr.mxu0 0.0
    %2861 = vmatpush1.msra.mxu0 0.0
    %2862 = vmatprep.mubr.f32.mxu0 0.0
    %2863 = vmatmul.mubr.f32.gmra.mrb[0].mxu0 %v2713
    %v2864 = vpop.f32.mrb[0].mxu0
    %v2865 = vadd.f32 0.0, %v2864
    %v2866 = vpop.f32.mrb[0].mxu0
    %v2867 = vadd.f32 0.0, %v2866
    %2868 = vdwg.mxu0
    %s2869 = scalar_lea.vmem %s7, 8
    %v2870 = vld [vmem:[%s2869] sm:$0x7f]
    %v2872 = vsel %vm2711, %v2870, 0
    %2874 = vmatprep.subr.mxu0 %v2703
    %2875 = vmatpush1.msra.mxu0 %v2702
    %2876 = vmatprep.subr.mxu0 %v2719
    %2877 = vmatpush1.msra.mxu0 %v2716
    %2878 = vmatprep.subr.mxu0 0.0
    %2879 = vmatpush1.msra.mxu0 0.0
    %2880 = vmatprep.subr.mxu0 0.0
    %2881 = vmatpush1.msra.mxu0 0.0
    %2882 = vmatprep.subr.mxu0 0.0
    %2883 = vmatpush1.msra.mxu0 0.0
    %2884 = vmatprep.subr.mxu0 0.0
    %2885 = vmatpush1.msra.mxu0 0.0
    %2886 = vmatprep.subr.mxu0 0.0
    %2887 = vmatpush1.msra.mxu0 0.0
    %2888 = vmatprep.subr.mxu0 0.0
    %2889 = vmatpush1.msra.mxu0 0.0
    %2890 = vmatprep.subr.mxu0 0.0
    %2891 = vmatpush1.msra.mxu0 0.0
    %2892 = vmatprep.subr.mxu0 0.0
    %2893 = vmatpush1.msra.mxu0 0.0
    %2894 = vmatprep.subr.mxu0 0.0
    %2895 = vmatpush1.msra.mxu0 0.0
    %2896 = vmatprep.subr.mxu0 0.0
    %2897 = vmatpush1.msra.mxu0 0.0
    %2898 = vmatprep.subr.mxu0 0.0
    %2899 = vmatpush1.msra.mxu0 0.0
    %2900 = vmatprep.subr.mxu0 0.0
    %2901 = vmatpush1.msra.mxu0 0.0
    %2902 = vmatprep.subr.mxu0 0.0
    %2903 = vmatpush1.msra.mxu0 0.0
    %2904 = vmatprep.subr.mxu0 0.0
    %2905 = vmatpush1.msra.mxu0 0.0
    %2906 = vmatprep.subr.mxu0 0.0
    %2907 = vmatpush1.msra.mxu0 0.0
    %2908 = vmatprep.subr.mxu0 0.0
    %2909 = vmatpush1.msra.mxu0 0.0
    %2910 = vmatprep.subr.mxu0 0.0
    %2911 = vmatpush1.msra.mxu0 0.0
    %2912 = vmatprep.subr.mxu0 0.0
    %2913 = vmatpush1.msra.mxu0 0.0
    %2914 = vmatprep.subr.mxu0 0.0
    %2915 = vmatpush1.msra.mxu0 0.0
    %2916 = vmatprep.subr.mxu0 0.0
    %2917 = vmatpush1.msra.mxu0 0.0
    %2918 = vmatprep.subr.mxu0 0.0
    %2919 = vmatpush1.msra.mxu0 0.0
    %2920 = vmatprep.subr.mxu0 0.0
    %2921 = vmatpush1.msra.mxu0 0.0
    %2922 = vmatprep.subr.mxu0 0.0
    %2923 = vmatpush1.msra.mxu0 0.0
    %2924 = vmatprep.subr.mxu0 0.0
    %2925 = vmatpush1.msra.mxu0 0.0
    %2926 = vmatprep.subr.mxu0 0.0
    %2927 = vmatpush1.msra.mxu0 0.0
    %2928 = vmatprep.subr.mxu0 0.0
    %2929 = vmatpush1.msra.mxu0 0.0
    %2930 = vmatprep.subr.mxu0 0.0
    %2931 = vmatpush1.msra.mxu0 0.0
    %2932 = vmatprep.subr.mxu0 0.0
    %2933 = vmatpush1.msra.mxu0 0.0
    %2934 = vmatprep.subr.mxu0 0.0
    %2935 = vmatpush1.msra.mxu0 0.0
    %2936 = vmatprep.subr.mxu0 0.0
    %2937 = vmatpush1.msra.mxu0 0.0
    %2938 = vmatprep.mubr.f32.mxu0 0.0
    %2939 = vmatmul.mubr.f32.gmra.mrb[0].mxu0 %v2872
    %v2940 = vpop.f32.mrb[0].mxu0
    %v2941 = vadd.f32 0.0, %v2940
    %v2942 = vpop.f32.mrb[0].mxu0
    %v2943 = vadd.f32 0.0, %v2942
    %2944 = vdwg.mxu0
    %2945 = vmatprep.subr.mxu0 %v2705
    %2946 = vmatpush1.msra.mxu0 %v2704
    %2947 = vmatprep.subr.mxu0 %v2725
    %2948 = vmatpush1.msra.mxu0 %v2722
    %2949 = vmatprep.subr.mxu0 0.0
    %2950 = vmatpush1.msra.mxu0 0.0
    %2951 = vmatprep.subr.mxu0 0.0
    %2952 = vmatpush1.msra.mxu0 0.0
    %2953 = vmatprep.subr.mxu0 0.0
    %2954 = vmatpush1.msra.mxu0 0.0
    %2955 = vmatprep.subr.mxu0 0.0
    %2956 = vmatpush1.msra.mxu0 0.0
    %2957 = vmatprep.subr.mxu0 0.0
    %2958 = vmatpush1.msra.mxu0 0.0
    %2959 = vmatprep.subr.mxu0 0.0
    %2960 = vmatpush1.msra.mxu0 0.0
    %2961 = vmatprep.subr.mxu0 0.0
    %2962 = vmatpush1.msra.mxu0 0.0
    %2963 = vmatprep.subr.mxu0 0.0
    %2964 = vmatpush1.msra.mxu0 0.0
    %2965 = vmatprep.subr.mxu0 0.0
    %2966 = vmatpush1.msra.mxu0 0.0
    %2967 = vmatprep.subr.mxu0 0.0
    %2968 = vmatpush1.msra.mxu0 0.0
    %2969 = vmatprep.subr.mxu0 0.0
    %2970 = vmatpush1.msra.mxu0 0.0
    %2971 = vmatprep.subr.mxu0 0.0
    %2972 = vmatpush1.msra.mxu0 0.0
    %2973 = vmatprep.subr.mxu0 0.0
    %2974 = vmatpush1.msra.mxu0 0.0
    %2975 = vmatprep.subr.mxu0 0.0
    %2976 = vmatpush1.msra.mxu0 0.0
    %2977 = vmatprep.subr.mxu0 0.0
    %2978 = vmatpush1.msra.mxu0 0.0
    %2979 = vmatprep.subr.mxu0 0.0
    %2980 = vmatpush1.msra.mxu0 0.0
    %2981 = vmatprep.subr.mxu0 0.0
    %2982 = vmatpush1.msra.mxu0 0.0
    %2983 = vmatprep.subr.mxu0 0.0
    %2984 = vmatpush1.msra.mxu0 0.0
    %2985 = vmatprep.subr.mxu0 0.0
    %2986 = vmatpush1.msra.mxu0 0.0
    %2987 = vmatprep.subr.mxu0 0.0
    %2988 = vmatpush1.msra.mxu0 0.0
    %2989 = vmatprep.subr.mxu0 0.0
    %2990 = vmatpush1.msra.mxu0 0.0
    %2991 = vmatprep.subr.mxu0 0.0
    %2992 = vmatpush1.msra.mxu0 0.0
    %2993 = vmatprep.subr.mxu0 0.0
    %2994 = vmatpush1.msra.mxu0 0.0
    %2995 = vmatprep.subr.mxu0 0.0
    %2996 = vmatpush1.msra.mxu0 0.0
    %2997 = vmatprep.subr.mxu0 0.0
    %2998 = vmatpush1.msra.mxu0 0.0
    %2999 = vmatprep.subr.mxu0 0.0
    %3000 = vmatpush1.msra.mxu0 0.0
    %3001 = vmatprep.subr.mxu0 0.0
    %3002 = vmatpush1.msra.mxu0 0.0
    %3003 = vmatprep.subr.mxu0 0.0
    %3004 = vmatpush1.msra.mxu0 0.0
    %3005 = vmatprep.subr.mxu0 0.0
    %3006 = vmatpush1.msra.mxu0 0.0
    %3007 = vmatprep.subr.mxu0 0.0
    %3008 = vmatpush1.msra.mxu0 0.0
    %3009 = vmatprep.mubr.f32.mxu0 0.0
    %3010 = vmatmul.mubr.f32.gmra.mrb[0].mxu0 %v2872
    %v3011 = vpop.f32.mrb[0].mxu0
    %v3012 = vadd.f32 0.0, %v3011
    %v3013 = vpop.f32.mrb[0].mxu0
    %v3014 = vadd.f32 0.0, %v3013
    %3015 = vdwg.mxu0
    %v3016 = vmax.f32 %v2794, %v2941
    %v3017 = vmax.f32 %v2796, %v2943
    %v3018 = vmax.f32 %v2865, %v3012
    %v3019 = vmax.f32 %v2867, %v3014
    %v3020 = vld [vmem:[#allocation12] sm:$0xff]
    %v3021 = vld [vmem:[#allocation12 + $0x8] sm:$0xff]
    %v3022 = vld [vmem:[#allocation12 + $0x10] sm:$0xff]
    %v3023 = vld [vmem:[#allocation12 + $0x18] sm:$0xff]
    %v3024 = vld [vmem:[#allocation12 + $0x20] sm:$0xff]
    %v3025 = vld [vmem:[#allocation12 + $0x28] sm:$0xff]
    %v3026 = vld [vmem:[#allocation12 + $0x30] sm:$0xff]
    %v3027 = vld [vmem:[#allocation12 + $0x38] sm:$0xff]
    %v3028 = vld [vmem:[#allocation12 + $0x40] sm:$0xff]
    %v3029 = vld [vmem:[#allocation12 + $0x48] sm:$0xff]
    %v3030 = vld [vmem:[#allocation12 + $0x50] sm:$0xff]
    %v3031 = vld [vmem:[#allocation12 + $0x58] sm:$0xff]
    %v3032 = vld [vmem:[#allocation12 + $0x60] sm:$0xff]
    %v3033 = vld [vmem:[#allocation12 + $0x68] sm:$0xff]
    %v3034 = vld [vmem:[#allocation12 + $0x70] sm:$0xff]
    %v3035 = vld [vmem:[#allocation12 + $0x78] sm:$0xff]
    %v3036 = vld [vmem:[#allocation12 + $0x80] sm:$0xff]
    %v3037 = vld [vmem:[#allocation12 + $0x88] sm:$0xff]
    %v3038 = vld [vmem:[#allocation12 + $0x90] sm:$0xff]
    %v3039 = vld [vmem:[#allocation12 + $0x98] sm:$0xff]
    %v3040 = vld [vmem:[#allocation12 + $0xa0] sm:$0xff]
    %v3041 = vld [vmem:[#allocation12 + $0xa8] sm:$0xff]
    %v3042 = vld [vmem:[#allocation12 + $0xb0] sm:$0xff]
    %v3043 = vld [vmem:[#allocation12 + $0xb8] sm:$0xff]
    %v3044 = vld [vmem:[#allocation12 + $0xc0] sm:$0xff]
    %v3045 = vld [vmem:[#allocation12 + $0xc8] sm:$0xff]
    %v3046 = vld [vmem:[#allocation12 + $0xd0] sm:$0xff]
    %v3047 = vld [vmem:[#allocation12 + $0xd8] sm:$0xff]
    %v3048 = vld [vmem:[#allocation12 + $0xe0] sm:$0xff]
    %v3049 = vld [vmem:[#allocation12 + $0xe8] sm:$0xff]
    %v3050 = vld [vmem:[#allocation12 + $0xf0] sm:$0xff]
    %v3051 = vld [vmem:[#allocation12 + $0xf8] sm:$0xff]
    %v3052 = vld [vmem:[#allocation12 + $0x100] sm:$0xff]
    %v3053 = vld [vmem:[#allocation12 + $0x108] sm:$0xff]
    %v3054 = vld [vmem:[#allocation12 + $0x110] sm:$0xff]
    %v3055 = vld [vmem:[#allocation12 + $0x118] sm:$0xff]
    %v3056 = vld [vmem:[#allocation12 + $0x120] sm:$0xff]
    %v3057 = vld [vmem:[#allocation12 + $0x128] sm:$0xff]
    %v3058 = vld [vmem:[#allocation12 + $0x130] sm:$0xff]
    %v3059 = vld [vmem:[#allocation12 + $0x138] sm:$0xff]
    %v3060 = vld [vmem:[#allocation12 + $0x140] sm:$0xff]
    %v3061 = vld [vmem:[#allocation12 + $0x148] sm:$0xff]
    %v3062 = vld [vmem:[#allocation12 + $0x150] sm:$0xff]
    %v3063 = vld [vmem:[#allocation12 + $0x158] sm:$0xff]
    %v3064 = vld [vmem:[#allocation12 + $0x160] sm:$0xff]
    %v3065 = vld [vmem:[#allocation12 + $0x168] sm:$0xff]
    %v3066 = vld [vmem:[#allocation12 + $0x170] sm:$0xff]
    %v3067 = vld [vmem:[#allocation12 + $0x178] sm:$0xff]
    %v3068 = vld [vmem:[#allocation12 + $0x180] sm:$0xff]
    %v3069 = vld [vmem:[#allocation12 + $0x188] sm:$0xff]
    %v3070 = vld [vmem:[#allocation12 + $0x190] sm:$0xff]
    %v3071 = vld [vmem:[#allocation12 + $0x198] sm:$0xff]
    %v3072 = vld [vmem:[#allocation12 + $0x1a0] sm:$0xff]
    %v3073 = vld [vmem:[#allocation12 + $0x1a8] sm:$0xff]
    %v3074 = vld [vmem:[#allocation12 + $0x1b0] sm:$0xff]
    %v3075 = vld [vmem:[#allocation12 + $0x1b8] sm:$0xff]
    %v3076 = vld [vmem:[#allocation12 + $0x1c0] sm:$0xff]
    %v3077 = vld [vmem:[#allocation12 + $0x1c8] sm:$0xff]
    %v3078 = vld [vmem:[#allocation12 + $0x1d0] sm:$0xff]
    %v3079 = vld [vmem:[#allocation12 + $0x1d8] sm:$0xff]
    %v3080 = vld [vmem:[#allocation12 + $0x1e0] sm:$0xff]
    %v3081 = vld [vmem:[#allocation12 + $0x1e8] sm:$0xff]
    %v3082 = vld [vmem:[#allocation12 + $0x1f0] sm:$0xff]
    %v3083 = vld [vmem:[#allocation12 + $0x1f8] sm:$0xff]
    %v3084 = vld [vmem:[#allocation12 + $0x200] sm:$0xff]
    %v3085 = vld [vmem:[#allocation12 + $0x208] sm:$0xff]
    %v3086 = vld [vmem:[#allocation12 + $0x210] sm:$0xff]
    %v3087 = vld [vmem:[#allocation12 + $0x218] sm:$0xff]
    %v3088 = vld [vmem:[#allocation12 + $0x220] sm:$0xff]
    %v3089 = vld [vmem:[#allocation12 + $0x228] sm:$0xff]
    %v3090 = vld [vmem:[#allocation12 + $0x230] sm:$0xff]
    %v3091 = vld [vmem:[#allocation12 + $0x238] sm:$0xff]
    %v3092 = vld [vmem:[#allocation12 + $0x240] sm:$0xff]
    %v3093 = vld [vmem:[#allocation12 + $0x248] sm:$0xff]
    %v3094 = vld [vmem:[#allocation12 + $0x250] sm:$0xff]
    %v3095 = vld [vmem:[#allocation12 + $0x258] sm:$0xff]
    %v3096 = vld [vmem:[#allocation12 + $0x260] sm:$0xff]
    %v3097 = vld [vmem:[#allocation12 + $0x268] sm:$0xff]
    %v3098 = vld [vmem:[#allocation12 + $0x270] sm:$0xff]
    %v3099 = vld [vmem:[#allocation12 + $0x278] sm:$0xff]
    %v3100 = vld [vmem:[#allocation12 + $0x280] sm:$0xff]
    %v3101 = vld [vmem:[#allocation12 + $0x288] sm:$0xff]
    %v3102 = vld [vmem:[#allocation12 + $0x290] sm:$0xff]
    %v3103 = vld [vmem:[#allocation12 + $0x298] sm:$0xff]
    %v3104 = vld [vmem:[#allocation12 + $0x2a0] sm:$0xff]
    %v3105 = vld [vmem:[#allocation12 + $0x2a8] sm:$0xff]
    %v3106 = vld [vmem:[#allocation12 + $0x2b0] sm:$0xff]
    %v3107 = vld [vmem:[#allocation12 + $0x2b8] sm:$0xff]
    %v3108 = vld [vmem:[#allocation12 + $0x2c0] sm:$0xff]
    %v3109 = vld [vmem:[#allocation12 + $0x2c8] sm:$0xff]
    %v3110 = vld [vmem:[#allocation12 + $0x2d0] sm:$0xff]
    %v3111 = vld [vmem:[#allocation12 + $0x2d8] sm:$0xff]
    %v3112 = vld [vmem:[#allocation12 + $0x2e0] sm:$0xff]
    %v3113 = vld [vmem:[#allocation12 + $0x2e8] sm:$0xff]
    %v3114 = vld [vmem:[#allocation12 + $0x2f0] sm:$0xff]
    %v3115 = vld [vmem:[#allocation12 + $0x2f8] sm:$0xff]
    %v3116 = vld [vmem:[#allocation12 + $0x300] sm:$0xff]
    %v3117 = vld [vmem:[#allocation12 + $0x308] sm:$0xff]
    %v3118 = vld [vmem:[#allocation12 + $0x310] sm:$0xff]
    %v3119 = vld [vmem:[#allocation12 + $0x318] sm:$0xff]
    %v3120 = vld [vmem:[#allocation12 + $0x320] sm:$0xff]
    %v3121 = vld [vmem:[#allocation12 + $0x328] sm:$0xff]
    %v3122 = vld [vmem:[#allocation12 + $0x330] sm:$0xff]
    %v3123 = vld [vmem:[#allocation12 + $0x338] sm:$0xff]
    %v3124 = vld [vmem:[#allocation12 + $0x340] sm:$0xff]
    %v3125 = vld [vmem:[#allocation12 + $0x348] sm:$0xff]
    %v3126 = vld [vmem:[#allocation12 + $0x350] sm:$0xff]
    %v3127 = vld [vmem:[#allocation12 + $0x358] sm:$0xff]
    %v3128 = vld [vmem:[#allocation12 + $0x360] sm:$0xff]
    %v3129 = vld [vmem:[#allocation12 + $0x368] sm:$0xff]
    %v3130 = vld [vmem:[#allocation12 + $0x370] sm:$0xff]
    %v3131 = vld [vmem:[#allocation12 + $0x378] sm:$0xff]
    %v3133 = vsel %vm1375, %v3019, 0
    %3135 = vmatprep.subr.mxu0 %v3021
    %3136 = vmatpush1.msra.mxu0 %v3020
    %3137 = vmatprep.subr.mxu0 %v3023
    %3138 = vmatpush1.msra.mxu0 %v3022
    %3139 = vmatprep.subr.mxu0 %v3025
    %3140 = vmatpush1.msra.mxu0 %v3024
    %3141 = vmatprep.subr.mxu0 %v3027
    %3142 = vmatpush1.msra.mxu0 %v3026
    %3143 = vmatprep.subr.mxu0 %v3029
    %3144 = vmatpush1.msra.mxu0 %v3028
    %3145 = vmatprep.subr.mxu0 %v3031
    %3146 = vmatpush1.msra.mxu0 %v3030
    %3147 = vmatprep.subr.mxu0 %v3033
    %3148 = vmatpush1.msra.mxu0 %v3032
    %3149 = vmatprep.subr.mxu0 %v3035
    %3150 = vmatpush1.msra.mxu0 %v3034
    %3151 = vmatprep.subr.mxu0 %v3037
    %3152 = vmatpush1.msra.mxu0 %v3036
    %3153 = vmatprep.subr.mxu0 %v3039
    %3154 = vmatpush1.msra.mxu0 %v3038
    %3155 = vmatprep.subr.mxu0 %v3041
    %3156 = vmatpush1.msra.mxu0 %v3040
    %3157 = vmatprep.subr.mxu0 %v3043
    %3158 = vmatpush1.msra.mxu0 %v3042
    %3159 = vmatprep.subr.mxu0 %v3045
    %3160 = vmatpush1.msra.mxu0 %v3044
    %3161 = vmatprep.subr.mxu0 %v3047
    %3162 = vmatpush1.msra.mxu0 %v3046
    %3163 = vmatprep.subr.mxu0 %v3049
    %3164 = vmatpush1.msra.mxu0 %v3048
    %3165 = vmatprep.subr.mxu0 %v3051
    %3166 = vmatpush1.msra.mxu0 %v3050
    %3167 = vmatprep.subr.mxu0 %v3053
    %3168 = vmatpush1.msra.mxu0 %v3052
    %3169 = vmatprep.subr.mxu0 %v3055
    %3170 = vmatpush1.msra.mxu0 %v3054
    %3171 = vmatprep.subr.mxu0 %v3057
    %3172 = vmatpush1.msra.mxu0 %v3056
    %3173 = vmatprep.subr.mxu0 %v3059
    %3174 = vmatpush1.msra.mxu0 %v3058
    %3175 = vmatprep.subr.mxu0 %v3061
    %3176 = vmatpush1.msra.mxu0 %v3060
    %3177 = vmatprep.subr.mxu0 %v3063
    %3178 = vmatpush1.msra.mxu0 %v3062
    %3179 = vmatprep.subr.mxu0 %v3065
    %3180 = vmatpush1.msra.mxu0 %v3064
    %3181 = vmatprep.subr.mxu0 %v3067
    %3182 = vmatpush1.msra.mxu0 %v3066
    %3183 = vmatprep.subr.mxu0 %v3069
    %3184 = vmatpush1.msra.mxu0 %v3068
    %3185 = vmatprep.subr.mxu0 %v3071
    %3186 = vmatpush1.msra.mxu0 %v3070
    %3187 = vmatprep.subr.mxu0 %v3073
    %3188 = vmatpush1.msra.mxu0 %v3072
    %3189 = vmatprep.subr.mxu0 %v3075
    %3190 = vmatpush1.msra.mxu0 %v3074
    %3191 = vmatprep.subr.mxu0 %v3077
    %3192 = vmatpush1.msra.mxu0 %v3076
    %3193 = vmatprep.subr.mxu0 %v3079
    %3194 = vmatpush1.msra.mxu0 %v3078
    %3195 = vmatprep.subr.mxu0 %v3081
    %3196 = vmatpush1.msra.mxu0 %v3080
    %3197 = vmatprep.subr.mxu0 %v3083
    %3198 = vmatpush1.msra.mxu0 %v3082
    %3199 = vmatprep.mubr.f32.mxu0 %v3017
    %3200 = vmatmul.mubr.f32.gmra.mrb[0].mxu0 %v3016
    %v3201 = vpop.f32.mrb[0].mxu0
    %v3202 = vadd.f32 0.0, %v3201
    %v3203 = vpop.f32.mrb[0].mxu0
    %v3204 = vadd.f32 0.0, %v3203
    %3205 = vdwg.mxu0
    %3206 = vmatprep.subr.mxu0 %v3085
    %3207 = vmatpush1.msra.mxu0 %v3084
    %3208 = vmatprep.subr.mxu0 %v3087
    %3209 = vmatpush1.msra.mxu0 %v3086
    %3210 = vmatprep.subr.mxu0 %v3089
    %3211 = vmatpush1.msra.mxu0 %v3088
    %3212 = vmatprep.subr.mxu0 %v3091
    %3213 = vmatpush1.msra.mxu0 %v3090
    %3214 = vmatprep.subr.mxu0 %v3093
    %3215 = vmatpush1.msra.mxu0 %v3092
    %3216 = vmatprep.subr.mxu0 %v3095
    %3217 = vmatpush1.msra.mxu0 %v3094
    %3218 = vmatprep.subr.mxu0 %v3097
    %3219 = vmatpush1.msra.mxu0 %v3096
    %3220 = vmatprep.subr.mxu0 %v3099
    %3221 = vmatpush1.msra.mxu0 %v3098
    %3222 = vmatprep.subr.mxu0 %v3101
    %3223 = vmatpush1.msra.mxu0 %v3100
    %3224 = vmatprep.subr.mxu0 %v3103
    %3225 = vmatpush1.msra.mxu0 %v3102
    %3226 = vmatprep.subr.mxu0 %v3105
    %3227 = vmatpush1.msra.mxu0 %v3104
    %3228 = vmatprep.subr.mxu0 %v3107
    %3229 = vmatpush1.msra.mxu0 %v3106
    %3230 = vmatprep.subr.mxu0 %v3109
    %3231 = vmatpush1.msra.mxu0 %v3108
    %3232 = vmatprep.subr.mxu0 %v3111
    %3233 = vmatpush1.msra.mxu0 %v3110
    %3234 = vmatprep.subr.mxu0 %v3113
    %3235 = vmatpush1.msra.mxu0 %v3112
    %3236 = vmatprep.subr.mxu0 %v3115
    %3237 = vmatpush1.msra.mxu0 %v3114
    %3238 = vmatprep.subr.mxu0 %v3117
    %3239 = vmatpush1.msra.mxu0 %v3116
    %3240 = vmatprep.subr.mxu0 %v3119
    %3241 = vmatpush1.msra.mxu0 %v3118
    %3242 = vmatprep.subr.mxu0 %v3121
    %3243 = vmatpush1.msra.mxu0 %v3120
    %3244 = vmatprep.subr.mxu0 %v3123
    %3245 = vmatpush1.msra.mxu0 %v3122
    %3246 = vmatprep.subr.mxu0 %v3125
    %3247 = vmatpush1.msra.mxu0 %v3124
    %3248 = vmatprep.subr.mxu0 %v3127
    %3249 = vmatpush1.msra.mxu0 %v3126
    %3250 = vmatprep.subr.mxu0 %v3129
    %3251 = vmatpush1.msra.mxu0 %v3128
    %3252 = vmatprep.subr.mxu0 %v3131
    %3253 = vmatpush1.msra.mxu0 %v3130
    %3254 = vmatprep.subr.mxu0 0.0
    %3255 = vmatpush1.msra.mxu0 0.0
    %3256 = vmatprep.subr.mxu0 0.0
    %3257 = vmatpush1.msra.mxu0 0.0
    %3258 = vmatprep.subr.mxu0 0.0
    %3259 = vmatpush1.msra.mxu0 0.0
    %3260 = vmatprep.subr.mxu0 0.0
    %3261 = vmatpush1.msra.mxu0 0.0
    %3262 = vmatprep.subr.mxu0 0.0
    %3263 = vmatpush1.msra.mxu0 0.0
    %3264 = vmatprep.subr.mxu0 0.0
    %3265 = vmatpush1.msra.mxu0 0.0
    %3266 = vmatprep.subr.mxu0 0.0
    %3267 = vmatpush1.msra.mxu0 0.0
    %3268 = vmatprep.subr.mxu0 0.0
    %3269 = vmatpush1.msra.mxu0 0.0
    %3270 = vmatprep.mubr.f32.mxu0 %v3133
    %3271 = vmatmul.mubr.f32.gmra.mrb[0].mxu0 %v3018
    %v3272 = vpop.f32.mrb[0].mxu0
    %v3273 = vadd.f32 %v3202, %v3272
    %v3274 = vpop.f32.mrb[0].mxu0
    %v3275 = vadd.f32 %v3204, %v3274
    %3276 = vdwg.mxu0
    %s3277 = scalar_lea.vmem [#allocation12], 896
    %v3278 = vld [vmem:[%s3277] sm:$0xff]
    %v3279 = vld [vmem:[%s3277 + $0x8] sm:$0xff]
    %v3280 = vld [vmem:[%s3277 + $0x10] sm:$0xff]
    %v3281 = vld [vmem:[%s3277 + $0x18] sm:$0xff]
    %v3282 = vld [vmem:[%s3277 + $0x20] sm:$0xff]
    %v3283 = vld [vmem:[%s3277 + $0x28] sm:$0xff]
    %v3284 = vld [vmem:[%s3277 + $0x30] sm:$0xff]
    %v3285 = vld [vmem:[%s3277 + $0x38] sm:$0xff]
    %v3286 = vld [vmem:[%s3277 + $0x40] sm:$0xff]
    %v3287 = vld [vmem:[%s3277 + $0x48] sm:$0xff]
    %v3288 = vld [vmem:[%s3277 + $0x50] sm:$0xff]
    %v3289 = vld [vmem:[%s3277 + $0x58] sm:$0xff]
    %v3290 = vld [vmem:[%s3277 + $0x60] sm:$0xff]
    %v3291 = vld [vmem:[%s3277 + $0x68] sm:$0xff]
    %v3292 = vld [vmem:[%s3277 + $0x70] sm:$0xff]
    %v3293 = vld [vmem:[%s3277 + $0x78] sm:$0xff]
    %v3294 = vld [vmem:[%s3277 + $0x80] sm:$0xff]
    %v3295 = vld [vmem:[%s3277 + $0x88] sm:$0xff]
    %v3296 = vld [vmem:[%s3277 + $0x90] sm:$0xff]
    %v3297 = vld [vmem:[%s3277 + $0x98] sm:$0xff]
    %v3298 = vld [vmem:[%s3277 + $0xa0] sm:$0xff]
    %v3299 = vld [vmem:[%s3277 + $0xa8] sm:$0xff]
    %v3300 = vld [vmem:[%s3277 + $0xb0] sm:$0xff]
    %v3301 = vld [vmem:[%s3277 + $0xb8] sm:$0xff]
    %v3302 = vld [vmem:[%s3277 + $0xc0] sm:$0xff]
    %v3303 = vld [vmem:[%s3277 + $0xc8] sm:$0xff]
    %v3304 = vld [vmem:[%s3277 + $0xd0] sm:$0xff]
    %v3305 = vld [vmem:[%s3277 + $0xd8] sm:$0xff]
    %v3306 = vld [vmem:[%s3277 + $0xe0] sm:$0xff]
    %v3307 = vld [vmem:[%s3277 + $0xe8] sm:$0xff]
    %v3308 = vld [vmem:[%s3277 + $0xf0] sm:$0xff]
    %v3309 = vld [vmem:[%s3277 + $0xf8] sm:$0xff]
    %v3310 = vld [vmem:[%s3277 + $0x100] sm:$0xff]
    %v3311 = vld [vmem:[%s3277 + $0x108] sm:$0xff]
    %v3312 = vld [vmem:[%s3277 + $0x110] sm:$0xff]
    %v3313 = vld [vmem:[%s3277 + $0x118] sm:$0xff]
    %v3314 = vld [vmem:[%s3277 + $0x120] sm:$0xff]
    %v3315 = vld [vmem:[%s3277 + $0x128] sm:$0xff]
    %v3316 = vld [vmem:[%s3277 + $0x130] sm:$0xff]
    %v3317 = vld [vmem:[%s3277 + $0x138] sm:$0xff]
    %v3318 = vld [vmem:[%s3277 + $0x140] sm:$0xff]
    %v3319 = vld [vmem:[%s3277 + $0x148] sm:$0xff]
    %v3320 = vld [vmem:[%s3277 + $0x150] sm:$0xff]
    %v3321 = vld [vmem:[%s3277 + $0x158] sm:$0xff]
    %v3322 = vld [vmem:[%s3277 + $0x160] sm:$0xff]
    %v3323 = vld [vmem:[%s3277 + $0x168] sm:$0xff]
    %v3324 = vld [vmem:[%s3277 + $0x170] sm:$0xff]
    %v3325 = vld [vmem:[%s3277 + $0x178] sm:$0xff]
    %v3326 = vld [vmem:[%s3277 + $0x180] sm:$0xff]
    %v3327 = vld [vmem:[%s3277 + $0x188] sm:$0xff]
    %v3328 = vld [vmem:[%s3277 + $0x190] sm:$0xff]
    %v3329 = vld [vmem:[%s3277 + $0x198] sm:$0xff]
    %v3330 = vld [vmem:[%s3277 + $0x1a0] sm:$0xff]
    %v3331 = vld [vmem:[%s3277 + $0x1a8] sm:$0xff]
    %v3332 = vld [vmem:[%s3277 + $0x1b0] sm:$0xff]
    %v3333 = vld [vmem:[%s3277 + $0x1b8] sm:$0xff]
    %v3334 = vld [vmem:[%s3277 + $0x1c0] sm:$0xff]
    %v3335 = vld [vmem:[%s3277 + $0x1c8] sm:$0xff]
    %v3336 = vld [vmem:[%s3277 + $0x1d0] sm:$0xff]
    %v3337 = vld [vmem:[%s3277 + $0x1d8] sm:$0xff]
    %v3338 = vld [vmem:[%s3277 + $0x1e0] sm:$0xff]
    %v3339 = vld [vmem:[%s3277 + $0x1e8] sm:$0xff]
    %v3340 = vld [vmem:[%s3277 + $0x1f0] sm:$0xff]
    %v3341 = vld [vmem:[%s3277 + $0x1f8] sm:$0xff]
    %v3342 = vld [vmem:[%s3277 + $0x200] sm:$0xff]
    %v3343 = vld [vmem:[%s3277 + $0x208] sm:$0xff]
    %v3344 = vld [vmem:[%s3277 + $0x210] sm:$0xff]
    %v3345 = vld [vmem:[%s3277 + $0x218] sm:$0xff]
    %v3346 = vld [vmem:[%s3277 + $0x220] sm:$0xff]
    %v3347 = vld [vmem:[%s3277 + $0x228] sm:$0xff]
    %v3348 = vld [vmem:[%s3277 + $0x230] sm:$0xff]
    %v3349 = vld [vmem:[%s3277 + $0x238] sm:$0xff]
    %v3350 = vld [vmem:[%s3277 + $0x240] sm:$0xff]
    %v3351 = vld [vmem:[%s3277 + $0x248] sm:$0xff]
    %v3352 = vld [vmem:[%s3277 + $0x250] sm:$0xff]
    %v3353 = vld [vmem:[%s3277 + $0x258] sm:$0xff]
    %v3354 = vld [vmem:[%s3277 + $0x260] sm:$0xff]
    %v3355 = vld [vmem:[%s3277 + $0x268] sm:$0xff]
    %v3356 = vld [vmem:[%s3277 + $0x270] sm:$0xff]
    %v3357 = vld [vmem:[%s3277 + $0x278] sm:$0xff]
    %v3358 = vld [vmem:[%s3277 + $0x280] sm:$0xff]
    %v3359 = vld [vmem:[%s3277 + $0x288] sm:$0xff]
    %v3360 = vld [vmem:[%s3277 + $0x290] sm:$0xff]
    %v3361 = vld [vmem:[%s3277 + $0x298] sm:$0xff]
    %v3362 = vld [vmem:[%s3277 + $0x2a0] sm:$0xff]
    %v3363 = vld [vmem:[%s3277 + $0x2a8] sm:$0xff]
    %v3364 = vld [vmem:[%s3277 + $0x2b0] sm:$0xff]
    %v3365 = vld [vmem:[%s3277 + $0x2b8] sm:$0xff]
    %v3366 = vld [vmem:[%s3277 + $0x2c0] sm:$0xff]
    %v3367 = vld [vmem:[%s3277 + $0x2c8] sm:$0xff]
    %v3368 = vld [vmem:[%s3277 + $0x2d0] sm:$0xff]
    %v3369 = vld [vmem:[%s3277 + $0x2d8] sm:$0xff]
    %v3370 = vld [vmem:[%s3277 + $0x2e0] sm:$0xff]
    %v3371 = vld [vmem:[%s3277 + $0x2e8] sm:$0xff]
    %v3372 = vld [vmem:[%s3277 + $0x2f0] sm:$0xff]
    %v3373 = vld [vmem:[%s3277 + $0x2f8] sm:$0xff]
    %v3374 = vld [vmem:[%s3277 + $0x300] sm:$0xff]
    %v3375 = vld [vmem:[%s3277 + $0x308] sm:$0xff]
    %v3376 = vld [vmem:[%s3277 + $0x310] sm:$0xff]
    %v3377 = vld [vmem:[%s3277 + $0x318] sm:$0xff]
    %v3378 = vld [vmem:[%s3277 + $0x320] sm:$0xff]
    %v3379 = vld [vmem:[%s3277 + $0x328] sm:$0xff]
    %v3380 = vld [vmem:[%s3277 + $0x330] sm:$0xff]
    %v3381 = vld [vmem:[%s3277 + $0x338] sm:$0xff]
    %v3382 = vld [vmem:[%s3277 + $0x340] sm:$0xff]
    %v3383 = vld [vmem:[%s3277 + $0x348] sm:$0xff]
    %v3384 = vld [vmem:[%s3277 + $0x350] sm:$0xff]
    %v3385 = vld [vmem:[%s3277 + $0x358] sm:$0xff]
    %v3386 = vld [vmem:[%s3277 + $0x360] sm:$0xff]
    %v3387 = vld [vmem:[%s3277 + $0x368] sm:$0xff]
    %v3388 = vld [vmem:[%s3277 + $0x370] sm:$0xff]
    %v3389 = vld [vmem:[%s3277 + $0x378] sm:$0xff]
    %3390 = vmatprep.subr.mxu0 %v3279
    %3391 = vmatpush1.msra.mxu0 %v3278
    %3392 = vmatprep.subr.mxu0 %v3281
    %3393 = vmatpush1.msra.mxu0 %v3280
    %3394 = vmatprep.subr.mxu0 %v3283
    %3395 = vmatpush1.msra.mxu0 %v3282
    %3396 = vmatprep.subr.mxu0 %v3285
    %3397 = vmatpush1.msra.mxu0 %v3284
    %3398 = vmatprep.subr.mxu0 %v3287
    %3399 = vmatpush1.msra.mxu0 %v3286
    %3400 = vmatprep.subr.mxu0 %v3289
    %3401 = vmatpush1.msra.mxu0 %v3288
    %3402 = vmatprep.subr.mxu0 %v3291
    %3403 = vmatpush1.msra.mxu0 %v3290
    %3404 = vmatprep.subr.mxu0 %v3293
    %3405 = vmatpush1.msra.mxu0 %v3292
    %3406 = vmatprep.subr.mxu0 %v3295
    %3407 = vmatpush1.msra.mxu0 %v3294
    %3408 = vmatprep.subr.mxu0 %v3297
    %3409 = vmatpush1.msra.mxu0 %v3296
    %3410 = vmatprep.subr.mxu0 %v3299
    %3411 = vmatpush1.msra.mxu0 %v3298
    %3412 = vmatprep.subr.mxu0 %v3301
    %3413 = vmatpush1.msra.mxu0 %v3300
    %3414 = vmatprep.subr.mxu0 %v3303
    %3415 = vmatpush1.msra.mxu0 %v3302
    %3416 = vmatprep.subr.mxu0 %v3305
    %3417 = vmatpush1.msra.mxu0 %v3304
    %3418 = vmatprep.subr.mxu0 %v3307
    %3419 = vmatpush1.msra.mxu0 %v3306
    %3420 = vmatprep.subr.mxu0 %v3309
    %3421 = vmatpush1.msra.mxu0 %v3308
    %3422 = vmatprep.subr.mxu0 %v3311
    %3423 = vmatpush1.msra.mxu0 %v3310
    %3424 = vmatprep.subr.mxu0 %v3313
    %3425 = vmatpush1.msra.mxu0 %v3312
    %3426 = vmatprep.subr.mxu0 %v3315
    %3427 = vmatpush1.msra.mxu0 %v3314
    %3428 = vmatprep.subr.mxu0 %v3317
    %3429 = vmatpush1.msra.mxu0 %v3316
    %3430 = vmatprep.subr.mxu0 %v3319
    %3431 = vmatpush1.msra.mxu0 %v3318
    %3432 = vmatprep.subr.mxu0 %v3321
    %3433 = vmatpush1.msra.mxu0 %v3320
    %3434 = vmatprep.subr.mxu0 %v3323
    %3435 = vmatpush1.msra.mxu0 %v3322
    %3436 = vmatprep.subr.mxu0 %v3325
    %3437 = vmatpush1.msra.mxu0 %v3324
    %3438 = vmatprep.subr.mxu0 %v3327
    %3439 = vmatpush1.msra.mxu0 %v3326
    %3440 = vmatprep.subr.mxu0 %v3329
    %3441 = vmatpush1.msra.mxu0 %v3328
    %3442 = vmatprep.subr.mxu0 %v3331
    %3443 = vmatpush1.msra.mxu0 %v3330
    %3444 = vmatprep.subr.mxu0 %v3333
    %3445 = vmatpush1.msra.mxu0 %v3332
    %3446 = vmatprep.subr.mxu0 %v3335
    %3447 = vmatpush1.msra.mxu0 %v3334
    %3448 = vmatprep.subr.mxu0 %v3337
    %3449 = vmatpush1.msra.mxu0 %v3336
    %3450 = vmatprep.subr.mxu0 %v3339
    %3451 = vmatpush1.msra.mxu0 %v3338
    %3452 = vmatprep.subr.mxu0 %v3341
    %3453 = vmatpush1.msra.mxu0 %v3340
    %3454 = vmatprep.mubr.f32.mxu0 %v3017
    %3455 = vmatmul.mubr.f32.gmra.mrb[0].mxu0 %v3016
    %v3456 = vpop.f32.mrb[0].mxu0
    %v3457 = vadd.f32 0.0, %v3456
    %v3458 = vpop.f32.mrb[0].mxu0
    %v3459 = vadd.f32 0.0, %v3458
    %3460 = vdwg.mxu0
    %3461 = vmatprep.subr.mxu0 %v3343
    %3462 = vmatpush1.msra.mxu0 %v3342
    %3463 = vmatprep.subr.mxu0 %v3345
    %3464 = vmatpush1.msra.mxu0 %v3344
    %3465 = vmatprep.subr.mxu0 %v3347
    %3466 = vmatpush1.msra.mxu0 %v3346
    %3467 = vmatprep.subr.mxu0 %v3349
    %3468 = vmatpush1.msra.mxu0 %v3348
    %3469 = vmatprep.subr.mxu0 %v3351
    %3470 = vmatpush1.msra.mxu0 %v3350
    %3471 = vmatprep.subr.mxu0 %v3353
    %3472 = vmatpush1.msra.mxu0 %v3352
    %3473 = vmatprep.subr.mxu0 %v3355
    %3474 = vmatpush1.msra.mxu0 %v3354
    %3475 = vmatprep.subr.mxu0 %v3357
    %3476 = vmatpush1.msra.mxu0 %v3356
    %3477 = vmatprep.subr.mxu0 %v3359
    %3478 = vmatpush1.msra.mxu0 %v3358
    %3479 = vmatprep.subr.mxu0 %v3361
    %3480 = vmatpush1.msra.mxu0 %v3360
    %3481 = vmatprep.subr.mxu0 %v3363
    %3482 = vmatpush1.msra.mxu0 %v3362
    %3483 = vmatprep.subr.mxu0 %v3365
    %3484 = vmatpush1.msra.mxu0 %v3364
    %3485 = vmatprep.subr.mxu0 %v3367
    %3486 = vmatpush1.msra.mxu0 %v3366
    %3487 = vmatprep.subr.mxu0 %v3369
    %3488 = vmatpush1.msra.mxu0 %v3368
    %3489 = vmatprep.subr.mxu0 %v3371
    %3490 = vmatpush1.msra.mxu0 %v3370
    %3491 = vmatprep.subr.mxu0 %v3373
    %3492 = vmatpush1.msra.mxu0 %v3372
    %3493 = vmatprep.subr.mxu0 %v3375
    %3494 = vmatpush1.msra.mxu0 %v3374
    %3495 = vmatprep.subr.mxu0 %v3377
    %3496 = vmatpush1.msra.mxu0 %v3376
    %3497 = vmatprep.subr.mxu0 %v3379
    %3498 = vmatpush1.msra.mxu0 %v3378
    %3499 = vmatprep.subr.mxu0 %v3381
    %3500 = vmatpush1.msra.mxu0 %v3380
    %3501 = vmatprep.subr.mxu0 %v3383
    %3502 = vmatpush1.msra.mxu0 %v3382
    %3503 = vmatprep.subr.mxu0 %v3385
    %3504 = vmatpush1.msra.mxu0 %v3384
    %3505 = vmatprep.subr.mxu0 %v3387
    %3506 = vmatpush1.msra.mxu0 %v3386
    %3507 = vmatprep.subr.mxu0 %v3389
    %3508 = vmatpush1.msra.mxu0 %v3388
    %3509 = vmatprep.subr.mxu0 0.0
    %3510 = vmatpush1.msra.mxu0 0.0
    %3511 = vmatprep.subr.mxu0 0.0
    %3512 = vmatpush1.msra.mxu0 0.0
    %3513 = vmatprep.subr.mxu0 0.0
    %3514 = vmatpush1.msra.mxu0 0.0
    %3515 = vmatprep.subr.mxu0 0.0
    %3516 = vmatpush1.msra.mxu0 0.0
    %3517 = vmatprep.subr.mxu0 0.0
    %3518 = vmatpush1.msra.mxu0 0.0
    %3519 = vmatprep.subr.mxu0 0.0
    %3520 = vmatpush1.msra.mxu0 0.0
    %3521 = vmatprep.subr.mxu0 0.0
    %3522 = vmatpush1.msra.mxu0 0.0
    %3523 = vmatprep.subr.mxu0 0.0
    %3524 = vmatpush1.msra.mxu0 0.0
    %3525 = vmatprep.mubr.f32.mxu0 %v3133
    %3526 = vmatmul.mubr.f32.gmra.mrb[0].mxu0 %v3018
    %v3527 = vpop.f32.mrb[0].mxu0
    %v3528 = vadd.f32 %v3457, %v3527
    %v3529 = vpop.f32.mrb[0].mxu0
    %v3530 = vadd.f32 %v3459, %v3529
    %3531 = vdwg.mxu0
    %v3532 = vmax.f32 %v3273, %v3528
    %v3533 = vmax.f32 %v3275, %v3530
    %v3534 = vld [vmem:[#allocation15] sm:$0x1]
    %v3535 = vld [vmem:[#allocation14] sm:$0xff]
    %v3536 = vld [vmem:[#allocation14 + $0x8] sm:$0xff]
    %v3537 = vld [vmem:[#allocation14 + $0x10] sm:$0xff]
    %v3538 = vld [vmem:[#allocation14 + $0x18] sm:$0xff]
    %v3539 = vld [vmem:[#allocation14 + $0x20] sm:$0xff]
    %v3540 = vld [vmem:[#allocation14 + $0x28] sm:$0xff]
    %v3541 = vld [vmem:[#allocation14 + $0x30] sm:$0xff]
    %v3542 = vld [vmem:[#allocation14 + $0x38] sm:$0xff]
    %v3543 = vld [vmem:[#allocation14 + $0x40] sm:$0xff]
    %v3544 = vld [vmem:[#allocation14 + $0x48] sm:$0xff]
    %v3545 = vld [vmem:[#allocation14 + $0x50] sm:$0xff]
    %v3546 = vld [vmem:[#allocation14 + $0x58] sm:$0xff]
    %v3547 = vld [vmem:[#allocation14 + $0x60] sm:$0xff]
    %v3548 = vld [vmem:[#allocation14 + $0x68] sm:$0xff]
    %v3549 = vld [vmem:[#allocation14 + $0x70] sm:$0xff]
    %v3550 = vld [vmem:[#allocation14 + $0x78] sm:$0xff]
    %v3551 = vld [vmem:[#allocation14 + $0x80] sm:$0xff]
    %v3552 = vld [vmem:[#allocation14 + $0x88] sm:$0xff]
    %v3553 = vld [vmem:[#allocation14 + $0x90] sm:$0xff]
    %v3554 = vld [vmem:[#allocation14 + $0x98] sm:$0xff]
    %v3555 = vld [vmem:[#allocation14 + $0xa0] sm:$0xff]
    %v3556 = vld [vmem:[#allocation14 + $0xa8] sm:$0xff]
    %v3557 = vld [vmem:[#allocation14 + $0xb0] sm:$0xff]
    %v3558 = vld [vmem:[#allocation14 + $0xb8] sm:$0xff]
    %v3559 = vld [vmem:[#allocation14 + $0xc0] sm:$0xff]
    %v3560 = vld [vmem:[#allocation14 + $0xc8] sm:$0xff]
    %v3561 = vld [vmem:[#allocation14 + $0xd0] sm:$0xff]
    %v3562 = vld [vmem:[#allocation14 + $0xd8] sm:$0xff]
    %v3564 = vsel %vm174, %v3533, 0
    %3566 = vmatprep.subr.mxu0 0.0
    %3567 = vmatpush1.msra.mxu0 %v3535
    %3568 = vmatprep.subr.mxu0 0.0
    %3569 = vmatpush1.msra.mxu0 %v3536
    %3570 = vmatprep.subr.mxu0 0.0
    %3571 = vmatpush1.msra.mxu0 %v3537
    %3572 = vmatprep.subr.mxu0 0.0
    %3573 = vmatpush1.msra.mxu0 %v3538
    %3574 = vmatprep.subr.mxu0 0.0
    %3575 = vmatpush1.msra.mxu0 %v3539
    %3576 = vmatprep.subr.mxu0 0.0
    %3577 = vmatpush1.msra.mxu0 %v3540
    %3578 = vmatprep.subr.mxu0 0.0
    %3579 = vmatpush1.msra.mxu0 %v3541
    %3580 = vmatprep.subr.mxu0 0.0
    %3581 = vmatpush1.msra.mxu0 %v3542
    %3582 = vmatprep.subr.mxu0 0.0
    %3583 = vmatpush1.msra.mxu0 %v3543
    %3584 = vmatprep.subr.mxu0 0.0
    %3585 = vmatpush1.msra.mxu0 %v3544
    %3586 = vmatprep.subr.mxu0 0.0
    %3587 = vmatpush1.msra.mxu0 %v3545
    %3588 = vmatprep.subr.mxu0 0.0
    %3589 = vmatpush1.msra.mxu0 %v3546
    %3590 = vmatprep.subr.mxu0 0.0
    %3591 = vmatpush1.msra.mxu0 %v3547
    %3592 = vmatprep.subr.mxu0 0.0
    %3593 = vmatpush1.msra.mxu0 %v3548
    %3594 = vmatprep.subr.mxu0 0.0
    %3595 = vmatpush1.msra.mxu0 %v3549
    %3596 = vmatprep.subr.mxu0 0.0
    %3597 = vmatpush1.msra.mxu0 %v3550
    %3598 = vmatprep.subr.mxu0 0.0
    %3599 = vmatpush1.msra.mxu0 %v3551
    %3600 = vmatprep.subr.mxu0 0.0
    %3601 = vmatpush1.msra.mxu0 %v3552
    %3602 = vmatprep.subr.mxu0 0.0
    %3603 = vmatpush1.msra.mxu0 %v3553
    %3604 = vmatprep.subr.mxu0 0.0
    %3605 = vmatpush1.msra.mxu0 %v3554
    %3606 = vmatprep.subr.mxu0 0.0
    %3607 = vmatpush1.msra.mxu0 %v3555
    %3608 = vmatprep.subr.mxu0 0.0
    %3609 = vmatpush1.msra.mxu0 %v3556
    %3610 = vmatprep.subr.mxu0 0.0
    %3611 = vmatpush1.msra.mxu0 %v3557
    %3612 = vmatprep.subr.mxu0 0.0
    %3613 = vmatpush1.msra.mxu0 %v3558
    %3614 = vmatprep.subr.mxu0 0.0
    %3615 = vmatpush1.msra.mxu0 %v3559
    %3616 = vmatprep.subr.mxu0 0.0
    %3617 = vmatpush1.msra.mxu0 %v3560
    %3618 = vmatprep.subr.mxu0 0.0
    %3619 = vmatpush1.msra.mxu0 %v3561
    %3620 = vmatprep.subr.mxu0 0.0
    %3621 = vmatpush1.msra.mxu0 %v3562
    %3622 = vmatprep.subr.mxu0 0.0
    %3623 = vmatpush1.msra.mxu0 0.0
    %3624 = vmatprep.subr.mxu0 0.0
    %3625 = vmatpush1.msra.mxu0 0.0
    %3626 = vmatprep.subr.mxu0 0.0
    %3627 = vmatpush1.msra.mxu0 0.0
    %3628 = vmatprep.subr.mxu0 0.0
    %3629 = vmatpush1.msra.mxu0 0.0
    %3630 = vmatprep.mubr.f32.mxu0 %v3564
    %3631 = vmatmul.mubr.f32.gmra.mrb[0].mxu0 %v3532
    %v3632 = vpop.f32.mrb[0].mxu0
    %v3633 = vadd.f32 0.0, %v3632
    %v3634 = vpop.f32.mrb[0].mxu0
    %3635 = vdwg.mxu0
    %v3636 = vadd.f32 %v3534, %v3633
    %s3637 = scalar_lea.vmem [#allocation14], 224
    %v3638 = vld [vmem:[%s3637] sm:$0xff]
    %v3639 = vld [vmem:[%s3637 + $0x8] sm:$0xff]
    %v3640 = vld [vmem:[%s3637 + $0x10] sm:$0xff]
    %v3641 = vld [vmem:[%s3637 + $0x18] sm:$0xff]
    %v3642 = vld [vmem:[%s3637 + $0x20] sm:$0xff]
    %v3643 = vld [vmem:[%s3637 + $0x28] sm:$0xff]
    %v3644 = vld [vmem:[%s3637 + $0x30] sm:$0xff]
    %v3645 = vld [vmem:[%s3637 + $0x38] sm:$0xff]
    %v3646 = vld [vmem:[%s3637 + $0x40] sm:$0xff]
    %v3647 = vld [vmem:[%s3637 + $0x48] sm:$0xff]
    %v3648 = vld [vmem:[%s3637 + $0x50] sm:$0xff]
    %v3649 = vld [vmem:[%s3637 + $0x58] sm:$0xff]
    %v3650 = vld [vmem:[%s3637 + $0x60] sm:$0xff]
    %v3651 = vld [vmem:[%s3637 + $0x68] sm:$0xff]
    %v3652 = vld [vmem:[%s3637 + $0x70] sm:$0xff]
    %v3653 = vld [vmem:[%s3637 + $0x78] sm:$0xff]
    %v3654 = vld [vmem:[%s3637 + $0x80] sm:$0xff]
    %v3655 = vld [vmem:[%s3637 + $0x88] sm:$0xff]
    %v3656 = vld [vmem:[%s3637 + $0x90] sm:$0xff]
    %v3657 = vld [vmem:[%s3637 + $0x98] sm:$0xff]
    %v3658 = vld [vmem:[%s3637 + $0xa0] sm:$0xff]
    %v3659 = vld [vmem:[%s3637 + $0xa8] sm:$0xff]
    %v3660 = vld [vmem:[%s3637 + $0xb0] sm:$0xff]
    %v3661 = vld [vmem:[%s3637 + $0xb8] sm:$0xff]
    %v3662 = vld [vmem:[%s3637 + $0xc0] sm:$0xff]
    %v3663 = vld [vmem:[%s3637 + $0xc8] sm:$0xff]
    %v3664 = vld [vmem:[%s3637 + $0xd0] sm:$0xff]
    %v3665 = vld [vmem:[%s3637 + $0xd8] sm:$0xff]
    %v3667 = vrot.slane %v3532, 1
    %v3668 = vrot.slane %v3533, 1
    %v3670 = vsel %vm174, %v3668, 0
    %3672 = vmatprep.subr.mxu0 0.0
    %3673 = vmatpush1.msra.mxu0 %v3638
    %3674 = vmatprep.subr.mxu0 0.0
    %3675 = vmatpush1.msra.mxu0 %v3639
    %3676 = vmatprep.subr.mxu0 0.0
    %3677 = vmatpush1.msra.mxu0 %v3640
    %3678 = vmatprep.subr.mxu0 0.0
    %3679 = vmatpush1.msra.mxu0 %v3641
    %3680 = vmatprep.subr.mxu0 0.0
    %3681 = vmatpush1.msra.mxu0 %v3642
    %3682 = vmatprep.subr.mxu0 0.0
    %3683 = vmatpush1.msra.mxu0 %v3643
    %3684 = vmatprep.subr.mxu0 0.0
    %3685 = vmatpush1.msra.mxu0 %v3644
    %3686 = vmatprep.subr.mxu0 0.0
    %3687 = vmatpush1.msra.mxu0 %v3645
    %3688 = vmatprep.subr.mxu0 0.0
    %3689 = vmatpush1.msra.mxu0 %v3646
    %3690 = vmatprep.subr.mxu0 0.0
    %3691 = vmatpush1.msra.mxu0 %v3647
    %3692 = vmatprep.subr.mxu0 0.0
    %3693 = vmatpush1.msra.mxu0 %v3648
    %3694 = vmatprep.subr.mxu0 0.0
    %3695 = vmatpush1.msra.mxu0 %v3649
    %3696 = vmatprep.subr.mxu0 0.0
    %3697 = vmatpush1.msra.mxu0 %v3650
    %3698 = vmatprep.subr.mxu0 0.0
    %3699 = vmatpush1.msra.mxu0 %v3651
    %3700 = vmatprep.subr.mxu0 0.0
    %3701 = vmatpush1.msra.mxu0 %v3652
    %3702 = vmatprep.subr.mxu0 0.0
    %3703 = vmatpush1.msra.mxu0 %v3653
    %3704 = vmatprep.subr.mxu0 0.0
    %3705 = vmatpush1.msra.mxu0 %v3654
    %3706 = vmatprep.subr.mxu0 0.0
    %3707 = vmatpush1.msra.mxu0 %v3655
    %3708 = vmatprep.subr.mxu0 0.0
    %3709 = vmatpush1.msra.mxu0 %v3656
    %3710 = vmatprep.subr.mxu0 0.0
    %3711 = vmatpush1.msra.mxu0 %v3657
    %3712 = vmatprep.subr.mxu0 0.0
    %3713 = vmatpush1.msra.mxu0 %v3658
    %3714 = vmatprep.subr.mxu0 0.0
    %3715 = vmatpush1.msra.mxu0 %v3659
    %3716 = vmatprep.subr.mxu0 0.0
    %3717 = vmatpush1.msra.mxu0 %v3660
    %3718 = vmatprep.subr.mxu0 0.0
    %3719 = vmatpush1.msra.mxu0 %v3661
    %3720 = vmatprep.subr.mxu0 0.0
    %3721 = vmatpush1.msra.mxu0 %v3662
    %3722 = vmatprep.subr.mxu0 0.0
    %3723 = vmatpush1.msra.mxu0 %v3663
    %3724 = vmatprep.subr.mxu0 0.0
    %3725 = vmatpush1.msra.mxu0 %v3664
    %3726 = vmatprep.subr.mxu0 0.0
    %3727 = vmatpush1.msra.mxu0 %v3665
    %3728 = vmatprep.subr.mxu0 0.0
    %3729 = vmatpush1.msra.mxu0 0.0
    %3730 = vmatprep.subr.mxu0 0.0
    %3731 = vmatpush1.msra.mxu0 0.0
    %3732 = vmatprep.subr.mxu0 0.0
    %3733 = vmatpush1.msra.mxu0 0.0
    %3734 = vmatprep.subr.mxu0 0.0
    %3735 = vmatpush1.msra.mxu0 0.0
    %3736 = vmatprep.mubr.f32.mxu0 %v3670
    %3737 = vmatmul.mubr.f32.gmra.mrb[0].mxu0 %v3667
    %v3738 = vpop.f32.mrb[0].mxu0
    %v3739 = vadd.f32 0.0, %v3738
    %v3740 = vpop.f32.mrb[0].mxu0
    %3741 = vdwg.mxu0
    %v3742 = vadd.f32 %v3636, %v3739
    %s3743 = scalar_lea.vmem [#allocation14], 448
    %v3744 = vld [vmem:[%s3743] sm:$0xff]
    %v3745 = vld [vmem:[%s3743 + $0x8] sm:$0xff]
    %v3746 = vld [vmem:[%s3743 + $0x10] sm:$0xff]
    %v3747 = vld [vmem:[%s3743 + $0x18] sm:$0xff]
    %v3748 = vld [vmem:[%s3743 + $0x20] sm:$0xff]
    %v3749 = vld [vmem:[%s3743 + $0x28] sm:$0xff]
    %v3750 = vld [vmem:[%s3743 + $0x30] sm:$0xff]
    %v3751 = vld [vmem:[%s3743 + $0x38] sm:$0xff]
    %v3752 = vld [vmem:[%s3743 + $0x40] sm:$0xff]
    %v3753 = vld [vmem:[%s3743 + $0x48] sm:$0xff]
    %v3754 = vld [vmem:[%s3743 + $0x50] sm:$0xff]
    %v3755 = vld [vmem:[%s3743 + $0x58] sm:$0xff]
    %v3756 = vld [vmem:[%s3743 + $0x60] sm:$0xff]
    %v3757 = vld [vmem:[%s3743 + $0x68] sm:$0xff]
    %v3758 = vld [vmem:[%s3743 + $0x70] sm:$0xff]
    %v3759 = vld [vmem:[%s3743 + $0x78] sm:$0xff]
    %v3760 = vld [vmem:[%s3743 + $0x80] sm:$0xff]
    %v3761 = vld [vmem:[%s3743 + $0x88] sm:$0xff]
    %v3762 = vld [vmem:[%s3743 + $0x90] sm:$0xff]
    %v3763 = vld [vmem:[%s3743 + $0x98] sm:$0xff]
    %v3764 = vld [vmem:[%s3743 + $0xa0] sm:$0xff]
    %v3765 = vld [vmem:[%s3743 + $0xa8] sm:$0xff]
    %v3766 = vld [vmem:[%s3743 + $0xb0] sm:$0xff]
    %v3767 = vld [vmem:[%s3743 + $0xb8] sm:$0xff]
    %v3768 = vld [vmem:[%s3743 + $0xc0] sm:$0xff]
    %v3769 = vld [vmem:[%s3743 + $0xc8] sm:$0xff]
    %v3770 = vld [vmem:[%s3743 + $0xd0] sm:$0xff]
    %v3771 = vld [vmem:[%s3743 + $0xd8] sm:$0xff]
    %v3772 = vrot.slane %v3532, 2
    %v3773 = vrot.slane %v3533, 2
    %v3775 = vsel %vm174, %v3773, 0
    %3777 = vmatprep.subr.mxu0 0.0
    %3778 = vmatpush1.msra.mxu0 %v3744
    %3779 = vmatprep.subr.mxu0 0.0
    %3780 = vmatpush1.msra.mxu0 %v3745
    %3781 = vmatprep.subr.mxu0 0.0
    %3782 = vmatpush1.msra.mxu0 %v3746
    %3783 = vmatprep.subr.mxu0 0.0
    %3784 = vmatpush1.msra.mxu0 %v3747
    %3785 = vmatprep.subr.mxu0 0.0
    %3786 = vmatpush1.msra.mxu0 %v3748
    %3787 = vmatprep.subr.mxu0 0.0
    %3788 = vmatpush1.msra.mxu0 %v3749
    %3789 = vmatprep.subr.mxu0 0.0
    %3790 = vmatpush1.msra.mxu0 %v3750
    %3791 = vmatprep.subr.mxu0 0.0
    %3792 = vmatpush1.msra.mxu0 %v3751
    %3793 = vmatprep.subr.mxu0 0.0
    %3794 = vmatpush1.msra.mxu0 %v3752
    %3795 = vmatprep.subr.mxu0 0.0
    %3796 = vmatpush1.msra.mxu0 %v3753
    %3797 = vmatprep.subr.mxu0 0.0
    %3798 = vmatpush1.msra.mxu0 %v3754
    %3799 = vmatprep.subr.mxu0 0.0
    %3800 = vmatpush1.msra.mxu0 %v3755
    %3801 = vmatprep.subr.mxu0 0.0
    %3802 = vmatpush1.msra.mxu0 %v3756
    %3803 = vmatprep.subr.mxu0 0.0
    %3804 = vmatpush1.msra.mxu0 %v3757
    %3805 = vmatprep.subr.mxu0 0.0
    %3806 = vmatpush1.msra.mxu0 %v3758
    %3807 = vmatprep.subr.mxu0 0.0
    %3808 = vmatpush1.msra.mxu0 %v3759
    %3809 = vmatprep.subr.mxu0 0.0
    %3810 = vmatpush1.msra.mxu0 %v3760
    %3811 = vmatprep.subr.mxu0 0.0
    %3812 = vmatpush1.msra.mxu0 %v3761
    %3813 = vmatprep.subr.mxu0 0.0
    %3814 = vmatpush1.msra.mxu0 %v3762
    %3815 = vmatprep.subr.mxu0 0.0
    %3816 = vmatpush1.msra.mxu0 %v3763
    %3817 = vmatprep.subr.mxu0 0.0
    %3818 = vmatpush1.msra.mxu0 %v3764
    %3819 = vmatprep.subr.mxu0 0.0
    %3820 = vmatpush1.msra.mxu0 %v3765
    %3821 = vmatprep.subr.mxu0 0.0
    %3822 = vmatpush1.msra.mxu0 %v3766
    %3823 = vmatprep.subr.mxu0 0.0
    %3824 = vmatpush1.msra.mxu0 %v3767
    %3825 = vmatprep.subr.mxu0 0.0
    %3826 = vmatpush1.msra.mxu0 %v3768
    %3827 = vmatprep.subr.mxu0 0.0
    %3828 = vmatpush1.msra.mxu0 %v3769
    %3829 = vmatprep.subr.mxu0 0.0
    %3830 = vmatpush1.msra.mxu0 %v3770
    %3831 = vmatprep.subr.mxu0 0.0
    %3832 = vmatpush1.msra.mxu0 %v3771
    %3833 = vmatprep.subr.mxu0 0.0
    %3834 = vmatpush1.msra.mxu0 0.0
    %3835 = vmatprep.subr.mxu0 0.0
    %3836 = vmatpush1.msra.mxu0 0.0
    %3837 = vmatprep.subr.mxu0 0.0
    %3838 = vmatpush1.msra.mxu0 0.0
    %3839 = vmatprep.subr.mxu0 0.0
    %3840 = vmatpush1.msra.mxu0 0.0
    %3841 = vmatprep.mubr.f32.mxu0 %v3775
    %3842 = vmatmul.mubr.f32.gmra.mrb[0].mxu0 %v3772
    %v3843 = vpop.f32.mrb[0].mxu0
    %v3844 = vadd.f32 0.0, %v3843
    %v3845 = vpop.f32.mrb[0].mxu0
    %3846 = vdwg.mxu0
    %v3847 = vadd.f32 %v3742, %v3844
    %s3848 = scalar_lea.vmem [#allocation14], 672
    %v3849 = vld [vmem:[%s3848] sm:$0xff]
    %v3850 = vld [vmem:[%s3848 + $0x8] sm:$0xff]
    %v3851 = vld [vmem:[%s3848 + $0x10] sm:$0xff]
    %v3852 = vld [vmem:[%s3848 + $0x18] sm:$0xff]
    %v3853 = vld [vmem:[%s3848 + $0x20] sm:$0xff]
    %v3854 = vld [vmem:[%s3848 + $0x28] sm:$0xff]
    %v3855 = vld [vmem:[%s3848 + $0x30] sm:$0xff]
    %v3856 = vld [vmem:[%s3848 + $0x38] sm:$0xff]
    %v3857 = vld [vmem:[%s3848 + $0x40] sm:$0xff]
    %v3858 = vld [vmem:[%s3848 + $0x48] sm:$0xff]
    %v3859 = vld [vmem:[%s3848 + $0x50] sm:$0xff]
    %v3860 = vld [vmem:[%s3848 + $0x58] sm:$0xff]
    %v3861 = vld [vmem:[%s3848 + $0x60] sm:$0xff]
    %v3862 = vld [vmem:[%s3848 + $0x68] sm:$0xff]
    %v3863 = vld [vmem:[%s3848 + $0x70] sm:$0xff]
    %v3864 = vld [vmem:[%s3848 + $0x78] sm:$0xff]
    %v3865 = vld [vmem:[%s3848 + $0x80] sm:$0xff]
    %v3866 = vld [vmem:[%s3848 + $0x88] sm:$0xff]
    %v3867 = vld [vmem:[%s3848 + $0x90] sm:$0xff]
    %v3868 = vld [vmem:[%s3848 + $0x98] sm:$0xff]
    %v3869 = vld [vmem:[%s3848 + $0xa0] sm:$0xff]
    %v3870 = vld [vmem:[%s3848 + $0xa8] sm:$0xff]
    %v3871 = vld [vmem:[%s3848 + $0xb0] sm:$0xff]
    %v3872 = vld [vmem:[%s3848 + $0xb8] sm:$0xff]
    %v3873 = vld [vmem:[%s3848 + $0xc0] sm:$0xff]
    %v3874 = vld [vmem:[%s3848 + $0xc8] sm:$0xff]
    %v3875 = vld [vmem:[%s3848 + $0xd0] sm:$0xff]
    %v3876 = vld [vmem:[%s3848 + $0xd8] sm:$0xff]
    %v3877 = vrot.slane %v3532, 3
    %v3878 = vrot.slane %v3533, 3
    %v3880 = vsel %vm174, %v3878, 0
    %3882 = vmatprep.subr.mxu0 0.0
    %3883 = vmatpush1.msra.mxu0 %v3849
    %3884 = vmatprep.subr.mxu0 0.0
    %3885 = vmatpush1.msra.mxu0 %v3850
    %3886 = vmatprep.subr.mxu0 0.0
    %3887 = vmatpush1.msra.mxu0 %v3851
    %3888 = vmatprep.subr.mxu0 0.0
    %3889 = vmatpush1.msra.mxu0 %v3852
    %3890 = vmatprep.subr.mxu0 0.0
    %3891 = vmatpush1.msra.mxu0 %v3853
    %3892 = vmatprep.subr.mxu0 0.0
    %3893 = vmatpush1.msra.mxu0 %v3854
    %3894 = vmatprep.subr.mxu0 0.0
    %3895 = vmatpush1.msra.mxu0 %v3855
    %3896 = vmatprep.subr.mxu0 0.0
    %3897 = vmatpush1.msra.mxu0 %v3856
    %3898 = vmatprep.subr.mxu0 0.0
    %3899 = vmatpush1.msra.mxu0 %v3857
    %3900 = vmatprep.subr.mxu0 0.0
    %3901 = vmatpush1.msra.mxu0 %v3858
    %3902 = vmatprep.subr.mxu0 0.0
    %3903 = vmatpush1.msra.mxu0 %v3859
    %3904 = vmatprep.subr.mxu0 0.0
    %3905 = vmatpush1.msra.mxu0 %v3860
    %3906 = vmatprep.subr.mxu0 0.0
    %3907 = vmatpush1.msra.mxu0 %v3861
    %3908 = vmatprep.subr.mxu0 0.0
    %3909 = vmatpush1.msra.mxu0 %v3862
    %3910 = vmatprep.subr.mxu0 0.0
    %3911 = vmatpush1.msra.mxu0 %v3863
    %3912 = vmatprep.subr.mxu0 0.0
    %3913 = vmatpush1.msra.mxu0 %v3864
    %3914 = vmatprep.subr.mxu0 0.0
    %3915 = vmatpush1.msra.mxu0 %v3865
    %3916 = vmatprep.subr.mxu0 0.0
    %3917 = vmatpush1.msra.mxu0 %v3866
    %3918 = vmatprep.subr.mxu0 0.0
    %3919 = vmatpush1.msra.mxu0 %v3867
    %3920 = vmatprep.subr.mxu0 0.0
    %3921 = vmatpush1.msra.mxu0 %v3868
    %3922 = vmatprep.subr.mxu0 0.0
    %3923 = vmatpush1.msra.mxu0 %v3869
    %3924 = vmatprep.subr.mxu0 0.0
    %3925 = vmatpush1.msra.mxu0 %v3870
    %3926 = vmatprep.subr.mxu0 0.0
    %3927 = vmatpush1.msra.mxu0 %v3871
    %3928 = vmatprep.subr.mxu0 0.0
    %3929 = vmatpush1.msra.mxu0 %v3872
    %3930 = vmatprep.subr.mxu0 0.0
    %3931 = vmatpush1.msra.mxu0 %v3873
    %3932 = vmatprep.subr.mxu0 0.0
    %3933 = vmatpush1.msra.mxu0 %v3874
    %3934 = vmatprep.subr.mxu0 0.0
    %3935 = vmatpush1.msra.mxu0 %v3875
    %3936 = vmatprep.subr.mxu0 0.0
    %3937 = vmatpush1.msra.mxu0 %v3876
    %3938 = vmatprep.subr.mxu0 0.0
    %3939 = vmatpush1.msra.mxu0 0.0
    %3940 = vmatprep.subr.mxu0 0.0
    %3941 = vmatpush1.msra.mxu0 0.0
    %3942 = vmatprep.subr.mxu0 0.0
    %3943 = vmatpush1.msra.mxu0 0.0
    %3944 = vmatprep.subr.mxu0 0.0
    %3945 = vmatpush1.msra.mxu0 0.0
    %3946 = vmatprep.mubr.f32.mxu0 %v3880
    %3947 = vmatmul.mubr.f32.gmra.mrb[0].mxu0 %v3877
    %v3948 = vpop.f32.mrb[0].mxu0
    %v3949 = vadd.f32 0.0, %v3948
    %v3950 = vpop.f32.mrb[0].mxu0
    %3951 = vdwg.mxu0
    %v3952 = vadd.f32 %v3847, %v3949
    %s3953 = scalar_lea.vmem [#allocation14], 896
    %v3954 = vld [vmem:[%s3953] sm:$0xff]
    %v3955 = vld [vmem:[%s3953 + $0x8] sm:$0xff]
    %v3956 = vld [vmem:[%s3953 + $0x10] sm:$0xff]
    %v3957 = vld [vmem:[%s3953 + $0x18] sm:$0xff]
    %v3958 = vld [vmem:[%s3953 + $0x20] sm:$0xff]
    %v3959 = vld [vmem:[%s3953 + $0x28] sm:$0xff]
    %v3960 = vld [vmem:[%s3953 + $0x30] sm:$0xff]
    %v3961 = vld [vmem:[%s3953 + $0x38] sm:$0xff]
    %v3962 = vld [vmem:[%s3953 + $0x40] sm:$0xff]
    %v3963 = vld [vmem:[%s3953 + $0x48] sm:$0xff]
    %v3964 = vld [vmem:[%s3953 + $0x50] sm:$0xff]
    %v3965 = vld [vmem:[%s3953 + $0x58] sm:$0xff]
    %v3966 = vld [vmem:[%s3953 + $0x60] sm:$0xff]
    %v3967 = vld [vmem:[%s3953 + $0x68] sm:$0xff]
    %v3968 = vld [vmem:[%s3953 + $0x70] sm:$0xff]
    %v3969 = vld [vmem:[%s3953 + $0x78] sm:$0xff]
    %v3970 = vld [vmem:[%s3953 + $0x80] sm:$0xff]
    %v3971 = vld [vmem:[%s3953 + $0x88] sm:$0xff]
    %v3972 = vld [vmem:[%s3953 + $0x90] sm:$0xff]
    %v3973 = vld [vmem:[%s3953 + $0x98] sm:$0xff]
    %v3974 = vld [vmem:[%s3953 + $0xa0] sm:$0xff]
    %v3975 = vld [vmem:[%s3953 + $0xa8] sm:$0xff]
    %v3976 = vld [vmem:[%s3953 + $0xb0] sm:$0xff]
    %v3977 = vld [vmem:[%s3953 + $0xb8] sm:$0xff]
    %v3978 = vld [vmem:[%s3953 + $0xc0] sm:$0xff]
    %v3979 = vld [vmem:[%s3953 + $0xc8] sm:$0xff]
    %v3980 = vld [vmem:[%s3953 + $0xd0] sm:$0xff]
    %v3981 = vld [vmem:[%s3953 + $0xd8] sm:$0xff]
    %v3982 = vrot.slane %v3532, 4
    %v3983 = vrot.slane %v3533, 4
    %v3985 = vsel %vm174, %v3983, 0
    %3987 = vmatprep.subr.mxu0 0.0
    %3988 = vmatpush1.msra.mxu0 %v3954
    %3989 = vmatprep.subr.mxu0 0.0
    %3990 = vmatpush1.msra.mxu0 %v3955
    %3991 = vmatprep.subr.mxu0 0.0
    %3992 = vmatpush1.msra.mxu0 %v3956
    %3993 = vmatprep.subr.mxu0 0.0
    %3994 = vmatpush1.msra.mxu0 %v3957
    %3995 = vmatprep.subr.mxu0 0.0
    %3996 = vmatpush1.msra.mxu0 %v3958
    %3997 = vmatprep.subr.mxu0 0.0
    %3998 = vmatpush1.msra.mxu0 %v3959
    %3999 = vmatprep.subr.mxu0 0.0
    %4000 = vmatpush1.msra.mxu0 %v3960
    %4001 = vmatprep.subr.mxu0 0.0
    %4002 = vmatpush1.msra.mxu0 %v3961
    %4003 = vmatprep.subr.mxu0 0.0
    %4004 = vmatpush1.msra.mxu0 %v3962
    %4005 = vmatprep.subr.mxu0 0.0
    %4006 = vmatpush1.msra.mxu0 %v3963
    %4007 = vmatprep.subr.mxu0 0.0
    %4008 = vmatpush1.msra.mxu0 %v3964
    %4009 = vmatprep.subr.mxu0 0.0
    %4010 = vmatpush1.msra.mxu0 %v3965
    %4011 = vmatprep.subr.mxu0 0.0
    %4012 = vmatpush1.msra.mxu0 %v3966
    %4013 = vmatprep.subr.mxu0 0.0
    %4014 = vmatpush1.msra.mxu0 %v3967
    %4015 = vmatprep.subr.mxu0 0.0
    %4016 = vmatpush1.msra.mxu0 %v3968
    %4017 = vmatprep.subr.mxu0 0.0
    %4018 = vmatpush1.msra.mxu0 %v3969
    %4019 = vmatprep.subr.mxu0 0.0
    %4020 = vmatpush1.msra.mxu0 %v3970
    %4021 = vmatprep.subr.mxu0 0.0
    %4022 = vmatpush1.msra.mxu0 %v3971
    %4023 = vmatprep.subr.mxu0 0.0
    %4024 = vmatpush1.msra.mxu0 %v3972
    %4025 = vmatprep.subr.mxu0 0.0
    %4026 = vmatpush1.msra.mxu0 %v3973
    %4027 = vmatprep.subr.mxu0 0.0
    %4028 = vmatpush1.msra.mxu0 %v3974
    %4029 = vmatprep.subr.mxu0 0.0
    %4030 = vmatpush1.msra.mxu0 %v3975
    %4031 = vmatprep.subr.mxu0 0.0
    %4032 = vmatpush1.msra.mxu0 %v3976
    %4033 = vmatprep.subr.mxu0 0.0
    %4034 = vmatpush1.msra.mxu0 %v3977
    %4035 = vmatprep.subr.mxu0 0.0
    %4036 = vmatpush1.msra.mxu0 %v3978
    %4037 = vmatprep.subr.mxu0 0.0
    %4038 = vmatpush1.msra.mxu0 %v3979
    %4039 = vmatprep.subr.mxu0 0.0
    %4040 = vmatpush1.msra.mxu0 %v3980
    %4041 = vmatprep.subr.mxu0 0.0
    %4042 = vmatpush1.msra.mxu0 %v3981
    %4043 = vmatprep.subr.mxu0 0.0
    %4044 = vmatpush1.msra.mxu0 0.0
    %4045 = vmatprep.subr.mxu0 0.0
    %4046 = vmatpush1.msra.mxu0 0.0
    %4047 = vmatprep.subr.mxu0 0.0
    %4048 = vmatpush1.msra.mxu0 0.0
    %4049 = vmatprep.subr.mxu0 0.0
    %4050 = vmatpush1.msra.mxu0 0.0
    %4051 = vmatprep.mubr.f32.mxu0 %v3985
    %4052 = vmatmul.mubr.f32.gmra.mrb[0].mxu0 %v3982
    %v4053 = vpop.f32.mrb[0].mxu0
    %v4054 = vadd.f32 0.0, %v4053
    %v4055 = vpop.f32.mrb[0].mxu0
    %4056 = vdwg.mxu0
    %v4057 = vadd.f32 %v3952, %v4054
    %s4058 = scalar_lea.vmem [#allocation14], 1120
    %v4059 = vld [vmem:[%s4058] sm:$0xff]
    %v4060 = vld [vmem:[%s4058 + $0x8] sm:$0xff]
    %v4061 = vld [vmem:[%s4058 + $0x10] sm:$0xff]
    %v4062 = vld [vmem:[%s4058 + $0x18] sm:$0xff]
    %v4063 = vld [vmem:[%s4058 + $0x20] sm:$0xff]
    %v4064 = vld [vmem:[%s4058 + $0x28] sm:$0xff]
    %v4065 = vld [vmem:[%s4058 + $0x30] sm:$0xff]
    %v4066 = vld [vmem:[%s4058 + $0x38] sm:$0xff]
    %v4067 = vld [vmem:[%s4058 + $0x40] sm:$0xff]
    %v4068 = vld [vmem:[%s4058 + $0x48] sm:$0xff]
    %v4069 = vld [vmem:[%s4058 + $0x50] sm:$0xff]
    %v4070 = vld [vmem:[%s4058 + $0x58] sm:$0xff]
    %v4071 = vld [vmem:[%s4058 + $0x60] sm:$0xff]
    %v4072 = vld [vmem:[%s4058 + $0x68] sm:$0xff]
    %v4073 = vld [vmem:[%s4058 + $0x70] sm:$0xff]
    %v4074 = vld [vmem:[%s4058 + $0x78] sm:$0xff]
    %v4075 = vld [vmem:[%s4058 + $0x80] sm:$0xff]
    %v4076 = vld [vmem:[%s4058 + $0x88] sm:$0xff]
    %v4077 = vld [vmem:[%s4058 + $0x90] sm:$0xff]
    %v4078 = vld [vmem:[%s4058 + $0x98] sm:$0xff]
    %v4079 = vld [vmem:[%s4058 + $0xa0] sm:$0xff]
    %v4080 = vld [vmem:[%s4058 + $0xa8] sm:$0xff]
    %v4081 = vld [vmem:[%s4058 + $0xb0] sm:$0xff]
    %v4082 = vld [vmem:[%s4058 + $0xb8] sm:$0xff]
    %v4083 = vld [vmem:[%s4058 + $0xc0] sm:$0xff]
    %v4084 = vld [vmem:[%s4058 + $0xc8] sm:$0xff]
    %v4085 = vld [vmem:[%s4058 + $0xd0] sm:$0xff]
    %v4086 = vld [vmem:[%s4058 + $0xd8] sm:$0xff]
    %v4087 = vrot.slane %v3532, 5
    %v4088 = vrot.slane %v3533, 5
    %v4090 = vsel %vm174, %v4088, 0
    %4092 = vmatprep.subr.mxu0 0.0
    %4093 = vmatpush1.msra.mxu0 %v4059
    %4094 = vmatprep.subr.mxu0 0.0
    %4095 = vmatpush1.msra.mxu0 %v4060
    %4096 = vmatprep.subr.mxu0 0.0
    %4097 = vmatpush1.msra.mxu0 %v4061
    %4098 = vmatprep.subr.mxu0 0.0
    %4099 = vmatpush1.msra.mxu0 %v4062
    %4100 = vmatprep.subr.mxu0 0.0
    %4101 = vmatpush1.msra.mxu0 %v4063
    %4102 = vmatprep.subr.mxu0 0.0
    %4103 = vmatpush1.msra.mxu0 %v4064
    %4104 = vmatprep.subr.mxu0 0.0
    %4105 = vmatpush1.msra.mxu0 %v4065
    %4106 = vmatprep.subr.mxu0 0.0
    %4107 = vmatpush1.msra.mxu0 %v4066
    %4108 = vmatprep.subr.mxu0 0.0
    %4109 = vmatpush1.msra.mxu0 %v4067
    %4110 = vmatprep.subr.mxu0 0.0
    %4111 = vmatpush1.msra.mxu0 %v4068
    %4112 = vmatprep.subr.mxu0 0.0
    %4113 = vmatpush1.msra.mxu0 %v4069
    %4114 = vmatprep.subr.mxu0 0.0
    %4115 = vmatpush1.msra.mxu0 %v4070
    %4116 = vmatprep.subr.mxu0 0.0
    %4117 = vmatpush1.msra.mxu0 %v4071
    %4118 = vmatprep.subr.mxu0 0.0
    %4119 = vmatpush1.msra.mxu0 %v4072
    %4120 = vmatprep.subr.mxu0 0.0
    %4121 = vmatpush1.msra.mxu0 %v4073
    %4122 = vmatprep.subr.mxu0 0.0
    %4123 = vmatpush1.msra.mxu0 %v4074
    %4124 = vmatprep.subr.mxu0 0.0
    %4125 = vmatpush1.msra.mxu0 %v4075
    %4126 = vmatprep.subr.mxu0 0.0
    %4127 = vmatpush1.msra.mxu0 %v4076
    %4128 = vmatprep.subr.mxu0 0.0
    %4129 = vmatpush1.msra.mxu0 %v4077
    %4130 = vmatprep.subr.mxu0 0.0
    %4131 = vmatpush1.msra.mxu0 %v4078
    %4132 = vmatprep.subr.mxu0 0.0
    %4133 = vmatpush1.msra.mxu0 %v4079
    %4134 = vmatprep.subr.mxu0 0.0
    %4135 = vmatpush1.msra.mxu0 %v4080
    %4136 = vmatprep.subr.mxu0 0.0
    %4137 = vmatpush1.msra.mxu0 %v4081
    %4138 = vmatprep.subr.mxu0 0.0
    %4139 = vmatpush1.msra.mxu0 %v4082
    %4140 = vmatprep.subr.mxu0 0.0
    %4141 = vmatpush1.msra.mxu0 %v4083
    %4142 = vmatprep.subr.mxu0 0.0
    %4143 = vmatpush1.msra.mxu0 %v4084
    %4144 = vmatprep.subr.mxu0 0.0
    %4145 = vmatpush1.msra.mxu0 %v4085
    %4146 = vmatprep.subr.mxu0 0.0
    %4147 = vmatpush1.msra.mxu0 %v4086
    %4148 = vmatprep.subr.mxu0 0.0
    %4149 = vmatpush1.msra.mxu0 0.0
    %4150 = vmatprep.subr.mxu0 0.0
    %4151 = vmatpush1.msra.mxu0 0.0
    %4152 = vmatprep.subr.mxu0 0.0
    %4153 = vmatpush1.msra.mxu0 0.0
    %4154 = vmatprep.subr.mxu0 0.0
    %4155 = vmatpush1.msra.mxu0 0.0
    %4156 = vmatprep.mubr.f32.mxu0 %v4090
    %4157 = vmatmul.mubr.f32.gmra.mrb[0].mxu0 %v4087
    %v4158 = vpop.f32.mrb[0].mxu0
    %v4159 = vadd.f32 0.0, %v4158
    %v4160 = vpop.f32.mrb[0].mxu0
    %4161 = vdwg.mxu0
    %v4162 = vadd.f32 %v4057, %v4159
    %s4163 = scalar_lea.vmem [#allocation14], 1344
    %v4164 = vld [vmem:[%s4163] sm:$0xff]
    %v4165 = vld [vmem:[%s4163 + $0x8] sm:$0xff]
    %v4166 = vld [vmem:[%s4163 + $0x10] sm:$0xff]
    %v4167 = vld [vmem:[%s4163 + $0x18] sm:$0xff]
    %v4168 = vld [vmem:[%s4163 + $0x20] sm:$0xff]
    %v4169 = vld [vmem:[%s4163 + $0x28] sm:$0xff]
    %v4170 = vld [vmem:[%s4163 + $0x30] sm:$0xff]
    %v4171 = vld [vmem:[%s4163 + $0x38] sm:$0xff]
    %v4172 = vld [vmem:[%s4163 + $0x40] sm:$0xff]
    %v4173 = vld [vmem:[%s4163 + $0x48] sm:$0xff]
    %v4174 = vld [vmem:[%s4163 + $0x50] sm:$0xff]
    %v4175 = vld [vmem:[%s4163 + $0x58] sm:$0xff]
    %v4176 = vld [vmem:[%s4163 + $0x60] sm:$0xff]
    %v4177 = vld [vmem:[%s4163 + $0x68] sm:$0xff]
    %v4178 = vld [vmem:[%s4163 + $0x70] sm:$0xff]
    %v4179 = vld [vmem:[%s4163 + $0x78] sm:$0xff]
    %v4180 = vld [vmem:[%s4163 + $0x80] sm:$0xff]
    %v4181 = vld [vmem:[%s4163 + $0x88] sm:$0xff]
    %v4182 = vld [vmem:[%s4163 + $0x90] sm:$0xff]
    %v4183 = vld [vmem:[%s4163 + $0x98] sm:$0xff]
    %v4184 = vld [vmem:[%s4163 + $0xa0] sm:$0xff]
    %v4185 = vld [vmem:[%s4163 + $0xa8] sm:$0xff]
    %v4186 = vld [vmem:[%s4163 + $0xb0] sm:$0xff]
    %v4187 = vld [vmem:[%s4163 + $0xb8] sm:$0xff]
    %v4188 = vld [vmem:[%s4163 + $0xc0] sm:$0xff]
    %v4189 = vld [vmem:[%s4163 + $0xc8] sm:$0xff]
    %v4190 = vld [vmem:[%s4163 + $0xd0] sm:$0xff]
    %v4191 = vld [vmem:[%s4163 + $0xd8] sm:$0xff]
    %v4192 = vrot.slane %v3532, 6
    %v4193 = vrot.slane %v3533, 6
    %v4195 = vsel %vm174, %v4193, 0
    %4197 = vmatprep.subr.mxu0 0.0
    %4198 = vmatpush1.msra.mxu0 %v4164
    %4199 = vmatprep.subr.mxu0 0.0
    %4200 = vmatpush1.msra.mxu0 %v4165
    %4201 = vmatprep.subr.mxu0 0.0
    %4202 = vmatpush1.msra.mxu0 %v4166
    %4203 = vmatprep.subr.mxu0 0.0
    %4204 = vmatpush1.msra.mxu0 %v4167
    %4205 = vmatprep.subr.mxu0 0.0
    %4206 = vmatpush1.msra.mxu0 %v4168
    %4207 = vmatprep.subr.mxu0 0.0
    %4208 = vmatpush1.msra.mxu0 %v4169
    %4209 = vmatprep.subr.mxu0 0.0
    %4210 = vmatpush1.msra.mxu0 %v4170
    %4211 = vmatprep.subr.mxu0 0.0
    %4212 = vmatpush1.msra.mxu0 %v4171
    %4213 = vmatprep.subr.mxu0 0.0
    %4214 = vmatpush1.msra.mxu0 %v4172
    %4215 = vmatprep.subr.mxu0 0.0
    %4216 = vmatpush1.msra.mxu0 %v4173
    %4217 = vmatprep.subr.mxu0 0.0
    %4218 = vmatpush1.msra.mxu0 %v4174
    %4219 = vmatprep.subr.mxu0 0.0
    %4220 = vmatpush1.msra.mxu0 %v4175
    %4221 = vmatprep.subr.mxu0 0.0
    %4222 = vmatpush1.msra.mxu0 %v4176
    %4223 = vmatprep.subr.mxu0 0.0
    %4224 = vmatpush1.msra.mxu0 %v4177
    %4225 = vmatprep.subr.mxu0 0.0
    %4226 = vmatpush1.msra.mxu0 %v4178
    %4227 = vmatprep.subr.mxu0 0.0
    %4228 = vmatpush1.msra.mxu0 %v4179
    %4229 = vmatprep.subr.mxu0 0.0
    %4230 = vmatpush1.msra.mxu0 %v4180
    %4231 = vmatprep.subr.mxu0 0.0
    %4232 = vmatpush1.msra.mxu0 %v4181
    %4233 = vmatprep.subr.mxu0 0.0
    %4234 = vmatpush1.msra.mxu0 %v4182
    %4235 = vmatprep.subr.mxu0 0.0
    %4236 = vmatpush1.msra.mxu0 %v4183
    %4237 = vmatprep.subr.mxu0 0.0
    %4238 = vmatpush1.msra.mxu0 %v4184
    %4239 = vmatprep.subr.mxu0 0.0
    %4240 = vmatpush1.msra.mxu0 %v4185
    %4241 = vmatprep.subr.mxu0 0.0
    %4242 = vmatpush1.msra.mxu0 %v4186
    %4243 = vmatprep.subr.mxu0 0.0
    %4244 = vmatpush1.msra.mxu0 %v4187
    %4245 = vmatprep.subr.mxu0 0.0
    %4246 = vmatpush1.msra.mxu0 %v4188
    %4247 = vmatprep.subr.mxu0 0.0
    %4248 = vmatpush1.msra.mxu0 %v4189
    %4249 = vmatprep.subr.mxu0 0.0
    %4250 = vmatpush1.msra.mxu0 %v4190
    %4251 = vmatprep.subr.mxu0 0.0
    %4252 = vmatpush1.msra.mxu0 %v4191
    %4253 = vmatprep.subr.mxu0 0.0
    %4254 = vmatpush1.msra.mxu0 0.0
    %4255 = vmatprep.subr.mxu0 0.0
    %4256 = vmatpush1.msra.mxu0 0.0
    %4257 = vmatprep.subr.mxu0 0.0
    %4258 = vmatpush1.msra.mxu0 0.0
    %4259 = vmatprep.subr.mxu0 0.0
    %4260 = vmatpush1.msra.mxu0 0.0
    %4261 = vmatprep.mubr.f32.mxu0 %v4195
    %4262 = vmatmul.mubr.f32.gmra.mrb[0].mxu0 %v4192
    %v4263 = vpop.f32.mrb[0].mxu0
    %v4264 = vadd.f32 0.0, %v4263
    %v4265 = vpop.f32.mrb[0].mxu0
    %4266 = vdwg.mxu0
    %v4267 = vadd.f32 %v4162, %v4264
    %v4268 = vmax.f32 %v4267, 0.0
    %v4269 = vld [vmem:[#allocation17] sm:$0xff]
    %v4270 = vld [vmem:[#allocation17 + $0x8] sm:$0xff]
    %v4271 = vld [vmem:[#allocation17 + $0x10] sm:$0xff]
    %v4272 = vld [vmem:[#allocation17 + $0x18] sm:$0xff]
    %v4273 = vld [vmem:[#allocation17 + $0x20] sm:$0xff]
    %v4274 = vld [vmem:[#allocation17 + $0x28] sm:$0xff]
    %v4275 = vld [vmem:[#allocation17 + $0x30] sm:$0xff]
    %v4276 = vld [vmem:[#allocation17 + $0x38] sm:$0xff]
    %v4277 = vld [vmem:[#allocation17 + $0x40] sm:$0xff]
    %v4278 = vld [vmem:[#allocation17 + $0x48] sm:$0xff]
    %v4279 = vld [vmem:[#allocation17 + $0x50] sm:$0xff]
    %v4280 = vld [vmem:[#allocation17 + $0x58] sm:$0xff]
    %v4281 = vld [vmem:[#allocation17 + $0x60] sm:$0xff]
    %v4282 = vld [vmem:[#allocation17 + $0x68] sm:$0xff]
    %v4283 = vld [vmem:[#allocation17 + $0x70] sm:$0xff]
    %v4284 = vld [vmem:[#allocation17 + $0x78] sm:$0xff]
    %v4285 = vld [vmem:[#allocation18] sm:$0x1]
    %4286 = vmatprep.subr.mxu0 0.0
    %4287 = vmatpush1.msra.mxu0 %v4269
    %4288 = vmatprep.subr.mxu0 0.0
    %4289 = vmatpush1.msra.mxu0 %v4270
    %4290 = vmatprep.subr.mxu0 0.0
    %4291 = vmatpush1.msra.mxu0 %v4271
    %4292 = vmatprep.subr.mxu0 0.0
    %4293 = vmatpush1.msra.mxu0 %v4272
    %4294 = vmatprep.subr.mxu0 0.0
    %4295 = vmatpush1.msra.mxu0 %v4273
    %4296 = vmatprep.subr.mxu0 0.0
    %4297 = vmatpush1.msra.mxu0 %v4274
    %4298 = vmatprep.subr.mxu0 0.0
    %4299 = vmatpush1.msra.mxu0 %v4275
    %4300 = vmatprep.subr.mxu0 0.0
    %4301 = vmatpush1.msra.mxu0 %v4276
    %4302 = vmatprep.subr.mxu0 0.0
    %4303 = vmatpush1.msra.mxu0 %v4277
    %4304 = vmatprep.subr.mxu0 0.0
    %4305 = vmatpush1.msra.mxu0 %v4278
    %4306 = vmatprep.subr.mxu0 0.0
    %4307 = vmatpush1.msra.mxu0 %v4279
    %4308 = vmatprep.subr.mxu0 0.0
    %4309 = vmatpush1.msra.mxu0 %v4280
    %4310 = vmatprep.subr.mxu0 0.0
    %4311 = vmatpush1.msra.mxu0 %v4281
    %4312 = vmatprep.subr.mxu0 0.0
    %4313 = vmatpush1.msra.mxu0 %v4282
    %4314 = vmatprep.subr.mxu0 0.0
    %4315 = vmatpush1.msra.mxu0 %v4283
    %4316 = vmatprep.subr.mxu0 0.0
    %4317 = vmatpush1.msra.mxu0 %v4284
    %4318 = vmatprep.subr.mxu0 0.0
    %4319 = vmatpush1.msra.mxu0 0.0
    %4320 = vmatprep.subr.mxu0 0.0
    %4321 = vmatpush1.msra.mxu0 0.0
    %4322 = vmatprep.subr.mxu0 0.0
    %4323 = vmatpush1.msra.mxu0 0.0
    %4324 = vmatprep.subr.mxu0 0.0
    %4325 = vmatpush1.msra.mxu0 0.0
    %4326 = vmatprep.subr.mxu0 0.0
    %4327 = vmatpush1.msra.mxu0 0.0
    %4328 = vmatprep.subr.mxu0 0.0
    %4329 = vmatpush1.msra.mxu0 0.0
    %4330 = vmatprep.subr.mxu0 0.0
    %4331 = vmatpush1.msra.mxu0 0.0
    %4332 = vmatprep.subr.mxu0 0.0
    %4333 = vmatpush1.msra.mxu0 0.0
    %4334 = vmatprep.subr.mxu0 0.0
    %4335 = vmatpush1.msra.mxu0 0.0
    %4336 = vmatprep.subr.mxu0 0.0
    %4337 = vmatpush1.msra.mxu0 0.0
    %4338 = vmatprep.subr.mxu0 0.0
    %4339 = vmatpush1.msra.mxu0 0.0
    %4340 = vmatprep.subr.mxu0 0.0
    %4341 = vmatpush1.msra.mxu0 0.0
    %4342 = vmatprep.subr.mxu0 0.0
    %4343 = vmatpush1.msra.mxu0 0.0
    %4344 = vmatprep.subr.mxu0 0.0
    %4345 = vmatpush1.msra.mxu0 0.0
    %4346 = vmatprep.subr.mxu0 0.0
    %4347 = vmatpush1.msra.mxu0 0.0
    %4348 = vmatprep.subr.mxu0 0.0
    %4349 = vmatpush1.msra.mxu0 0.0
    %4350 = vmatprep.mubr.f32.mxu0 0.0
    %4351 = vmatmul.mubr.f32.gmra.mrb[0].mxu0 %v4268
    %v4352 = vpop.f32.mrb[0].mxu0
    %v4353 = vadd.f32 %v4285, %v4352
    %v4354 = vpop.f32.mrb[0].mxu0
    %4355 = vdwg.mxu0
    %4356 = vst [vmem:[#allocation20] sm:$0x1] %v4353
    %s4357 = scalar_lea.vmem %s0, 32
    %v4358 = vld [vmem:[%s4357] sm:$0xff]
    %v4359 = vld [vmem:[%s4357 + $0x8] sm:$0xff]
    %v4360 = vld [vmem:[%s4357 + $0x10] sm:$0xff]
    %v4361 = vld [vmem:[%s4357 + $0x18] sm:$0x3f]
    %v4362 = vld [vmem:[#allocation3] sm:$0xff]
    %v4363 = vld [vmem:[#allocation3 + $0x8] sm:$0xff]
    %v4364 = vld [vmem:[#allocation3 + $0x10] sm:$0xff]
    %v4365 = vld [vmem:[#allocation3 + $0x18] sm:$0xff]
    %v4366 = vld [vmem:[#allocation3 + $0x20] sm:$0xff]
    %v4367 = vld [vmem:[#allocation3 + $0x28] sm:$0xff]
    %v4368 = vld [vmem:[#allocation3 + $0x30] sm:$0xff]
    %v4369 = vld [vmem:[#allocation3 + $0x38] sm:$0xff]
    %v4370 = vld [vmem:[#allocation3 + $0x40] sm:$0xff]
    %v4371 = vld [vmem:[#allocation3 + $0x48] sm:$0xff]
    %v4372 = vld [vmem:[#allocation3 + $0x50] sm:$0xff]
    %v4373 = vld [vmem:[#allocation3 + $0x58] sm:$0xff]
    %v4374 = vld [vmem:[#allocation3 + $0x60] sm:$0xf]
    %v4375 = vld [vmem:[#allocation3 + $0x68] sm:$0xf]
    %v4376 = vld [vmem:[#allocation3 + $0x70] sm:$0xf]
    %v4377 = vld [vmem:[#allocation3 + $0x78] sm:$0xf]
    %v4378 = vld [vmem:[%s198] sm:$0xff]
    %v4379 = vld [vmem:[%s198 + $0x8] sm:$0xff]
    %v4380 = vld [vmem:[%s198 + $0x10] sm:$0xff]
    %v4381 = vld [vmem:[%s198 + $0x18] sm:$0xff]
    %v4382 = vld [vmem:[%s198 + $0x20] sm:$0xff]
    %v4383 = vld [vmem:[%s198 + $0x28] sm:$0xff]
    %v4384 = vld [vmem:[%s198 + $0x30] sm:$0xff]
    %v4385 = vld [vmem:[%s198 + $0x38] sm:$0xff]
    %v4386 = vld [vmem:[%s198 + $0x40] sm:$0xff]
    %v4387 = vld [vmem:[%s198 + $0x48] sm:$0xff]
    %v4388 = vld [vmem:[%s198 + $0x50] sm:$0xff]
    %v4389 = vld [vmem:[%s198 + $0x58] sm:$0xff]
    %v4390 = vld [vmem:[%s198 + $0x60] sm:$0xf]
    %v4391 = vld [vmem:[%s198 + $0x68] sm:$0xf]
    %v4392 = vld [vmem:[%s198 + $0x70] sm:$0xf]
    %v4393 = vld [vmem:[%s198 + $0x78] sm:$0xf]
    %v4398 = vrot.slane %v4358, 1
    %v4399 = vrot.slane %v4359, 1
    %v4400 = vsel %vm219, %v4398, %v4399
    %v4401 = vrot.slane %v4360, 1
    %v4402 = vsel %vm219, %v4399, %v4401
    %v4403 = vrot.slane %v4361, 1
    %v4404 = vsel %vm219, %v4401, %v4403
    %v4405 = vsel %vm227, %v4400, 0
    %v4407 = vsel %vm227, %v4402, 0
    %v4409 = vsel %vm227, %v4404, 0
    %v4411 = vsel %vm227, %v4403, 0
    %v4414 = vsel %vm236, %v4390, 0
    %v4417 = vsel %vm236, %v4391, 0
    %v4420 = vsel %vm236, %v4392, 0
    %v4423 = vsel %vm236, %v4393, 0
    %4425 = vmatprep.subr.mxu0 %v4379
    %4426 = vmatpush1.msra.mxu0 %v4378
    %4427 = vmatprep.subr.mxu0 %v4383
    %4428 = vmatpush1.msra.mxu0 %v4382
    %4429 = vmatprep.subr.mxu0 %v4387
    %4430 = vmatpush1.msra.mxu0 %v4386
    %4431 = vmatprep.subr.mxu0 %v4417
    %4432 = vmatpush1.msra.mxu0 %v4414
    %4433 = vmatprep.subr.mxu0 0.0
    %4434 = vmatpush1.msra.mxu0 0.0
    %4435 = vmatprep.subr.mxu0 0.0
    %4436 = vmatpush1.msra.mxu0 0.0
    %4437 = vmatprep.subr.mxu0 0.0
    %4438 = vmatpush1.msra.mxu0 0.0
    %4439 = vmatprep.subr.mxu0 0.0
    %4440 = vmatpush1.msra.mxu0 0.0
    %4441 = vmatprep.subr.mxu0 0.0
    %4442 = vmatpush1.msra.mxu0 0.0
    %4443 = vmatprep.subr.mxu0 0.0
    %4444 = vmatpush1.msra.mxu0 0.0
    %4445 = vmatprep.subr.mxu0 0.0
    %4446 = vmatpush1.msra.mxu0 0.0
    %4447 = vmatprep.subr.mxu0 0.0
    %4448 = vmatpush1.msra.mxu0 0.0
    %4449 = vmatprep.subr.mxu0 0.0
    %4450 = vmatpush1.msra.mxu0 0.0
    %4451 = vmatprep.subr.mxu0 0.0
    %4452 = vmatpush1.msra.mxu0 0.0
    %4453 = vmatprep.subr.mxu0 0.0
    %4454 = vmatpush1.msra.mxu0 0.0
    %4455 = vmatprep.subr.mxu0 0.0
    %4456 = vmatpush1.msra.mxu0 0.0
    %4457 = vmatprep.subr.mxu0 0.0
    %4458 = vmatpush1.msra.mxu0 0.0
    %4459 = vmatprep.subr.mxu0 0.0
    %4460 = vmatpush1.msra.mxu0 0.0
    %4461 = vmatprep.subr.mxu0 0.0
    %4462 = vmatpush1.msra.mxu0 0.0
    %4463 = vmatprep.subr.mxu0 0.0
    %4464 = vmatpush1.msra.mxu0 0.0
    %4465 = vmatprep.subr.mxu0 0.0
    %4466 = vmatpush1.msra.mxu0 0.0
    %4467 = vmatprep.subr.mxu0 0.0
    %4468 = vmatpush1.msra.mxu0 0.0
    %4469 = vmatprep.subr.mxu0 0.0
    %4470 = vmatpush1.msra.mxu0 0.0
    %4471 = vmatprep.subr.mxu0 0.0
    %4472 = vmatpush1.msra.mxu0 0.0
    %4473 = vmatprep.subr.mxu0 0.0
    %4474 = vmatpush1.msra.mxu0 0.0
    %4475 = vmatprep.subr.mxu0 0.0
    %4476 = vmatpush1.msra.mxu0 0.0
    %4477 = vmatprep.subr.mxu0 0.0
    %4478 = vmatpush1.msra.mxu0 0.0
    %4479 = vmatprep.subr.mxu0 0.0
    %4480 = vmatpush1.msra.mxu0 0.0
    %4481 = vmatprep.subr.mxu0 0.0
    %4482 = vmatpush1.msra.mxu0 0.0
    %4483 = vmatprep.subr.mxu0 0.0
    %4484 = vmatpush1.msra.mxu0 0.0
    %4485 = vmatprep.subr.mxu0 0.0
    %4486 = vmatpush1.msra.mxu0 0.0
    %4487 = vmatprep.subr.mxu0 0.0
    %4488 = vmatpush1.msra.mxu0 0.0
    %4489 = vmatprep.mubr.f32.mxu0 0.0
    %4490 = vmatmul.mubr.f32.gmra.mrb[0].mxu0 %v4405
    %v4491 = vpop.f32.mrb[0].mxu0
    %v4492 = vadd.f32 0.0, %v4491
    %v4493 = vpop.f32.mrb[0].mxu0
    %v4494 = vadd.f32 0.0, %v4493
    %4495 = vmatprep.mubr.f32.mxu0 0.0
    %4496 = vmatmul.mubr.f32.gmra.mrb[0].mxu0 %v4407
    %v4497 = vpop.f32.mrb[0].mxu0
    %v4498 = vadd.f32 0.0, %v4497
    %v4499 = vpop.f32.mrb[0].mxu0
    %v4500 = vadd.f32 0.0, %v4499
    %4501 = vmatprep.mubr.f32.mxu0 0.0
    %4502 = vmatmul.mubr.f32.gmra.mrb[0].mxu0 %v4409
    %v4503 = vpop.f32.mrb[0].mxu0
    %v4504 = vadd.f32 0.0, %v4503
    %v4505 = vpop.f32.mrb[0].mxu0
    %v4506 = vadd.f32 0.0, %v4505
    %4507 = vmatprep.mubr.f32.mxu0 0.0
    %4508 = vmatmul.mubr.f32.gmra.mrb[0].mxu0 %v4411
    %v4509 = vpop.f32.mrb[0].mxu0
    %v4510 = vadd.f32 0.0, %v4509
    %v4511 = vpop.f32.mrb[0].mxu0
    %v4512 = vadd.f32 0.0, %v4511
    %4513 = vdwg.mxu0
    %4514 = vmatprep.subr.mxu0 %v4381
    %4515 = vmatpush1.msra.mxu0 %v4380
    %4516 = vmatprep.subr.mxu0 %v4385
    %4517 = vmatpush1.msra.mxu0 %v4384
    %4518 = vmatprep.subr.mxu0 %v4389
    %4519 = vmatpush1.msra.mxu0 %v4388
    %4520 = vmatprep.subr.mxu0 %v4423
    %4521 = vmatpush1.msra.mxu0 %v4420
    %4522 = vmatprep.subr.mxu0 0.0
    %4523 = vmatpush1.msra.mxu0 0.0
    %4524 = vmatprep.subr.mxu0 0.0
    %4525 = vmatpush1.msra.mxu0 0.0
    %4526 = vmatprep.subr.mxu0 0.0
    %4527 = vmatpush1.msra.mxu0 0.0
    %4528 = vmatprep.subr.mxu0 0.0
    %4529 = vmatpush1.msra.mxu0 0.0
    %4530 = vmatprep.subr.mxu0 0.0
    %4531 = vmatpush1.msra.mxu0 0.0
    %4532 = vmatprep.subr.mxu0 0.0
    %4533 = vmatpush1.msra.mxu0 0.0
    %4534 = vmatprep.subr.mxu0 0.0
    %4535 = vmatpush1.msra.mxu0 0.0
    %4536 = vmatprep.subr.mxu0 0.0
    %4537 = vmatpush1.msra.mxu0 0.0
    %4538 = vmatprep.subr.mxu0 0.0
    %4539 = vmatpush1.msra.mxu0 0.0
    %4540 = vmatprep.subr.mxu0 0.0
    %4541 = vmatpush1.msra.mxu0 0.0
    %4542 = vmatprep.subr.mxu0 0.0
    %4543 = vmatpush1.msra.mxu0 0.0
    %4544 = vmatprep.subr.mxu0 0.0
    %4545 = vmatpush1.msra.mxu0 0.0
    %4546 = vmatprep.subr.mxu0 0.0
    %4547 = vmatpush1.msra.mxu0 0.0
    %4548 = vmatprep.subr.mxu0 0.0
    %4549 = vmatpush1.msra.mxu0 0.0
    %4550 = vmatprep.subr.mxu0 0.0
    %4551 = vmatpush1.msra.mxu0 0.0
    %4552 = vmatprep.subr.mxu0 0.0
    %4553 = vmatpush1.msra.mxu0 0.0
    %4554 = vmatprep.subr.mxu0 0.0
    %4555 = vmatpush1.msra.mxu0 0.0
    %4556 = vmatprep.subr.mxu0 0.0
    %4557 = vmatpush1.msra.mxu0 0.0
    %4558 = vmatprep.subr.mxu0 0.0
    %4559 = vmatpush1.msra.mxu0 0.0
    %4560 = vmatprep.subr.mxu0 0.0
    %4561 = vmatpush1.msra.mxu0 0.0
    %4562 = vmatprep.subr.mxu0 0.0
    %4563 = vmatpush1.msra.mxu0 0.0
    %4564 = vmatprep.subr.mxu0 0.0
    %4565 = vmatpush1.msra.mxu0 0.0
    %4566 = vmatprep.subr.mxu0 0.0
    %4567 = vmatpush1.msra.mxu0 0.0
    %4568 = vmatprep.subr.mxu0 0.0
    %4569 = vmatpush1.msra.mxu0 0.0
    %4570 = vmatprep.subr.mxu0 0.0
    %4571 = vmatpush1.msra.mxu0 0.0
    %4572 = vmatprep.subr.mxu0 0.0
    %4573 = vmatpush1.msra.mxu0 0.0
    %4574 = vmatprep.subr.mxu0 0.0
    %4575 = vmatpush1.msra.mxu0 0.0
    %4576 = vmatprep.subr.mxu0 0.0
    %4577 = vmatpush1.msra.mxu0 0.0
    %4578 = vmatprep.mubr.f32.mxu0 0.0
    %4579 = vmatmul.mubr.f32.gmra.mrb[0].mxu0 %v4405
    %v4580 = vpop.f32.mrb[0].mxu0
    %v4581 = vadd.f32 0.0, %v4580
    %v4582 = vpop.f32.mrb[0].mxu0
    %v4583 = vadd.f32 0.0, %v4582
    %4584 = vmatprep.mubr.f32.mxu0 0.0
    %4585 = vmatmul.mubr.f32.gmra.mrb[0].mxu0 %v4407
    %v4586 = vpop.f32.mrb[0].mxu0
    %v4587 = vadd.f32 0.0, %v4586
    %v4588 = vpop.f32.mrb[0].mxu0
    %v4589 = vadd.f32 0.0, %v4588
    %4590 = vmatprep.mubr.f32.mxu0 0.0
    %4591 = vmatmul.mubr.f32.gmra.mrb[0].mxu0 %v4409
    %v4592 = vpop.f32.mrb[0].mxu0
    %v4593 = vadd.f32 0.0, %v4592
    %v4594 = vpop.f32.mrb[0].mxu0
    %v4595 = vadd.f32 0.0, %v4594
    %4596 = vmatprep.mubr.f32.mxu0 0.0
    %4597 = vmatmul.mubr.f32.gmra.mrb[0].mxu0 %v4411
    %v4598 = vpop.f32.mrb[0].mxu0
    %v4599 = vadd.f32 0.0, %v4598
    %v4600 = vpop.f32.mrb[0].mxu0
    %v4601 = vadd.f32 0.0, %v4600
    %4602 = vdwg.mxu0
    %v4603 = vsel %vm227, %v4358, 0
    %v4605 = vsel %vm227, %v4359, 0
    %v4607 = vsel %vm227, %v4360, 0
    %v4609 = vsel %vm227, %v4361, 0
    %v4612 = vsel %vm236, %v4374, 0
    %v4615 = vsel %vm236, %v4375, 0
    %v4618 = vsel %vm236, %v4376, 0
    %v4621 = vsel %vm236, %v4377, 0
    %4623 = vmatprep.subr.mxu0 %v4363
    %4624 = vmatpush1.msra.mxu0 %v4362
    %4625 = vmatprep.subr.mxu0 %v4367
    %4626 = vmatpush1.msra.mxu0 %v4366
    %4627 = vmatprep.subr.mxu0 %v4371
    %4628 = vmatpush1.msra.mxu0 %v4370
    %4629 = vmatprep.subr.mxu0 %v4615
    %4630 = vmatpush1.msra.mxu0 %v4612
    %4631 = vmatprep.subr.mxu0 0.0
    %4632 = vmatpush1.msra.mxu0 0.0
    %4633 = vmatprep.subr.mxu0 0.0
    %4634 = vmatpush1.msra.mxu0 0.0
    %4635 = vmatprep.subr.mxu0 0.0
    %4636 = vmatpush1.msra.mxu0 0.0
    %4637 = vmatprep.subr.mxu0 0.0
    %4638 = vmatpush1.msra.mxu0 0.0
    %4639 = vmatprep.subr.mxu0 0.0
    %4640 = vmatpush1.msra.mxu0 0.0
    %4641 = vmatprep.subr.mxu0 0.0
    %4642 = vmatpush1.msra.mxu0 0.0
    %4643 = vmatprep.subr.mxu0 0.0
    %4644 = vmatpush1.msra.mxu0 0.0
    %4645 = vmatprep.subr.mxu0 0.0
    %4646 = vmatpush1.msra.mxu0 0.0
    %4647 = vmatprep.subr.mxu0 0.0
    %4648 = vmatpush1.msra.mxu0 0.0
    %4649 = vmatprep.subr.mxu0 0.0
    %4650 = vmatpush1.msra.mxu0 0.0
    %4651 = vmatprep.subr.mxu0 0.0
    %4652 = vmatpush1.msra.mxu0 0.0
    %4653 = vmatprep.subr.mxu0 0.0
    %4654 = vmatpush1.msra.mxu0 0.0
    %4655 = vmatprep.subr.mxu0 0.0
    %4656 = vmatpush1.msra.mxu0 0.0
    %4657 = vmatprep.subr.mxu0 0.0
    %4658 = vmatpush1.msra.mxu0 0.0
    %4659 = vmatprep.subr.mxu0 0.0
    %4660 = vmatpush1.msra.mxu0 0.0
    %4661 = vmatprep.subr.mxu0 0.0
    %4662 = vmatpush1.msra.mxu0 0.0
    %4663 = vmatprep.subr.mxu0 0.0
    %4664 = vmatpush1.msra.mxu0 0.0
    %4665 = vmatprep.subr.mxu0 0.0
    %4666 = vmatpush1.msra.mxu0 0.0
    %4667 = vmatprep.subr.mxu0 0.0
    %4668 = vmatpush1.msra.mxu0 0.0
    %4669 = vmatprep.subr.mxu0 0.0
    %4670 = vmatpush1.msra.mxu0 0.0
    %4671 = vmatprep.subr.mxu0 0.0
    %4672 = vmatpush1.msra.mxu0 0.0
    %4673 = vmatprep.subr.mxu0 0.0
    %4674 = vmatpush1.msra.mxu0 0.0
    %4675 = vmatprep.subr.mxu0 0.0
    %4676 = vmatpush1.msra.mxu0 0.0
    %4677 = vmatprep.subr.mxu0 0.0
    %4678 = vmatpush1.msra.mxu0 0.0
    %4679 = vmatprep.subr.mxu0 0.0
    %4680 = vmatpush1.msra.mxu0 0.0
    %4681 = vmatprep.subr.mxu0 0.0
    %4682 = vmatpush1.msra.mxu0 0.0
    %4683 = vmatprep.subr.mxu0 0.0
    %4684 = vmatpush1.msra.mxu0 0.0
    %4685 = vmatprep.subr.mxu0 0.0
    %4686 = vmatpush1.msra.mxu0 0.0
    %4687 = vmatprep.mubr.f32.mxu0 0.0
    %4688 = vmatmul.mubr.f32.gmra.mrb[0].mxu0 %v4603
    %v4689 = vpop.f32.mrb[0].mxu0
    %v4690 = vadd.f32 %v4492, %v4689
    %v4691 = vpop.f32.mrb[0].mxu0
    %v4692 = vadd.f32 %v4494, %v4691
    %4693 = vmatprep.mubr.f32.mxu0 0.0
    %4694 = vmatmul.mubr.f32.gmra.mrb[0].mxu0 %v4605
    %v4695 = vpop.f32.mrb[0].mxu0
    %v4696 = vadd.f32 %v4498, %v4695
    %v4697 = vpop.f32.mrb[0].mxu0
    %v4698 = vadd.f32 %v4500, %v4697
    %4699 = vmatprep.mubr.f32.mxu0 0.0
    %4700 = vmatmul.mubr.f32.gmra.mrb[0].mxu0 %v4607
    %v4701 = vpop.f32.mrb[0].mxu0
    %v4702 = vadd.f32 %v4504, %v4701
    %v4703 = vpop.f32.mrb[0].mxu0
    %v4704 = vadd.f32 %v4506, %v4703
    %4705 = vmatprep.mubr.f32.mxu0 0.0
    %4706 = vmatmul.mubr.f32.gmra.mrb[0].mxu0 %v4609
    %v4707 = vpop.f32.mrb[0].mxu0
    %v4708 = vadd.f32 %v4510, %v4707
    %v4709 = vpop.f32.mrb[0].mxu0
    %v4710 = vadd.f32 %v4512, %v4709
    %4711 = vdwg.mxu0
    %4712 = vmatprep.subr.mxu0 %v4365
    %4713 = vmatpush1.msra.mxu0 %v4364
    %4714 = vmatprep.subr.mxu0 %v4369
    %4715 = vmatpush1.msra.mxu0 %v4368
    %4716 = vmatprep.subr.mxu0 %v4373
    %4717 = vmatpush1.msra.mxu0 %v4372
    %4718 = vmatprep.subr.mxu0 %v4621
    %4719 = vmatpush1.msra.mxu0 %v4618
    %4720 = vmatprep.subr.mxu0 0.0
    %4721 = vmatpush1.msra.mxu0 0.0
    %4722 = vmatprep.subr.mxu0 0.0
    %4723 = vmatpush1.msra.mxu0 0.0
    %4724 = vmatprep.subr.mxu0 0.0
    %4725 = vmatpush1.msra.mxu0 0.0
    %4726 = vmatprep.subr.mxu0 0.0
    %4727 = vmatpush1.msra.mxu0 0.0
    %4728 = vmatprep.subr.mxu0 0.0
    %4729 = vmatpush1.msra.mxu0 0.0
    %4730 = vmatprep.subr.mxu0 0.0
    %4731 = vmatpush1.msra.mxu0 0.0
    %4732 = vmatprep.subr.mxu0 0.0
    %4733 = vmatpush1.msra.mxu0 0.0
    %4734 = vmatprep.subr.mxu0 0.0
    %4735 = vmatpush1.msra.mxu0 0.0
    %4736 = vmatprep.subr.mxu0 0.0
    %4737 = vmatpush1.msra.mxu0 0.0
    %4738 = vmatprep.subr.mxu0 0.0
    %4739 = vmatpush1.msra.mxu0 0.0
    %4740 = vmatprep.subr.mxu0 0.0
    %4741 = vmatpush1.msra.mxu0 0.0
    %4742 = vmatprep.subr.mxu0 0.0
    %4743 = vmatpush1.msra.mxu0 0.0
    %4744 = vmatprep.subr.mxu0 0.0
    %4745 = vmatpush1.msra.mxu0 0.0
    %4746 = vmatprep.subr.mxu0 0.0
    %4747 = vmatpush1.msra.mxu0 0.0
    %4748 = vmatprep.subr.mxu0 0.0
    %4749 = vmatpush1.msra.mxu0 0.0
    %4750 = vmatprep.subr.mxu0 0.0
    %4751 = vmatpush1.msra.mxu0 0.0
    %4752 = vmatprep.subr.mxu0 0.0
    %4753 = vmatpush1.msra.mxu0 0.0
    %4754 = vmatprep.subr.mxu0 0.0
    %4755 = vmatpush1.msra.mxu0 0.0
    %4756 = vmatprep.subr.mxu0 0.0
    %4757 = vmatpush1.msra.mxu0 0.0
    %4758 = vmatprep.subr.mxu0 0.0
    %4759 = vmatpush1.msra.mxu0 0.0
    %4760 = vmatprep.subr.mxu0 0.0
    %4761 = vmatpush1.msra.mxu0 0.0
    %4762 = vmatprep.subr.mxu0 0.0
    %4763 = vmatpush1.msra.mxu0 0.0
    %4764 = vmatprep.subr.mxu0 0.0
    %4765 = vmatpush1.msra.mxu0 0.0
    %4766 = vmatprep.subr.mxu0 0.0
    %4767 = vmatpush1.msra.mxu0 0.0
    %4768 = vmatprep.subr.mxu0 0.0
    %4769 = vmatpush1.msra.mxu0 0.0
    %4770 = vmatprep.subr.mxu0 0.0
    %4771 = vmatpush1.msra.mxu0 0.0
    %4772 = vmatprep.subr.mxu0 0.0
    %4773 = vmatpush1.msra.mxu0 0.0
    %4774 = vmatprep.subr.mxu0 0.0
    %4775 = vmatpush1.msra.mxu0 0.0
    %4776 = vmatprep.mubr.f32.mxu0 0.0
    %4777 = vmatmul.mubr.f32.gmra.mrb[0].mxu0 %v4603
    %v4778 = vpop.f32.mrb[0].mxu0
    %v4779 = vadd.f32 %v4581, %v4778
    %v4780 = vpop.f32.mrb[0].mxu0
    %v4781 = vadd.f32 %v4583, %v4780
    %4782 = vmatprep.mubr.f32.mxu0 0.0
    %4783 = vmatmul.mubr.f32.gmra.mrb[0].mxu0 %v4605
    %v4784 = vpop.f32.mrb[0].mxu0
    %v4785 = vadd.f32 %v4587, %v4784
    %v4786 = vpop.f32.mrb[0].mxu0
    %v4787 = vadd.f32 %v4589, %v4786
    %4788 = vmatprep.mubr.f32.mxu0 0.0
    %4789 = vmatmul.mubr.f32.gmra.mrb[0].mxu0 %v4607
    %v4790 = vpop.f32.mrb[0].mxu0
    %v4791 = vadd.f32 %v4593, %v4790
    %v4792 = vpop.f32.mrb[0].mxu0
    %v4793 = vadd.f32 %v4595, %v4792
    %4794 = vmatprep.mubr.f32.mxu0 0.0
    %4795 = vmatmul.mubr.f32.gmra.mrb[0].mxu0 %v4609
    %v4796 = vpop.f32.mrb[0].mxu0
    %v4797 = vadd.f32 %v4599, %v4796
    %v4798 = vpop.f32.mrb[0].mxu0
    %v4799 = vadd.f32 %v4601, %v4798
    %4800 = vdwg.mxu0
    %v4801 = vld [vmem:[%s625] sm:$0xff]
    %v4802 = vld [vmem:[%s625 + $0x8] sm:$0xff]
    %v4803 = vld [vmem:[%s625 + $0x10] sm:$0xff]
    %v4804 = vld [vmem:[%s625 + $0x18] sm:$0xff]
    %v4805 = vld [vmem:[%s625 + $0x20] sm:$0xff]
    %v4806 = vld [vmem:[%s625 + $0x28] sm:$0xff]
    %v4807 = vld [vmem:[%s625 + $0x30] sm:$0xff]
    %v4808 = vld [vmem:[%s625 + $0x38] sm:$0xff]
    %v4809 = vld [vmem:[%s625 + $0x40] sm:$0xff]
    %v4810 = vld [vmem:[%s625 + $0x48] sm:$0xff]
    %v4811 = vld [vmem:[%s625 + $0x50] sm:$0xff]
    %v4812 = vld [vmem:[%s625 + $0x58] sm:$0xff]
    %v4813 = vld [vmem:[%s625 + $0x60] sm:$0xf]
    %v4814 = vld [vmem:[%s625 + $0x68] sm:$0xf]
    %v4815 = vld [vmem:[%s625 + $0x70] sm:$0xf]
    %v4816 = vld [vmem:[%s625 + $0x78] sm:$0xf]
    %v4817 = vrot.slane %v4358, 2
    %v4818 = vrot.slane %v4359, 2
    %v4819 = vsel %vm642, %v4817, %v4818
    %v4820 = vrot.slane %v4360, 2
    %v4821 = vsel %vm642, %v4818, %v4820
    %v4822 = vrot.slane %v4361, 2
    %v4823 = vsel %vm642, %v4820, %v4822
    %v4824 = vsel %vm227, %v4819, 0
    %v4826 = vsel %vm227, %v4821, 0
    %v4828 = vsel %vm227, %v4823, 0
    %v4830 = vsel %vm227, %v4822, 0
    %v4833 = vsel %vm236, %v4813, 0
    %v4836 = vsel %vm236, %v4814, 0
    %v4839 = vsel %vm236, %v4815, 0
    %v4842 = vsel %vm236, %v4816, 0
    %4844 = vmatprep.subr.mxu0 %v4802
    %4845 = vmatpush1.msra.mxu0 %v4801
    %4846 = vmatprep.subr.mxu0 %v4806
    %4847 = vmatpush1.msra.mxu0 %v4805
    %4848 = vmatprep.subr.mxu0 %v4810
    %4849 = vmatpush1.msra.mxu0 %v4809
    %4850 = vmatprep.subr.mxu0 %v4836
    %4851 = vmatpush1.msra.mxu0 %v4833
    %4852 = vmatprep.subr.mxu0 0.0
    %4853 = vmatpush1.msra.mxu0 0.0
    %4854 = vmatprep.subr.mxu0 0.0
    %4855 = vmatpush1.msra.mxu0 0.0
    %4856 = vmatprep.subr.mxu0 0.0
    %4857 = vmatpush1.msra.mxu0 0.0
    %4858 = vmatprep.subr.mxu0 0.0
    %4859 = vmatpush1.msra.mxu0 0.0
    %4860 = vmatprep.subr.mxu0 0.0
    %4861 = vmatpush1.msra.mxu0 0.0
    %4862 = vmatprep.subr.mxu0 0.0
    %4863 = vmatpush1.msra.mxu0 0.0
    %4864 = vmatprep.subr.mxu0 0.0
    %4865 = vmatpush1.msra.mxu0 0.0
    %4866 = vmatprep.subr.mxu0 0.0
    %4867 = vmatpush1.msra.mxu0 0.0
    %4868 = vmatprep.subr.mxu0 0.0
    %4869 = vmatpush1.msra.mxu0 0.0
    %4870 = vmatprep.subr.mxu0 0.0
    %4871 = vmatpush1.msra.mxu0 0.0
    %4872 = vmatprep.subr.mxu0 0.0
    %4873 = vmatpush1.msra.mxu0 0.0
    %4874 = vmatprep.subr.mxu0 0.0
    %4875 = vmatpush1.msra.mxu0 0.0
    %4876 = vmatprep.subr.mxu0 0.0
    %4877 = vmatpush1.msra.mxu0 0.0
    %4878 = vmatprep.subr.mxu0 0.0
    %4879 = vmatpush1.msra.mxu0 0.0
    %4880 = vmatprep.subr.mxu0 0.0
    %4881 = vmatpush1.msra.mxu0 0.0
    %4882 = vmatprep.subr.mxu0 0.0
    %4883 = vmatpush1.msra.mxu0 0.0
    %4884 = vmatprep.subr.mxu0 0.0
    %4885 = vmatpush1.msra.mxu0 0.0
    %4886 = vmatprep.subr.mxu0 0.0
    %4887 = vmatpush1.msra.mxu0 0.0
    %4888 = vmatprep.subr.mxu0 0.0
    %4889 = vmatpush1.msra.mxu0 0.0
    %4890 = vmatprep.subr.mxu0 0.0
    %4891 = vmatpush1.msra.mxu0 0.0
    %4892 = vmatprep.subr.mxu0 0.0
    %4893 = vmatpush1.msra.mxu0 0.0
    %4894 = vmatprep.subr.mxu0 0.0
    %4895 = vmatpush1.msra.mxu0 0.0
    %4896 = vmatprep.subr.mxu0 0.0
    %4897 = vmatpush1.msra.mxu0 0.0
    %4898 = vmatprep.subr.mxu0 0.0
    %4899 = vmatpush1.msra.mxu0 0.0
    %4900 = vmatprep.subr.mxu0 0.0
    %4901 = vmatpush1.msra.mxu0 0.0
    %4902 = vmatprep.subr.mxu0 0.0
    %4903 = vmatpush1.msra.mxu0 0.0
    %4904 = vmatprep.subr.mxu0 0.0
    %4905 = vmatpush1.msra.mxu0 0.0
    %4906 = vmatprep.subr.mxu0 0.0
    %4907 = vmatpush1.msra.mxu0 0.0
    %4908 = vmatprep.mubr.f32.mxu0 0.0
    %4909 = vmatmul.mubr.f32.gmra.mrb[0].mxu0 %v4824
    %v4910 = vpop.f32.mrb[0].mxu0
    %v4911 = vadd.f32 0.0, %v4910
    %v4912 = vpop.f32.mrb[0].mxu0
    %v4913 = vadd.f32 0.0, %v4912
    %4914 = vmatprep.mubr.f32.mxu0 0.0
    %4915 = vmatmul.mubr.f32.gmra.mrb[0].mxu0 %v4826
    %v4916 = vpop.f32.mrb[0].mxu0
    %v4917 = vadd.f32 0.0, %v4916
    %v4918 = vpop.f32.mrb[0].mxu0
    %v4919 = vadd.f32 0.0, %v4918
    %4920 = vmatprep.mubr.f32.mxu0 0.0
    %4921 = vmatmul.mubr.f32.gmra.mrb[0].mxu0 %v4828
    %v4922 = vpop.f32.mrb[0].mxu0
    %v4923 = vadd.f32 0.0, %v4922
    %v4924 = vpop.f32.mrb[0].mxu0
    %v4925 = vadd.f32 0.0, %v4924
    %4926 = vmatprep.mubr.f32.mxu0 0.0
    %4927 = vmatmul.mubr.f32.gmra.mrb[0].mxu0 %v4830
    %v4928 = vpop.f32.mrb[0].mxu0
    %v4929 = vadd.f32 0.0, %v4928
    %v4930 = vpop.f32.mrb[0].mxu0
    %v4931 = vadd.f32 0.0, %v4930
    %4932 = vdwg.mxu0
    %4933 = vmatprep.subr.mxu0 %v4804
    %4934 = vmatpush1.msra.mxu0 %v4803
    %4935 = vmatprep.subr.mxu0 %v4808
    %4936 = vmatpush1.msra.mxu0 %v4807
    %4937 = vmatprep.subr.mxu0 %v4812
    %4938 = vmatpush1.msra.mxu0 %v4811
    %4939 = vmatprep.subr.mxu0 %v4842
    %4940 = vmatpush1.msra.mxu0 %v4839
    %4941 = vmatprep.subr.mxu0 0.0
    %4942 = vmatpush1.msra.mxu0 0.0
    %4943 = vmatprep.subr.mxu0 0.0
    %4944 = vmatpush1.msra.mxu0 0.0
    %4945 = vmatprep.subr.mxu0 0.0
    %4946 = vmatpush1.msra.mxu0 0.0
    %4947 = vmatprep.subr.mxu0 0.0
    %4948 = vmatpush1.msra.mxu0 0.0
    %4949 = vmatprep.subr.mxu0 0.0
    %4950 = vmatpush1.msra.mxu0 0.0
    %4951 = vmatprep.subr.mxu0 0.0
    %4952 = vmatpush1.msra.mxu0 0.0
    %4953 = vmatprep.subr.mxu0 0.0
    %4954 = vmatpush1.msra.mxu0 0.0
    %4955 = vmatprep.subr.mxu0 0.0
    %4956 = vmatpush1.msra.mxu0 0.0
    %4957 = vmatprep.subr.mxu0 0.0
    %4958 = vmatpush1.msra.mxu0 0.0
    %4959 = vmatprep.subr.mxu0 0.0
    %4960 = vmatpush1.msra.mxu0 0.0
    %4961 = vmatprep.subr.mxu0 0.0
    %4962 = vmatpush1.msra.mxu0 0.0
    %4963 = vmatprep.subr.mxu0 0.0
    %4964 = vmatpush1.msra.mxu0 0.0
    %4965 = vmatprep.subr.mxu0 0.0
    %4966 = vmatpush1.msra.mxu0 0.0
    %4967 = vmatprep.subr.mxu0 0.0
    %4968 = vmatpush1.msra.mxu0 0.0
    %4969 = vmatprep.subr.mxu0 0.0
    %4970 = vmatpush1.msra.mxu0 0.0
    %4971 = vmatprep.subr.mxu0 0.0
    %4972 = vmatpush1.msra.mxu0 0.0
    %4973 = vmatprep.subr.mxu0 0.0
    %4974 = vmatpush1.msra.mxu0 0.0
    %4975 = vmatprep.subr.mxu0 0.0
    %4976 = vmatpush1.msra.mxu0 0.0
    %4977 = vmatprep.subr.mxu0 0.0
    %4978 = vmatpush1.msra.mxu0 0.0
    %4979 = vmatprep.subr.mxu0 0.0
    %4980 = vmatpush1.msra.mxu0 0.0
    %4981 = vmatprep.subr.mxu0 0.0
    %4982 = vmatpush1.msra.mxu0 0.0
    %4983 = vmatprep.subr.mxu0 0.0
    %4984 = vmatpush1.msra.mxu0 0.0
    %4985 = vmatprep.subr.mxu0 0.0
    %4986 = vmatpush1.msra.mxu0 0.0
    %4987 = vmatprep.subr.mxu0 0.0
    %4988 = vmatpush1.msra.mxu0 0.0
    %4989 = vmatprep.subr.mxu0 0.0
    %4990 = vmatpush1.msra.mxu0 0.0
    %4991 = vmatprep.subr.mxu0 0.0
    %4992 = vmatpush1.msra.mxu0 0.0
    %4993 = vmatprep.subr.mxu0 0.0
    %4994 = vmatpush1.msra.mxu0 0.0
    %4995 = vmatprep.subr.mxu0 0.0
    %4996 = vmatpush1.msra.mxu0 0.0
    %4997 = vmatprep.mubr.f32.mxu0 0.0
    %4998 = vmatmul.mubr.f32.gmra.mrb[0].mxu0 %v4824
    %v4999 = vpop.f32.mrb[0].mxu0
    %v5000 = vadd.f32 0.0, %v4999
    %v5001 = vpop.f32.mrb[0].mxu0
    %v5002 = vadd.f32 0.0, %v5001
    %5003 = vmatprep.mubr.f32.mxu0 0.0
    %5004 = vmatmul.mubr.f32.gmra.mrb[0].mxu0 %v4826
    %v5005 = vpop.f32.mrb[0].mxu0
    %v5006 = vadd.f32 0.0, %v5005
    %v5007 = vpop.f32.mrb[0].mxu0
    %v5008 = vadd.f32 0.0, %v5007
    %5009 = vmatprep.mubr.f32.mxu0 0.0
    %5010 = vmatmul.mubr.f32.gmra.mrb[0].mxu0 %v4828
    %v5011 = vpop.f32.mrb[0].mxu0
    %v5012 = vadd.f32 0.0, %v5011
    %v5013 = vpop.f32.mrb[0].mxu0
    %v5014 = vadd.f32 0.0, %v5013
    %5015 = vmatprep.mubr.f32.mxu0 0.0
    %5016 = vmatmul.mubr.f32.gmra.mrb[0].mxu0 %v4830
    %v5017 = vpop.f32.mrb[0].mxu0
    %v5018 = vadd.f32 0.0, %v5017
    %v5019 = vpop.f32.mrb[0].mxu0
    %v5020 = vadd.f32 0.0, %v5019
    %5021 = vdwg.mxu0
    %v5022 = vadd.f32 %v4690, %v4911
    %v5023 = vadd.f32 %v4692, %v4913
    %v5024 = vadd.f32 %v4779, %v5000
    %v5025 = vadd.f32 %v4781, %v5002
    %v5026 = vadd.f32 %v4696, %v4917
    %v5027 = vadd.f32 %v4698, %v4919
    %v5028 = vadd.f32 %v4785, %v5006
    %v5029 = vadd.f32 %v4787, %v5008
    %v5030 = vadd.f32 %v4702, %v4923
    %v5031 = vadd.f32 %v4704, %v4925
    %v5032 = vadd.f32 %v4791, %v5012
    %v5033 = vadd.f32 %v4793, %v5014
    %v5034 = vadd.f32 %v4708, %v4929
    %v5035 = vadd.f32 %v4710, %v4931
    %v5036 = vadd.f32 %v4797, %v5018
    %v5037 = vadd.f32 %v4799, %v5020
    %v5038 = vld [vmem:[#allocation6] sm:$0xf]
    %v5040 = vlaneseq
    %v5041 = vshrl.u32 %v5040, 7
    %v5042 = vsub.s32 0, %v5041
    %v5043 = vrot.slane %v5038, %v5042
    %v5044 = vlaneseq
    %v5045 = vshrl.u32 %v5044, 7
    %v5046 = vsub.s32 1, %v5045
    %v5047 = vrot.slane %v5038, %v5046
    %v5048 = vlaneseq
    %v5049 = vshrl.u32 %v5048, 7
    %v5050 = vsub.s32 2, %v5049
    %v5051 = vrot.slane %v5038, %v5050
    %v5052 = vlaneseq
    %v5053 = vshrl.u32 %v5052, 7
    %v5054 = vsub.s32 3, %v5053
    %v5055 = vrot.slane %v5038, %v5054
    %v5060 = vadd.f32 %v5022, %v5043
    %v5061 = vadd.f32 %v5023, %v5047
    %v5062 = vadd.f32 %v5024, %v5051
    %v5063 = vadd.f32 %v5025, %v5055
    %v5064 = vadd.f32 %v5026, %v5043
    %v5065 = vadd.f32 %v5027, %v5047
    %v5066 = vadd.f32 %v5028, %v5051
    %v5067 = vadd.f32 %v5029, %v5055
    %v5068 = vadd.f32 %v5030, %v5043
    %v5069 = vadd.f32 %v5031, %v5047
    %v5070 = vadd.f32 %v5032, %v5051
    %v5071 = vadd.f32 %v5033, %v5055
    %v5072 = vadd.f32 %v5034, %v5043
    %v5073 = vadd.f32 %v5035, %v5047
    %v5074 = vadd.f32 %v5036, %v5051
    %v5075 = vadd.f32 %v5037, %v5055
    %v5076 = vmax.f32 %v5060, 0.0
    %v5077 = vmax.f32 %v5061, 0.0
    %v5078 = vmax.f32 %v5062, 0.0
    %v5079 = vmax.f32 %v5063, 0.0
    %v5080 = vmax.f32 %v5064, 0.0
    %v5081 = vmax.f32 %v5065, 0.0
    %v5082 = vmax.f32 %v5066, 0.0
    %v5083 = vmax.f32 %v5067, 0.0
    %v5084 = vmax.f32 %v5068, 0.0
    %v5085 = vmax.f32 %v5069, 0.0
    %v5086 = vmax.f32 %v5070, 0.0
    %v5087 = vmax.f32 %v5071, 0.0
    %v5088 = vmax.f32 %v5072, 0.0
    %v5089 = vmax.f32 %v5073, 0.0
    %v5090 = vmax.f32 %v5074, 0.0
    %v5091 = vmax.f32 %v5075, 0.0
    %v5092 = vld [vmem:[%s5] sm:$0xff]
    %v5093 = vld [vmem:[%s5 + $0x8] sm:$0x3f]
    %v5095 = vsel %vm227, %v5092, 0
    %v5098 = vsel %vm227, %v5093, 0
    %v5101 = vsel %vm236, %v5088, 0
    %v5104 = vsel %vm236, %v5089, 0
    %v5107 = vsel %vm236, %v5090, 0
    %v5110 = vsel %vm236, %v5091, 0
    %5112 = vmatprep.subr.mxu0 %v5077
    %5113 = vmatpush1.msra.mxu0 %v5076
    %5114 = vmatprep.subr.mxu0 %v5081
    %5115 = vmatpush1.msra.mxu0 %v5080
    %5116 = vmatprep.subr.mxu0 %v5085
    %5117 = vmatpush1.msra.mxu0 %v5084
    %5118 = vmatprep.subr.mxu0 %v5104
    %5119 = vmatpush1.msra.mxu0 %v5101
    %5120 = vmatprep.subr.mxu0 0.0
    %5121 = vmatpush1.msra.mxu0 0.0
    %5122 = vmatprep.subr.mxu0 0.0
    %5123 = vmatpush1.msra.mxu0 0.0
    %5124 = vmatprep.subr.mxu0 0.0
    %5125 = vmatpush1.msra.mxu0 0.0
    %5126 = vmatprep.subr.mxu0 0.0
    %5127 = vmatpush1.msra.mxu0 0.0
    %5128 = vmatprep.subr.mxu0 0.0
    %5129 = vmatpush1.msra.mxu0 0.0
    %5130 = vmatprep.subr.mxu0 0.0
    %5131 = vmatpush1.msra.mxu0 0.0
    %5132 = vmatprep.subr.mxu0 0.0
    %5133 = vmatpush1.msra.mxu0 0.0
    %5134 = vmatprep.subr.mxu0 0.0
    %5135 = vmatpush1.msra.mxu0 0.0
    %5136 = vmatprep.subr.mxu0 0.0
    %5137 = vmatpush1.msra.mxu0 0.0
    %5138 = vmatprep.subr.mxu0 0.0
    %5139 = vmatpush1.msra.mxu0 0.0
    %5140 = vmatprep.subr.mxu0 0.0
    %5141 = vmatpush1.msra.mxu0 0.0
    %5142 = vmatprep.subr.mxu0 0.0
    %5143 = vmatpush1.msra.mxu0 0.0
    %5144 = vmatprep.subr.mxu0 0.0
    %5145 = vmatpush1.msra.mxu0 0.0
    %5146 = vmatprep.subr.mxu0 0.0
    %5147 = vmatpush1.msra.mxu0 0.0
    %5148 = vmatprep.subr.mxu0 0.0
    %5149 = vmatpush1.msra.mxu0 0.0
    %5150 = vmatprep.subr.mxu0 0.0
    %5151 = vmatpush1.msra.mxu0 0.0
    %5152 = vmatprep.subr.mxu0 0.0
    %5153 = vmatpush1.msra.mxu0 0.0
    %5154 = vmatprep.subr.mxu0 0.0
    %5155 = vmatpush1.msra.mxu0 0.0
    %5156 = vmatprep.subr.mxu0 0.0
    %5157 = vmatpush1.msra.mxu0 0.0
    %5158 = vmatprep.subr.mxu0 0.0
    %5159 = vmatpush1.msra.mxu0 0.0
    %5160 = vmatprep.subr.mxu0 0.0
    %5161 = vmatpush1.msra.mxu0 0.0
    %5162 = vmatprep.subr.mxu0 0.0
    %5163 = vmatpush1.msra.mxu0 0.0
    %5164 = vmatprep.subr.mxu0 0.0
    %5165 = vmatpush1.msra.mxu0 0.0
    %5166 = vmatprep.subr.mxu0 0.0
    %5167 = vmatpush1.msra.mxu0 0.0
    %5168 = vmatprep.subr.mxu0 0.0
    %5169 = vmatpush1.msra.mxu0 0.0
    %5170 = vmatprep.subr.mxu0 0.0
    %5171 = vmatpush1.msra.mxu0 0.0
    %5172 = vmatprep.subr.mxu0 0.0
    %5173 = vmatpush1.msra.mxu0 0.0
    %5174 = vmatprep.subr.mxu0 0.0
    %5175 = vmatpush1.msra.mxu0 0.0
    %5176 = vmatprep.mubr.f32.mxu0 0.0
    %5177 = vmatmul.mubr.f32.gmra.mrb[0].mxu0 %v5095
    %v5178 = vpop.f32.mrb[0].mxu0
    %v5179 = vadd.f32 0.0, %v5178
    %v5180 = vpop.f32.mrb[0].mxu0
    %v5181 = vadd.f32 0.0, %v5180
    %5182 = vmatprep.mubr.f32.mxu0 0.0
    %5183 = vmatmul.mubr.f32.gmra.mrb[0].mxu0 %v5098
    %v5184 = vpop.f32.mrb[0].mxu0
    %v5185 = vadd.f32 0.0, %v5184
    %v5186 = vpop.f32.mrb[0].mxu0
    %v5187 = vadd.f32 0.0, %v5186
    %5188 = vdwg.mxu0
    %5189 = vmatprep.subr.mxu0 %v5079
    %5190 = vmatpush1.msra.mxu0 %v5078
    %5191 = vmatprep.subr.mxu0 %v5083
    %5192 = vmatpush1.msra.mxu0 %v5082
    %5193 = vmatprep.subr.mxu0 %v5087
    %5194 = vmatpush1.msra.mxu0 %v5086
    %5195 = vmatprep.subr.mxu0 %v5110
    %5196 = vmatpush1.msra.mxu0 %v5107
    %5197 = vmatprep.subr.mxu0 0.0
    %5198 = vmatpush1.msra.mxu0 0.0
    %5199 = vmatprep.subr.mxu0 0.0
    %5200 = vmatpush1.msra.mxu0 0.0
    %5201 = vmatprep.subr.mxu0 0.0
    %5202 = vmatpush1.msra.mxu0 0.0
    %5203 = vmatprep.subr.mxu0 0.0
    %5204 = vmatpush1.msra.mxu0 0.0
    %5205 = vmatprep.subr.mxu0 0.0
    %5206 = vmatpush1.msra.mxu0 0.0
    %5207 = vmatprep.subr.mxu0 0.0
    %5208 = vmatpush1.msra.mxu0 0.0
    %5209 = vmatprep.subr.mxu0 0.0
    %5210 = vmatpush1.msra.mxu0 0.0
    %5211 = vmatprep.subr.mxu0 0.0
    %5212 = vmatpush1.msra.mxu0 0.0
    %5213 = vmatprep.subr.mxu0 0.0
    %5214 = vmatpush1.msra.mxu0 0.0
    %5215 = vmatprep.subr.mxu0 0.0
    %5216 = vmatpush1.msra.mxu0 0.0
    %5217 = vmatprep.subr.mxu0 0.0
    %5218 = vmatpush1.msra.mxu0 0.0
    %5219 = vmatprep.subr.mxu0 0.0
    %5220 = vmatpush1.msra.mxu0 0.0
    %5221 = vmatprep.subr.mxu0 0.0
    %5222 = vmatpush1.msra.mxu0 0.0
    %5223 = vmatprep.subr.mxu0 0.0
    %5224 = vmatpush1.msra.mxu0 0.0
    %5225 = vmatprep.subr.mxu0 0.0
    %5226 = vmatpush1.msra.mxu0 0.0
    %5227 = vmatprep.subr.mxu0 0.0
    %5228 = vmatpush1.msra.mxu0 0.0
    %5229 = vmatprep.subr.mxu0 0.0
    %5230 = vmatpush1.msra.mxu0 0.0
    %5231 = vmatprep.subr.mxu0 0.0
    %5232 = vmatpush1.msra.mxu0 0.0
    %5233 = vmatprep.subr.mxu0 0.0
    %5234 = vmatpush1.msra.mxu0 0.0
    %5235 = vmatprep.subr.mxu0 0.0
    %5236 = vmatpush1.msra.mxu0 0.0
    %5237 = vmatprep.subr.mxu0 0.0
    %5238 = vmatpush1.msra.mxu0 0.0
    %5239 = vmatprep.subr.mxu0 0.0
    %5240 = vmatpush1.msra.mxu0 0.0
    %5241 = vmatprep.subr.mxu0 0.0
    %5242 = vmatpush1.msra.mxu0 0.0
    %5243 = vmatprep.subr.mxu0 0.0
    %5244 = vmatpush1.msra.mxu0 0.0
    %5245 = vmatprep.subr.mxu0 0.0
    %5246 = vmatpush1.msra.mxu0 0.0
    %5247 = vmatprep.subr.mxu0 0.0
    %5248 = vmatpush1.msra.mxu0 0.0
    %5249 = vmatprep.subr.mxu0 0.0
    %5250 = vmatpush1.msra.mxu0 0.0
    %5251 = vmatprep.subr.mxu0 0.0
    %5252 = vmatpush1.msra.mxu0 0.0
    %5253 = vmatprep.mubr.f32.mxu0 0.0
    %5254 = vmatmul.mubr.f32.gmra.mrb[0].mxu0 %v5095
    %v5255 = vpop.f32.mrb[0].mxu0
    %v5256 = vadd.f32 0.0, %v5255
    %v5257 = vpop.f32.mrb[0].mxu0
    %v5258 = vadd.f32 0.0, %v5257
    %5259 = vmatprep.mubr.f32.mxu0 0.0
    %5260 = vmatmul.mubr.f32.gmra.mrb[0].mxu0 %v5098
    %v5261 = vpop.f32.mrb[0].mxu0
    %v5262 = vadd.f32 0.0, %v5261
    %v5263 = vpop.f32.mrb[0].mxu0
    %v5264 = vadd.f32 0.0, %v5263
    %5265 = vdwg.mxu0
    %v5266 = vld [vmem:[%s1092] sm:$0xff]
    %v5267 = vld [vmem:[%s1092 + $0x8] sm:$0x3f]
    %v5269 = vsel %vm227, %v5266, 0
    %v5272 = vsel %vm227, %v5267, 0
    %5274 = vmatprep.subr.mxu0 %v5077
    %5275 = vmatpush1.msra.mxu0 %v5076
    %5276 = vmatprep.subr.mxu0 %v5081
    %5277 = vmatpush1.msra.mxu0 %v5080
    %5278 = vmatprep.subr.mxu0 %v5085
    %5279 = vmatpush1.msra.mxu0 %v5084
    %5280 = vmatprep.subr.mxu0 %v5104
    %5281 = vmatpush1.msra.mxu0 %v5101
    %5282 = vmatprep.subr.mxu0 0.0
    %5283 = vmatpush1.msra.mxu0 0.0
    %5284 = vmatprep.subr.mxu0 0.0
    %5285 = vmatpush1.msra.mxu0 0.0
    %5286 = vmatprep.subr.mxu0 0.0
    %5287 = vmatpush1.msra.mxu0 0.0
    %5288 = vmatprep.subr.mxu0 0.0
    %5289 = vmatpush1.msra.mxu0 0.0
    %5290 = vmatprep.subr.mxu0 0.0
    %5291 = vmatpush1.msra.mxu0 0.0
    %5292 = vmatprep.subr.mxu0 0.0
    %5293 = vmatpush1.msra.mxu0 0.0
    %5294 = vmatprep.subr.mxu0 0.0
    %5295 = vmatpush1.msra.mxu0 0.0
    %5296 = vmatprep.subr.mxu0 0.0
    %5297 = vmatpush1.msra.mxu0 0.0
    %5298 = vmatprep.subr.mxu0 0.0
    %5299 = vmatpush1.msra.mxu0 0.0
    %5300 = vmatprep.subr.mxu0 0.0
    %5301 = vmatpush1.msra.mxu0 0.0
    %5302 = vmatprep.subr.mxu0 0.0
    %5303 = vmatpush1.msra.mxu0 0.0
    %5304 = vmatprep.subr.mxu0 0.0
    %5305 = vmatpush1.msra.mxu0 0.0
    %5306 = vmatprep.subr.mxu0 0.0
    %5307 = vmatpush1.msra.mxu0 0.0
    %5308 = vmatprep.subr.mxu0 0.0
    %5309 = vmatpush1.msra.mxu0 0.0
    %5310 = vmatprep.subr.mxu0 0.0
    %5311 = vmatpush1.msra.mxu0 0.0
    %5312 = vmatprep.subr.mxu0 0.0
    %5313 = vmatpush1.msra.mxu0 0.0
    %5314 = vmatprep.subr.mxu0 0.0
    %5315 = vmatpush1.msra.mxu0 0.0
    %5316 = vmatprep.subr.mxu0 0.0
    %5317 = vmatpush1.msra.mxu0 0.0
    %5318 = vmatprep.subr.mxu0 0.0
    %5319 = vmatpush1.msra.mxu0 0.0
    %5320 = vmatprep.subr.mxu0 0.0
    %5321 = vmatpush1.msra.mxu0 0.0
    %5322 = vmatprep.subr.mxu0 0.0
    %5323 = vmatpush1.msra.mxu0 0.0
    %5324 = vmatprep.subr.mxu0 0.0
    %5325 = vmatpush1.msra.mxu0 0.0
    %5326 = vmatprep.subr.mxu0 0.0
    %5327 = vmatpush1.msra.mxu0 0.0
    %5328 = vmatprep.subr.mxu0 0.0
    %5329 = vmatpush1.msra.mxu0 0.0
    %5330 = vmatprep.subr.mxu0 0.0
    %5331 = vmatpush1.msra.mxu0 0.0
    %5332 = vmatprep.subr.mxu0 0.0
    %5333 = vmatpush1.msra.mxu0 0.0
    %5334 = vmatprep.subr.mxu0 0.0
    %5335 = vmatpush1.msra.mxu0 0.0
    %5336 = vmatprep.subr.mxu0 0.0
    %5337 = vmatpush1.msra.mxu0 0.0
    %5338 = vmatprep.mubr.f32.mxu0 0.0
    %5339 = vmatmul.mubr.f32.gmra.mrb[0].mxu0 %v5269
    %v5340 = vpop.f32.mrb[0].mxu0
    %v5341 = vadd.f32 0.0, %v5340
    %v5342 = vpop.f32.mrb[0].mxu0
    %v5343 = vadd.f32 0.0, %v5342
    %5344 = vmatprep.mubr.f32.mxu0 0.0
    %5345 = vmatmul.mubr.f32.gmra.mrb[0].mxu0 %v5272
    %v5346 = vpop.f32.mrb[0].mxu0
    %v5347 = vadd.f32 0.0, %v5346
    %v5348 = vpop.f32.mrb[0].mxu0
    %v5349 = vadd.f32 0.0, %v5348
    %5350 = vdwg.mxu0
    %5351 = vmatprep.subr.mxu0 %v5079
    %5352 = vmatpush1.msra.mxu0 %v5078
    %5353 = vmatprep.subr.mxu0 %v5083
    %5354 = vmatpush1.msra.mxu0 %v5082
    %5355 = vmatprep.subr.mxu0 %v5087
    %5356 = vmatpush1.msra.mxu0 %v5086
    %5357 = vmatprep.subr.mxu0 %v5110
    %5358 = vmatpush1.msra.mxu0 %v5107
    %5359 = vmatprep.subr.mxu0 0.0
    %5360 = vmatpush1.msra.mxu0 0.0
    %5361 = vmatprep.subr.mxu0 0.0
    %5362 = vmatpush1.msra.mxu0 0.0
    %5363 = vmatprep.subr.mxu0 0.0
    %5364 = vmatpush1.msra.mxu0 0.0
    %5365 = vmatprep.subr.mxu0 0.0
    %5366 = vmatpush1.msra.mxu0 0.0
    %5367 = vmatprep.subr.mxu0 0.0
    %5368 = vmatpush1.msra.mxu0 0.0
    %5369 = vmatprep.subr.mxu0 0.0
    %5370 = vmatpush1.msra.mxu0 0.0
    %5371 = vmatprep.subr.mxu0 0.0
    %5372 = vmatpush1.msra.mxu0 0.0
    %5373 = vmatprep.subr.mxu0 0.0
    %5374 = vmatpush1.msra.mxu0 0.0
    %5375 = vmatprep.subr.mxu0 0.0
    %5376 = vmatpush1.msra.mxu0 0.0
    %5377 = vmatprep.subr.mxu0 0.0
    %5378 = vmatpush1.msra.mxu0 0.0
    %5379 = vmatprep.subr.mxu0 0.0
    %5380 = vmatpush1.msra.mxu0 0.0
    %5381 = vmatprep.subr.mxu0 0.0
    %5382 = vmatpush1.msra.mxu0 0.0
    %5383 = vmatprep.subr.mxu0 0.0
    %5384 = vmatpush1.msra.mxu0 0.0
    %5385 = vmatprep.subr.mxu0 0.0
    %5386 = vmatpush1.msra.mxu0 0.0
    %5387 = vmatprep.subr.mxu0 0.0
    %5388 = vmatpush1.msra.mxu0 0.0
    %5389 = vmatprep.subr.mxu0 0.0
    %5390 = vmatpush1.msra.mxu0 0.0
    %5391 = vmatprep.subr.mxu0 0.0
    %5392 = vmatpush1.msra.mxu0 0.0
    %5393 = vmatprep.subr.mxu0 0.0
    %5394 = vmatpush1.msra.mxu0 0.0
    %5395 = vmatprep.subr.mxu0 0.0
    %5396 = vmatpush1.msra.mxu0 0.0
    %5397 = vmatprep.subr.mxu0 0.0
    %5398 = vmatpush1.msra.mxu0 0.0
    %5399 = vmatprep.subr.mxu0 0.0
    %5400 = vmatpush1.msra.mxu0 0.0
    %5401 = vmatprep.subr.mxu0 0.0
    %5402 = vmatpush1.msra.mxu0 0.0
    %5403 = vmatprep.subr.mxu0 0.0
    %5404 = vmatpush1.msra.mxu0 0.0
    %5405 = vmatprep.subr.mxu0 0.0
    %5406 = vmatpush1.msra.mxu0 0.0
    %5407 = vmatprep.subr.mxu0 0.0
    %5408 = vmatpush1.msra.mxu0 0.0
    %5409 = vmatprep.subr.mxu0 0.0
    %5410 = vmatpush1.msra.mxu0 0.0
    %5411 = vmatprep.subr.mxu0 0.0
    %5412 = vmatpush1.msra.mxu0 0.0
    %5413 = vmatprep.subr.mxu0 0.0
    %5414 = vmatpush1.msra.mxu0 0.0
    %5415 = vmatprep.mubr.f32.mxu0 0.0
    %5416 = vmatmul.mubr.f32.gmra.mrb[0].mxu0 %v5269
    %v5417 = vpop.f32.mrb[0].mxu0
    %v5418 = vadd.f32 0.0, %v5417
    %v5419 = vpop.f32.mrb[0].mxu0
    %v5420 = vadd.f32 0.0, %v5419
    %5421 = vmatprep.mubr.f32.mxu0 0.0
    %5422 = vmatmul.mubr.f32.gmra.mrb[0].mxu0 %v5272
    %v5423 = vpop.f32.mrb[0].mxu0
    %v5424 = vadd.f32 0.0, %v5423
    %v5425 = vpop.f32.mrb[0].mxu0
    %v5426 = vadd.f32 0.0, %v5425
    %5427 = vdwg.mxu0
    %v5428 = vmax.f32 %v5179, %v5341
    %v5429 = vmax.f32 %v5181, %v5343
    %v5430 = vmax.f32 %v5256, %v5418
    %v5431 = vmax.f32 %v5258, %v5420
    %v5432 = vmax.f32 %v5185, %v5347
    %v5433 = vmax.f32 %v5187, %v5349
    %v5434 = vmax.f32 %v5262, %v5424
    %v5435 = vmax.f32 %v5264, %v5426
    %v5436 = vld [vmem:[#allocation11] sm:$0xff]
    %v5437 = vld [vmem:[#allocation11 + $0x8] sm:$0xff]
    %v5438 = vld [vmem:[#allocation11 + $0x10] sm:$0xff]
    %v5439 = vld [vmem:[#allocation11 + $0x18] sm:$0xff]
    %v5440 = vld [vmem:[#allocation11 + $0x20] sm:$0xff]
    %v5441 = vld [vmem:[#allocation11 + $0x28] sm:$0xff]
    %v5442 = vld [vmem:[#allocation11 + $0x30] sm:$0xff]
    %v5443 = vld [vmem:[#allocation11 + $0x38] sm:$0xff]
    %v5444 = vld [vmem:[#allocation11 + $0x40] sm:$0xff]
    %v5445 = vld [vmem:[#allocation11 + $0x48] sm:$0xff]
    %v5446 = vld [vmem:[#allocation11 + $0x50] sm:$0xff]
    %v5447 = vld [vmem:[#allocation11 + $0x58] sm:$0xff]
    %v5448 = vld [vmem:[#allocation11 + $0x60] sm:$0xff]
    %v5449 = vld [vmem:[#allocation11 + $0x68] sm:$0xff]
    %v5450 = vld [vmem:[#allocation11 + $0x70] sm:$0xff]
    %v5451 = vld [vmem:[#allocation11 + $0x78] sm:$0xff]
    %v5452 = vld [vmem:[#allocation11 + $0x80] sm:$0xff]
    %v5453 = vld [vmem:[#allocation11 + $0x88] sm:$0xff]
    %v5454 = vld [vmem:[#allocation11 + $0x90] sm:$0xff]
    %v5455 = vld [vmem:[#allocation11 + $0x98] sm:$0xff]
    %v5456 = vld [vmem:[#allocation11 + $0xa0] sm:$0xff]
    %v5457 = vld [vmem:[#allocation11 + $0xa8] sm:$0xff]
    %v5458 = vld [vmem:[#allocation11 + $0xb0] sm:$0xff]
    %v5459 = vld [vmem:[#allocation11 + $0xb8] sm:$0xff]
    %v5460 = vld [vmem:[#allocation11 + $0xc0] sm:$0xff]
    %v5461 = vld [vmem:[#allocation11 + $0xc8] sm:$0xff]
    %v5462 = vld [vmem:[#allocation11 + $0xd0] sm:$0xff]
    %v5463 = vld [vmem:[#allocation11 + $0xd8] sm:$0xff]
    %v5464 = vld [vmem:[#allocation11 + $0xe0] sm:$0xff]
    %v5465 = vld [vmem:[#allocation11 + $0xe8] sm:$0xff]
    %v5466 = vld [vmem:[#allocation11 + $0xf0] sm:$0xff]
    %v5467 = vld [vmem:[#allocation11 + $0xf8] sm:$0xff]
    %v5468 = vld [vmem:[#allocation11 + $0x100] sm:$0xff]
    %v5469 = vld [vmem:[#allocation11 + $0x108] sm:$0xff]
    %v5470 = vld [vmem:[#allocation11 + $0x110] sm:$0xff]
    %v5471 = vld [vmem:[#allocation11 + $0x118] sm:$0xff]
    %v5472 = vld [vmem:[#allocation11 + $0x120] sm:$0xff]
    %v5473 = vld [vmem:[#allocation11 + $0x128] sm:$0xff]
    %v5474 = vld [vmem:[#allocation11 + $0x130] sm:$0xff]
    %v5475 = vld [vmem:[#allocation11 + $0x138] sm:$0xff]
    %v5476 = vld [vmem:[#allocation11 + $0x140] sm:$0xff]
    %v5477 = vld [vmem:[#allocation11 + $0x148] sm:$0xff]
    %v5478 = vld [vmem:[#allocation11 + $0x150] sm:$0xff]
    %v5479 = vld [vmem:[#allocation11 + $0x158] sm:$0xff]
    %v5480 = vld [vmem:[#allocation11 + $0x160] sm:$0xff]
    %v5481 = vld [vmem:[#allocation11 + $0x168] sm:$0xff]
    %v5482 = vld [vmem:[#allocation11 + $0x170] sm:$0xff]
    %v5483 = vld [vmem:[#allocation11 + $0x178] sm:$0xff]
    %v5484 = vld [vmem:[#allocation11 + $0x180] sm:$0xff]
    %v5485 = vld [vmem:[#allocation11 + $0x188] sm:$0xff]
    %v5486 = vld [vmem:[#allocation11 + $0x190] sm:$0xff]
    %v5487 = vld [vmem:[#allocation11 + $0x198] sm:$0xff]
    %v5488 = vld [vmem:[#allocation11 + $0x1a0] sm:$0xff]
    %v5489 = vld [vmem:[#allocation11 + $0x1a8] sm:$0xff]
    %v5490 = vld [vmem:[#allocation11 + $0x1b0] sm:$0xff]
    %v5491 = vld [vmem:[#allocation11 + $0x1b8] sm:$0xff]
    %v5492 = vld [vmem:[#allocation11 + $0x1c0] sm:$0xff]
    %v5493 = vld [vmem:[#allocation11 + $0x1c8] sm:$0xff]
    %v5494 = vld [vmem:[#allocation11 + $0x1d0] sm:$0xff]
    %v5495 = vld [vmem:[#allocation11 + $0x1d8] sm:$0xff]
    %v5496 = vld [vmem:[#allocation11 + $0x1e0] sm:$0xff]
    %v5497 = vld [vmem:[#allocation11 + $0x1e8] sm:$0xff]
    %v5498 = vld [vmem:[#allocation11 + $0x1f0] sm:$0xff]
    %v5499 = vld [vmem:[#allocation11 + $0x1f8] sm:$0xff]
    %v5500 = vld [vmem:[#allocation11 + $0x200] sm:$0xff]
    %v5501 = vld [vmem:[#allocation11 + $0x208] sm:$0xff]
    %v5502 = vld [vmem:[#allocation11 + $0x210] sm:$0xff]
    %v5503 = vld [vmem:[#allocation11 + $0x218] sm:$0xff]
    %v5504 = vld [vmem:[#allocation11 + $0x220] sm:$0xff]
    %v5505 = vld [vmem:[#allocation11 + $0x228] sm:$0xff]
    %v5506 = vld [vmem:[#allocation11 + $0x230] sm:$0xff]
    %v5507 = vld [vmem:[#allocation11 + $0x238] sm:$0xff]
    %v5508 = vld [vmem:[#allocation11 + $0x240] sm:$0xff]
    %v5509 = vld [vmem:[#allocation11 + $0x248] sm:$0xff]
    %v5510 = vld [vmem:[#allocation11 + $0x250] sm:$0xff]
    %v5511 = vld [vmem:[#allocation11 + $0x258] sm:$0xff]
    %v5512 = vld [vmem:[#allocation11 + $0x260] sm:$0xff]
    %v5513 = vld [vmem:[#allocation11 + $0x268] sm:$0xff]
    %v5514 = vld [vmem:[#allocation11 + $0x270] sm:$0xff]
    %v5515 = vld [vmem:[#allocation11 + $0x278] sm:$0xff]
    %v5516 = vld [vmem:[#allocation11 + $0x280] sm:$0xff]
    %v5517 = vld [vmem:[#allocation11 + $0x288] sm:$0xff]
    %v5518 = vld [vmem:[#allocation11 + $0x290] sm:$0xff]
    %v5519 = vld [vmem:[#allocation11 + $0x298] sm:$0xff]
    %v5520 = vld [vmem:[#allocation11 + $0x2a0] sm:$0xff]
    %v5521 = vld [vmem:[#allocation11 + $0x2a8] sm:$0xff]
    %v5522 = vld [vmem:[#allocation11 + $0x2b0] sm:$0xff]
    %v5523 = vld [vmem:[#allocation11 + $0x2b8] sm:$0xff]
    %v5524 = vld [vmem:[#allocation11 + $0x2c0] sm:$0xff]
    %v5525 = vld [vmem:[#allocation11 + $0x2c8] sm:$0xff]
    %v5526 = vld [vmem:[#allocation11 + $0x2d0] sm:$0xff]
    %v5527 = vld [vmem:[#allocation11 + $0x2d8] sm:$0xff]
    %v5528 = vld [vmem:[#allocation11 + $0x2e0] sm:$0xff]
    %v5529 = vld [vmem:[#allocation11 + $0x2e8] sm:$0xff]
    %v5530 = vld [vmem:[#allocation11 + $0x2f0] sm:$0xff]
    %v5531 = vld [vmem:[#allocation11 + $0x2f8] sm:$0xff]
    %v5532 = vld [vmem:[#allocation11 + $0x300] sm:$0xff]
    %v5533 = vld [vmem:[#allocation11 + $0x308] sm:$0xff]
    %v5534 = vld [vmem:[#allocation11 + $0x310] sm:$0xff]
    %v5535 = vld [vmem:[#allocation11 + $0x318] sm:$0xff]
    %v5536 = vld [vmem:[#allocation11 + $0x320] sm:$0xff]
    %v5537 = vld [vmem:[#allocation11 + $0x328] sm:$0xff]
    %v5538 = vld [vmem:[#allocation11 + $0x330] sm:$0xff]
    %v5539 = vld [vmem:[#allocation11 + $0x338] sm:$0xff]
    %v5540 = vld [vmem:[#allocation11 + $0x340] sm:$0xff]
    %v5541 = vld [vmem:[#allocation11 + $0x348] sm:$0xff]
    %v5542 = vld [vmem:[#allocation11 + $0x350] sm:$0xff]
    %v5543 = vld [vmem:[#allocation11 + $0x358] sm:$0xff]
    %v5544 = vld [vmem:[#allocation11 + $0x360] sm:$0xff]
    %v5545 = vld [vmem:[#allocation11 + $0x368] sm:$0xff]
    %v5546 = vld [vmem:[#allocation11 + $0x370] sm:$0xff]
    %v5547 = vld [vmem:[#allocation11 + $0x378] sm:$0xff]
    %v5549 = vsel %vm1375, %v5431, 0
    %v5552 = vsel %vm1375, %v5435, 0
    %5554 = vmatprep.subr.mxu0 %v5437
    %5555 = vmatpush1.msra.mxu0 %v5436
    %5556 = vmatprep.subr.mxu0 %v5439
    %5557 = vmatpush1.msra.mxu0 %v5438
    %5558 = vmatprep.subr.mxu0 %v5441
    %5559 = vmatpush1.msra.mxu0 %v5440
    %5560 = vmatprep.subr.mxu0 %v5443
    %5561 = vmatpush1.msra.mxu0 %v5442
    %5562 = vmatprep.subr.mxu0 %v5445
    %5563 = vmatpush1.msra.mxu0 %v5444
    %5564 = vmatprep.subr.mxu0 %v5447
    %5565 = vmatpush1.msra.mxu0 %v5446
    %5566 = vmatprep.subr.mxu0 %v5449
    %5567 = vmatpush1.msra.mxu0 %v5448
    %5568 = vmatprep.subr.mxu0 %v5451
    %5569 = vmatpush1.msra.mxu0 %v5450
    %5570 = vmatprep.subr.mxu0 %v5453
    %5571 = vmatpush1.msra.mxu0 %v5452
    %5572 = vmatprep.subr.mxu0 %v5455
    %5573 = vmatpush1.msra.mxu0 %v5454
    %5574 = vmatprep.subr.mxu0 %v5457
    %5575 = vmatpush1.msra.mxu0 %v5456
    %5576 = vmatprep.subr.mxu0 %v5459
    %5577 = vmatpush1.msra.mxu0 %v5458
    %5578 = vmatprep.subr.mxu0 %v5461
    %5579 = vmatpush1.msra.mxu0 %v5460
    %5580 = vmatprep.subr.mxu0 %v5463
    %5581 = vmatpush1.msra.mxu0 %v5462
    %5582 = vmatprep.subr.mxu0 %v5465
    %5583 = vmatpush1.msra.mxu0 %v5464
    %5584 = vmatprep.subr.mxu0 %v5467
    %5585 = vmatpush1.msra.mxu0 %v5466
    %5586 = vmatprep.subr.mxu0 %v5469
    %5587 = vmatpush1.msra.mxu0 %v5468
    %5588 = vmatprep.subr.mxu0 %v5471
    %5589 = vmatpush1.msra.mxu0 %v5470
    %5590 = vmatprep.subr.mxu0 %v5473
    %5591 = vmatpush1.msra.mxu0 %v5472
    %5592 = vmatprep.subr.mxu0 %v5475
    %5593 = vmatpush1.msra.mxu0 %v5474
    %5594 = vmatprep.subr.mxu0 %v5477
    %5595 = vmatpush1.msra.mxu0 %v5476
    %5596 = vmatprep.subr.mxu0 %v5479
    %5597 = vmatpush1.msra.mxu0 %v5478
    %5598 = vmatprep.subr.mxu0 %v5481
    %5599 = vmatpush1.msra.mxu0 %v5480
    %5600 = vmatprep.subr.mxu0 %v5483
    %5601 = vmatpush1.msra.mxu0 %v5482
    %5602 = vmatprep.subr.mxu0 %v5485
    %5603 = vmatpush1.msra.mxu0 %v5484
    %5604 = vmatprep.subr.mxu0 %v5487
    %5605 = vmatpush1.msra.mxu0 %v5486
    %5606 = vmatprep.subr.mxu0 %v5489
    %5607 = vmatpush1.msra.mxu0 %v5488
    %5608 = vmatprep.subr.mxu0 %v5491
    %5609 = vmatpush1.msra.mxu0 %v5490
    %5610 = vmatprep.subr.mxu0 %v5493
    %5611 = vmatpush1.msra.mxu0 %v5492
    %5612 = vmatprep.subr.mxu0 %v5495
    %5613 = vmatpush1.msra.mxu0 %v5494
    %5614 = vmatprep.subr.mxu0 %v5497
    %5615 = vmatpush1.msra.mxu0 %v5496
    %5616 = vmatprep.subr.mxu0 %v5499
    %5617 = vmatpush1.msra.mxu0 %v5498
    %5618 = vmatprep.mubr.f32.mxu0 %v5429
    %5619 = vmatmul.mubr.f32.gmra.mrb[0].mxu0 %v5428
    %v5620 = vpop.f32.mrb[0].mxu0
    %v5621 = vadd.f32 0.0, %v5620
    %v5622 = vpop.f32.mrb[0].mxu0
    %v5623 = vadd.f32 0.0, %v5622
    %5624 = vmatprep.mubr.f32.mxu0 %v5433
    %5625 = vmatmul.mubr.f32.gmra.mrb[0].mxu0 %v5432
    %v5626 = vpop.f32.mrb[0].mxu0
    %v5627 = vadd.f32 0.0, %v5626
    %v5628 = vpop.f32.mrb[0].mxu0
    %v5629 = vadd.f32 0.0, %v5628
    %5630 = vdwg.mxu0
    %5631 = vmatprep.subr.mxu0 %v5501
    %5632 = vmatpush1.msra.mxu0 %v5500
    %5633 = vmatprep.subr.mxu0 %v5503
    %5634 = vmatpush1.msra.mxu0 %v5502
    %5635 = vmatprep.subr.mxu0 %v5505
    %5636 = vmatpush1.msra.mxu0 %v5504
    %5637 = vmatprep.subr.mxu0 %v5507
    %5638 = vmatpush1.msra.mxu0 %v5506
    %5639 = vmatprep.subr.mxu0 %v5509
    %5640 = vmatpush1.msra.mxu0 %v5508
    %5641 = vmatprep.subr.mxu0 %v5511
    %5642 = vmatpush1.msra.mxu0 %v5510
    %5643 = vmatprep.subr.mxu0 %v5513
    %5644 = vmatpush1.msra.mxu0 %v5512
    %5645 = vmatprep.subr.mxu0 %v5515
    %5646 = vmatpush1.msra.mxu0 %v5514
    %5647 = vmatprep.subr.mxu0 %v5517
    %5648 = vmatpush1.msra.mxu0 %v5516
    %5649 = vmatprep.subr.mxu0 %v5519
    %5650 = vmatpush1.msra.mxu0 %v5518
    %5651 = vmatprep.subr.mxu0 %v5521
    %5652 = vmatpush1.msra.mxu0 %v5520
    %5653 = vmatprep.subr.mxu0 %v5523
    %5654 = vmatpush1.msra.mxu0 %v5522
    %5655 = vmatprep.subr.mxu0 %v5525
    %5656 = vmatpush1.msra.mxu0 %v5524
    %5657 = vmatprep.subr.mxu0 %v5527
    %5658 = vmatpush1.msra.mxu0 %v5526
    %5659 = vmatprep.subr.mxu0 %v5529
    %5660 = vmatpush1.msra.mxu0 %v5528
    %5661 = vmatprep.subr.mxu0 %v5531
    %5662 = vmatpush1.msra.mxu0 %v5530
    %5663 = vmatprep.subr.mxu0 %v5533
    %5664 = vmatpush1.msra.mxu0 %v5532
    %5665 = vmatprep.subr.mxu0 %v5535
    %5666 = vmatpush1.msra.mxu0 %v5534
    %5667 = vmatprep.subr.mxu0 %v5537
    %5668 = vmatpush1.msra.mxu0 %v5536
    %5669 = vmatprep.subr.mxu0 %v5539
    %5670 = vmatpush1.msra.mxu0 %v5538
    %5671 = vmatprep.subr.mxu0 %v5541
    %5672 = vmatpush1.msra.mxu0 %v5540
    %5673 = vmatprep.subr.mxu0 %v5543
    %5674 = vmatpush1.msra.mxu0 %v5542
    %5675 = vmatprep.subr.mxu0 %v5545
    %5676 = vmatpush1.msra.mxu0 %v5544
    %5677 = vmatprep.subr.mxu0 %v5547
    %5678 = vmatpush1.msra.mxu0 %v5546
    %5679 = vmatprep.subr.mxu0 0.0
    %5680 = vmatpush1.msra.mxu0 0.0
    %5681 = vmatprep.subr.mxu0 0.0
    %5682 = vmatpush1.msra.mxu0 0.0
    %5683 = vmatprep.subr.mxu0 0.0
    %5684 = vmatpush1.msra.mxu0 0.0
    %5685 = vmatprep.subr.mxu0 0.0
    %5686 = vmatpush1.msra.mxu0 0.0
    %5687 = vmatprep.subr.mxu0 0.0
    %5688 = vmatpush1.msra.mxu0 0.0
    %5689 = vmatprep.subr.mxu0 0.0
    %5690 = vmatpush1.msra.mxu0 0.0
    %5691 = vmatprep.subr.mxu0 0.0
    %5692 = vmatpush1.msra.mxu0 0.0
    %5693 = vmatprep.subr.mxu0 0.0
    %5694 = vmatpush1.msra.mxu0 0.0
    %5695 = vmatprep.mubr.f32.mxu0 %v5549
    %5696 = vmatmul.mubr.f32.gmra.mrb[0].mxu0 %v5430
    %v5697 = vpop.f32.mrb[0].mxu0
    %v5698 = vadd.f32 %v5621, %v5697
    %v5699 = vpop.f32.mrb[0].mxu0
    %v5700 = vadd.f32 %v5623, %v5699
    %5701 = vmatprep.mubr.f32.mxu0 %v5552
    %5702 = vmatmul.mubr.f32.gmra.mrb[0].mxu0 %v5434
    %v5703 = vpop.f32.mrb[0].mxu0
    %v5704 = vadd.f32 %v5627, %v5703
    %v5705 = vpop.f32.mrb[0].mxu0
    %v5706 = vadd.f32 %v5629, %v5705
    %5707 = vdwg.mxu0
    %v5708 = vld [vmem:[%s1536] sm:$0xff]
    %v5709 = vld [vmem:[%s1536 + $0x8] sm:$0xff]
    %v5710 = vld [vmem:[%s1536 + $0x10] sm:$0xff]
    %v5711 = vld [vmem:[%s1536 + $0x18] sm:$0xff]
    %v5712 = vld [vmem:[%s1536 + $0x20] sm:$0xff]
    %v5713 = vld [vmem:[%s1536 + $0x28] sm:$0xff]
    %v5714 = vld [vmem:[%s1536 + $0x30] sm:$0xff]
    %v5715 = vld [vmem:[%s1536 + $0x38] sm:$0xff]
    %v5716 = vld [vmem:[%s1536 + $0x40] sm:$0xff]
    %v5717 = vld [vmem:[%s1536 + $0x48] sm:$0xff]
    %v5718 = vld [vmem:[%s1536 + $0x50] sm:$0xff]
    %v5719 = vld [vmem:[%s1536 + $0x58] sm:$0xff]
    %v5720 = vld [vmem:[%s1536 + $0x60] sm:$0xff]
    %v5721 = vld [vmem:[%s1536 + $0x68] sm:$0xff]
    %v5722 = vld [vmem:[%s1536 + $0x70] sm:$0xff]
    %v5723 = vld [vmem:[%s1536 + $0x78] sm:$0xff]
    %v5724 = vld [vmem:[%s1536 + $0x80] sm:$0xff]
    %v5725 = vld [vmem:[%s1536 + $0x88] sm:$0xff]
    %v5726 = vld [vmem:[%s1536 + $0x90] sm:$0xff]
    %v5727 = vld [vmem:[%s1536 + $0x98] sm:$0xff]
    %v5728 = vld [vmem:[%s1536 + $0xa0] sm:$0xff]
    %v5729 = vld [vmem:[%s1536 + $0xa8] sm:$0xff]
    %v5730 = vld [vmem:[%s1536 + $0xb0] sm:$0xff]
    %v5731 = vld [vmem:[%s1536 + $0xb8] sm:$0xff]
    %v5732 = vld [vmem:[%s1536 + $0xc0] sm:$0xff]
    %v5733 = vld [vmem:[%s1536 + $0xc8] sm:$0xff]
    %v5734 = vld [vmem:[%s1536 + $0xd0] sm:$0xff]
    %v5735 = vld [vmem:[%s1536 + $0xd8] sm:$0xff]
    %v5736 = vld [vmem:[%s1536 + $0xe0] sm:$0xff]
    %v5737 = vld [vmem:[%s1536 + $0xe8] sm:$0xff]
    %v5738 = vld [vmem:[%s1536 + $0xf0] sm:$0xff]
    %v5739 = vld [vmem:[%s1536 + $0xf8] sm:$0xff]
    %v5740 = vld [vmem:[%s1536 + $0x100] sm:$0xff]
    %v5741 = vld [vmem:[%s1536 + $0x108] sm:$0xff]
    %v5742 = vld [vmem:[%s1536 + $0x110] sm:$0xff]
    %v5743 = vld [vmem:[%s1536 + $0x118] sm:$0xff]
    %v5744 = vld [vmem:[%s1536 + $0x120] sm:$0xff]
    %v5745 = vld [vmem:[%s1536 + $0x128] sm:$0xff]
    %v5746 = vld [vmem:[%s1536 + $0x130] sm:$0xff]
    %v5747 = vld [vmem:[%s1536 + $0x138] sm:$0xff]
    %v5748 = vld [vmem:[%s1536 + $0x140] sm:$0xff]
    %v5749 = vld [vmem:[%s1536 + $0x148] sm:$0xff]
    %v5750 = vld [vmem:[%s1536 + $0x150] sm:$0xff]
    %v5751 = vld [vmem:[%s1536 + $0x158] sm:$0xff]
    %v5752 = vld [vmem:[%s1536 + $0x160] sm:$0xff]
    %v5753 = vld [vmem:[%s1536 + $0x168] sm:$0xff]
    %v5754 = vld [vmem:[%s1536 + $0x170] sm:$0xff]
    %v5755 = vld [vmem:[%s1536 + $0x178] sm:$0xff]
    %v5756 = vld [vmem:[%s1536 + $0x180] sm:$0xff]
    %v5757 = vld [vmem:[%s1536 + $0x188] sm:$0xff]
    %v5758 = vld [vmem:[%s1536 + $0x190] sm:$0xff]
    %v5759 = vld [vmem:[%s1536 + $0x198] sm:$0xff]
    %v5760 = vld [vmem:[%s1536 + $0x1a0] sm:$0xff]
    %v5761 = vld [vmem:[%s1536 + $0x1a8] sm:$0xff]
    %v5762 = vld [vmem:[%s1536 + $0x1b0] sm:$0xff]
    %v5763 = vld [vmem:[%s1536 + $0x1b8] sm:$0xff]
    %v5764 = vld [vmem:[%s1536 + $0x1c0] sm:$0xff]
    %v5765 = vld [vmem:[%s1536 + $0x1c8] sm:$0xff]
    %v5766 = vld [vmem:[%s1536 + $0x1d0] sm:$0xff]
    %v5767 = vld [vmem:[%s1536 + $0x1d8] sm:$0xff]
    %v5768 = vld [vmem:[%s1536 + $0x1e0] sm:$0xff]
    %v5769 = vld [vmem:[%s1536 + $0x1e8] sm:$0xff]
    %v5770 = vld [vmem:[%s1536 + $0x1f0] sm:$0xff]
    %v5771 = vld [vmem:[%s1536 + $0x1f8] sm:$0xff]
    %v5772 = vld [vmem:[%s1536 + $0x200] sm:$0xff]
    %v5773 = vld [vmem:[%s1536 + $0x208] sm:$0xff]
    %v5774 = vld [vmem:[%s1536 + $0x210] sm:$0xff]
    %v5775 = vld [vmem:[%s1536 + $0x218] sm:$0xff]
    %v5776 = vld [vmem:[%s1536 + $0x220] sm:$0xff]
    %v5777 = vld [vmem:[%s1536 + $0x228] sm:$0xff]
    %v5778 = vld [vmem:[%s1536 + $0x230] sm:$0xff]
    %v5779 = vld [vmem:[%s1536 + $0x238] sm:$0xff]
    %v5780 = vld [vmem:[%s1536 + $0x240] sm:$0xff]
    %v5781 = vld [vmem:[%s1536 + $0x248] sm:$0xff]
    %v5782 = vld [vmem:[%s1536 + $0x250] sm:$0xff]
    %v5783 = vld [vmem:[%s1536 + $0x258] sm:$0xff]
    %v5784 = vld [vmem:[%s1536 + $0x260] sm:$0xff]
    %v5785 = vld [vmem:[%s1536 + $0x268] sm:$0xff]
    %v5786 = vld [vmem:[%s1536 + $0x270] sm:$0xff]
    %v5787 = vld [vmem:[%s1536 + $0x278] sm:$0xff]
    %v5788 = vld [vmem:[%s1536 + $0x280] sm:$0xff]
    %v5789 = vld [vmem:[%s1536 + $0x288] sm:$0xff]
    %v5790 = vld [vmem:[%s1536 + $0x290] sm:$0xff]
    %v5791 = vld [vmem:[%s1536 + $0x298] sm:$0xff]
    %v5792 = vld [vmem:[%s1536 + $0x2a0] sm:$0xff]
    %v5793 = vld [vmem:[%s1536 + $0x2a8] sm:$0xff]
    %v5794 = vld [vmem:[%s1536 + $0x2b0] sm:$0xff]
    %v5795 = vld [vmem:[%s1536 + $0x2b8] sm:$0xff]
    %v5796 = vld [vmem:[%s1536 + $0x2c0] sm:$0xff]
    %v5797 = vld [vmem:[%s1536 + $0x2c8] sm:$0xff]
    %v5798 = vld [vmem:[%s1536 + $0x2d0] sm:$0xff]
    %v5799 = vld [vmem:[%s1536 + $0x2d8] sm:$0xff]
    %v5800 = vld [vmem:[%s1536 + $0x2e0] sm:$0xff]
    %v5801 = vld [vmem:[%s1536 + $0x2e8] sm:$0xff]
    %v5802 = vld [vmem:[%s1536 + $0x2f0] sm:$0xff]
    %v5803 = vld [vmem:[%s1536 + $0x2f8] sm:$0xff]
    %v5804 = vld [vmem:[%s1536 + $0x300] sm:$0xff]
    %v5805 = vld [vmem:[%s1536 + $0x308] sm:$0xff]
    %v5806 = vld [vmem:[%s1536 + $0x310] sm:$0xff]
    %v5807 = vld [vmem:[%s1536 + $0x318] sm:$0xff]
    %v5808 = vld [vmem:[%s1536 + $0x320] sm:$0xff]
    %v5809 = vld [vmem:[%s1536 + $0x328] sm:$0xff]
    %v5810 = vld [vmem:[%s1536 + $0x330] sm:$0xff]
    %v5811 = vld [vmem:[%s1536 + $0x338] sm:$0xff]
    %v5812 = vld [vmem:[%s1536 + $0x340] sm:$0xff]
    %v5813 = vld [vmem:[%s1536 + $0x348] sm:$0xff]
    %v5814 = vld [vmem:[%s1536 + $0x350] sm:$0xff]
    %v5815 = vld [vmem:[%s1536 + $0x358] sm:$0xff]
    %v5816 = vld [vmem:[%s1536 + $0x360] sm:$0xff]
    %v5817 = vld [vmem:[%s1536 + $0x368] sm:$0xff]
    %v5818 = vld [vmem:[%s1536 + $0x370] sm:$0xff]
    %v5819 = vld [vmem:[%s1536 + $0x378] sm:$0xff]
    %5820 = vmatprep.subr.mxu0 %v5709
    %5821 = vmatpush1.msra.mxu0 %v5708
    %5822 = vmatprep.subr.mxu0 %v5711
    %5823 = vmatpush1.msra.mxu0 %v5710
    %5824 = vmatprep.subr.mxu0 %v5713
    %5825 = vmatpush1.msra.mxu0 %v5712
    %5826 = vmatprep.subr.mxu0 %v5715
    %5827 = vmatpush1.msra.mxu0 %v5714
    %5828 = vmatprep.subr.mxu0 %v5717
    %5829 = vmatpush1.msra.mxu0 %v5716
    %5830 = vmatprep.subr.mxu0 %v5719
    %5831 = vmatpush1.msra.mxu0 %v5718
    %5832 = vmatprep.subr.mxu0 %v5721
    %5833 = vmatpush1.msra.mxu0 %v5720
    %5834 = vmatprep.subr.mxu0 %v5723
    %5835 = vmatpush1.msra.mxu0 %v5722
    %5836 = vmatprep.subr.mxu0 %v5725
    %5837 = vmatpush1.msra.mxu0 %v5724
    %5838 = vmatprep.subr.mxu0 %v5727
    %5839 = vmatpush1.msra.mxu0 %v5726
    %5840 = vmatprep.subr.mxu0 %v5729
    %5841 = vmatpush1.msra.mxu0 %v5728
    %5842 = vmatprep.subr.mxu0 %v5731
    %5843 = vmatpush1.msra.mxu0 %v5730
    %5844 = vmatprep.subr.mxu0 %v5733
    %5845 = vmatpush1.msra.mxu0 %v5732
    %5846 = vmatprep.subr.mxu0 %v5735
    %5847 = vmatpush1.msra.mxu0 %v5734
    %5848 = vmatprep.subr.mxu0 %v5737
    %5849 = vmatpush1.msra.mxu0 %v5736
    %5850 = vmatprep.subr.mxu0 %v5739
    %5851 = vmatpush1.msra.mxu0 %v5738
    %5852 = vmatprep.subr.mxu0 %v5741
    %5853 = vmatpush1.msra.mxu0 %v5740
    %5854 = vmatprep.subr.mxu0 %v5743
    %5855 = vmatpush1.msra.mxu0 %v5742
    %5856 = vmatprep.subr.mxu0 %v5745
    %5857 = vmatpush1.msra.mxu0 %v5744
    %5858 = vmatprep.subr.mxu0 %v5747
    %5859 = vmatpush1.msra.mxu0 %v5746
    %5860 = vmatprep.subr.mxu0 %v5749
    %5861 = vmatpush1.msra.mxu0 %v5748
    %5862 = vmatprep.subr.mxu0 %v5751
    %5863 = vmatpush1.msra.mxu0 %v5750
    %5864 = vmatprep.subr.mxu0 %v5753
    %5865 = vmatpush1.msra.mxu0 %v5752
    %5866 = vmatprep.subr.mxu0 %v5755
    %5867 = vmatpush1.msra.mxu0 %v5754
    %5868 = vmatprep.subr.mxu0 %v5757
    %5869 = vmatpush1.msra.mxu0 %v5756
    %5870 = vmatprep.subr.mxu0 %v5759
    %5871 = vmatpush1.msra.mxu0 %v5758
    %5872 = vmatprep.subr.mxu0 %v5761
    %5873 = vmatpush1.msra.mxu0 %v5760
    %5874 = vmatprep.subr.mxu0 %v5763
    %5875 = vmatpush1.msra.mxu0 %v5762
    %5876 = vmatprep.subr.mxu0 %v5765
    %5877 = vmatpush1.msra.mxu0 %v5764
    %5878 = vmatprep.subr.mxu0 %v5767
    %5879 = vmatpush1.msra.mxu0 %v5766
    %5880 = vmatprep.subr.mxu0 %v5769
    %5881 = vmatpush1.msra.mxu0 %v5768
    %5882 = vmatprep.subr.mxu0 %v5771
    %5883 = vmatpush1.msra.mxu0 %v5770
    %5884 = vmatprep.mubr.f32.mxu0 %v5429
    %5885 = vmatmul.mubr.f32.gmra.mrb[0].mxu0 %v5428
    %v5886 = vpop.f32.mrb[0].mxu0
    %v5887 = vadd.f32 0.0, %v5886
    %v5888 = vpop.f32.mrb[0].mxu0
    %v5889 = vadd.f32 0.0, %v5888
    %5890 = vmatprep.mubr.f32.mxu0 %v5433
    %5891 = vmatmul.mubr.f32.gmra.mrb[0].mxu0 %v5432
    %v5892 = vpop.f32.mrb[0].mxu0
    %v5893 = vadd.f32 0.0, %v5892
    %v5894 = vpop.f32.mrb[0].mxu0
    %v5895 = vadd.f32 0.0, %v5894
    %5896 = vdwg.mxu0
    %5897 = vmatprep.subr.mxu0 %v5773
    %5898 = vmatpush1.msra.mxu0 %v5772
    %5899 = vmatprep.subr.mxu0 %v5775
    %5900 = vmatpush1.msra.mxu0 %v5774
    %5901 = vmatprep.subr.mxu0 %v5777
    %5902 = vmatpush1.msra.mxu0 %v5776
    %5903 = vmatprep.subr.mxu0 %v5779
    %5904 = vmatpush1.msra.mxu0 %v5778
    %5905 = vmatprep.subr.mxu0 %v5781
    %5906 = vmatpush1.msra.mxu0 %v5780
    %5907 = vmatprep.subr.mxu0 %v5783
    %5908 = vmatpush1.msra.mxu0 %v5782
    %5909 = vmatprep.subr.mxu0 %v5785
    %5910 = vmatpush1.msra.mxu0 %v5784
    %5911 = vmatprep.subr.mxu0 %v5787
    %5912 = vmatpush1.msra.mxu0 %v5786
    %5913 = vmatprep.subr.mxu0 %v5789
    %5914 = vmatpush1.msra.mxu0 %v5788
    %5915 = vmatprep.subr.mxu0 %v5791
    %5916 = vmatpush1.msra.mxu0 %v5790
    %5917 = vmatprep.subr.mxu0 %v5793
    %5918 = vmatpush1.msra.mxu0 %v5792
    %5919 = vmatprep.subr.mxu0 %v5795
    %5920 = vmatpush1.msra.mxu0 %v5794
    %5921 = vmatprep.subr.mxu0 %v5797
    %5922 = vmatpush1.msra.mxu0 %v5796
    %5923 = vmatprep.subr.mxu0 %v5799
    %5924 = vmatpush1.msra.mxu0 %v5798
    %5925 = vmatprep.subr.mxu0 %v5801
    %5926 = vmatpush1.msra.mxu0 %v5800
    %5927 = vmatprep.subr.mxu0 %v5803
    %5928 = vmatpush1.msra.mxu0 %v5802
    %5929 = vmatprep.subr.mxu0 %v5805
    %5930 = vmatpush1.msra.mxu0 %v5804
    %5931 = vmatprep.subr.mxu0 %v5807
    %5932 = vmatpush1.msra.mxu0 %v5806
    %5933 = vmatprep.subr.mxu0 %v5809
    %5934 = vmatpush1.msra.mxu0 %v5808
    %5935 = vmatprep.subr.mxu0 %v5811
    %5936 = vmatpush1.msra.mxu0 %v5810
    %5937 = vmatprep.subr.mxu0 %v5813
    %5938 = vmatpush1.msra.mxu0 %v5812
    %5939 = vmatprep.subr.mxu0 %v5815
    %5940 = vmatpush1.msra.mxu0 %v5814
    %5941 = vmatprep.subr.mxu0 %v5817
    %5942 = vmatpush1.msra.mxu0 %v5816
    %5943 = vmatprep.subr.mxu0 %v5819
    %5944 = vmatpush1.msra.mxu0 %v5818
    %5945 = vmatprep.subr.mxu0 0.0
    %5946 = vmatpush1.msra.mxu0 0.0
    %5947 = vmatprep.subr.mxu0 0.0
    %5948 = vmatpush1.msra.mxu0 0.0
    %5949 = vmatprep.subr.mxu0 0.0
    %5950 = vmatpush1.msra.mxu0 0.0
    %5951 = vmatprep.subr.mxu0 0.0
    %5952 = vmatpush1.msra.mxu0 0.0
    %5953 = vmatprep.subr.mxu0 0.0
    %5954 = vmatpush1.msra.mxu0 0.0
    %5955 = vmatprep.subr.mxu0 0.0
    %5956 = vmatpush1.msra.mxu0 0.0
    %5957 = vmatprep.subr.mxu0 0.0
    %5958 = vmatpush1.msra.mxu0 0.0
    %5959 = vmatprep.subr.mxu0 0.0
    %5960 = vmatpush1.msra.mxu0 0.0
    %5961 = vmatprep.mubr.f32.mxu0 %v5549
    %5962 = vmatmul.mubr.f32.gmra.mrb[0].mxu0 %v5430
    %v5963 = vpop.f32.mrb[0].mxu0
    %v5964 = vadd.f32 %v5887, %v5963
    %v5965 = vpop.f32.mrb[0].mxu0
    %v5966 = vadd.f32 %v5889, %v5965
    %5967 = vmatprep.mubr.f32.mxu0 %v5552
    %5968 = vmatmul.mubr.f32.gmra.mrb[0].mxu0 %v5434
    %v5969 = vpop.f32.mrb[0].mxu0
    %v5970 = vadd.f32 %v5893, %v5969
    %v5971 = vpop.f32.mrb[0].mxu0
    %v5972 = vadd.f32 %v5895, %v5971
    %5973 = vdwg.mxu0
    %v5974 = vmax.f32 %v5698, %v5964
    %v5975 = vmax.f32 %v5700, %v5966
    %v5976 = vmax.f32 %v5704, %v5970
    %v5977 = vmax.f32 %v5706, %v5972
    %v5982 = vrot.slane %v5974, 7
    %v5983 = vrot.slane %v5975, 7
    %v5984 = vrot.slane %v5976, 7
    %v5985 = vsel %vm1811, %v5982, %v5984
    %v5986 = vrot.slane %v5977, 7
    %v5987 = vsel %vm1811, %v5983, %v5986
    %5992 = vst [vmem:[#allocation2] sm:$0xfe] %v5982
    %5993 = vst.msk [vmem:[#allocation2 + $0x8] sm:$0xfe] %vm1823, %v5983
    %5994 = vst [vmem:[#allocation2 + $0x10] sm:$0x7f] %v5985
    %5995 = vst.msk [vmem:[#allocation2 + $0x18] sm:$0x7f] %vm1826, %v5987
    %v5996 = vld [vmem:[#allocation2] sm:$0xff]
    %v5997 = vld [vmem:[#allocation2 + $0x8] sm:$0xff]
    %v5998 = vld [vmem:[#allocation2 + $0x10] sm:$0xff]
    %v5999 = vld [vmem:[#allocation2 + $0x18] sm:$0xff]
    %v6000 = vld [vmem:[#allocation8] sm:$0xff]
    %v6001 = vld [vmem:[#allocation8 + $0x8] sm:$0xff]
    %v6002 = vld [vmem:[#allocation8 + $0x10] sm:$0xff]
    %v6003 = vld [vmem:[#allocation8 + $0x18] sm:$0xff]
    %v6004 = vld [vmem:[#allocation8 + $0x20] sm:$0xff]
    %v6005 = vld [vmem:[#allocation8 + $0x28] sm:$0xff]
    %v6006 = vld [vmem:[#allocation8 + $0x30] sm:$0xff]
    %v6007 = vld [vmem:[#allocation8 + $0x38] sm:$0xff]
    %v6008 = vld [vmem:[#allocation8 + $0x40] sm:$0xff]
    %v6009 = vld [vmem:[#allocation8 + $0x48] sm:$0xff]
    %v6010 = vld [vmem:[#allocation8 + $0x50] sm:$0xff]
    %v6011 = vld [vmem:[#allocation8 + $0x58] sm:$0xff]
    %v6012 = vld [vmem:[#allocation8 + $0x60] sm:$0xff]
    %v6013 = vld [vmem:[#allocation8 + $0x68] sm:$0xff]
    %v6014 = vld [vmem:[#allocation8 + $0x70] sm:$0xff]
    %v6015 = vld [vmem:[#allocation8 + $0x78] sm:$0xff]
    %v6016 = vld [vmem:[#allocation8 + $0x80] sm:$0xff]
    %v6017 = vld [vmem:[#allocation8 + $0x88] sm:$0xff]
    %v6018 = vld [vmem:[#allocation8 + $0x90] sm:$0xff]
    %v6019 = vld [vmem:[#allocation8 + $0x98] sm:$0xff]
    %v6020 = vld [vmem:[#allocation8 + $0xa0] sm:$0xff]
    %v6021 = vld [vmem:[#allocation8 + $0xa8] sm:$0xff]
    %v6022 = vld [vmem:[#allocation8 + $0xb0] sm:$0xff]
    %v6023 = vld [vmem:[#allocation8 + $0xb8] sm:$0xff]
    %v6024 = vld [vmem:[#allocation8 + $0xc0] sm:$0xff]
    %v6025 = vld [vmem:[#allocation8 + $0xc8] sm:$0xff]
    %v6026 = vld [vmem:[#allocation8 + $0xd0] sm:$0xff]
    %v6027 = vld [vmem:[#allocation8 + $0xd8] sm:$0xff]
    %v6028 = vld [vmem:[#allocation8 + $0xe0] sm:$0xff]
    %v6029 = vld [vmem:[#allocation8 + $0xe8] sm:$0xff]
    %v6030 = vld [vmem:[#allocation8 + $0xf0] sm:$0xff]
    %v6031 = vld [vmem:[#allocation8 + $0xf8] sm:$0xff]
    %v6032 = vld [vmem:[#allocation8 + $0x100] sm:$0xff]
    %v6033 = vld [vmem:[#allocation8 + $0x108] sm:$0xff]
    %v6034 = vld [vmem:[#allocation8 + $0x110] sm:$0xff]
    %v6035 = vld [vmem:[#allocation8 + $0x118] sm:$0xff]
    %v6036 = vld [vmem:[#allocation8 + $0x120] sm:$0xff]
    %v6037 = vld [vmem:[#allocation8 + $0x128] sm:$0xff]
    %v6038 = vld [vmem:[#allocation8 + $0x130] sm:$0xff]
    %v6039 = vld [vmem:[#allocation8 + $0x138] sm:$0xff]
    %v6040 = vld [vmem:[#allocation8 + $0x140] sm:$0xff]
    %v6041 = vld [vmem:[#allocation8 + $0x148] sm:$0xff]
    %v6042 = vld [vmem:[#allocation8 + $0x150] sm:$0xff]
    %v6043 = vld [vmem:[#allocation8 + $0x158] sm:$0xff]
    %v6044 = vld [vmem:[#allocation8 + $0x160] sm:$0xff]
    %v6045 = vld [vmem:[#allocation8 + $0x168] sm:$0xff]
    %v6046 = vld [vmem:[#allocation8 + $0x170] sm:$0xff]
    %v6047 = vld [vmem:[#allocation8 + $0x178] sm:$0xff]
    %v6048 = vld [vmem:[#allocation8 + $0x180] sm:$0xff]
    %v6049 = vld [vmem:[#allocation8 + $0x188] sm:$0xff]
    %v6050 = vld [vmem:[#allocation8 + $0x190] sm:$0xff]
    %v6051 = vld [vmem:[#allocation8 + $0x198] sm:$0xff]
    %v6052 = vld [vmem:[#allocation8 + $0x1a0] sm:$0xff]
    %v6053 = vld [vmem:[#allocation8 + $0x1a8] sm:$0xff]
    %v6054 = vld [vmem:[#allocation8 + $0x1b0] sm:$0xff]
    %v6055 = vld [vmem:[#allocation8 + $0x1b8] sm:$0xff]
    %v6056 = vld [vmem:[#allocation8 + $0x1c0] sm:$0xff]
    %v6057 = vld [vmem:[#allocation8 + $0x1c8] sm:$0xff]
    %v6058 = vld [vmem:[#allocation8 + $0x1d0] sm:$0xff]
    %v6059 = vld [vmem:[#allocation8 + $0x1d8] sm:$0xff]
    %v6060 = vld [vmem:[#allocation8 + $0x1e0] sm:$0xff]
    %v6061 = vld [vmem:[#allocation8 + $0x1e8] sm:$0xff]
    %v6062 = vld [vmem:[#allocation8 + $0x1f0] sm:$0xff]
    %v6063 = vld [vmem:[#allocation8 + $0x1f8] sm:$0xff]
    %v6064 = vld [vmem:[#allocation8 + $0x200] sm:$0xff]
    %v6065 = vld [vmem:[#allocation8 + $0x208] sm:$0xff]
    %v6066 = vld [vmem:[#allocation8 + $0x210] sm:$0xff]
    %v6067 = vld [vmem:[#allocation8 + $0x218] sm:$0xff]
    %v6068 = vld [vmem:[#allocation8 + $0x220] sm:$0xff]
    %v6069 = vld [vmem:[#allocation8 + $0x228] sm:$0xff]
    %v6070 = vld [vmem:[#allocation8 + $0x230] sm:$0xff]
    %v6071 = vld [vmem:[#allocation8 + $0x238] sm:$0xff]
    %v6072 = vld [vmem:[#allocation8 + $0x240] sm:$0xff]
    %v6073 = vld [vmem:[#allocation8 + $0x248] sm:$0xff]
    %v6074 = vld [vmem:[#allocation8 + $0x250] sm:$0xff]
    %v6075 = vld [vmem:[#allocation8 + $0x258] sm:$0xff]
    %v6076 = vld [vmem:[#allocation8 + $0x260] sm:$0xff]
    %v6077 = vld [vmem:[#allocation8 + $0x268] sm:$0xff]
    %v6078 = vld [vmem:[#allocation8 + $0x270] sm:$0xff]
    %v6079 = vld [vmem:[#allocation8 + $0x278] sm:$0xff]
    %v6080 = vld [vmem:[#allocation8 + $0x280] sm:$0xff]
    %v6081 = vld [vmem:[#allocation8 + $0x288] sm:$0xff]
    %v6082 = vld [vmem:[#allocation8 + $0x290] sm:$0xff]
    %v6083 = vld [vmem:[#allocation8 + $0x298] sm:$0xff]
    %v6084 = vld [vmem:[#allocation8 + $0x2a0] sm:$0xff]
    %v6085 = vld [vmem:[#allocation8 + $0x2a8] sm:$0xff]
    %v6086 = vld [vmem:[#allocation8 + $0x2b0] sm:$0xff]
    %v6087 = vld [vmem:[#allocation8 + $0x2b8] sm:$0xff]
    %v6088 = vld [vmem:[#allocation8 + $0x2c0] sm:$0xff]
    %v6089 = vld [vmem:[#allocation8 + $0x2c8] sm:$0xff]
    %v6090 = vld [vmem:[#allocation8 + $0x2d0] sm:$0xff]
    %v6091 = vld [vmem:[#allocation8 + $0x2d8] sm:$0xff]
    %v6092 = vld [vmem:[#allocation8 + $0x2e0] sm:$0xff]
    %v6093 = vld [vmem:[#allocation8 + $0x2e8] sm:$0xff]
    %v6094 = vld [vmem:[#allocation8 + $0x2f0] sm:$0xff]
    %v6095 = vld [vmem:[#allocation8 + $0x2f8] sm:$0xff]
    %v6096 = vld [vmem:[#allocation8 + $0x300] sm:$0xff]
    %v6097 = vld [vmem:[#allocation8 + $0x308] sm:$0xff]
    %v6098 = vld [vmem:[#allocation8 + $0x310] sm:$0xff]
    %v6099 = vld [vmem:[#allocation8 + $0x318] sm:$0xff]
    %v6100 = vld [vmem:[#allocation8 + $0x320] sm:$0xff]
    %v6101 = vld [vmem:[#allocation8 + $0x328] sm:$0xff]
    %v6102 = vld [vmem:[#allocation8 + $0x330] sm:$0xff]
    %v6103 = vld [vmem:[#allocation8 + $0x338] sm:$0xff]
    %v6104 = vld [vmem:[#allocation8 + $0x340] sm:$0xff]
    %v6105 = vld [vmem:[#allocation8 + $0x348] sm:$0xff]
    %v6106 = vld [vmem:[#allocation8 + $0x350] sm:$0xff]
    %v6107 = vld [vmem:[#allocation8 + $0x358] sm:$0xff]
    %v6108 = vld [vmem:[#allocation8 + $0x360] sm:$0xff]
    %v6109 = vld [vmem:[#allocation8 + $0x368] sm:$0xff]
    %v6110 = vld [vmem:[#allocation8 + $0x370] sm:$0xff]
    %v6111 = vld [vmem:[#allocation8 + $0x378] sm:$0xff]
    %v6112 = vld [vmem:[%s1944] sm:$0xff]
    %v6113 = vld [vmem:[%s1944 + $0x8] sm:$0xff]
    %v6114 = vld [vmem:[%s1944 + $0x10] sm:$0xff]
    %v6115 = vld [vmem:[%s1944 + $0x18] sm:$0xff]
    %v6116 = vld [vmem:[%s1944 + $0x20] sm:$0xff]
    %v6117 = vld [vmem:[%s1944 + $0x28] sm:$0xff]
    %v6118 = vld [vmem:[%s1944 + $0x30] sm:$0xff]
    %v6119 = vld [vmem:[%s1944 + $0x38] sm:$0xff]
    %v6120 = vld [vmem:[%s1944 + $0x40] sm:$0xff]
    %v6121 = vld [vmem:[%s1944 + $0x48] sm:$0xff]
    %v6122 = vld [vmem:[%s1944 + $0x50] sm:$0xff]
    %v6123 = vld [vmem:[%s1944 + $0x58] sm:$0xff]
    %v6124 = vld [vmem:[%s1944 + $0x60] sm:$0xff]
    %v6125 = vld [vmem:[%s1944 + $0x68] sm:$0xff]
    %v6126 = vld [vmem:[%s1944 + $0x70] sm:$0xff]
    %v6127 = vld [vmem:[%s1944 + $0x78] sm:$0xff]
    %v6128 = vld [vmem:[%s1944 + $0x80] sm:$0xff]
    %v6129 = vld [vmem:[%s1944 + $0x88] sm:$0xff]
    %v6130 = vld [vmem:[%s1944 + $0x90] sm:$0xff]
    %v6131 = vld [vmem:[%s1944 + $0x98] sm:$0xff]
    %v6132 = vld [vmem:[%s1944 + $0xa0] sm:$0xff]
    %v6133 = vld [vmem:[%s1944 + $0xa8] sm:$0xff]
    %v6134 = vld [vmem:[%s1944 + $0xb0] sm:$0xff]
    %v6135 = vld [vmem:[%s1944 + $0xb8] sm:$0xff]
    %v6136 = vld [vmem:[%s1944 + $0xc0] sm:$0xff]
    %v6137 = vld [vmem:[%s1944 + $0xc8] sm:$0xff]
    %v6138 = vld [vmem:[%s1944 + $0xd0] sm:$0xff]
    %v6139 = vld [vmem:[%s1944 + $0xd8] sm:$0xff]
    %v6140 = vld [vmem:[%s1944 + $0xe0] sm:$0xff]
    %v6141 = vld [vmem:[%s1944 + $0xe8] sm:$0xff]
    %v6142 = vld [vmem:[%s1944 + $0xf0] sm:$0xff]
    %v6143 = vld [vmem:[%s1944 + $0xf8] sm:$0xff]
    %v6144 = vld [vmem:[%s1944 + $0x100] sm:$0xff]
    %v6145 = vld [vmem:[%s1944 + $0x108] sm:$0xff]
    %v6146 = vld [vmem:[%s1944 + $0x110] sm:$0xff]
    %v6147 = vld [vmem:[%s1944 + $0x118] sm:$0xff]
    %v6148 = vld [vmem:[%s1944 + $0x120] sm:$0xff]
    %v6149 = vld [vmem:[%s1944 + $0x128] sm:$0xff]
    %v6150 = vld [vmem:[%s1944 + $0x130] sm:$0xff]
    %v6151 = vld [vmem:[%s1944 + $0x138] sm:$0xff]
    %v6152 = vld [vmem:[%s1944 + $0x140] sm:$0xff]
    %v6153 = vld [vmem:[%s1944 + $0x148] sm:$0xff]
    %v6154 = vld [vmem:[%s1944 + $0x150] sm:$0xff]
    %v6155 = vld [vmem:[%s1944 + $0x158] sm:$0xff]
    %v6156 = vld [vmem:[%s1944 + $0x160] sm:$0xff]
    %v6157 = vld [vmem:[%s1944 + $0x168] sm:$0xff]
    %v6158 = vld [vmem:[%s1944 + $0x170] sm:$0xff]
    %v6159 = vld [vmem:[%s1944 + $0x178] sm:$0xff]
    %v6160 = vld [vmem:[%s1944 + $0x180] sm:$0xff]
    %v6161 = vld [vmem:[%s1944 + $0x188] sm:$0xff]
    %v6162 = vld [vmem:[%s1944 + $0x190] sm:$0xff]
    %v6163 = vld [vmem:[%s1944 + $0x198] sm:$0xff]
    %v6164 = vld [vmem:[%s1944 + $0x1a0] sm:$0xff]
    %v6165 = vld [vmem:[%s1944 + $0x1a8] sm:$0xff]
    %v6166 = vld [vmem:[%s1944 + $0x1b0] sm:$0xff]
    %v6167 = vld [vmem:[%s1944 + $0x1b8] sm:$0xff]
    %v6168 = vld [vmem:[%s1944 + $0x1c0] sm:$0xff]
    %v6169 = vld [vmem:[%s1944 + $0x1c8] sm:$0xff]
    %v6170 = vld [vmem:[%s1944 + $0x1d0] sm:$0xff]
    %v6171 = vld [vmem:[%s1944 + $0x1d8] sm:$0xff]
    %v6172 = vld [vmem:[%s1944 + $0x1e0] sm:$0xff]
    %v6173 = vld [vmem:[%s1944 + $0x1e8] sm:$0xff]
    %v6174 = vld [vmem:[%s1944 + $0x1f0] sm:$0xff]
    %v6175 = vld [vmem:[%s1944 + $0x1f8] sm:$0xff]
    %v6176 = vld [vmem:[%s1944 + $0x200] sm:$0xff]
    %v6177 = vld [vmem:[%s1944 + $0x208] sm:$0xff]
    %v6178 = vld [vmem:[%s1944 + $0x210] sm:$0xff]
    %v6179 = vld [vmem:[%s1944 + $0x218] sm:$0xff]
    %v6180 = vld [vmem:[%s1944 + $0x220] sm:$0xff]
    %v6181 = vld [vmem:[%s1944 + $0x228] sm:$0xff]
    %v6182 = vld [vmem:[%s1944 + $0x230] sm:$0xff]
    %v6183 = vld [vmem:[%s1944 + $0x238] sm:$0xff]
    %v6184 = vld [vmem:[%s1944 + $0x240] sm:$0xff]
    %v6185 = vld [vmem:[%s1944 + $0x248] sm:$0xff]
    %v6186 = vld [vmem:[%s1944 + $0x250] sm:$0xff]
    %v6187 = vld [vmem:[%s1944 + $0x258] sm:$0xff]
    %v6188 = vld [vmem:[%s1944 + $0x260] sm:$0xff]
    %v6189 = vld [vmem:[%s1944 + $0x268] sm:$0xff]
    %v6190 = vld [vmem:[%s1944 + $0x270] sm:$0xff]
    %v6191 = vld [vmem:[%s1944 + $0x278] sm:$0xff]
    %v6192 = vld [vmem:[%s1944 + $0x280] sm:$0xff]
    %v6193 = vld [vmem:[%s1944 + $0x288] sm:$0xff]
    %v6194 = vld [vmem:[%s1944 + $0x290] sm:$0xff]
    %v6195 = vld [vmem:[%s1944 + $0x298] sm:$0xff]
    %v6196 = vld [vmem:[%s1944 + $0x2a0] sm:$0xff]
    %v6197 = vld [vmem:[%s1944 + $0x2a8] sm:$0xff]
    %v6198 = vld [vmem:[%s1944 + $0x2b0] sm:$0xff]
    %v6199 = vld [vmem:[%s1944 + $0x2b8] sm:$0xff]
    %v6200 = vld [vmem:[%s1944 + $0x2c0] sm:$0xff]
    %v6201 = vld [vmem:[%s1944 + $0x2c8] sm:$0xff]
    %v6202 = vld [vmem:[%s1944 + $0x2d0] sm:$0xff]
    %v6203 = vld [vmem:[%s1944 + $0x2d8] sm:$0xff]
    %v6204 = vld [vmem:[%s1944 + $0x2e0] sm:$0xff]
    %v6205 = vld [vmem:[%s1944 + $0x2e8] sm:$0xff]
    %v6206 = vld [vmem:[%s1944 + $0x2f0] sm:$0xff]
    %v6207 = vld [vmem:[%s1944 + $0x2f8] sm:$0xff]
    %v6208 = vld [vmem:[%s1944 + $0x300] sm:$0xff]
    %v6209 = vld [vmem:[%s1944 + $0x308] sm:$0xff]
    %v6210 = vld [vmem:[%s1944 + $0x310] sm:$0xff]
    %v6211 = vld [vmem:[%s1944 + $0x318] sm:$0xff]
    %v6212 = vld [vmem:[%s1944 + $0x320] sm:$0xff]
    %v6213 = vld [vmem:[%s1944 + $0x328] sm:$0xff]
    %v6214 = vld [vmem:[%s1944 + $0x330] sm:$0xff]
    %v6215 = vld [vmem:[%s1944 + $0x338] sm:$0xff]
    %v6216 = vld [vmem:[%s1944 + $0x340] sm:$0xff]
    %v6217 = vld [vmem:[%s1944 + $0x348] sm:$0xff]
    %v6218 = vld [vmem:[%s1944 + $0x350] sm:$0xff]
    %v6219 = vld [vmem:[%s1944 + $0x358] sm:$0xff]
    %v6220 = vld [vmem:[%s1944 + $0x360] sm:$0xff]
    %v6221 = vld [vmem:[%s1944 + $0x368] sm:$0xff]
    %v6222 = vld [vmem:[%s1944 + $0x370] sm:$0xff]
    %v6223 = vld [vmem:[%s1944 + $0x378] sm:$0xff]
    %v6228 = vrot.slane %v5996, 1
    %v6229 = vrot.slane %v5998, 1
    %v6230 = vsel %vm219, %v6228, %v6229
    %v6231 = vrot.slane %v5997, 1
    %v6232 = vrot.slane %v5999, 1
    %v6233 = vsel %vm219, %v6231, %v6232
    %v6236 = vsel %vm174, %v6233, 0
    %v6238 = vsel %vm174, %v6232, 0
    %6240 = vmatprep.subr.mxu0 %v6113
    %6241 = vmatpush1.msra.mxu0 %v6112
    %6242 = vmatprep.subr.mxu0 %v6117
    %6243 = vmatpush1.msra.mxu0 %v6116
    %6244 = vmatprep.subr.mxu0 %v6121
    %6245 = vmatpush1.msra.mxu0 %v6120
    %6246 = vmatprep.subr.mxu0 %v6125
    %6247 = vmatpush1.msra.mxu0 %v6124
    %6248 = vmatprep.subr.mxu0 %v6129
    %6249 = vmatpush1.msra.mxu0 %v6128
    %6250 = vmatprep.subr.mxu0 %v6133
    %6251 = vmatpush1.msra.mxu0 %v6132
    %6252 = vmatprep.subr.mxu0 %v6137
    %6253 = vmatpush1.msra.mxu0 %v6136
    %6254 = vmatprep.subr.mxu0 %v6141
    %6255 = vmatpush1.msra.mxu0 %v6140
    %6256 = vmatprep.subr.mxu0 %v6145
    %6257 = vmatpush1.msra.mxu0 %v6144
    %6258 = vmatprep.subr.mxu0 %v6149
    %6259 = vmatpush1.msra.mxu0 %v6148
    %6260 = vmatprep.subr.mxu0 %v6153
    %6261 = vmatpush1.msra.mxu0 %v6152
    %6262 = vmatprep.subr.mxu0 %v6157
    %6263 = vmatpush1.msra.mxu0 %v6156
    %6264 = vmatprep.subr.mxu0 %v6161
    %6265 = vmatpush1.msra.mxu0 %v6160
    %6266 = vmatprep.subr.mxu0 %v6165
    %6267 = vmatpush1.msra.mxu0 %v6164
    %6268 = vmatprep.subr.mxu0 %v6169
    %6269 = vmatpush1.msra.mxu0 %v6168
    %6270 = vmatprep.subr.mxu0 %v6173
    %6271 = vmatpush1.msra.mxu0 %v6172
    %6272 = vmatprep.subr.mxu0 %v6177
    %6273 = vmatpush1.msra.mxu0 %v6176
    %6274 = vmatprep.subr.mxu0 %v6181
    %6275 = vmatpush1.msra.mxu0 %v6180
    %6276 = vmatprep.subr.mxu0 %v6185
    %6277 = vmatpush1.msra.mxu0 %v6184
    %6278 = vmatprep.subr.mxu0 %v6189
    %6279 = vmatpush1.msra.mxu0 %v6188
    %6280 = vmatprep.subr.mxu0 %v6193
    %6281 = vmatpush1.msra.mxu0 %v6192
    %6282 = vmatprep.subr.mxu0 %v6197
    %6283 = vmatpush1.msra.mxu0 %v6196
    %6284 = vmatprep.subr.mxu0 %v6201
    %6285 = vmatpush1.msra.mxu0 %v6200
    %6286 = vmatprep.subr.mxu0 %v6205
    %6287 = vmatpush1.msra.mxu0 %v6204
    %6288 = vmatprep.subr.mxu0 %v6209
    %6289 = vmatpush1.msra.mxu0 %v6208
    %6290 = vmatprep.subr.mxu0 %v6213
    %6291 = vmatpush1.msra.mxu0 %v6212
    %6292 = vmatprep.subr.mxu0 %v6217
    %6293 = vmatpush1.msra.mxu0 %v6216
    %6294 = vmatprep.subr.mxu0 %v6221
    %6295 = vmatpush1.msra.mxu0 %v6220
    %6296 = vmatprep.subr.mxu0 0.0
    %6297 = vmatpush1.msra.mxu0 0.0
    %6298 = vmatprep.subr.mxu0 0.0
    %6299 = vmatpush1.msra.mxu0 0.0
    %6300 = vmatprep.subr.mxu0 0.0
    %6301 = vmatpush1.msra.mxu0 0.0
    %6302 = vmatprep.subr.mxu0 0.0
    %6303 = vmatpush1.msra.mxu0 0.0
    %6304 = vmatprep.mubr.f32.mxu0 %v6236
    %6305 = vmatmul.mubr.f32.gmra.mrb[0].mxu0 %v6230
    %v6306 = vpop.f32.mrb[0].mxu0
    %v6307 = vadd.f32 0.0, %v6306
    %v6308 = vpop.f32.mrb[0].mxu0
    %v6309 = vadd.f32 0.0, %v6308
    %6310 = vmatprep.mubr.f32.mxu0 %v6238
    %6311 = vmatmul.mubr.f32.gmra.mrb[0].mxu0 %v6229
    %v6312 = vpop.f32.mrb[0].mxu0
    %v6313 = vadd.f32 0.0, %v6312
    %v6314 = vpop.f32.mrb[0].mxu0
    %v6315 = vadd.f32 0.0, %v6314
    %6316 = vdwg.mxu0
    %6317 = vmatprep.subr.mxu0 %v6115
    %6318 = vmatpush1.msra.mxu0 %v6114
    %6319 = vmatprep.subr.mxu0 %v6119
    %6320 = vmatpush1.msra.mxu0 %v6118
    %6321 = vmatprep.subr.mxu0 %v6123
    %6322 = vmatpush1.msra.mxu0 %v6122
    %6323 = vmatprep.subr.mxu0 %v6127
    %6324 = vmatpush1.msra.mxu0 %v6126
    %6325 = vmatprep.subr.mxu0 %v6131
    %6326 = vmatpush1.msra.mxu0 %v6130
    %6327 = vmatprep.subr.mxu0 %v6135
    %6328 = vmatpush1.msra.mxu0 %v6134
    %6329 = vmatprep.subr.mxu0 %v6139
    %6330 = vmatpush1.msra.mxu0 %v6138
    %6331 = vmatprep.subr.mxu0 %v6143
    %6332 = vmatpush1.msra.mxu0 %v6142
    %6333 = vmatprep.subr.mxu0 %v6147
    %6334 = vmatpush1.msra.mxu0 %v6146
    %6335 = vmatprep.subr.mxu0 %v6151
    %6336 = vmatpush1.msra.mxu0 %v6150
    %6337 = vmatprep.subr.mxu0 %v6155
    %6338 = vmatpush1.msra.mxu0 %v6154
    %6339 = vmatprep.subr.mxu0 %v6159
    %6340 = vmatpush1.msra.mxu0 %v6158
    %6341 = vmatprep.subr.mxu0 %v6163
    %6342 = vmatpush1.msra.mxu0 %v6162
    %6343 = vmatprep.subr.mxu0 %v6167
    %6344 = vmatpush1.msra.mxu0 %v6166
    %6345 = vmatprep.subr.mxu0 %v6171
    %6346 = vmatpush1.msra.mxu0 %v6170
    %6347 = vmatprep.subr.mxu0 %v6175
    %6348 = vmatpush1.msra.mxu0 %v6174
    %6349 = vmatprep.subr.mxu0 %v6179
    %6350 = vmatpush1.msra.mxu0 %v6178
    %6351 = vmatprep.subr.mxu0 %v6183
    %6352 = vmatpush1.msra.mxu0 %v6182
    %6353 = vmatprep.subr.mxu0 %v6187
    %6354 = vmatpush1.msra.mxu0 %v6186
    %6355 = vmatprep.subr.mxu0 %v6191
    %6356 = vmatpush1.msra.mxu0 %v6190
    %6357 = vmatprep.subr.mxu0 %v6195
    %6358 = vmatpush1.msra.mxu0 %v6194
    %6359 = vmatprep.subr.mxu0 %v6199
    %6360 = vmatpush1.msra.mxu0 %v6198
    %6361 = vmatprep.subr.mxu0 %v6203
    %6362 = vmatpush1.msra.mxu0 %v6202
    %6363 = vmatprep.subr.mxu0 %v6207
    %6364 = vmatpush1.msra.mxu0 %v6206
    %6365 = vmatprep.subr.mxu0 %v6211
    %6366 = vmatpush1.msra.mxu0 %v6210
    %6367 = vmatprep.subr.mxu0 %v6215
    %6368 = vmatpush1.msra.mxu0 %v6214
    %6369 = vmatprep.subr.mxu0 %v6219
    %6370 = vmatpush1.msra.mxu0 %v6218
    %6371 = vmatprep.subr.mxu0 %v6223
    %6372 = vmatpush1.msra.mxu0 %v6222
    %6373 = vmatprep.subr.mxu0 0.0
    %6374 = vmatpush1.msra.mxu0 0.0
    %6375 = vmatprep.subr.mxu0 0.0
    %6376 = vmatpush1.msra.mxu0 0.0
    %6377 = vmatprep.subr.mxu0 0.0
    %6378 = vmatpush1.msra.mxu0 0.0
    %6379 = vmatprep.subr.mxu0 0.0
    %6380 = vmatpush1.msra.mxu0 0.0
    %6381 = vmatprep.mubr.f32.mxu0 %v6236
    %6382 = vmatmul.mubr.f32.gmra.mrb[0].mxu0 %v6230
    %v6383 = vpop.f32.mrb[0].mxu0
    %v6384 = vadd.f32 0.0, %v6383
    %v6385 = vpop.f32.mrb[0].mxu0
    %v6386 = vadd.f32 0.0, %v6385
    %6387 = vmatprep.mubr.f32.mxu0 %v6238
    %6388 = vmatmul.mubr.f32.gmra.mrb[0].mxu0 %v6229
    %v6389 = vpop.f32.mrb[0].mxu0
    %v6390 = vadd.f32 0.0, %v6389
    %v6391 = vpop.f32.mrb[0].mxu0
    %v6392 = vadd.f32 0.0, %v6391
    %6393 = vdwg.mxu0
    %v6394 = vsel %vm174, %v5997, 0
    %v6396 = vsel %vm174, %v5999, 0
    %6398 = vmatprep.subr.mxu0 %v6001
    %6399 = vmatpush1.msra.mxu0 %v6000
    %6400 = vmatprep.subr.mxu0 %v6005
    %6401 = vmatpush1.msra.mxu0 %v6004
    %6402 = vmatprep.subr.mxu0 %v6009
    %6403 = vmatpush1.msra.mxu0 %v6008
    %6404 = vmatprep.subr.mxu0 %v6013
    %6405 = vmatpush1.msra.mxu0 %v6012
    %6406 = vmatprep.subr.mxu0 %v6017
    %6407 = vmatpush1.msra.mxu0 %v6016
    %6408 = vmatprep.subr.mxu0 %v6021
    %6409 = vmatpush1.msra.mxu0 %v6020
    %6410 = vmatprep.subr.mxu0 %v6025
    %6411 = vmatpush1.msra.mxu0 %v6024
    %6412 = vmatprep.subr.mxu0 %v6029
    %6413 = vmatpush1.msra.mxu0 %v6028
    %6414 = vmatprep.subr.mxu0 %v6033
    %6415 = vmatpush1.msra.mxu0 %v6032
    %6416 = vmatprep.subr.mxu0 %v6037
    %6417 = vmatpush1.msra.mxu0 %v6036
    %6418 = vmatprep.subr.mxu0 %v6041
    %6419 = vmatpush1.msra.mxu0 %v6040
    %6420 = vmatprep.subr.mxu0 %v6045
    %6421 = vmatpush1.msra.mxu0 %v6044
    %6422 = vmatprep.subr.mxu0 %v6049
    %6423 = vmatpush1.msra.mxu0 %v6048
    %6424 = vmatprep.subr.mxu0 %v6053
    %6425 = vmatpush1.msra.mxu0 %v6052
    %6426 = vmatprep.subr.mxu0 %v6057
    %6427 = vmatpush1.msra.mxu0 %v6056
    %6428 = vmatprep.subr.mxu0 %v6061
    %6429 = vmatpush1.msra.mxu0 %v6060
    %6430 = vmatprep.subr.mxu0 %v6065
    %6431 = vmatpush1.msra.mxu0 %v6064
    %6432 = vmatprep.subr.mxu0 %v6069
    %6433 = vmatpush1.msra.mxu0 %v6068
    %6434 = vmatprep.subr.mxu0 %v6073
    %6435 = vmatpush1.msra.mxu0 %v6072
    %6436 = vmatprep.subr.mxu0 %v6077
    %6437 = vmatpush1.msra.mxu0 %v6076
    %6438 = vmatprep.subr.mxu0 %v6081
    %6439 = vmatpush1.msra.mxu0 %v6080
    %6440 = vmatprep.subr.mxu0 %v6085
    %6441 = vmatpush1.msra.mxu0 %v6084
    %6442 = vmatprep.subr.mxu0 %v6089
    %6443 = vmatpush1.msra.mxu0 %v6088
    %6444 = vmatprep.subr.mxu0 %v6093
    %6445 = vmatpush1.msra.mxu0 %v6092
    %6446 = vmatprep.subr.mxu0 %v6097
    %6447 = vmatpush1.msra.mxu0 %v6096
    %6448 = vmatprep.subr.mxu0 %v6101
    %6449 = vmatpush1.msra.mxu0 %v6100
    %6450 = vmatprep.subr.mxu0 %v6105
    %6451 = vmatpush1.msra.mxu0 %v6104
    %6452 = vmatprep.subr.mxu0 %v6109
    %6453 = vmatpush1.msra.mxu0 %v6108
    %6454 = vmatprep.subr.mxu0 0.0
    %6455 = vmatpush1.msra.mxu0 0.0
    %6456 = vmatprep.subr.mxu0 0.0
    %6457 = vmatpush1.msra.mxu0 0.0
    %6458 = vmatprep.subr.mxu0 0.0
    %6459 = vmatpush1.msra.mxu0 0.0
    %6460 = vmatprep.subr.mxu0 0.0
    %6461 = vmatpush1.msra.mxu0 0.0
    %6462 = vmatprep.mubr.f32.mxu0 %v6394
    %6463 = vmatmul.mubr.f32.gmra.mrb[0].mxu0 %v5996
    %v6464 = vpop.f32.mrb[0].mxu0
    %v6465 = vadd.f32 %v6307, %v6464
    %v6466 = vpop.f32.mrb[0].mxu0
    %v6467 = vadd.f32 %v6309, %v6466
    %6468 = vmatprep.mubr.f32.mxu0 %v6396
    %6469 = vmatmul.mubr.f32.gmra.mrb[0].mxu0 %v5998
    %v6470 = vpop.f32.mrb[0].mxu0
    %v6471 = vadd.f32 %v6313, %v6470
    %v6472 = vpop.f32.mrb[0].mxu0
    %v6473 = vadd.f32 %v6315, %v6472
    %6474 = vdwg.mxu0
    %6475 = vmatprep.subr.mxu0 %v6003
    %6476 = vmatpush1.msra.mxu0 %v6002
    %6477 = vmatprep.subr.mxu0 %v6007
    %6478 = vmatpush1.msra.mxu0 %v6006
    %6479 = vmatprep.subr.mxu0 %v6011
    %6480 = vmatpush1.msra.mxu0 %v6010
    %6481 = vmatprep.subr.mxu0 %v6015
    %6482 = vmatpush1.msra.mxu0 %v6014
    %6483 = vmatprep.subr.mxu0 %v6019
    %6484 = vmatpush1.msra.mxu0 %v6018
    %6485 = vmatprep.subr.mxu0 %v6023
    %6486 = vmatpush1.msra.mxu0 %v6022
    %6487 = vmatprep.subr.mxu0 %v6027
    %6488 = vmatpush1.msra.mxu0 %v6026
    %6489 = vmatprep.subr.mxu0 %v6031
    %6490 = vmatpush1.msra.mxu0 %v6030
    %6491 = vmatprep.subr.mxu0 %v6035
    %6492 = vmatpush1.msra.mxu0 %v6034
    %6493 = vmatprep.subr.mxu0 %v6039
    %6494 = vmatpush1.msra.mxu0 %v6038
    %6495 = vmatprep.subr.mxu0 %v6043
    %6496 = vmatpush1.msra.mxu0 %v6042
    %6497 = vmatprep.subr.mxu0 %v6047
    %6498 = vmatpush1.msra.mxu0 %v6046
    %6499 = vmatprep.subr.mxu0 %v6051
    %6500 = vmatpush1.msra.mxu0 %v6050
    %6501 = vmatprep.subr.mxu0 %v6055
    %6502 = vmatpush1.msra.mxu0 %v6054
    %6503 = vmatprep.subr.mxu0 %v6059
    %6504 = vmatpush1.msra.mxu0 %v6058
    %6505 = vmatprep.subr.mxu0 %v6063
    %6506 = vmatpush1.msra.mxu0 %v6062
    %6507 = vmatprep.subr.mxu0 %v6067
    %6508 = vmatpush1.msra.mxu0 %v6066
    %6509 = vmatprep.subr.mxu0 %v6071
    %6510 = vmatpush1.msra.mxu0 %v6070
    %6511 = vmatprep.subr.mxu0 %v6075
    %6512 = vmatpush1.msra.mxu0 %v6074
    %6513 = vmatprep.subr.mxu0 %v6079
    %6514 = vmatpush1.msra.mxu0 %v6078
    %6515 = vmatprep.subr.mxu0 %v6083
    %6516 = vmatpush1.msra.mxu0 %v6082
    %6517 = vmatprep.subr.mxu0 %v6087
    %6518 = vmatpush1.msra.mxu0 %v6086
    %6519 = vmatprep.subr.mxu0 %v6091
    %6520 = vmatpush1.msra.mxu0 %v6090
    %6521 = vmatprep.subr.mxu0 %v6095
    %6522 = vmatpush1.msra.mxu0 %v6094
    %6523 = vmatprep.subr.mxu0 %v6099
    %6524 = vmatpush1.msra.mxu0 %v6098
    %6525 = vmatprep.subr.mxu0 %v6103
    %6526 = vmatpush1.msra.mxu0 %v6102
    %6527 = vmatprep.subr.mxu0 %v6107
    %6528 = vmatpush1.msra.mxu0 %v6106
    %6529 = vmatprep.subr.mxu0 %v6111
    %6530 = vmatpush1.msra.mxu0 %v6110
    %6531 = vmatprep.subr.mxu0 0.0
    %6532 = vmatpush1.msra.mxu0 0.0
    %6533 = vmatprep.subr.mxu0 0.0
    %6534 = vmatpush1.msra.mxu0 0.0
    %6535 = vmatprep.subr.mxu0 0.0
    %6536 = vmatpush1.msra.mxu0 0.0
    %6537 = vmatprep.subr.mxu0 0.0
    %6538 = vmatpush1.msra.mxu0 0.0
    %6539 = vmatprep.mubr.f32.mxu0 %v6394
    %6540 = vmatmul.mubr.f32.gmra.mrb[0].mxu0 %v5996
    %v6541 = vpop.f32.mrb[0].mxu0
    %v6542 = vadd.f32 %v6384, %v6541
    %v6543 = vpop.f32.mrb[0].mxu0
    %v6544 = vadd.f32 %v6386, %v6543
    %6545 = vmatprep.mubr.f32.mxu0 %v6396
    %6546 = vmatmul.mubr.f32.gmra.mrb[0].mxu0 %v5998
    %v6547 = vpop.f32.mrb[0].mxu0
    %v6548 = vadd.f32 %v6390, %v6547
    %v6549 = vpop.f32.mrb[0].mxu0
    %v6550 = vadd.f32 %v6392, %v6549
    %6551 = vdwg.mxu0
    %v6552 = vld [vmem:[%s2385] sm:$0xff]
    %v6553 = vld [vmem:[%s2385 + $0x8] sm:$0xff]
    %v6554 = vld [vmem:[%s2385 + $0x10] sm:$0xff]
    %v6555 = vld [vmem:[%s2385 + $0x18] sm:$0xff]
    %v6556 = vld [vmem:[%s2385 + $0x20] sm:$0xff]
    %v6557 = vld [vmem:[%s2385 + $0x28] sm:$0xff]
    %v6558 = vld [vmem:[%s2385 + $0x30] sm:$0xff]
    %v6559 = vld [vmem:[%s2385 + $0x38] sm:$0xff]
    %v6560 = vld [vmem:[%s2385 + $0x40] sm:$0xff]
    %v6561 = vld [vmem:[%s2385 + $0x48] sm:$0xff]
    %v6562 = vld [vmem:[%s2385 + $0x50] sm:$0xff]
    %v6563 = vld [vmem:[%s2385 + $0x58] sm:$0xff]
    %v6564 = vld [vmem:[%s2385 + $0x60] sm:$0xff]
    %v6565 = vld [vmem:[%s2385 + $0x68] sm:$0xff]
    %v6566 = vld [vmem:[%s2385 + $0x70] sm:$0xff]
    %v6567 = vld [vmem:[%s2385 + $0x78] sm:$0xff]
    %v6568 = vld [vmem:[%s2385 + $0x80] sm:$0xff]
    %v6569 = vld [vmem:[%s2385 + $0x88] sm:$0xff]
    %v6570 = vld [vmem:[%s2385 + $0x90] sm:$0xff]
    %v6571 = vld [vmem:[%s2385 + $0x98] sm:$0xff]
    %v6572 = vld [vmem:[%s2385 + $0xa0] sm:$0xff]
    %v6573 = vld [vmem:[%s2385 + $0xa8] sm:$0xff]
    %v6574 = vld [vmem:[%s2385 + $0xb0] sm:$0xff]
    %v6575 = vld [vmem:[%s2385 + $0xb8] sm:$0xff]
    %v6576 = vld [vmem:[%s2385 + $0xc0] sm:$0xff]
    %v6577 = vld [vmem:[%s2385 + $0xc8] sm:$0xff]
    %v6578 = vld [vmem:[%s2385 + $0xd0] sm:$0xff]
    %v6579 = vld [vmem:[%s2385 + $0xd8] sm:$0xff]
    %v6580 = vld [vmem:[%s2385 + $0xe0] sm:$0xff]
    %v6581 = vld [vmem:[%s2385 + $0xe8] sm:$0xff]
    %v6582 = vld [vmem:[%s2385 + $0xf0] sm:$0xff]
    %v6583 = vld [vmem:[%s2385 + $0xf8] sm:$0xff]
    %v6584 = vld [vmem:[%s2385 + $0x100] sm:$0xff]
    %v6585 = vld [vmem:[%s2385 + $0x108] sm:$0xff]
    %v6586 = vld [vmem:[%s2385 + $0x110] sm:$0xff]
    %v6587 = vld [vmem:[%s2385 + $0x118] sm:$0xff]
    %v6588 = vld [vmem:[%s2385 + $0x120] sm:$0xff]
    %v6589 = vld [vmem:[%s2385 + $0x128] sm:$0xff]
    %v6590 = vld [vmem:[%s2385 + $0x130] sm:$0xff]
    %v6591 = vld [vmem:[%s2385 + $0x138] sm:$0xff]
    %v6592 = vld [vmem:[%s2385 + $0x140] sm:$0xff]
    %v6593 = vld [vmem:[%s2385 + $0x148] sm:$0xff]
    %v6594 = vld [vmem:[%s2385 + $0x150] sm:$0xff]
    %v6595 = vld [vmem:[%s2385 + $0x158] sm:$0xff]
    %v6596 = vld [vmem:[%s2385 + $0x160] sm:$0xff]
    %v6597 = vld [vmem:[%s2385 + $0x168] sm:$0xff]
    %v6598 = vld [vmem:[%s2385 + $0x170] sm:$0xff]
    %v6599 = vld [vmem:[%s2385 + $0x178] sm:$0xff]
    %v6600 = vld [vmem:[%s2385 + $0x180] sm:$0xff]
    %v6601 = vld [vmem:[%s2385 + $0x188] sm:$0xff]
    %v6602 = vld [vmem:[%s2385 + $0x190] sm:$0xff]
    %v6603 = vld [vmem:[%s2385 + $0x198] sm:$0xff]
    %v6604 = vld [vmem:[%s2385 + $0x1a0] sm:$0xff]
    %v6605 = vld [vmem:[%s2385 + $0x1a8] sm:$0xff]
    %v6606 = vld [vmem:[%s2385 + $0x1b0] sm:$0xff]
    %v6607 = vld [vmem:[%s2385 + $0x1b8] sm:$0xff]
    %v6608 = vld [vmem:[%s2385 + $0x1c0] sm:$0xff]
    %v6609 = vld [vmem:[%s2385 + $0x1c8] sm:$0xff]
    %v6610 = vld [vmem:[%s2385 + $0x1d0] sm:$0xff]
    %v6611 = vld [vmem:[%s2385 + $0x1d8] sm:$0xff]
    %v6612 = vld [vmem:[%s2385 + $0x1e0] sm:$0xff]
    %v6613 = vld [vmem:[%s2385 + $0x1e8] sm:$0xff]
    %v6614 = vld [vmem:[%s2385 + $0x1f0] sm:$0xff]
    %v6615 = vld [vmem:[%s2385 + $0x1f8] sm:$0xff]
    %v6616 = vld [vmem:[%s2385 + $0x200] sm:$0xff]
    %v6617 = vld [vmem:[%s2385 + $0x208] sm:$0xff]
    %v6618 = vld [vmem:[%s2385 + $0x210] sm:$0xff]
    %v6619 = vld [vmem:[%s2385 + $0x218] sm:$0xff]
    %v6620 = vld [vmem:[%s2385 + $0x220] sm:$0xff]
    %v6621 = vld [vmem:[%s2385 + $0x228] sm:$0xff]
    %v6622 = vld [vmem:[%s2385 + $0x230] sm:$0xff]
    %v6623 = vld [vmem:[%s2385 + $0x238] sm:$0xff]
    %v6624 = vld [vmem:[%s2385 + $0x240] sm:$0xff]
    %v6625 = vld [vmem:[%s2385 + $0x248] sm:$0xff]
    %v6626 = vld [vmem:[%s2385 + $0x250] sm:$0xff]
    %v6627 = vld [vmem:[%s2385 + $0x258] sm:$0xff]
    %v6628 = vld [vmem:[%s2385 + $0x260] sm:$0xff]
    %v6629 = vld [vmem:[%s2385 + $0x268] sm:$0xff]
    %v6630 = vld [vmem:[%s2385 + $0x270] sm:$0xff]
    %v6631 = vld [vmem:[%s2385 + $0x278] sm:$0xff]
    %v6632 = vld [vmem:[%s2385 + $0x280] sm:$0xff]
    %v6633 = vld [vmem:[%s2385 + $0x288] sm:$0xff]
    %v6634 = vld [vmem:[%s2385 + $0x290] sm:$0xff]
    %v6635 = vld [vmem:[%s2385 + $0x298] sm:$0xff]
    %v6636 = vld [vmem:[%s2385 + $0x2a0] sm:$0xff]
    %v6637 = vld [vmem:[%s2385 + $0x2a8] sm:$0xff]
    %v6638 = vld [vmem:[%s2385 + $0x2b0] sm:$0xff]
    %v6639 = vld [vmem:[%s2385 + $0x2b8] sm:$0xff]
    %v6640 = vld [vmem:[%s2385 + $0x2c0] sm:$0xff]
    %v6641 = vld [vmem:[%s2385 + $0x2c8] sm:$0xff]
    %v6642 = vld [vmem:[%s2385 + $0x2d0] sm:$0xff]
    %v6643 = vld [vmem:[%s2385 + $0x2d8] sm:$0xff]
    %v6644 = vld [vmem:[%s2385 + $0x2e0] sm:$0xff]
    %v6645 = vld [vmem:[%s2385 + $0x2e8] sm:$0xff]
    %v6646 = vld [vmem:[%s2385 + $0x2f0] sm:$0xff]
    %v6647 = vld [vmem:[%s2385 + $0x2f8] sm:$0xff]
    %v6648 = vld [vmem:[%s2385 + $0x300] sm:$0xff]
    %v6649 = vld [vmem:[%s2385 + $0x308] sm:$0xff]
    %v6650 = vld [vmem:[%s2385 + $0x310] sm:$0xff]
    %v6651 = vld [vmem:[%s2385 + $0x318] sm:$0xff]
    %v6652 = vld [vmem:[%s2385 + $0x320] sm:$0xff]
    %v6653 = vld [vmem:[%s2385 + $0x328] sm:$0xff]
    %v6654 = vld [vmem:[%s2385 + $0x330] sm:$0xff]
    %v6655 = vld [vmem:[%s2385 + $0x338] sm:$0xff]
    %v6656 = vld [vmem:[%s2385 + $0x340] sm:$0xff]
    %v6657 = vld [vmem:[%s2385 + $0x348] sm:$0xff]
    %v6658 = vld [vmem:[%s2385 + $0x350] sm:$0xff]
    %v6659 = vld [vmem:[%s2385 + $0x358] sm:$0xff]
    %v6660 = vld [vmem:[%s2385 + $0x360] sm:$0xff]
    %v6661 = vld [vmem:[%s2385 + $0x368] sm:$0xff]
    %v6662 = vld [vmem:[%s2385 + $0x370] sm:$0xff]
    %v6663 = vld [vmem:[%s2385 + $0x378] sm:$0xff]
    %v6664 = vrot.slane %v5996, 2
    %v6665 = vrot.slane %v5998, 2
    %v6666 = vsel %vm642, %v6664, %v6665
    %v6667 = vrot.slane %v5997, 2
    %v6668 = vrot.slane %v5999, 2
    %v6669 = vsel %vm642, %v6667, %v6668
    %v6672 = vsel %vm174, %v6669, 0
    %v6674 = vsel %vm174, %v6668, 0
    %6676 = vmatprep.subr.mxu0 %v6553
    %6677 = vmatpush1.msra.mxu0 %v6552
    %6678 = vmatprep.subr.mxu0 %v6557
    %6679 = vmatpush1.msra.mxu0 %v6556
    %6680 = vmatprep.subr.mxu0 %v6561
    %6681 = vmatpush1.msra.mxu0 %v6560
    %6682 = vmatprep.subr.mxu0 %v6565
    %6683 = vmatpush1.msra.mxu0 %v6564
    %6684 = vmatprep.subr.mxu0 %v6569
    %6685 = vmatpush1.msra.mxu0 %v6568
    %6686 = vmatprep.subr.mxu0 %v6573
    %6687 = vmatpush1.msra.mxu0 %v6572
    %6688 = vmatprep.subr.mxu0 %v6577
    %6689 = vmatpush1.msra.mxu0 %v6576
    %6690 = vmatprep.subr.mxu0 %v6581
    %6691 = vmatpush1.msra.mxu0 %v6580
    %6692 = vmatprep.subr.mxu0 %v6585
    %6693 = vmatpush1.msra.mxu0 %v6584
    %6694 = vmatprep.subr.mxu0 %v6589
    %6695 = vmatpush1.msra.mxu0 %v6588
    %6696 = vmatprep.subr.mxu0 %v6593
    %6697 = vmatpush1.msra.mxu0 %v6592
    %6698 = vmatprep.subr.mxu0 %v6597
    %6699 = vmatpush1.msra.mxu0 %v6596
    %6700 = vmatprep.subr.mxu0 %v6601
    %6701 = vmatpush1.msra.mxu0 %v6600
    %6702 = vmatprep.subr.mxu0 %v6605
    %6703 = vmatpush1.msra.mxu0 %v6604
    %6704 = vmatprep.subr.mxu0 %v6609
    %6705 = vmatpush1.msra.mxu0 %v6608
    %6706 = vmatprep.subr.mxu0 %v6613
    %6707 = vmatpush1.msra.mxu0 %v6612
    %6708 = vmatprep.subr.mxu0 %v6617
    %6709 = vmatpush1.msra.mxu0 %v6616
    %6710 = vmatprep.subr.mxu0 %v6621
    %6711 = vmatpush1.msra.mxu0 %v6620
    %6712 = vmatprep.subr.mxu0 %v6625
    %6713 = vmatpush1.msra.mxu0 %v6624
    %6714 = vmatprep.subr.mxu0 %v6629
    %6715 = vmatpush1.msra.mxu0 %v6628
    %6716 = vmatprep.subr.mxu0 %v6633
    %6717 = vmatpush1.msra.mxu0 %v6632
    %6718 = vmatprep.subr.mxu0 %v6637
    %6719 = vmatpush1.msra.mxu0 %v6636
    %6720 = vmatprep.subr.mxu0 %v6641
    %6721 = vmatpush1.msra.mxu0 %v6640
    %6722 = vmatprep.subr.mxu0 %v6645
    %6723 = vmatpush1.msra.mxu0 %v6644
    %6724 = vmatprep.subr.mxu0 %v6649
    %6725 = vmatpush1.msra.mxu0 %v6648
    %6726 = vmatprep.subr.mxu0 %v6653
    %6727 = vmatpush1.msra.mxu0 %v6652
    %6728 = vmatprep.subr.mxu0 %v6657
    %6729 = vmatpush1.msra.mxu0 %v6656
    %6730 = vmatprep.subr.mxu0 %v6661
    %6731 = vmatpush1.msra.mxu0 %v6660
    %6732 = vmatprep.subr.mxu0 0.0
    %6733 = vmatpush1.msra.mxu0 0.0
    %6734 = vmatprep.subr.mxu0 0.0
    %6735 = vmatpush1.msra.mxu0 0.0
    %6736 = vmatprep.subr.mxu0 0.0
    %6737 = vmatpush1.msra.mxu0 0.0
    %6738 = vmatprep.subr.mxu0 0.0
    %6739 = vmatpush1.msra.mxu0 0.0
    %6740 = vmatprep.mubr.f32.mxu0 %v6672
    %6741 = vmatmul.mubr.f32.gmra.mrb[0].mxu0 %v6666
    %v6742 = vpop.f32.mrb[0].mxu0
    %v6743 = vadd.f32 0.0, %v6742
    %v6744 = vpop.f32.mrb[0].mxu0
    %v6745 = vadd.f32 0.0, %v6744
    %6746 = vmatprep.mubr.f32.mxu0 %v6674
    %6747 = vmatmul.mubr.f32.gmra.mrb[0].mxu0 %v6665
    %v6748 = vpop.f32.mrb[0].mxu0
    %v6749 = vadd.f32 0.0, %v6748
    %v6750 = vpop.f32.mrb[0].mxu0
    %v6751 = vadd.f32 0.0, %v6750
    %6752 = vdwg.mxu0
    %6753 = vmatprep.subr.mxu0 %v6555
    %6754 = vmatpush1.msra.mxu0 %v6554
    %6755 = vmatprep.subr.mxu0 %v6559
    %6756 = vmatpush1.msra.mxu0 %v6558
    %6757 = vmatprep.subr.mxu0 %v6563
    %6758 = vmatpush1.msra.mxu0 %v6562
    %6759 = vmatprep.subr.mxu0 %v6567
    %6760 = vmatpush1.msra.mxu0 %v6566
    %6761 = vmatprep.subr.mxu0 %v6571
    %6762 = vmatpush1.msra.mxu0 %v6570
    %6763 = vmatprep.subr.mxu0 %v6575
    %6764 = vmatpush1.msra.mxu0 %v6574
    %6765 = vmatprep.subr.mxu0 %v6579
    %6766 = vmatpush1.msra.mxu0 %v6578
    %6767 = vmatprep.subr.mxu0 %v6583
    %6768 = vmatpush1.msra.mxu0 %v6582
    %6769 = vmatprep.subr.mxu0 %v6587
    %6770 = vmatpush1.msra.mxu0 %v6586
    %6771 = vmatprep.subr.mxu0 %v6591
    %6772 = vmatpush1.msra.mxu0 %v6590
    %6773 = vmatprep.subr.mxu0 %v6595
    %6774 = vmatpush1.msra.mxu0 %v6594
    %6775 = vmatprep.subr.mxu0 %v6599
    %6776 = vmatpush1.msra.mxu0 %v6598
    %6777 = vmatprep.subr.mxu0 %v6603
    %6778 = vmatpush1.msra.mxu0 %v6602
    %6779 = vmatprep.subr.mxu0 %v6607
    %6780 = vmatpush1.msra.mxu0 %v6606
    %6781 = vmatprep.subr.mxu0 %v6611
    %6782 = vmatpush1.msra.mxu0 %v6610
    %6783 = vmatprep.subr.mxu0 %v6615
    %6784 = vmatpush1.msra.mxu0 %v6614
    %6785 = vmatprep.subr.mxu0 %v6619
    %6786 = vmatpush1.msra.mxu0 %v6618
    %6787 = vmatprep.subr.mxu0 %v6623
    %6788 = vmatpush1.msra.mxu0 %v6622
    %6789 = vmatprep.subr.mxu0 %v6627
    %6790 = vmatpush1.msra.mxu0 %v6626
    %6791 = vmatprep.subr.mxu0 %v6631
    %6792 = vmatpush1.msra.mxu0 %v6630
    %6793 = vmatprep.subr.mxu0 %v6635
    %6794 = vmatpush1.msra.mxu0 %v6634
    %6795 = vmatprep.subr.mxu0 %v6639
    %6796 = vmatpush1.msra.mxu0 %v6638
    %6797 = vmatprep.subr.mxu0 %v6643
    %6798 = vmatpush1.msra.mxu0 %v6642
    %6799 = vmatprep.subr.mxu0 %v6647
    %6800 = vmatpush1.msra.mxu0 %v6646
    %6801 = vmatprep.subr.mxu0 %v6651
    %6802 = vmatpush1.msra.mxu0 %v6650
    %6803 = vmatprep.subr.mxu0 %v6655
    %6804 = vmatpush1.msra.mxu0 %v6654
    %6805 = vmatprep.subr.mxu0 %v6659
    %6806 = vmatpush1.msra.mxu0 %v6658
    %6807 = vmatprep.subr.mxu0 %v6663
    %6808 = vmatpush1.msra.mxu0 %v6662
    %6809 = vmatprep.subr.mxu0 0.0
    %6810 = vmatpush1.msra.mxu0 0.0
    %6811 = vmatprep.subr.mxu0 0.0
    %6812 = vmatpush1.msra.mxu0 0.0
    %6813 = vmatprep.subr.mxu0 0.0
    %6814 = vmatpush1.msra.mxu0 0.0
    %6815 = vmatprep.subr.mxu0 0.0
    %6816 = vmatpush1.msra.mxu0 0.0
    %6817 = vmatprep.mubr.f32.mxu0 %v6672
    %6818 = vmatmul.mubr.f32.gmra.mrb[0].mxu0 %v6666
    %v6819 = vpop.f32.mrb[0].mxu0
    %v6820 = vadd.f32 0.0, %v6819
    %v6821 = vpop.f32.mrb[0].mxu0
    %v6822 = vadd.f32 0.0, %v6821
    %6823 = vmatprep.mubr.f32.mxu0 %v6674
    %6824 = vmatmul.mubr.f32.gmra.mrb[0].mxu0 %v6665
    %v6825 = vpop.f32.mrb[0].mxu0
    %v6826 = vadd.f32 0.0, %v6825
    %v6827 = vpop.f32.mrb[0].mxu0
    %v6828 = vadd.f32 0.0, %v6827
    %6829 = vdwg.mxu0
    %v6830 = vadd.f32 %v6465, %v6743
    %v6831 = vadd.f32 %v6467, %v6745
    %v6832 = vadd.f32 %v6542, %v6820
    %v6833 = vadd.f32 %v6544, %v6822
    %v6834 = vadd.f32 %v6471, %v6749
    %v6835 = vadd.f32 %v6473, %v6751
    %v6836 = vadd.f32 %v6548, %v6826
    %v6837 = vadd.f32 %v6550, %v6828
    %v6838 = vld [vmem:[#allocation9] sm:$0xf]
    %v6840 = vlaneseq
    %v6841 = vshrl.u32 %v6840, 7
    %v6842 = vsub.s32 0, %v6841
    %v6843 = vrot.slane %v6838, %v6842
    %v6844 = vlaneseq
    %v6845 = vshrl.u32 %v6844, 7
    %v6846 = vsub.s32 1, %v6845
    %v6847 = vrot.slane %v6838, %v6846
    %v6848 = vlaneseq
    %v6849 = vshrl.u32 %v6848, 7
    %v6850 = vsub.s32 2, %v6849
    %v6851 = vrot.slane %v6838, %v6850
    %v6852 = vlaneseq
    %v6853 = vshrl.u32 %v6852, 7
    %v6854 = vsub.s32 3, %v6853
    %v6855 = vrot.slane %v6838, %v6854
    %v6860 = vadd.f32 %v6830, %v6843
    %v6861 = vadd.f32 %v6831, %v6847
    %v6862 = vadd.f32 %v6832, %v6851
    %v6863 = vadd.f32 %v6833, %v6855
    %v6864 = vadd.f32 %v6834, %v6843
    %v6865 = vadd.f32 %v6835, %v6847
    %v6866 = vadd.f32 %v6836, %v6851
    %v6867 = vadd.f32 %v6837, %v6855
    %v6868 = vmax.f32 %v6860, 0.0
    %v6869 = vmax.f32 %v6861, 0.0
    %v6870 = vmax.f32 %v6862, 0.0
    %v6871 = vmax.f32 %v6863, 0.0
    %v6872 = vmax.f32 %v6864, 0.0
    %v6873 = vmax.f32 %v6865, 0.0
    %v6874 = vmax.f32 %v6866, 0.0
    %v6875 = vmax.f32 %v6867, 0.0
    %v6876 = vld [vmem:[%s7] sm:$0x7f]
    %v6878 = vsel %vm2711, %v6876, 0
    %v6881 = vsel %vm642, %v6872, 0
    %v6884 = vsel %vm642, %v6873, 0
    %v6887 = vsel %vm642, %v6874, 0
    %v6890 = vsel %vm642, %v6875, 0
    %6892 = vmatprep.subr.mxu0 %v6869
    %6893 = vmatpush1.msra.mxu0 %v6868
    %6894 = vmatprep.subr.mxu0 %v6884
    %6895 = vmatpush1.msra.mxu0 %v6881
    %6896 = vmatprep.subr.mxu0 0.0
    %6897 = vmatpush1.msra.mxu0 0.0
    %6898 = vmatprep.subr.mxu0 0.0
    %6899 = vmatpush1.msra.mxu0 0.0
    %6900 = vmatprep.subr.mxu0 0.0
    %6901 = vmatpush1.msra.mxu0 0.0
    %6902 = vmatprep.subr.mxu0 0.0
    %6903 = vmatpush1.msra.mxu0 0.0
    %6904 = vmatprep.subr.mxu0 0.0
    %6905 = vmatpush1.msra.mxu0 0.0
    %6906 = vmatprep.subr.mxu0 0.0
    %6907 = vmatpush1.msra.mxu0 0.0
    %6908 = vmatprep.subr.mxu0 0.0
    %6909 = vmatpush1.msra.mxu0 0.0
    %6910 = vmatprep.subr.mxu0 0.0
    %6911 = vmatpush1.msra.mxu0 0.0
    %6912 = vmatprep.subr.mxu0 0.0
    %6913 = vmatpush1.msra.mxu0 0.0
    %6914 = vmatprep.subr.mxu0 0.0
    %6915 = vmatpush1.msra.mxu0 0.0
    %6916 = vmatprep.subr.mxu0 0.0
    %6917 = vmatpush1.msra.mxu0 0.0
    %6918 = vmatprep.subr.mxu0 0.0
    %6919 = vmatpush1.msra.mxu0 0.0
    %6920 = vmatprep.subr.mxu0 0.0
    %6921 = vmatpush1.msra.mxu0 0.0
    %6922 = vmatprep.subr.mxu0 0.0
    %6923 = vmatpush1.msra.mxu0 0.0
    %6924 = vmatprep.subr.mxu0 0.0
    %6925 = vmatpush1.msra.mxu0 0.0
    %6926 = vmatprep.subr.mxu0 0.0
    %6927 = vmatpush1.msra.mxu0 0.0
    %6928 = vmatprep.subr.mxu0 0.0
    %6929 = vmatpush1.msra.mxu0 0.0
    %6930 = vmatprep.subr.mxu0 0.0
    %6931 = vmatpush1.msra.mxu0 0.0
    %6932 = vmatprep.subr.mxu0 0.0
    %6933 = vmatpush1.msra.mxu0 0.0
    %6934 = vmatprep.subr.mxu0 0.0
    %6935 = vmatpush1.msra.mxu0 0.0
    %6936 = vmatprep.subr.mxu0 0.0
    %6937 = vmatpush1.msra.mxu0 0.0
    %6938 = vmatprep.subr.mxu0 0.0
    %6939 = vmatpush1.msra.mxu0 0.0
    %6940 = vmatprep.subr.mxu0 0.0
    %6941 = vmatpush1.msra.mxu0 0.0
    %6942 = vmatprep.subr.mxu0 0.0
    %6943 = vmatpush1.msra.mxu0 0.0
    %6944 = vmatprep.subr.mxu0 0.0
    %6945 = vmatpush1.msra.mxu0 0.0
    %6946 = vmatprep.subr.mxu0 0.0
    %6947 = vmatpush1.msra.mxu0 0.0
    %6948 = vmatprep.subr.mxu0 0.0
    %6949 = vmatpush1.msra.mxu0 0.0
    %6950 = vmatprep.subr.mxu0 0.0
    %6951 = vmatpush1.msra.mxu0 0.0
    %6952 = vmatprep.subr.mxu0 0.0
    %6953 = vmatpush1.msra.mxu0 0.0
    %6954 = vmatprep.subr.mxu0 0.0
    %6955 = vmatpush1.msra.mxu0 0.0
    %6956 = vmatprep.mubr.f32.mxu0 0.0
    %6957 = vmatmul.mubr.f32.gmra.mrb[0].mxu0 %v6878
    %v6958 = vpop.f32.mrb[0].mxu0
    %v6959 = vadd.f32 0.0, %v6958
    %v6960 = vpop.f32.mrb[0].mxu0
    %v6961 = vadd.f32 0.0, %v6960
    %6962 = vdwg.mxu0
    %6963 = vmatprep.subr.mxu0 %v6871
    %6964 = vmatpush1.msra.mxu0 %v6870
    %6965 = vmatprep.subr.mxu0 %v6890
    %6966 = vmatpush1.msra.mxu0 %v6887
    %6967 = vmatprep.subr.mxu0 0.0
    %6968 = vmatpush1.msra.mxu0 0.0
    %6969 = vmatprep.subr.mxu0 0.0
    %6970 = vmatpush1.msra.mxu0 0.0
    %6971 = vmatprep.subr.mxu0 0.0
    %6972 = vmatpush1.msra.mxu0 0.0
    %6973 = vmatprep.subr.mxu0 0.0
    %6974 = vmatpush1.msra.mxu0 0.0
    %6975 = vmatprep.subr.mxu0 0.0
    %6976 = vmatpush1.msra.mxu0 0.0
    %6977 = vmatprep.subr.mxu0 0.0
    %6978 = vmatpush1.msra.mxu0 0.0
    %6979 = vmatprep.subr.mxu0 0.0
    %6980 = vmatpush1.msra.mxu0 0.0
    %6981 = vmatprep.subr.mxu0 0.0
    %6982 = vmatpush1.msra.mxu0 0.0
    %6983 = vmatprep.subr.mxu0 0.0
    %6984 = vmatpush1.msra.mxu0 0.0
    %6985 = vmatprep.subr.mxu0 0.0
    %6986 = vmatpush1.msra.mxu0 0.0
    %6987 = vmatprep.subr.mxu0 0.0
    %6988 = vmatpush1.msra.mxu0 0.0
    %6989 = vmatprep.subr.mxu0 0.0
    %6990 = vmatpush1.msra.mxu0 0.0
    %6991 = vmatprep.subr.mxu0 0.0
    %6992 = vmatpush1.msra.mxu0 0.0
    %6993 = vmatprep.subr.mxu0 0.0
    %6994 = vmatpush1.msra.mxu0 0.0
    %6995 = vmatprep.subr.mxu0 0.0
    %6996 = vmatpush1.msra.mxu0 0.0
    %6997 = vmatprep.subr.mxu0 0.0
    %6998 = vmatpush1.msra.mxu0 0.0
    %6999 = vmatprep.subr.mxu0 0.0
    %7000 = vmatpush1.msra.mxu0 0.0
    %7001 = vmatprep.subr.mxu0 0.0
    %7002 = vmatpush1.msra.mxu0 0.0
    %7003 = vmatprep.subr.mxu0 0.0
    %7004 = vmatpush1.msra.mxu0 0.0
    %7005 = vmatprep.subr.mxu0 0.0
    %7006 = vmatpush1.msra.mxu0 0.0
    %7007 = vmatprep.subr.mxu0 0.0
    %7008 = vmatpush1.msra.mxu0 0.0
    %7009 = vmatprep.subr.mxu0 0.0
    %7010 = vmatpush1.msra.mxu0 0.0
    %7011 = vmatprep.subr.mxu0 0.0
    %7012 = vmatpush1.msra.mxu0 0.0
    %7013 = vmatprep.subr.mxu0 0.0
    %7014 = vmatpush1.msra.mxu0 0.0
    %7015 = vmatprep.subr.mxu0 0.0
    %7016 = vmatpush1.msra.mxu0 0.0
    %7017 = vmatprep.subr.mxu0 0.0
    %7018 = vmatpush1.msra.mxu0 0.0
    %7019 = vmatprep.subr.mxu0 0.0
    %7020 = vmatpush1.msra.mxu0 0.0
    %7021 = vmatprep.subr.mxu0 0.0
    %7022 = vmatpush1.msra.mxu0 0.0
    %7023 = vmatprep.subr.mxu0 0.0
    %7024 = vmatpush1.msra.mxu0 0.0
    %7025 = vmatprep.subr.mxu0 0.0
    %7026 = vmatpush1.msra.mxu0 0.0
    %7027 = vmatprep.mubr.f32.mxu0 0.0
    %7028 = vmatmul.mubr.f32.gmra.mrb[0].mxu0 %v6878
    %v7029 = vpop.f32.mrb[0].mxu0
    %v7030 = vadd.f32 0.0, %v7029
    %v7031 = vpop.f32.mrb[0].mxu0
    %v7032 = vadd.f32 0.0, %v7031
    %7033 = vdwg.mxu0
    %v7034 = vld [vmem:[%s2869] sm:$0x7f]
    %v7036 = vsel %vm2711, %v7034, 0
    %7038 = vmatprep.subr.mxu0 %v6869
    %7039 = vmatpush1.msra.mxu0 %v6868
    %7040 = vmatprep.subr.mxu0 %v6884
    %7041 = vmatpush1.msra.mxu0 %v6881
    %7042 = vmatprep.subr.mxu0 0.0
    %7043 = vmatpush1.msra.mxu0 0.0
    %7044 = vmatprep.subr.mxu0 0.0
    %7045 = vmatpush1.msra.mxu0 0.0
    %7046 = vmatprep.subr.mxu0 0.0
    %7047 = vmatpush1.msra.mxu0 0.0
    %7048 = vmatprep.subr.mxu0 0.0
    %7049 = vmatpush1.msra.mxu0 0.0
    %7050 = vmatprep.subr.mxu0 0.0
    %7051 = vmatpush1.msra.mxu0 0.0
    %7052 = vmatprep.subr.mxu0 0.0
    %7053 = vmatpush1.msra.mxu0 0.0
    %7054 = vmatprep.subr.mxu0 0.0
    %7055 = vmatpush1.msra.mxu0 0.0
    %7056 = vmatprep.subr.mxu0 0.0
    %7057 = vmatpush1.msra.mxu0 0.0
    %7058 = vmatprep.subr.mxu0 0.0
    %7059 = vmatpush1.msra.mxu0 0.0
    %7060 = vmatprep.subr.mxu0 0.0
    %7061 = vmatpush1.msra.mxu0 0.0
    %7062 = vmatprep.subr.mxu0 0.0
    %7063 = vmatpush1.msra.mxu0 0.0
    %7064 = vmatprep.subr.mxu0 0.0
    %7065 = vmatpush1.msra.mxu0 0.0
    %7066 = vmatprep.subr.mxu0 0.0
    %7067 = vmatpush1.msra.mxu0 0.0
    %7068 = vmatprep.subr.mxu0 0.0
    %7069 = vmatpush1.msra.mxu0 0.0
    %7070 = vmatprep.subr.mxu0 0.0
    %7071 = vmatpush1.msra.mxu0 0.0
    %7072 = vmatprep.subr.mxu0 0.0
    %7073 = vmatpush1.msra.mxu0 0.0
    %7074 = vmatprep.subr.mxu0 0.0
    %7075 = vmatpush1.msra.mxu0 0.0
    %7076 = vmatprep.subr.mxu0 0.0
    %7077 = vmatpush1.msra.mxu0 0.0
    %7078 = vmatprep.subr.mxu0 0.0
    %7079 = vmatpush1.msra.mxu0 0.0
    %7080 = vmatprep.subr.mxu0 0.0
    %7081 = vmatpush1.msra.mxu0 0.0
    %7082 = vmatprep.subr.mxu0 0.0
    %7083 = vmatpush1.msra.mxu0 0.0
    %7084 = vmatprep.subr.mxu0 0.0
    %7085 = vmatpush1.msra.mxu0 0.0
    %7086 = vmatprep.subr.mxu0 0.0
    %7087 = vmatpush1.msra.mxu0 0.0
    %7088 = vmatprep.subr.mxu0 0.0
    %7089 = vmatpush1.msra.mxu0 0.0
    %7090 = vmatprep.subr.mxu0 0.0
    %7091 = vmatpush1.msra.mxu0 0.0
    %7092 = vmatprep.subr.mxu0 0.0
    %7093 = vmatpush1.msra.mxu0 0.0
    %7094 = vmatprep.subr.mxu0 0.0
    %7095 = vmatpush1.msra.mxu0 0.0
    %7096 = vmatprep.subr.mxu0 0.0
    %7097 = vmatpush1.msra.mxu0 0.0
    %7098 = vmatprep.subr.mxu0 0.0
    %7099 = vmatpush1.msra.mxu0 0.0
    %7100 = vmatprep.subr.mxu0 0.0
    %7101 = vmatpush1.msra.mxu0 0.0
    %7102 = vmatprep.mubr.f32.mxu0 0.0
    %7103 = vmatmul.mubr.f32.gmra.mrb[0].mxu0 %v7036
    %v7104 = vpop.f32.mrb[0].mxu0
    %v7105 = vadd.f32 0.0, %v7104
    %v7106 = vpop.f32.mrb[0].mxu0
    %v7107 = vadd.f32 0.0, %v7106
    %7108 = vdwg.mxu0
    %7109 = vmatprep.subr.mxu0 %v6871
    %7110 = vmatpush1.msra.mxu0 %v6870
    %7111 = vmatprep.subr.mxu0 %v6890
    %7112 = vmatpush1.msra.mxu0 %v6887
    %7113 = vmatprep.subr.mxu0 0.0
    %7114 = vmatpush1.msra.mxu0 0.0
    %7115 = vmatprep.subr.mxu0 0.0
    %7116 = vmatpush1.msra.mxu0 0.0
    %7117 = vmatprep.subr.mxu0 0.0
    %7118 = vmatpush1.msra.mxu0 0.0
    %7119 = vmatprep.subr.mxu0 0.0
    %7120 = vmatpush1.msra.mxu0 0.0
    %7121 = vmatprep.subr.mxu0 0.0
    %7122 = vmatpush1.msra.mxu0 0.0
    %7123 = vmatprep.subr.mxu0 0.0
    %7124 = vmatpush1.msra.mxu0 0.0
    %7125 = vmatprep.subr.mxu0 0.0
    %7126 = vmatpush1.msra.mxu0 0.0
    %7127 = vmatprep.subr.mxu0 0.0
    %7128 = vmatpush1.msra.mxu0 0.0
    %7129 = vmatprep.subr.mxu0 0.0
    %7130 = vmatpush1.msra.mxu0 0.0
    %7131 = vmatprep.subr.mxu0 0.0
    %7132 = vmatpush1.msra.mxu0 0.0
    %7133 = vmatprep.subr.mxu0 0.0
    %7134 = vmatpush1.msra.mxu0 0.0
    %7135 = vmatprep.subr.mxu0 0.0
    %7136 = vmatpush1.msra.mxu0 0.0
    %7137 = vmatprep.subr.mxu0 0.0
    %7138 = vmatpush1.msra.mxu0 0.0
    %7139 = vmatprep.subr.mxu0 0.0
    %7140 = vmatpush1.msra.mxu0 0.0
    %7141 = vmatprep.subr.mxu0 0.0
    %7142 = vmatpush1.msra.mxu0 0.0
    %7143 = vmatprep.subr.mxu0 0.0
    %7144 = vmatpush1.msra.mxu0 0.0
    %7145 = vmatprep.subr.mxu0 0.0
    %7146 = vmatpush1.msra.mxu0 0.0
    %7147 = vmatprep.subr.mxu0 0.0
    %7148 = vmatpush1.msra.mxu0 0.0
    %7149 = vmatprep.subr.mxu0 0.0
    %7150 = vmatpush1.msra.mxu0 0.0
    %7151 = vmatprep.subr.mxu0 0.0
    %7152 = vmatpush1.msra.mxu0 0.0
    %7153 = vmatprep.subr.mxu0 0.0
    %7154 = vmatpush1.msra.mxu0 0.0
    %7155 = vmatprep.subr.mxu0 0.0
    %7156 = vmatpush1.msra.mxu0 0.0
    %7157 = vmatprep.subr.mxu0 0.0
    %7158 = vmatpush1.msra.mxu0 0.0
    %7159 = vmatprep.subr.mxu0 0.0
    %7160 = vmatpush1.msra.mxu0 0.0
    %7161 = vmatprep.subr.mxu0 0.0
    %7162 = vmatpush1.msra.mxu0 0.0
    %7163 = vmatprep.subr.mxu0 0.0
    %7164 = vmatpush1.msra.mxu0 0.0
    %7165 = vmatprep.subr.mxu0 0.0
    %7166 = vmatpush1.msra.mxu0 0.0
    %7167 = vmatprep.subr.mxu0 0.0
    %7168 = vmatpush1.msra.mxu0 0.0
    %7169 = vmatprep.subr.mxu0 0.0
    %7170 = vmatpush1.msra.mxu0 0.0
    %7171 = vmatprep.subr.mxu0 0.0
    %7172 = vmatpush1.msra.mxu0 0.0
    %7173 = vmatprep.mubr.f32.mxu0 0.0
    %7174 = vmatmul.mubr.f32.gmra.mrb[0].mxu0 %v7036
    %v7175 = vpop.f32.mrb[0].mxu0
    %v7176 = vadd.f32 0.0, %v7175
    %v7177 = vpop.f32.mrb[0].mxu0
    %v7178 = vadd.f32 0.0, %v7177
    %7179 = vdwg.mxu0
    %v7180 = vmax.f32 %v6959, %v7105
    %v7181 = vmax.f32 %v6961, %v7107
    %v7182 = vmax.f32 %v7030, %v7176
    %v7183 = vmax.f32 %v7032, %v7178
    %v7184 = vld [vmem:[#allocation12] sm:$0xff]
    %v7185 = vld [vmem:[#allocation12 + $0x8] sm:$0xff]
    %v7186 = vld [vmem:[#allocation12 + $0x10] sm:$0xff]
    %v7187 = vld [vmem:[#allocation12 + $0x18] sm:$0xff]
    %v7188 = vld [vmem:[#allocation12 + $0x20] sm:$0xff]
    %v7189 = vld [vmem:[#allocation12 + $0x28] sm:$0xff]
    %v7190 = vld [vmem:[#allocation12 + $0x30] sm:$0xff]
    %v7191 = vld [vmem:[#allocation12 + $0x38] sm:$0xff]
    %v7192 = vld [vmem:[#allocation12 + $0x40] sm:$0xff]
    %v7193 = vld [vmem:[#allocation12 + $0x48] sm:$0xff]
    %v7194 = vld [vmem:[#allocation12 + $0x50] sm:$0xff]
    %v7195 = vld [vmem:[#allocation12 + $0x58] sm:$0xff]
    %v7196 = vld [vmem:[#allocation12 + $0x60] sm:$0xff]
    %v7197 = vld [vmem:[#allocation12 + $0x68] sm:$0xff]
    %v7198 = vld [vmem:[#allocation12 + $0x70] sm:$0xff]
    %v7199 = vld [vmem:[#allocation12 + $0x78] sm:$0xff]
    %v7200 = vld [vmem:[#allocation12 + $0x80] sm:$0xff]
    %v7201 = vld [vmem:[#allocation12 + $0x88] sm:$0xff]
    %v7202 = vld [vmem:[#allocation12 + $0x90] sm:$0xff]
    %v7203 = vld [vmem:[#allocation12 + $0x98] sm:$0xff]
    %v7204 = vld [vmem:[#allocation12 + $0xa0] sm:$0xff]
    %v7205 = vld [vmem:[#allocation12 + $0xa8] sm:$0xff]
    %v7206 = vld [vmem:[#allocation12 + $0xb0] sm:$0xff]
    %v7207 = vld [vmem:[#allocation12 + $0xb8] sm:$0xff]
    %v7208 = vld [vmem:[#allocation12 + $0xc0] sm:$0xff]
    %v7209 = vld [vmem:[#allocation12 + $0xc8] sm:$0xff]
    %v7210 = vld [vmem:[#allocation12 + $0xd0] sm:$0xff]
    %v7211 = vld [vmem:[#allocation12 + $0xd8] sm:$0xff]
    %v7212 = vld [vmem:[#allocation12 + $0xe0] sm:$0xff]
    %v7213 = vld [vmem:[#allocation12 + $0xe8] sm:$0xff]
    %v7214 = vld [vmem:[#allocation12 + $0xf0] sm:$0xff]
    %v7215 = vld [vmem:[#allocation12 + $0xf8] sm:$0xff]
    %v7216 = vld [vmem:[#allocation12 + $0x100] sm:$0xff]
    %v7217 = vld [vmem:[#allocation12 + $0x108] sm:$0xff]
    %v7218 = vld [vmem:[#allocation12 + $0x110] sm:$0xff]
    %v7219 = vld [vmem:[#allocation12 + $0x118] sm:$0xff]
    %v7220 = vld [vmem:[#allocation12 + $0x120] sm:$0xff]
    %v7221 = vld [vmem:[#allocation12 + $0x128] sm:$0xff]
    %v7222 = vld [vmem:[#allocation12 + $0x130] sm:$0xff]
    %v7223 = vld [vmem:[#allocation12 + $0x138] sm:$0xff]
    %v7224 = vld [vmem:[#allocation12 + $0x140] sm:$0xff]
    %v7225 = vld [vmem:[#allocation12 + $0x148] sm:$0xff]
    %v7226 = vld [vmem:[#allocation12 + $0x150] sm:$0xff]
    %v7227 = vld [vmem:[#allocation12 + $0x158] sm:$0xff]
    %v7228 = vld [vmem:[#allocation12 + $0x160] sm:$0xff]
    %v7229 = vld [vmem:[#allocation12 + $0x168] sm:$0xff]
    %v7230 = vld [vmem:[#allocation12 + $0x170] sm:$0xff]
    %v7231 = vld [vmem:[#allocation12 + $0x178] sm:$0xff]
    %v7232 = vld [vmem:[#allocation12 + $0x180] sm:$0xff]
    %v7233 = vld [vmem:[#allocation12 + $0x188] sm:$0xff]
    %v7234 = vld [vmem:[#allocation12 + $0x190] sm:$0xff]
    %v7235 = vld [vmem:[#allocation12 + $0x198] sm:$0xff]
    %v7236 = vld [vmem:[#allocation12 + $0x1a0] sm:$0xff]
    %v7237 = vld [vmem:[#allocation12 + $0x1a8] sm:$0xff]
    %v7238 = vld [vmem:[#allocation12 + $0x1b0] sm:$0xff]
    %v7239 = vld [vmem:[#allocation12 + $0x1b8] sm:$0xff]
    %v7240 = vld [vmem:[#allocation12 + $0x1c0] sm:$0xff]
    %v7241 = vld [vmem:[#allocation12 + $0x1c8] sm:$0xff]
    %v7242 = vld [vmem:[#allocation12 + $0x1d0] sm:$0xff]
    %v7243 = vld [vmem:[#allocation12 + $0x1d8] sm:$0xff]
    %v7244 = vld [vmem:[#allocation12 + $0x1e0] sm:$0xff]
    %v7245 = vld [vmem:[#allocation12 + $0x1e8] sm:$0xff]
    %v7246 = vld [vmem:[#allocation12 + $0x1f0] sm:$0xff]
    %v7247 = vld [vmem:[#allocation12 + $0x1f8] sm:$0xff]
    %v7248 = vld [vmem:[#allocation12 + $0x200] sm:$0xff]
    %v7249 = vld [vmem:[#allocation12 + $0x208] sm:$0xff]
    %v7250 = vld [vmem:[#allocation12 + $0x210] sm:$0xff]
    %v7251 = vld [vmem:[#allocation12 + $0x218] sm:$0xff]
    %v7252 = vld [vmem:[#allocation12 + $0x220] sm:$0xff]
    %v7253 = vld [vmem:[#allocation12 + $0x228] sm:$0xff]
    %v7254 = vld [vmem:[#allocation12 + $0x230] sm:$0xff]
    %v7255 = vld [vmem:[#allocation12 + $0x238] sm:$0xff]
    %v7256 = vld [vmem:[#allocation12 + $0x240] sm:$0xff]
    %v7257 = vld [vmem:[#allocation12 + $0x248] sm:$0xff]
    %v7258 = vld [vmem:[#allocation12 + $0x250] sm:$0xff]
    %v7259 = vld [vmem:[#allocation12 + $0x258] sm:$0xff]
    %v7260 = vld [vmem:[#allocation12 + $0x260] sm:$0xff]
    %v7261 = vld [vmem:[#allocation12 + $0x268] sm:$0xff]
    %v7262 = vld [vmem:[#allocation12 + $0x270] sm:$0xff]
    %v7263 = vld [vmem:[#allocation12 + $0x278] sm:$0xff]
    %v7264 = vld [vmem:[#allocation12 + $0x280] sm:$0xff]
    %v7265 = vld [vmem:[#allocation12 + $0x288] sm:$0xff]
    %v7266 = vld [vmem:[#allocation12 + $0x290] sm:$0xff]
    %v7267 = vld [vmem:[#allocation12 + $0x298] sm:$0xff]
    %v7268 = vld [vmem:[#allocation12 + $0x2a0] sm:$0xff]
    %v7269 = vld [vmem:[#allocation12 + $0x2a8] sm:$0xff]
    %v7270 = vld [vmem:[#allocation12 + $0x2b0] sm:$0xff]
    %v7271 = vld [vmem:[#allocation12 + $0x2b8] sm:$0xff]
    %v7272 = vld [vmem:[#allocation12 + $0x2c0] sm:$0xff]
    %v7273 = vld [vmem:[#allocation12 + $0x2c8] sm:$0xff]
    %v7274 = vld [vmem:[#allocation12 + $0x2d0] sm:$0xff]
    %v7275 = vld [vmem:[#allocation12 + $0x2d8] sm:$0xff]
    %v7276 = vld [vmem:[#allocation12 + $0x2e0] sm:$0xff]
    %v7277 = vld [vmem:[#allocation12 + $0x2e8] sm:$0xff]
    %v7278 = vld [vmem:[#allocation12 + $0x2f0] sm:$0xff]
    %v7279 = vld [vmem:[#allocation12 + $0x2f8] sm:$0xff]
    %v7280 = vld [vmem:[#allocation12 + $0x300] sm:$0xff]
    %v7281 = vld [vmem:[#allocation12 + $0x308] sm:$0xff]
    %v7282 = vld [vmem:[#allocation12 + $0x310] sm:$0xff]
    %v7283 = vld [vmem:[#allocation12 + $0x318] sm:$0xff]
    %v7284 = vld [vmem:[#allocation12 + $0x320] sm:$0xff]
    %v7285 = vld [vmem:[#allocation12 + $0x328] sm:$0xff]
    %v7286 = vld [vmem:[#allocation12 + $0x330] sm:$0xff]
    %v7287 = vld [vmem:[#allocation12 + $0x338] sm:$0xff]
    %v7288 = vld [vmem:[#allocation12 + $0x340] sm:$0xff]
    %v7289 = vld [vmem:[#allocation12 + $0x348] sm:$0xff]
    %v7290 = vld [vmem:[#allocation12 + $0x350] sm:$0xff]
    %v7291 = vld [vmem:[#allocation12 + $0x358] sm:$0xff]
    %v7292 = vld [vmem:[#allocation12 + $0x360] sm:$0xff]
    %v7293 = vld [vmem:[#allocation12 + $0x368] sm:$0xff]
    %v7294 = vld [vmem:[#allocation12 + $0x370] sm:$0xff]
    %v7295 = vld [vmem:[#allocation12 + $0x378] sm:$0xff]
    %v7297 = vsel %vm1375, %v7183, 0
    %7299 = vmatprep.subr.mxu0 %v7185
    %7300 = vmatpush1.msra.mxu0 %v7184
    %7301 = vmatprep.subr.mxu0 %v7187
    %7302 = vmatpush1.msra.mxu0 %v7186
    %7303 = vmatprep.subr.mxu0 %v7189
    %7304 = vmatpush1.msra.mxu0 %v7188
    %7305 = vmatprep.subr.mxu0 %v7191
    %7306 = vmatpush1.msra.mxu0 %v7190
    %7307 = vmatprep.subr.mxu0 %v7193
    %7308 = vmatpush1.msra.mxu0 %v7192
    %7309 = vmatprep.subr.mxu0 %v7195
    %7310 = vmatpush1.msra.mxu0 %v7194
    %7311 = vmatprep.subr.mxu0 %v7197
    %7312 = vmatpush1.msra.mxu0 %v7196
    %7313 = vmatprep.subr.mxu0 %v7199
    %7314 = vmatpush1.msra.mxu0 %v7198
    %7315 = vmatprep.subr.mxu0 %v7201
    %7316 = vmatpush1.msra.mxu0 %v7200
    %7317 = vmatprep.subr.mxu0 %v7203
    %7318 = vmatpush1.msra.mxu0 %v7202
    %7319 = vmatprep.subr.mxu0 %v7205
    %7320 = vmatpush1.msra.mxu0 %v7204
    %7321 = vmatprep.subr.mxu0 %v7207
    %7322 = vmatpush1.msra.mxu0 %v7206
    %7323 = vmatprep.subr.mxu0 %v7209
    %7324 = vmatpush1.msra.mxu0 %v7208
    %7325 = vmatprep.subr.mxu0 %v7211
    %7326 = vmatpush1.msra.mxu0 %v7210
    %7327 = vmatprep.subr.mxu0 %v7213
    %7328 = vmatpush1.msra.mxu0 %v7212
    %7329 = vmatprep.subr.mxu0 %v7215
    %7330 = vmatpush1.msra.mxu0 %v7214
    %7331 = vmatprep.subr.mxu0 %v7217
    %7332 = vmatpush1.msra.mxu0 %v7216
    %7333 = vmatprep.subr.mxu0 %v7219
    %7334 = vmatpush1.msra.mxu0 %v7218
    %7335 = vmatprep.subr.mxu0 %v7221
    %7336 = vmatpush1.msra.mxu0 %v7220
    %7337 = vmatprep.subr.mxu0 %v7223
    %7338 = vmatpush1.msra.mxu0 %v7222
    %7339 = vmatprep.subr.mxu0 %v7225
    %7340 = vmatpush1.msra.mxu0 %v7224
    %7341 = vmatprep.subr.mxu0 %v7227
    %7342 = vmatpush1.msra.mxu0 %v7226
    %7343 = vmatprep.subr.mxu0 %v7229
    %7344 = vmatpush1.msra.mxu0 %v7228
    %7345 = vmatprep.subr.mxu0 %v7231
    %7346 = vmatpush1.msra.mxu0 %v7230
    %7347 = vmatprep.subr.mxu0 %v7233
    %7348 = vmatpush1.msra.mxu0 %v7232
    %7349 = vmatprep.subr.mxu0 %v7235
    %7350 = vmatpush1.msra.mxu0 %v7234
    %7351 = vmatprep.subr.mxu0 %v7237
    %7352 = vmatpush1.msra.mxu0 %v7236
    %7353 = vmatprep.subr.mxu0 %v7239
    %7354 = vmatpush1.msra.mxu0 %v7238
    %7355 = vmatprep.subr.mxu0 %v7241
    %7356 = vmatpush1.msra.mxu0 %v7240
    %7357 = vmatprep.subr.mxu0 %v7243
    %7358 = vmatpush1.msra.mxu0 %v7242
    %7359 = vmatprep.subr.mxu0 %v7245
    %7360 = vmatpush1.msra.mxu0 %v7244
    %7361 = vmatprep.subr.mxu0 %v7247
    %7362 = vmatpush1.msra.mxu0 %v7246
    %7363 = vmatprep.mubr.f32.mxu0 %v7181
    %7364 = vmatmul.mubr.f32.gmra.mrb[0].mxu0 %v7180
    %v7365 = vpop.f32.mrb[0].mxu0
    %v7366 = vadd.f32 0.0, %v7365
    %v7367 = vpop.f32.mrb[0].mxu0
    %v7368 = vadd.f32 0.0, %v7367
    %7369 = vdwg.mxu0
    %7370 = vmatprep.subr.mxu0 %v7249
    %7371 = vmatpush1.msra.mxu0 %v7248
    %7372 = vmatprep.subr.mxu0 %v7251
    %7373 = vmatpush1.msra.mxu0 %v7250
    %7374 = vmatprep.subr.mxu0 %v7253
    %7375 = vmatpush1.msra.mxu0 %v7252
    %7376 = vmatprep.subr.mxu0 %v7255
    %7377 = vmatpush1.msra.mxu0 %v7254
    %7378 = vmatprep.subr.mxu0 %v7257
    %7379 = vmatpush1.msra.mxu0 %v7256
    %7380 = vmatprep.subr.mxu0 %v7259
    %7381 = vmatpush1.msra.mxu0 %v7258
    %7382 = vmatprep.subr.mxu0 %v7261
    %7383 = vmatpush1.msra.mxu0 %v7260
    %7384 = vmatprep.subr.mxu0 %v7263
    %7385 = vmatpush1.msra.mxu0 %v7262
    %7386 = vmatprep.subr.mxu0 %v7265
    %7387 = vmatpush1.msra.mxu0 %v7264
    %7388 = vmatprep.subr.mxu0 %v7267
    %7389 = vmatpush1.msra.mxu0 %v7266
    %7390 = vmatprep.subr.mxu0 %v7269
    %7391 = vmatpush1.msra.mxu0 %v7268
    %7392 = vmatprep.subr.mxu0 %v7271
    %7393 = vmatpush1.msra.mxu0 %v7270
    %7394 = vmatprep.subr.mxu0 %v7273
    %7395 = vmatpush1.msra.mxu0 %v7272
    %7396 = vmatprep.subr.mxu0 %v7275
    %7397 = vmatpush1.msra.mxu0 %v7274
    %7398 = vmatprep.subr.mxu0 %v7277
    %7399 = vmatpush1.msra.mxu0 %v7276
    %7400 = vmatprep.subr.mxu0 %v7279
    %7401 = vmatpush1.msra.mxu0 %v7278
    %7402 = vmatprep.subr.mxu0 %v7281
    %7403 = vmatpush1.msra.mxu0 %v7280
    %7404 = vmatprep.subr.mxu0 %v7283
    %7405 = vmatpush1.msra.mxu0 %v7282
    %7406 = vmatprep.subr.mxu0 %v7285
    %7407 = vmatpush1.msra.mxu0 %v7284
    %7408 = vmatprep.subr.mxu0 %v7287
    %7409 = vmatpush1.msra.mxu0 %v7286
    %7410 = vmatprep.subr.mxu0 %v7289
    %7411 = vmatpush1.msra.mxu0 %v7288
    %7412 = vmatprep.subr.mxu0 %v7291
    %7413 = vmatpush1.msra.mxu0 %v7290
    %7414 = vmatprep.subr.mxu0 %v7293
    %7415 = vmatpush1.msra.mxu0 %v7292
    %7416 = vmatprep.subr.mxu0 %v7295
    %7417 = vmatpush1.msra.mxu0 %v7294
    %7418 = vmatprep.subr.mxu0 0.0
    %7419 = vmatpush1.msra.mxu0 0.0
    %7420 = vmatprep.subr.mxu0 0.0
    %7421 = vmatpush1.msra.mxu0 0.0
    %7422 = vmatprep.subr.mxu0 0.0
    %7423 = vmatpush1.msra.mxu0 0.0
    %7424 = vmatprep.subr.mxu0 0.0
    %7425 = vmatpush1.msra.mxu0 0.0
    %7426 = vmatprep.subr.mxu0 0.0
    %7427 = vmatpush1.msra.mxu0 0.0
    %7428 = vmatprep.subr.mxu0 0.0
    %7429 = vmatpush1.msra.mxu0 0.0
    %7430 = vmatprep.subr.mxu0 0.0
    %7431 = vmatpush1.msra.mxu0 0.0
    %7432 = vmatprep.subr.mxu0 0.0
    %7433 = vmatpush1.msra.mxu0 0.0
    %7434 = vmatprep.mubr.f32.mxu0 %v7297
    %7435 = vmatmul.mubr.f32.gmra.mrb[0].mxu0 %v7182
    %v7436 = vpop.f32.mrb[0].mxu0
    %v7437 = vadd.f32 %v7366, %v7436
    %v7438 = vpop.f32.mrb[0].mxu0
    %v7439 = vadd.f32 %v7368, %v7438
    %7440 = vdwg.mxu0
    %v7441 = vld [vmem:[%s3277] sm:$0xff]
    %v7442 = vld [vmem:[%s3277 + $0x8] sm:$0xff]
    %v7443 = vld [vmem:[%s3277 + $0x10] sm:$0xff]
    %v7444 = vld [vmem:[%s3277 + $0x18] sm:$0xff]
    %v7445 = vld [vmem:[%s3277 + $0x20] sm:$0xff]
    %v7446 = vld [vmem:[%s3277 + $0x28] sm:$0xff]
    %v7447 = vld [vmem:[%s3277 + $0x30] sm:$0xff]
    %v7448 = vld [vmem:[%s3277 + $0x38] sm:$0xff]
    %v7449 = vld [vmem:[%s3277 + $0x40] sm:$0xff]
    %v7450 = vld [vmem:[%s3277 + $0x48] sm:$0xff]
    %v7451 = vld [vmem:[%s3277 + $0x50] sm:$0xff]
    %v7452 = vld [vmem:[%s3277 + $0x58] sm:$0xff]
    %v7453 = vld [vmem:[%s3277 + $0x60] sm:$0xff]
    %v7454 = vld [vmem:[%s3277 + $0x68] sm:$0xff]
    %v7455 = vld [vmem:[%s3277 + $0x70] sm:$0xff]
    %v7456 = vld [vmem:[%s3277 + $0x78] sm:$0xff]
    %v7457 = vld [vmem:[%s3277 + $0x80] sm:$0xff]
    %v7458 = vld [vmem:[%s3277 + $0x88] sm:$0xff]
    %v7459 = vld [vmem:[%s3277 + $0x90] sm:$0xff]
    %v7460 = vld [vmem:[%s3277 + $0x98] sm:$0xff]
    %v7461 = vld [vmem:[%s3277 + $0xa0] sm:$0xff]
    %v7462 = vld [vmem:[%s3277 + $0xa8] sm:$0xff]
    %v7463 = vld [vmem:[%s3277 + $0xb0] sm:$0xff]
    %v7464 = vld [vmem:[%s3277 + $0xb8] sm:$0xff]
    %v7465 = vld [vmem:[%s3277 + $0xc0] sm:$0xff]
    %v7466 = vld [vmem:[%s3277 + $0xc8] sm:$0xff]
    %v7467 = vld [vmem:[%s3277 + $0xd0] sm:$0xff]
    %v7468 = vld [vmem:[%s3277 + $0xd8] sm:$0xff]
    %v7469 = vld [vmem:[%s3277 + $0xe0] sm:$0xff]
    %v7470 = vld [vmem:[%s3277 + $0xe8] sm:$0xff]
    %v7471 = vld [vmem:[%s3277 + $0xf0] sm:$0xff]
    %v7472 = vld [vmem:[%s3277 + $0xf8] sm:$0xff]
    %v7473 = vld [vmem:[%s3277 + $0x100] sm:$0xff]
    %v7474 = vld [vmem:[%s3277 + $0x108] sm:$0xff]
    %v7475 = vld [vmem:[%s3277 + $0x110] sm:$0xff]
    %v7476 = vld [vmem:[%s3277 + $0x118] sm:$0xff]
    %v7477 = vld [vmem:[%s3277 + $0x120] sm:$0xff]
    %v7478 = vld [vmem:[%s3277 + $0x128] sm:$0xff]
    %v7479 = vld [vmem:[%s3277 + $0x130] sm:$0xff]
    %v7480 = vld [vmem:[%s3277 + $0x138] sm:$0xff]
    %v7481 = vld [vmem:[%s3277 + $0x140] sm:$0xff]
    %v7482 = vld [vmem:[%s3277 + $0x148] sm:$0xff]
    %v7483 = vld [vmem:[%s3277 + $0x150] sm:$0xff]
    %v7484 = vld [vmem:[%s3277 + $0x158] sm:$0xff]
    %v7485 = vld [vmem:[%s3277 + $0x160] sm:$0xff]
    %v7486 = vld [vmem:[%s3277 + $0x168] sm:$0xff]
    %v7487 = vld [vmem:[%s3277 + $0x170] sm:$0xff]
    %v7488 = vld [vmem:[%s3277 + $0x178] sm:$0xff]
    %v7489 = vld [vmem:[%s3277 + $0x180] sm:$0xff]
    %v7490 = vld [vmem:[%s3277 + $0x188] sm:$0xff]
    %v7491 = vld [vmem:[%s3277 + $0x190] sm:$0xff]
    %v7492 = vld [vmem:[%s3277 + $0x198] sm:$0xff]
    %v7493 = vld [vmem:[%s3277 + $0x1a0] sm:$0xff]
    %v7494 = vld [vmem:[%s3277 + $0x1a8] sm:$0xff]
    %v7495 = vld [vmem:[%s3277 + $0x1b0] sm:$0xff]
    %v7496 = vld [vmem:[%s3277 + $0x1b8] sm:$0xff]
    %v7497 = vld [vmem:[%s3277 + $0x1c0] sm:$0xff]
    %v7498 = vld [vmem:[%s3277 + $0x1c8] sm:$0xff]
    %v7499 = vld [vmem:[%s3277 + $0x1d0] sm:$0xff]
    %v7500 = vld [vmem:[%s3277 + $0x1d8] sm:$0xff]
    %v7501 = vld [vmem:[%s3277 + $0x1e0] sm:$0xff]
    %v7502 = vld [vmem:[%s3277 + $0x1e8] sm:$0xff]
    %v7503 = vld [vmem:[%s3277 + $0x1f0] sm:$0xff]
    %v7504 = vld [vmem:[%s3277 + $0x1f8] sm:$0xff]
    %v7505 = vld [vmem:[%s3277 + $0x200] sm:$0xff]
    %v7506 = vld [vmem:[%s3277 + $0x208] sm:$0xff]
    %v7507 = vld [vmem:[%s3277 + $0x210] sm:$0xff]
    %v7508 = vld [vmem:[%s3277 + $0x218] sm:$0xff]
    %v7509 = vld [vmem:[%s3277 + $0x220] sm:$0xff]
    %v7510 = vld [vmem:[%s3277 + $0x228] sm:$0xff]
    %v7511 = vld [vmem:[%s3277 + $0x230] sm:$0xff]
    %v7512 = vld [vmem:[%s3277 + $0x238] sm:$0xff]
    %v7513 = vld [vmem:[%s3277 + $0x240] sm:$0xff]
    %v7514 = vld [vmem:[%s3277 + $0x248] sm:$0xff]
    %v7515 = vld [vmem:[%s3277 + $0x250] sm:$0xff]
    %v7516 = vld [vmem:[%s3277 + $0x258] sm:$0xff]
    %v7517 = vld [vmem:[%s3277 + $0x260] sm:$0xff]
    %v7518 = vld [vmem:[%s3277 + $0x268] sm:$0xff]
    %v7519 = vld [vmem:[%s3277 + $0x270] sm:$0xff]
    %v7520 = vld [vmem:[%s3277 + $0x278] sm:$0xff]
    %v7521 = vld [vmem:[%s3277 + $0x280] sm:$0xff]
    %v7522 = vld [vmem:[%s3277 + $0x288] sm:$0xff]
    %v7523 = vld [vmem:[%s3277 + $0x290] sm:$0xff]
    %v7524 = vld [vmem:[%s3277 + $0x298] sm:$0xff]
    %v7525 = vld [vmem:[%s3277 + $0x2a0] sm:$0xff]
    %v7526 = vld [vmem:[%s3277 + $0x2a8] sm:$0xff]
    %v7527 = vld [vmem:[%s3277 + $0x2b0] sm:$0xff]
    %v7528 = vld [vmem:[%s3277 + $0x2b8] sm:$0xff]
    %v7529 = vld [vmem:[%s3277 + $0x2c0] sm:$0xff]
    %v7530 = vld [vmem:[%s3277 + $0x2c8] sm:$0xff]
    %v7531 = vld [vmem:[%s3277 + $0x2d0] sm:$0xff]
    %v7532 = vld [vmem:[%s3277 + $0x2d8] sm:$0xff]
    %v7533 = vld [vmem:[%s3277 + $0x2e0] sm:$0xff]
    %v7534 = vld [vmem:[%s3277 + $0x2e8] sm:$0xff]
    %v7535 = vld [vmem:[%s3277 + $0x2f0] sm:$0xff]
    %v7536 = vld [vmem:[%s3277 + $0x2f8] sm:$0xff]
    %v7537 = vld [vmem:[%s3277 + $0x300] sm:$0xff]
    %v7538 = vld [vmem:[%s3277 + $0x308] sm:$0xff]
    %v7539 = vld [vmem:[%s3277 + $0x310] sm:$0xff]
    %v7540 = vld [vmem:[%s3277 + $0x318] sm:$0xff]
    %v7541 = vld [vmem:[%s3277 + $0x320] sm:$0xff]
    %v7542 = vld [vmem:[%s3277 + $0x328] sm:$0xff]
    %v7543 = vld [vmem:[%s3277 + $0x330] sm:$0xff]
    %v7544 = vld [vmem:[%s3277 + $0x338] sm:$0xff]
    %v7545 = vld [vmem:[%s3277 + $0x340] sm:$0xff]
    %v7546 = vld [vmem:[%s3277 + $0x348] sm:$0xff]
    %v7547 = vld [vmem:[%s3277 + $0x350] sm:$0xff]
    %v7548 = vld [vmem:[%s3277 + $0x358] sm:$0xff]
    %v7549 = vld [vmem:[%s3277 + $0x360] sm:$0xff]
    %v7550 = vld [vmem:[%s3277 + $0x368] sm:$0xff]
    %v7551 = vld [vmem:[%s3277 + $0x370] sm:$0xff]
    %v7552 = vld [vmem:[%s3277 + $0x378] sm:$0xff]
    %7553 = vmatprep.subr.mxu0 %v7442
    %7554 = vmatpush1.msra.mxu0 %v7441
    %7555 = vmatprep.subr.mxu0 %v7444
    %7556 = vmatpush1.msra.mxu0 %v7443
    %7557 = vmatprep.subr.mxu0 %v7446
    %7558 = vmatpush1.msra.mxu0 %v7445
    %7559 = vmatprep.subr.mxu0 %v7448
    %7560 = vmatpush1.msra.mxu0 %v7447
    %7561 = vmatprep.subr.mxu0 %v7450
    %7562 = vmatpush1.msra.mxu0 %v7449
    %7563 = vmatprep.subr.mxu0 %v7452
    %7564 = vmatpush1.msra.mxu0 %v7451
    %7565 = vmatprep.subr.mxu0 %v7454
    %7566 = vmatpush1.msra.mxu0 %v7453
    %7567 = vmatprep.subr.mxu0 %v7456
    %7568 = vmatpush1.msra.mxu0 %v7455
    %7569 = vmatprep.subr.mxu0 %v7458
    %7570 = vmatpush1.msra.mxu0 %v7457
    %7571 = vmatprep.subr.mxu0 %v7460
    %7572 = vmatpush1.msra.mxu0 %v7459
    %7573 = vmatprep.subr.mxu0 %v7462
    %7574 = vmatpush1.msra.mxu0 %v7461
    %7575 = vmatprep.subr.mxu0 %v7464
    %7576 = vmatpush1.msra.mxu0 %v7463
    %7577 = vmatprep.subr.mxu0 %v7466
    %7578 = vmatpush1.msra.mxu0 %v7465
    %7579 = vmatprep.subr.mxu0 %v7468
    %7580 = vmatpush1.msra.mxu0 %v7467
    %7581 = vmatprep.subr.mxu0 %v7470
    %7582 = vmatpush1.msra.mxu0 %v7469
    %7583 = vmatprep.subr.mxu0 %v7472
    %7584 = vmatpush1.msra.mxu0 %v7471
    %7585 = vmatprep.subr.mxu0 %v7474
    %7586 = vmatpush1.msra.mxu0 %v7473
    %7587 = vmatprep.subr.mxu0 %v7476
    %7588 = vmatpush1.msra.mxu0 %v7475
    %7589 = vmatprep.subr.mxu0 %v7478
    %7590 = vmatpush1.msra.mxu0 %v7477
    %7591 = vmatprep.subr.mxu0 %v7480
    %7592 = vmatpush1.msra.mxu0 %v7479
    %7593 = vmatprep.subr.mxu0 %v7482
    %7594 = vmatpush1.msra.mxu0 %v7481
    %7595 = vmatprep.subr.mxu0 %v7484
    %7596 = vmatpush1.msra.mxu0 %v7483
    %7597 = vmatprep.subr.mxu0 %v7486
    %7598 = vmatpush1.msra.mxu0 %v7485
    %7599 = vmatprep.subr.mxu0 %v7488
    %7600 = vmatpush1.msra.mxu0 %v7487
    %7601 = vmatprep.subr.mxu0 %v7490
    %7602 = vmatpush1.msra.mxu0 %v7489
    %7603 = vmatprep.subr.mxu0 %v7492
    %7604 = vmatpush1.msra.mxu0 %v7491
    %7605 = vmatprep.subr.mxu0 %v7494
    %7606 = vmatpush1.msra.mxu0 %v7493
    %7607 = vmatprep.subr.mxu0 %v7496
    %7608 = vmatpush1.msra.mxu0 %v7495
    %7609 = vmatprep.subr.mxu0 %v7498
    %7610 = vmatpush1.msra.mxu0 %v7497
    %7611 = vmatprep.subr.mxu0 %v7500
    %7612 = vmatpush1.msra.mxu0 %v7499
    %7613 = vmatprep.subr.mxu0 %v7502
    %7614 = vmatpush1.msra.mxu0 %v7501
    %7615 = vmatprep.subr.mxu0 %v7504
    %7616 = vmatpush1.msra.mxu0 %v7503
    %7617 = vmatprep.mubr.f32.mxu0 %v7181
    %7618 = vmatmul.mubr.f32.gmra.mrb[0].mxu0 %v7180
    %v7619 = vpop.f32.mrb[0].mxu0
    %v7620 = vadd.f32 0.0, %v7619
    %v7621 = vpop.f32.mrb[0].mxu0
    %v7622 = vadd.f32 0.0, %v7621
    %7623 = vdwg.mxu0
    %7624 = vmatprep.subr.mxu0 %v7506
    %7625 = vmatpush1.msra.mxu0 %v7505
    %7626 = vmatprep.subr.mxu0 %v7508
    %7627 = vmatpush1.msra.mxu0 %v7507
    %7628 = vmatprep.subr.mxu0 %v7510
    %7629 = vmatpush1.msra.mxu0 %v7509
    %7630 = vmatprep.subr.mxu0 %v7512
    %7631 = vmatpush1.msra.mxu0 %v7511
    %7632 = vmatprep.subr.mxu0 %v7514
    %7633 = vmatpush1.msra.mxu0 %v7513
    %7634 = vmatprep.subr.mxu0 %v7516
    %7635 = vmatpush1.msra.mxu0 %v7515
    %7636 = vmatprep.subr.mxu0 %v7518
    %7637 = vmatpush1.msra.mxu0 %v7517
    %7638 = vmatprep.subr.mxu0 %v7520
    %7639 = vmatpush1.msra.mxu0 %v7519
    %7640 = vmatprep.subr.mxu0 %v7522
    %7641 = vmatpush1.msra.mxu0 %v7521
    %7642 = vmatprep.subr.mxu0 %v7524
    %7643 = vmatpush1.msra.mxu0 %v7523
    %7644 = vmatprep.subr.mxu0 %v7526
    %7645 = vmatpush1.msra.mxu0 %v7525
    %7646 = vmatprep.subr.mxu0 %v7528
    %7647 = vmatpush1.msra.mxu0 %v7527
    %7648 = vmatprep.subr.mxu0 %v7530
    %7649 = vmatpush1.msra.mxu0 %v7529
    %7650 = vmatprep.subr.mxu0 %v7532
    %7651 = vmatpush1.msra.mxu0 %v7531
    %7652 = vmatprep.subr.mxu0 %v7534
    %7653 = vmatpush1.msra.mxu0 %v7533
    %7654 = vmatprep.subr.mxu0 %v7536
    %7655 = vmatpush1.msra.mxu0 %v7535
    %7656 = vmatprep.subr.mxu0 %v7538
    %7657 = vmatpush1.msra.mxu0 %v7537
    %7658 = vmatprep.subr.mxu0 %v7540
    %7659 = vmatpush1.msra.mxu0 %v7539
    %7660 = vmatprep.subr.mxu0 %v7542
    %7661 = vmatpush1.msra.mxu0 %v7541
    %7662 = vmatprep.subr.mxu0 %v7544
    %7663 = vmatpush1.msra.mxu0 %v7543
    %7664 = vmatprep.subr.mxu0 %v7546
    %7665 = vmatpush1.msra.mxu0 %v7545
    %7666 = vmatprep.subr.mxu0 %v7548
    %7667 = vmatpush1.msra.mxu0 %v7547
    %7668 = vmatprep.subr.mxu0 %v7550
    %7669 = vmatpush1.msra.mxu0 %v7549
    %7670 = vmatprep.subr.mxu0 %v7552
    %7671 = vmatpush1.msra.mxu0 %v7551
    %7672 = vmatprep.subr.mxu0 0.0
    %7673 = vmatpush1.msra.mxu0 0.0
    %7674 = vmatprep.subr.mxu0 0.0
    %7675 = vmatpush1.msra.mxu0 0.0
    %7676 = vmatprep.subr.mxu0 0.0
    %7677 = vmatpush1.msra.mxu0 0.0
    %7678 = vmatprep.subr.mxu0 0.0
    %7679 = vmatpush1.msra.mxu0 0.0
    %7680 = vmatprep.subr.mxu0 0.0
    %7681 = vmatpush1.msra.mxu0 0.0
    %7682 = vmatprep.subr.mxu0 0.0
    %7683 = vmatpush1.msra.mxu0 0.0
    %7684 = vmatprep.subr.mxu0 0.0
    %7685 = vmatpush1.msra.mxu0 0.0
    %7686 = vmatprep.subr.mxu0 0.0
    %7687 = vmatpush1.msra.mxu0 0.0
    %7688 = vmatprep.mubr.f32.mxu0 %v7297
    %7689 = vmatmul.mubr.f32.gmra.mrb[0].mxu0 %v7182
    %v7690 = vpop.f32.mrb[0].mxu0
    %v7691 = vadd.f32 %v7620, %v7690
    %v7692 = vpop.f32.mrb[0].mxu0
    %v7693 = vadd.f32 %v7622, %v7692
    %7694 = vdwg.mxu0
    %v7695 = vmax.f32 %v7437, %v7691
    %v7696 = vmax.f32 %v7439, %v7693
    %v7697 = vld [vmem:[#allocation15] sm:$0x1]
    %v7698 = vld [vmem:[#allocation14] sm:$0xff]
    %v7699 = vld [vmem:[#allocation14 + $0x8] sm:$0xff]
    %v7700 = vld [vmem:[#allocation14 + $0x10] sm:$0xff]
    %v7701 = vld [vmem:[#allocation14 + $0x18] sm:$0xff]
    %v7702 = vld [vmem:[#allocation14 + $0x20] sm:$0xff]
    %v7703 = vld [vmem:[#allocation14 + $0x28] sm:$0xff]
    %v7704 = vld [vmem:[#allocation14 + $0x30] sm:$0xff]
    %v7705 = vld [vmem:[#allocation14 + $0x38] sm:$0xff]
    %v7706 = vld [vmem:[#allocation14 + $0x40] sm:$0xff]
    %v7707 = vld [vmem:[#allocation14 + $0x48] sm:$0xff]
    %v7708 = vld [vmem:[#allocation14 + $0x50] sm:$0xff]
    %v7709 = vld [vmem:[#allocation14 + $0x58] sm:$0xff]
    %v7710 = vld [vmem:[#allocation14 + $0x60] sm:$0xff]
    %v7711 = vld [vmem:[#allocation14 + $0x68] sm:$0xff]
    %v7712 = vld [vmem:[#allocation14 + $0x70] sm:$0xff]
    %v7713 = vld [vmem:[#allocation14 + $0x78] sm:$0xff]
    %v7714 = vld [vmem:[#allocation14 + $0x80] sm:$0xff]
    %v7715 = vld [vmem:[#allocation14 + $0x88] sm:$0xff]
    %v7716 = vld [vmem:[#allocation14 + $0x90] sm:$0xff]
    %v7717 = vld [vmem:[#allocation14 + $0x98] sm:$0xff]
    %v7718 = vld [vmem:[#allocation14 + $0xa0] sm:$0xff]
    %v7719 = vld [vmem:[#allocation14 + $0xa8] sm:$0xff]
    %v7720 = vld [vmem:[#allocation14 + $0xb0] sm:$0xff]
    %v7721 = vld [vmem:[#allocation14 + $0xb8] sm:$0xff]
    %v7722 = vld [vmem:[#allocation14 + $0xc0] sm:$0xff]
    %v7723 = vld [vmem:[#allocation14 + $0xc8] sm:$0xff]
    %v7724 = vld [vmem:[#allocation14 + $0xd0] sm:$0xff]
    %v7725 = vld [vmem:[#allocation14 + $0xd8] sm:$0xff]
    %v7727 = vsel %vm174, %v7696, 0
    %7729 = vmatprep.subr.mxu0 0.0
    %7730 = vmatpush1.msra.mxu0 %v7698
    %7731 = vmatprep.subr.mxu0 0.0
    %7732 = vmatpush1.msra.mxu0 %v7699
    %7733 = vmatprep.subr.mxu0 0.0
    %7734 = vmatpush1.msra.mxu0 %v7700
    %7735 = vmatprep.subr.mxu0 0.0
    %7736 = vmatpush1.msra.mxu0 %v7701
    %7737 = vmatprep.subr.mxu0 0.0
    %7738 = vmatpush1.msra.mxu0 %v7702
    %7739 = vmatprep.subr.mxu0 0.0
    %7740 = vmatpush1.msra.mxu0 %v7703
    %7741 = vmatprep.subr.mxu0 0.0
    %7742 = vmatpush1.msra.mxu0 %v7704
    %7743 = vmatprep.subr.mxu0 0.0
    %7744 = vmatpush1.msra.mxu0 %v7705
    %7745 = vmatprep.subr.mxu0 0.0
    %7746 = vmatpush1.msra.mxu0 %v7706
    %7747 = vmatprep.subr.mxu0 0.0
    %7748 = vmatpush1.msra.mxu0 %v7707
    %7749 = vmatprep.subr.mxu0 0.0
    %7750 = vmatpush1.msra.mxu0 %v7708
    %7751 = vmatprep.subr.mxu0 0.0
    %7752 = vmatpush1.msra.mxu0 %v7709
    %7753 = vmatprep.subr.mxu0 0.0
    %7754 = vmatpush1.msra.mxu0 %v7710
    %7755 = vmatprep.subr.mxu0 0.0
    %7756 = vmatpush1.msra.mxu0 %v7711
    %7757 = vmatprep.subr.mxu0 0.0
    %7758 = vmatpush1.msra.mxu0 %v7712
    %7759 = vmatprep.subr.mxu0 0.0
    %7760 = vmatpush1.msra.mxu0 %v7713
    %7761 = vmatprep.subr.mxu0 0.0
    %7762 = vmatpush1.msra.mxu0 %v7714
    %7763 = vmatprep.subr.mxu0 0.0
    %7764 = vmatpush1.msra.mxu0 %v7715
    %7765 = vmatprep.subr.mxu0 0.0
    %7766 = vmatpush1.msra.mxu0 %v7716
    %7767 = vmatprep.subr.mxu0 0.0
    %7768 = vmatpush1.msra.mxu0 %v7717
    %7769 = vmatprep.subr.mxu0 0.0
    %7770 = vmatpush1.msra.mxu0 %v7718
    %7771 = vmatprep.subr.mxu0 0.0
    %7772 = vmatpush1.msra.mxu0 %v7719
    %7773 = vmatprep.subr.mxu0 0.0
    %7774 = vmatpush1.msra.mxu0 %v7720
    %7775 = vmatprep.subr.mxu0 0.0
    %7776 = vmatpush1.msra.mxu0 %v7721
    %7777 = vmatprep.subr.mxu0 0.0
    %7778 = vmatpush1.msra.mxu0 %v7722
    %7779 = vmatprep.subr.mxu0 0.0
    %7780 = vmatpush1.msra.mxu0 %v7723
    %7781 = vmatprep.subr.mxu0 0.0
    %7782 = vmatpush1.msra.mxu0 %v7724
    %7783 = vmatprep.subr.mxu0 0.0
    %7784 = vmatpush1.msra.mxu0 %v7725
    %7785 = vmatprep.subr.mxu0 0.0
    %7786 = vmatpush1.msra.mxu0 0.0
    %7787 = vmatprep.subr.mxu0 0.0
    %7788 = vmatpush1.msra.mxu0 0.0
    %7789 = vmatprep.subr.mxu0 0.0
    %7790 = vmatpush1.msra.mxu0 0.0
    %7791 = vmatprep.subr.mxu0 0.0
    %7792 = vmatpush1.msra.mxu0 0.0
    %7793 = vmatprep.mubr.f32.mxu0 %v7727
    %7794 = vmatmul.mubr.f32.gmra.mrb[0].mxu0 %v7695
    %v7795 = vpop.f32.mrb[0].mxu0
    %v7796 = vadd.f32 0.0, %v7795
    %v7797 = vpop.f32.mrb[0].mxu0
    %7798 = vdwg.mxu0
    %v7799 = vadd.f32 %v7697, %v7796
    %v7800 = vld [vmem:[%s3637] sm:$0xff]
    %v7801 = vld [vmem:[%s3637 + $0x8] sm:$0xff]
    %v7802 = vld [vmem:[%s3637 + $0x10] sm:$0xff]
    %v7803 = vld [vmem:[%s3637 + $0x18] sm:$0xff]
    %v7804 = vld [vmem:[%s3637 + $0x20] sm:$0xff]
    %v7805 = vld [vmem:[%s3637 + $0x28] sm:$0xff]
    %v7806 = vld [vmem:[%s3637 + $0x30] sm:$0xff]
    %v7807 = vld [vmem:[%s3637 + $0x38] sm:$0xff]
    %v7808 = vld [vmem:[%s3637 + $0x40] sm:$0xff]
    %v7809 = vld [vmem:[%s3637 + $0x48] sm:$0xff]
    %v7810 = vld [vmem:[%s3637 + $0x50] sm:$0xff]
    %v7811 = vld [vmem:[%s3637 + $0x58] sm:$0xff]
    %v7812 = vld [vmem:[%s3637 + $0x60] sm:$0xff]
    %v7813 = vld [vmem:[%s3637 + $0x68] sm:$0xff]
    %v7814 = vld [vmem:[%s3637 + $0x70] sm:$0xff]
    %v7815 = vld [vmem:[%s3637 + $0x78] sm:$0xff]
    %v7816 = vld [vmem:[%s3637 + $0x80] sm:$0xff]
    %v7817 = vld [vmem:[%s3637 + $0x88] sm:$0xff]
    %v7818 = vld [vmem:[%s3637 + $0x90] sm:$0xff]
    %v7819 = vld [vmem:[%s3637 + $0x98] sm:$0xff]
    %v7820 = vld [vmem:[%s3637 + $0xa0] sm:$0xff]
    %v7821 = vld [vmem:[%s3637 + $0xa8] sm:$0xff]
    %v7822 = vld [vmem:[%s3637 + $0xb0] sm:$0xff]
    %v7823 = vld [vmem:[%s3637 + $0xb8] sm:$0xff]
    %v7824 = vld [vmem:[%s3637 + $0xc0] sm:$0xff]
    %v7825 = vld [vmem:[%s3637 + $0xc8] sm:$0xff]
    %v7826 = vld [vmem:[%s3637 + $0xd0] sm:$0xff]
    %v7827 = vld [vmem:[%s3637 + $0xd8] sm:$0xff]
    %v7829 = vrot.slane %v7695, 1
    %v7830 = vrot.slane %v7696, 1
    %v7832 = vsel %vm174, %v7830, 0
    %7834 = vmatprep.subr.mxu0 0.0
    %7835 = vmatpush1.msra.mxu0 %v7800
    %7836 = vmatprep.subr.mxu0 0.0
    %7837 = vmatpush1.msra.mxu0 %v7801
    %7838 = vmatprep.subr.mxu0 0.0
    %7839 = vmatpush1.msra.mxu0 %v7802
    %7840 = vmatprep.subr.mxu0 0.0
    %7841 = vmatpush1.msra.mxu0 %v7803
    %7842 = vmatprep.subr.mxu0 0.0
    %7843 = vmatpush1.msra.mxu0 %v7804
    %7844 = vmatprep.subr.mxu0 0.0
    %7845 = vmatpush1.msra.mxu0 %v7805
    %7846 = vmatprep.subr.mxu0 0.0
    %7847 = vmatpush1.msra.mxu0 %v7806
    %7848 = vmatprep.subr.mxu0 0.0
    %7849 = vmatpush1.msra.mxu0 %v7807
    %7850 = vmatprep.subr.mxu0 0.0
    %7851 = vmatpush1.msra.mxu0 %v7808
    %7852 = vmatprep.subr.mxu0 0.0
    %7853 = vmatpush1.msra.mxu0 %v7809
    %7854 = vmatprep.subr.mxu0 0.0
    %7855 = vmatpush1.msra.mxu0 %v7810
    %7856 = vmatprep.subr.mxu0 0.0
    %7857 = vmatpush1.msra.mxu0 %v7811
    %7858 = vmatprep.subr.mxu0 0.0
    %7859 = vmatpush1.msra.mxu0 %v7812
    %7860 = vmatprep.subr.mxu0 0.0
    %7861 = vmatpush1.msra.mxu0 %v7813
    %7862 = vmatprep.subr.mxu0 0.0
    %7863 = vmatpush1.msra.mxu0 %v7814
    %7864 = vmatprep.subr.mxu0 0.0
    %7865 = vmatpush1.msra.mxu0 %v7815
    %7866 = vmatprep.subr.mxu0 0.0
    %7867 = vmatpush1.msra.mxu0 %v7816
    %7868 = vmatprep.subr.mxu0 0.0
    %7869 = vmatpush1.msra.mxu0 %v7817
    %7870 = vmatprep.subr.mxu0 0.0
    %7871 = vmatpush1.msra.mxu0 %v7818
    %7872 = vmatprep.subr.mxu0 0.0
    %7873 = vmatpush1.msra.mxu0 %v7819
    %7874 = vmatprep.subr.mxu0 0.0
    %7875 = vmatpush1.msra.mxu0 %v7820
    %7876 = vmatprep.subr.mxu0 0.0
    %7877 = vmatpush1.msra.mxu0 %v7821
    %7878 = vmatprep.subr.mxu0 0.0
    %7879 = vmatpush1.msra.mxu0 %v7822
    %7880 = vmatprep.subr.mxu0 0.0
    %7881 = vmatpush1.msra.mxu0 %v7823
    %7882 = vmatprep.subr.mxu0 0.0
    %7883 = vmatpush1.msra.mxu0 %v7824
    %7884 = vmatprep.subr.mxu0 0.0
    %7885 = vmatpush1.msra.mxu0 %v7825
    %7886 = vmatprep.subr.mxu0 0.0
    %7887 = vmatpush1.msra.mxu0 %v7826
    %7888 = vmatprep.subr.mxu0 0.0
    %7889 = vmatpush1.msra.mxu0 %v7827
    %7890 = vmatprep.subr.mxu0 0.0
    %7891 = vmatpush1.msra.mxu0 0.0
    %7892 = vmatprep.subr.mxu0 0.0
    %7893 = vmatpush1.msra.mxu0 0.0
    %7894 = vmatprep.subr.mxu0 0.0
    %7895 = vmatpush1.msra.mxu0 0.0
    %7896 = vmatprep.subr.mxu0 0.0
    %7897 = vmatpush1.msra.mxu0 0.0
    %7898 = vmatprep.mubr.f32.mxu0 %v7832
    %7899 = vmatmul.mubr.f32.gmra.mrb[0].mxu0 %v7829
    %v7900 = vpop.f32.mrb[0].mxu0
    %v7901 = vadd.f32 0.0, %v7900
    %v7902 = vpop.f32.mrb[0].mxu0
    %7903 = vdwg.mxu0
    %v7904 = vadd.f32 %v7799, %v7901
    %v7905 = vld [vmem:[%s3743] sm:$0xff]
    %v7906 = vld [vmem:[%s3743 + $0x8] sm:$0xff]
    %v7907 = vld [vmem:[%s3743 + $0x10] sm:$0xff]
    %v7908 = vld [vmem:[%s3743 + $0x18] sm:$0xff]
    %v7909 = vld [vmem:[%s3743 + $0x20] sm:$0xff]
    %v7910 = vld [vmem:[%s3743 + $0x28] sm:$0xff]
    %v7911 = vld [vmem:[%s3743 + $0x30] sm:$0xff]
    %v7912 = vld [vmem:[%s3743 + $0x38] sm:$0xff]
    %v7913 = vld [vmem:[%s3743 + $0x40] sm:$0xff]
    %v7914 = vld [vmem:[%s3743 + $0x48] sm:$0xff]
    %v7915 = vld [vmem:[%s3743 + $0x50] sm:$0xff]
    %v7916 = vld [vmem:[%s3743 + $0x58] sm:$0xff]
    %v7917 = vld [vmem:[%s3743 + $0x60] sm:$0xff]
    %v7918 = vld [vmem:[%s3743 + $0x68] sm:$0xff]
    %v7919 = vld [vmem:[%s3743 + $0x70] sm:$0xff]
    %v7920 = vld [vmem:[%s3743 + $0x78] sm:$0xff]
    %v7921 = vld [vmem:[%s3743 + $0x80] sm:$0xff]
    %v7922 = vld [vmem:[%s3743 + $0x88] sm:$0xff]
    %v7923 = vld [vmem:[%s3743 + $0x90] sm:$0xff]
    %v7924 = vld [vmem:[%s3743 + $0x98] sm:$0xff]
    %v7925 = vld [vmem:[%s3743 + $0xa0] sm:$0xff]
    %v7926 = vld [vmem:[%s3743 + $0xa8] sm:$0xff]
    %v7927 = vld [vmem:[%s3743 + $0xb0] sm:$0xff]
    %v7928 = vld [vmem:[%s3743 + $0xb8] sm:$0xff]
    %v7929 = vld [vmem:[%s3743 + $0xc0] sm:$0xff]
    %v7930 = vld [vmem:[%s3743 + $0xc8] sm:$0xff]
    %v7931 = vld [vmem:[%s3743 + $0xd0] sm:$0xff]
    %v7932 = vld [vmem:[%s3743 + $0xd8] sm:$0xff]
    %v7933 = vrot.slane %v7695, 2
    %v7934 = vrot.slane %v7696, 2
    %v7936 = vsel %vm174, %v7934, 0
    %7938 = vmatprep.subr.mxu0 0.0
    %7939 = vmatpush1.msra.mxu0 %v7905
    %7940 = vmatprep.subr.mxu0 0.0
    %7941 = vmatpush1.msra.mxu0 %v7906
    %7942 = vmatprep.subr.mxu0 0.0
    %7943 = vmatpush1.msra.mxu0 %v7907
    %7944 = vmatprep.subr.mxu0 0.0
    %7945 = vmatpush1.msra.mxu0 %v7908
    %7946 = vmatprep.subr.mxu0 0.0
    %7947 = vmatpush1.msra.mxu0 %v7909
    %7948 = vmatprep.subr.mxu0 0.0
    %7949 = vmatpush1.msra.mxu0 %v7910
    %7950 = vmatprep.subr.mxu0 0.0
    %7951 = vmatpush1.msra.mxu0 %v7911
    %7952 = vmatprep.subr.mxu0 0.0
    %7953 = vmatpush1.msra.mxu0 %v7912
    %7954 = vmatprep.subr.mxu0 0.0
    %7955 = vmatpush1.msra.mxu0 %v7913
    %7956 = vmatprep.subr.mxu0 0.0
    %7957 = vmatpush1.msra.mxu0 %v7914
    %7958 = vmatprep.subr.mxu0 0.0
    %7959 = vmatpush1.msra.mxu0 %v7915
    %7960 = vmatprep.subr.mxu0 0.0
    %7961 = vmatpush1.msra.mxu0 %v7916
    %7962 = vmatprep.subr.mxu0 0.0
    %7963 = vmatpush1.msra.mxu0 %v7917
    %7964 = vmatprep.subr.mxu0 0.0
    %7965 = vmatpush1.msra.mxu0 %v7918
    %7966 = vmatprep.subr.mxu0 0.0
    %7967 = vmatpush1.msra.mxu0 %v7919
    %7968 = vmatprep.subr.mxu0 0.0
    %7969 = vmatpush1.msra.mxu0 %v7920
    %7970 = vmatprep.subr.mxu0 0.0
    %7971 = vmatpush1.msra.mxu0 %v7921
    %7972 = vmatprep.subr.mxu0 0.0
    %7973 = vmatpush1.msra.mxu0 %v7922
    %7974 = vmatprep.subr.mxu0 0.0
    %7975 = vmatpush1.msra.mxu0 %v7923
    %7976 = vmatprep.subr.mxu0 0.0
    %7977 = vmatpush1.msra.mxu0 %v7924
    %7978 = vmatprep.subr.mxu0 0.0
    %7979 = vmatpush1.msra.mxu0 %v7925
    %7980 = vmatprep.subr.mxu0 0.0
    %7981 = vmatpush1.msra.mxu0 %v7926
    %7982 = vmatprep.subr.mxu0 0.0
    %7983 = vmatpush1.msra.mxu0 %v7927
    %7984 = vmatprep.subr.mxu0 0.0
    %7985 = vmatpush1.msra.mxu0 %v7928
    %7986 = vmatprep.subr.mxu0 0.0
    %7987 = vmatpush1.msra.mxu0 %v7929
    %7988 = vmatprep.subr.mxu0 0.0
    %7989 = vmatpush1.msra.mxu0 %v7930
    %7990 = vmatprep.subr.mxu0 0.0
    %7991 = vmatpush1.msra.mxu0 %v7931
    %7992 = vmatprep.subr.mxu0 0.0
    %7993 = vmatpush1.msra.mxu0 %v7932
    %7994 = vmatprep.subr.mxu0 0.0
    %7995 = vmatpush1.msra.mxu0 0.0
    %7996 = vmatprep.subr.mxu0 0.0
    %7997 = vmatpush1.msra.mxu0 0.0
    %7998 = vmatprep.subr.mxu0 0.0
    %7999 = vmatpush1.msra.mxu0 0.0
    %8000 = vmatprep.subr.mxu0 0.0
    %8001 = vmatpush1.msra.mxu0 0.0
    %8002 = vmatprep.mubr.f32.mxu0 %v7936
    %8003 = vmatmul.mubr.f32.gmra.mrb[0].mxu0 %v7933
    %v8004 = vpop.f32.mrb[0].mxu0
    %v8005 = vadd.f32 0.0, %v8004
    %v8006 = vpop.f32.mrb[0].mxu0
    %8007 = vdwg.mxu0
    %v8008 = vadd.f32 %v7904, %v8005
    %v8009 = vld [vmem:[%s3848] sm:$0xff]
    %v8010 = vld [vmem:[%s3848 + $0x8] sm:$0xff]
    %v8011 = vld [vmem:[%s3848 + $0x10] sm:$0xff]
    %v8012 = vld [vmem:[%s3848 + $0x18] sm:$0xff]
    %v8013 = vld [vmem:[%s3848 + $0x20] sm:$0xff]
    %v8014 = vld [vmem:[%s3848 + $0x28] sm:$0xff]
    %v8015 = vld [vmem:[%s3848 + $0x30] sm:$0xff]
    %v8016 = vld [vmem:[%s3848 + $0x38] sm:$0xff]
    %v8017 = vld [vmem:[%s3848 + $0x40] sm:$0xff]
    %v8018 = vld [vmem:[%s3848 + $0x48] sm:$0xff]
    %v8019 = vld [vmem:[%s3848 + $0x50] sm:$0xff]
    %v8020 = vld [vmem:[%s3848 + $0x58] sm:$0xff]
    %v8021 = vld [vmem:[%s3848 + $0x60] sm:$0xff]
    %v8022 = vld [vmem:[%s3848 + $0x68] sm:$0xff]
    %v8023 = vld [vmem:[%s3848 + $0x70] sm:$0xff]
    %v8024 = vld [vmem:[%s3848 + $0x78] sm:$0xff]
    %v8025 = vld [vmem:[%s3848 + $0x80] sm:$0xff]
    %v8026 = vld [vmem:[%s3848 + $0x88] sm:$0xff]
    %v8027 = vld [vmem:[%s3848 + $0x90] sm:$0xff]
    %v8028 = vld [vmem:[%s3848 + $0x98] sm:$0xff]
    %v8029 = vld [vmem:[%s3848 + $0xa0] sm:$0xff]
    %v8030 = vld [vmem:[%s3848 + $0xa8] sm:$0xff]
    %v8031 = vld [vmem:[%s3848 + $0xb0] sm:$0xff]
    %v8032 = vld [vmem:[%s3848 + $0xb8] sm:$0xff]
    %v8033 = vld [vmem:[%s3848 + $0xc0] sm:$0xff]
    %v8034 = vld [vmem:[%s3848 + $0xc8] sm:$0xff]
    %v8035 = vld [vmem:[%s3848 + $0xd0] sm:$0xff]
    %v8036 = vld [vmem:[%s3848 + $0xd8] sm:$0xff]
    %v8037 = vrot.slane %v7695, 3
    %v8038 = vrot.slane %v7696, 3
    %v8040 = vsel %vm174, %v8038, 0
    %8042 = vmatprep.subr.mxu0 0.0
    %8043 = vmatpush1.msra.mxu0 %v8009
    %8044 = vmatprep.subr.mxu0 0.0
    %8045 = vmatpush1.msra.mxu0 %v8010
    %8046 = vmatprep.subr.mxu0 0.0
    %8047 = vmatpush1.msra.mxu0 %v8011
    %8048 = vmatprep.subr.mxu0 0.0
    %8049 = vmatpush1.msra.mxu0 %v8012
    %8050 = vmatprep.subr.mxu0 0.0
    %8051 = vmatpush1.msra.mxu0 %v8013
    %8052 = vmatprep.subr.mxu0 0.0
    %8053 = vmatpush1.msra.mxu0 %v8014
    %8054 = vmatprep.subr.mxu0 0.0
    %8055 = vmatpush1.msra.mxu0 %v8015
    %8056 = vmatprep.subr.mxu0 0.0
    %8057 = vmatpush1.msra.mxu0 %v8016
    %8058 = vmatprep.subr.mxu0 0.0
    %8059 = vmatpush1.msra.mxu0 %v8017
    %8060 = vmatprep.subr.mxu0 0.0
    %8061 = vmatpush1.msra.mxu0 %v8018
    %8062 = vmatprep.subr.mxu0 0.0
    %8063 = vmatpush1.msra.mxu0 %v8019
    %8064 = vmatprep.subr.mxu0 0.0
    %8065 = vmatpush1.msra.mxu0 %v8020
    %8066 = vmatprep.subr.mxu0 0.0
    %8067 = vmatpush1.msra.mxu0 %v8021
    %8068 = vmatprep.subr.mxu0 0.0
    %8069 = vmatpush1.msra.mxu0 %v8022
    %8070 = vmatprep.subr.mxu0 0.0
    %8071 = vmatpush1.msra.mxu0 %v8023
    %8072 = vmatprep.subr.mxu0 0.0
    %8073 = vmatpush1.msra.mxu0 %v8024
    %8074 = vmatprep.subr.mxu0 0.0
    %8075 = vmatpush1.msra.mxu0 %v8025
    %8076 = vmatprep.subr.mxu0 0.0
    %8077 = vmatpush1.msra.mxu0 %v8026
    %8078 = vmatprep.subr.mxu0 0.0
    %8079 = vmatpush1.msra.mxu0 %v8027
    %8080 = vmatprep.subr.mxu0 0.0
    %8081 = vmatpush1.msra.mxu0 %v8028
    %8082 = vmatprep.subr.mxu0 0.0
    %8083 = vmatpush1.msra.mxu0 %v8029
    %8084 = vmatprep.subr.mxu0 0.0
    %8085 = vmatpush1.msra.mxu0 %v8030
    %8086 = vmatprep.subr.mxu0 0.0
    %8087 = vmatpush1.msra.mxu0 %v8031
    %8088 = vmatprep.subr.mxu0 0.0
    %8089 = vmatpush1.msra.mxu0 %v8032
    %8090 = vmatprep.subr.mxu0 0.0
    %8091 = vmatpush1.msra.mxu0 %v8033
    %8092 = vmatprep.subr.mxu0 0.0
    %8093 = vmatpush1.msra.mxu0 %v8034
    %8094 = vmatprep.subr.mxu0 0.0
    %8095 = vmatpush1.msra.mxu0 %v8035
    %8096 = vmatprep.subr.mxu0 0.0
    %8097 = vmatpush1.msra.mxu0 %v8036
    %8098 = vmatprep.subr.mxu0 0.0
    %8099 = vmatpush1.msra.mxu0 0.0
    %8100 = vmatprep.subr.mxu0 0.0
    %8101 = vmatpush1.msra.mxu0 0.0
    %8102 = vmatprep.subr.mxu0 0.0
    %8103 = vmatpush1.msra.mxu0 0.0
    %8104 = vmatprep.subr.mxu0 0.0
    %8105 = vmatpush1.msra.mxu0 0.0
    %8106 = vmatprep.mubr.f32.mxu0 %v8040
    %8107 = vmatmul.mubr.f32.gmra.mrb[0].mxu0 %v8037
    %v8108 = vpop.f32.mrb[0].mxu0
    %v8109 = vadd.f32 0.0, %v8108
    %v8110 = vpop.f32.mrb[0].mxu0
    %8111 = vdwg.mxu0
    %v8112 = vadd.f32 %v8008, %v8109
    %v8113 = vld [vmem:[%s3953] sm:$0xff]
    %v8114 = vld [vmem:[%s3953 + $0x8] sm:$0xff]
    %v8115 = vld [vmem:[%s3953 + $0x10] sm:$0xff]
    %v8116 = vld [vmem:[%s3953 + $0x18] sm:$0xff]
    %v8117 = vld [vmem:[%s3953 + $0x20] sm:$0xff]
    %v8118 = vld [vmem:[%s3953 + $0x28] sm:$0xff]
    %v8119 = vld [vmem:[%s3953 + $0x30] sm:$0xff]
    %v8120 = vld [vmem:[%s3953 + $0x38] sm:$0xff]
    %v8121 = vld [vmem:[%s3953 + $0x40] sm:$0xff]
    %v8122 = vld [vmem:[%s3953 + $0x48] sm:$0xff]
    %v8123 = vld [vmem:[%s3953 + $0x50] sm:$0xff]
    %v8124 = vld [vmem:[%s3953 + $0x58] sm:$0xff]
    %v8125 = vld [vmem:[%s3953 + $0x60] sm:$0xff]
    %v8126 = vld [vmem:[%s3953 + $0x68] sm:$0xff]
    %v8127 = vld [vmem:[%s3953 + $0x70] sm:$0xff]
    %v8128 = vld [vmem:[%s3953 + $0x78] sm:$0xff]
    %v8129 = vld [vmem:[%s3953 + $0x80] sm:$0xff]
    %v8130 = vld [vmem:[%s3953 + $0x88] sm:$0xff]
    %v8131 = vld [vmem:[%s3953 + $0x90] sm:$0xff]
    %v8132 = vld [vmem:[%s3953 + $0x98] sm:$0xff]
    %v8133 = vld [vmem:[%s3953 + $0xa0] sm:$0xff]
    %v8134 = vld [vmem:[%s3953 + $0xa8] sm:$0xff]
    %v8135 = vld [vmem:[%s3953 + $0xb0] sm:$0xff]
    %v8136 = vld [vmem:[%s3953 + $0xb8] sm:$0xff]
    %v8137 = vld [vmem:[%s3953 + $0xc0] sm:$0xff]
    %v8138 = vld [vmem:[%s3953 + $0xc8] sm:$0xff]
    %v8139 = vld [vmem:[%s3953 + $0xd0] sm:$0xff]
    %v8140 = vld [vmem:[%s3953 + $0xd8] sm:$0xff]
    %v8141 = vrot.slane %v7695, 4
    %v8142 = vrot.slane %v7696, 4
    %v8144 = vsel %vm174, %v8142, 0
    %8146 = vmatprep.subr.mxu0 0.0
    %8147 = vmatpush1.msra.mxu0 %v8113
    %8148 = vmatprep.subr.mxu0 0.0
    %8149 = vmatpush1.msra.mxu0 %v8114
    %8150 = vmatprep.subr.mxu0 0.0
    %8151 = vmatpush1.msra.mxu0 %v8115
    %8152 = vmatprep.subr.mxu0 0.0
    %8153 = vmatpush1.msra.mxu0 %v8116
    %8154 = vmatprep.subr.mxu0 0.0
    %8155 = vmatpush1.msra.mxu0 %v8117
    %8156 = vmatprep.subr.mxu0 0.0
    %8157 = vmatpush1.msra.mxu0 %v8118
    %8158 = vmatprep.subr.mxu0 0.0
    %8159 = vmatpush1.msra.mxu0 %v8119
    %8160 = vmatprep.subr.mxu0 0.0
    %8161 = vmatpush1.msra.mxu0 %v8120
    %8162 = vmatprep.subr.mxu0 0.0
    %8163 = vmatpush1.msra.mxu0 %v8121
    %8164 = vmatprep.subr.mxu0 0.0
    %8165 = vmatpush1.msra.mxu0 %v8122
    %8166 = vmatprep.subr.mxu0 0.0
    %8167 = vmatpush1.msra.mxu0 %v8123
    %8168 = vmatprep.subr.mxu0 0.0
    %8169 = vmatpush1.msra.mxu0 %v8124
    %8170 = vmatprep.subr.mxu0 0.0
    %8171 = vmatpush1.msra.mxu0 %v8125
    %8172 = vmatprep.subr.mxu0 0.0
    %8173 = vmatpush1.msra.mxu0 %v8126
    %8174 = vmatprep.subr.mxu0 0.0
    %8175 = vmatpush1.msra.mxu0 %v8127
    %8176 = vmatprep.subr.mxu0 0.0
    %8177 = vmatpush1.msra.mxu0 %v8128
    %8178 = vmatprep.subr.mxu0 0.0
    %8179 = vmatpush1.msra.mxu0 %v8129
    %8180 = vmatprep.subr.mxu0 0.0
    %8181 = vmatpush1.msra.mxu0 %v8130
    %8182 = vmatprep.subr.mxu0 0.0
    %8183 = vmatpush1.msra.mxu0 %v8131
    %8184 = vmatprep.subr.mxu0 0.0
    %8185 = vmatpush1.msra.mxu0 %v8132
    %8186 = vmatprep.subr.mxu0 0.0
    %8187 = vmatpush1.msra.mxu0 %v8133
    %8188 = vmatprep.subr.mxu0 0.0
    %8189 = vmatpush1.msra.mxu0 %v8134
    %8190 = vmatprep.subr.mxu0 0.0
    %8191 = vmatpush1.msra.mxu0 %v8135
    %8192 = vmatprep.subr.mxu0 0.0
    %8193 = vmatpush1.msra.mxu0 %v8136
    %8194 = vmatprep.subr.mxu0 0.0
    %8195 = vmatpush1.msra.mxu0 %v8137
    %8196 = vmatprep.subr.mxu0 0.0
    %8197 = vmatpush1.msra.mxu0 %v8138
    %8198 = vmatprep.subr.mxu0 0.0
    %8199 = vmatpush1.msra.mxu0 %v8139
    %8200 = vmatprep.subr.mxu0 0.0
    %8201 = vmatpush1.msra.mxu0 %v8140
    %8202 = vmatprep.subr.mxu0 0.0
    %8203 = vmatpush1.msra.mxu0 0.0
    %8204 = vmatprep.subr.mxu0 0.0
    %8205 = vmatpush1.msra.mxu0 0.0
    %8206 = vmatprep.subr.mxu0 0.0
    %8207 = vmatpush1.msra.mxu0 0.0
    %8208 = vmatprep.subr.mxu0 0.0
    %8209 = vmatpush1.msra.mxu0 0.0
    %8210 = vmatprep.mubr.f32.mxu0 %v8144
    %8211 = vmatmul.mubr.f32.gmra.mrb[0].mxu0 %v8141
    %v8212 = vpop.f32.mrb[0].mxu0
    %v8213 = vadd.f32 0.0, %v8212
    %v8214 = vpop.f32.mrb[0].mxu0
    %8215 = vdwg.mxu0
    %v8216 = vadd.f32 %v8112, %v8213
    %v8217 = vld [vmem:[%s4058] sm:$0xff]
    %v8218 = vld [vmem:[%s4058 + $0x8] sm:$0xff]
    %v8219 = vld [vmem:[%s4058 + $0x10] sm:$0xff]
    %v8220 = vld [vmem:[%s4058 + $0x18] sm:$0xff]
    %v8221 = vld [vmem:[%s4058 + $0x20] sm:$0xff]
    %v8222 = vld [vmem:[%s4058 + $0x28] sm:$0xff]
    %v8223 = vld [vmem:[%s4058 + $0x30] sm:$0xff]
    %v8224 = vld [vmem:[%s4058 + $0x38] sm:$0xff]
    %v8225 = vld [vmem:[%s4058 + $0x40] sm:$0xff]
    %v8226 = vld [vmem:[%s4058 + $0x48] sm:$0xff]
    %v8227 = vld [vmem:[%s4058 + $0x50] sm:$0xff]
    %v8228 = vld [vmem:[%s4058 + $0x58] sm:$0xff]
    %v8229 = vld [vmem:[%s4058 + $0x60] sm:$0xff]
    %v8230 = vld [vmem:[%s4058 + $0x68] sm:$0xff]
    %v8231 = vld [vmem:[%s4058 + $0x70] sm:$0xff]
    %v8232 = vld [vmem:[%s4058 + $0x78] sm:$0xff]
    %v8233 = vld [vmem:[%s4058 + $0x80] sm:$0xff]
    %v8234 = vld [vmem:[%s4058 + $0x88] sm:$0xff]
    %v8235 = vld [vmem:[%s4058 + $0x90] sm:$0xff]
    %v8236 = vld [vmem:[%s4058 + $0x98] sm:$0xff]
    %v8237 = vld [vmem:[%s4058 + $0xa0] sm:$0xff]
    %v8238 = vld [vmem:[%s4058 + $0xa8] sm:$0xff]
    %v8239 = vld [vmem:[%s4058 + $0xb0] sm:$0xff]
    %v8240 = vld [vmem:[%s4058 + $0xb8] sm:$0xff]
    %v8241 = vld [vmem:[%s4058 + $0xc0] sm:$0xff]
    %v8242 = vld [vmem:[%s4058 + $0xc8] sm:$0xff]
    %v8243 = vld [vmem:[%s4058 + $0xd0] sm:$0xff]
    %v8244 = vld [vmem:[%s4058 + $0xd8] sm:$0xff]
    %v8245 = vrot.slane %v7695, 5
    %v8246 = vrot.slane %v7696, 5
    %v8248 = vsel %vm174, %v8246, 0
    %8250 = vmatprep.subr.mxu0 0.0
    %8251 = vmatpush1.msra.mxu0 %v8217
    %8252 = vmatprep.subr.mxu0 0.0
    %8253 = vmatpush1.msra.mxu0 %v8218
    %8254 = vmatprep.subr.mxu0 0.0
    %8255 = vmatpush1.msra.mxu0 %v8219
    %8256 = vmatprep.subr.mxu0 0.0
    %8257 = vmatpush1.msra.mxu0 %v8220
    %8258 = vmatprep.subr.mxu0 0.0
    %8259 = vmatpush1.msra.mxu0 %v8221
    %8260 = vmatprep.subr.mxu0 0.0
    %8261 = vmatpush1.msra.mxu0 %v8222
    %8262 = vmatprep.subr.mxu0 0.0
    %8263 = vmatpush1.msra.mxu0 %v8223
    %8264 = vmatprep.subr.mxu0 0.0
    %8265 = vmatpush1.msra.mxu0 %v8224
    %8266 = vmatprep.subr.mxu0 0.0
    %8267 = vmatpush1.msra.mxu0 %v8225
    %8268 = vmatprep.subr.mxu0 0.0
    %8269 = vmatpush1.msra.mxu0 %v8226
    %8270 = vmatprep.subr.mxu0 0.0
    %8271 = vmatpush1.msra.mxu0 %v8227
    %8272 = vmatprep.subr.mxu0 0.0
    %8273 = vmatpush1.msra.mxu0 %v8228
    %8274 = vmatprep.subr.mxu0 0.0
    %8275 = vmatpush1.msra.mxu0 %v8229
    %8276 = vmatprep.subr.mxu0 0.0
    %8277 = vmatpush1.msra.mxu0 %v8230
    %8278 = vmatprep.subr.mxu0 0.0
    %8279 = vmatpush1.msra.mxu0 %v8231
    %8280 = vmatprep.subr.mxu0 0.0
    %8281 = vmatpush1.msra.mxu0 %v8232
    %8282 = vmatprep.subr.mxu0 0.0
    %8283 = vmatpush1.msra.mxu0 %v8233
    %8284 = vmatprep.subr.mxu0 0.0
    %8285 = vmatpush1.msra.mxu0 %v8234
    %8286 = vmatprep.subr.mxu0 0.0
    %8287 = vmatpush1.msra.mxu0 %v8235
    %8288 = vmatprep.subr.mxu0 0.0
    %8289 = vmatpush1.msra.mxu0 %v8236
    %8290 = vmatprep.subr.mxu0 0.0
    %8291 = vmatpush1.msra.mxu0 %v8237
    %8292 = vmatprep.subr.mxu0 0.0
    %8293 = vmatpush1.msra.mxu0 %v8238
    %8294 = vmatprep.subr.mxu0 0.0
    %8295 = vmatpush1.msra.mxu0 %v8239
    %8296 = vmatprep.subr.mxu0 0.0
    %8297 = vmatpush1.msra.mxu0 %v8240
    %8298 = vmatprep.subr.mxu0 0.0
    %8299 = vmatpush1.msra.mxu0 %v8241
    %8300 = vmatprep.subr.mxu0 0.0
    %8301 = vmatpush1.msra.mxu0 %v8242
    %8302 = vmatprep.subr.mxu0 0.0
    %8303 = vmatpush1.msra.mxu0 %v8243
    %8304 = vmatprep.subr.mxu0 0.0
    %8305 = vmatpush1.msra.mxu0 %v8244
    %8306 = vmatprep.subr.mxu0 0.0
    %8307 = vmatpush1.msra.mxu0 0.0
    %8308 = vmatprep.subr.mxu0 0.0
    %8309 = vmatpush1.msra.mxu0 0.0
    %8310 = vmatprep.subr.mxu0 0.0
    %8311 = vmatpush1.msra.mxu0 0.0
    %8312 = vmatprep.subr.mxu0 0.0
    %8313 = vmatpush1.msra.mxu0 0.0
    %8314 = vmatprep.mubr.f32.mxu0 %v8248
    %8315 = vmatmul.mubr.f32.gmra.mrb[0].mxu0 %v8245
    %v8316 = vpop.f32.mrb[0].mxu0
    %v8317 = vadd.f32 0.0, %v8316
    %v8318 = vpop.f32.mrb[0].mxu0
    %8319 = vdwg.mxu0
    %v8320 = vadd.f32 %v8216, %v8317
    %v8321 = vld [vmem:[%s4163] sm:$0xff]
    %v8322 = vld [vmem:[%s4163 + $0x8] sm:$0xff]
    %v8323 = vld [vmem:[%s4163 + $0x10] sm:$0xff]
    %v8324 = vld [vmem:[%s4163 + $0x18] sm:$0xff]
    %v8325 = vld [vmem:[%s4163 + $0x20] sm:$0xff]
    %v8326 = vld [vmem:[%s4163 + $0x28] sm:$0xff]
    %v8327 = vld [vmem:[%s4163 + $0x30] sm:$0xff]
    %v8328 = vld [vmem:[%s4163 + $0x38] sm:$0xff]
    %v8329 = vld [vmem:[%s4163 + $0x40] sm:$0xff]
    %v8330 = vld [vmem:[%s4163 + $0x48] sm:$0xff]
    %v8331 = vld [vmem:[%s4163 + $0x50] sm:$0xff]
    %v8332 = vld [vmem:[%s4163 + $0x58] sm:$0xff]
    %v8333 = vld [vmem:[%s4163 + $0x60] sm:$0xff]
    %v8334 = vld [vmem:[%s4163 + $0x68] sm:$0xff]
    %v8335 = vld [vmem:[%s4163 + $0x70] sm:$0xff]
    %v8336 = vld [vmem:[%s4163 + $0x78] sm:$0xff]
    %v8337 = vld [vmem:[%s4163 + $0x80] sm:$0xff]
    %v8338 = vld [vmem:[%s4163 + $0x88] sm:$0xff]
    %v8339 = vld [vmem:[%s4163 + $0x90] sm:$0xff]
    %v8340 = vld [vmem:[%s4163 + $0x98] sm:$0xff]
    %v8341 = vld [vmem:[%s4163 + $0xa0] sm:$0xff]
    %v8342 = vld [vmem:[%s4163 + $0xa8] sm:$0xff]
    %v8343 = vld [vmem:[%s4163 + $0xb0] sm:$0xff]
    %v8344 = vld [vmem:[%s4163 + $0xb8] sm:$0xff]
    %v8345 = vld [vmem:[%s4163 + $0xc0] sm:$0xff]
    %v8346 = vld [vmem:[%s4163 + $0xc8] sm:$0xff]
    %v8347 = vld [vmem:[%s4163 + $0xd0] sm:$0xff]
    %v8348 = vld [vmem:[%s4163 + $0xd8] sm:$0xff]
    %v8349 = vrot.slane %v7695, 6
    %v8350 = vrot.slane %v7696, 6
    %v8352 = vsel %vm174, %v8350, 0
    %8354 = vmatprep.subr.mxu0 0.0
    %8355 = vmatpush1.msra.mxu0 %v8321
    %8356 = vmatprep.subr.mxu0 0.0
    %8357 = vmatpush1.msra.mxu0 %v8322
    %8358 = vmatprep.subr.mxu0 0.0
    %8359 = vmatpush1.msra.mxu0 %v8323
    %8360 = vmatprep.subr.mxu0 0.0
    %8361 = vmatpush1.msra.mxu0 %v8324
    %8362 = vmatprep.subr.mxu0 0.0
    %8363 = vmatpush1.msra.mxu0 %v8325
    %8364 = vmatprep.subr.mxu0 0.0
    %8365 = vmatpush1.msra.mxu0 %v8326
    %8366 = vmatprep.subr.mxu0 0.0
    %8367 = vmatpush1.msra.mxu0 %v8327
    %8368 = vmatprep.subr.mxu0 0.0
    %8369 = vmatpush1.msra.mxu0 %v8328
    %8370 = vmatprep.subr.mxu0 0.0
    %8371 = vmatpush1.msra.mxu0 %v8329
    %8372 = vmatprep.subr.mxu0 0.0
    %8373 = vmatpush1.msra.mxu0 %v8330
    %8374 = vmatprep.subr.mxu0 0.0
    %8375 = vmatpush1.msra.mxu0 %v8331
    %8376 = vmatprep.subr.mxu0 0.0
    %8377 = vmatpush1.msra.mxu0 %v8332
    %8378 = vmatprep.subr.mxu0 0.0
    %8379 = vmatpush1.msra.mxu0 %v8333
    %8380 = vmatprep.subr.mxu0 0.0
    %8381 = vmatpush1.msra.mxu0 %v8334
    %8382 = vmatprep.subr.mxu0 0.0
    %8383 = vmatpush1.msra.mxu0 %v8335
    %8384 = vmatprep.subr.mxu0 0.0
    %8385 = vmatpush1.msra.mxu0 %v8336
    %8386 = vmatprep.subr.mxu0 0.0
    %8387 = vmatpush1.msra.mxu0 %v8337
    %8388 = vmatprep.subr.mxu0 0.0
    %8389 = vmatpush1.msra.mxu0 %v8338
    %8390 = vmatprep.subr.mxu0 0.0
    %8391 = vmatpush1.msra.mxu0 %v8339
    %8392 = vmatprep.subr.mxu0 0.0
    %8393 = vmatpush1.msra.mxu0 %v8340
    %8394 = vmatprep.subr.mxu0 0.0
    %8395 = vmatpush1.msra.mxu0 %v8341
    %8396 = vmatprep.subr.mxu0 0.0
    %8397 = vmatpush1.msra.mxu0 %v8342
    %8398 = vmatprep.subr.mxu0 0.0
    %8399 = vmatpush1.msra.mxu0 %v8343
    %8400 = vmatprep.subr.mxu0 0.0
    %8401 = vmatpush1.msra.mxu0 %v8344
    %8402 = vmatprep.subr.mxu0 0.0
    %8403 = vmatpush1.msra.mxu0 %v8345
    %8404 = vmatprep.subr.mxu0 0.0
    %8405 = vmatpush1.msra.mxu0 %v8346
    %8406 = vmatprep.subr.mxu0 0.0
    %8407 = vmatpush1.msra.mxu0 %v8347
    %8408 = vmatprep.subr.mxu0 0.0
    %8409 = vmatpush1.msra.mxu0 %v8348
    %8410 = vmatprep.subr.mxu0 0.0
    %8411 = vmatpush1.msra.mxu0 0.0
    %8412 = vmatprep.subr.mxu0 0.0
    %8413 = vmatpush1.msra.mxu0 0.0
    %8414 = vmatprep.subr.mxu0 0.0
    %8415 = vmatpush1.msra.mxu0 0.0
    %8416 = vmatprep.subr.mxu0 0.0
    %8417 = vmatpush1.msra.mxu0 0.0
    %8418 = vmatprep.mubr.f32.mxu0 %v8352
    %8419 = vmatmul.mubr.f32.gmra.mrb[0].mxu0 %v8349
    %v8420 = vpop.f32.mrb[0].mxu0
    %v8421 = vadd.f32 0.0, %v8420
    %v8422 = vpop.f32.mrb[0].mxu0
    %8423 = vdwg.mxu0
    %v8424 = vadd.f32 %v8320, %v8421
    %v8425 = vmax.f32 %v8424, 0.0
    %v8426 = vld [vmem:[#allocation17] sm:$0xff]
    %v8427 = vld [vmem:[#allocation17 + $0x8] sm:$0xff]
    %v8428 = vld [vmem:[#allocation17 + $0x10] sm:$0xff]
    %v8429 = vld [vmem:[#allocation17 + $0x18] sm:$0xff]
    %v8430 = vld [vmem:[#allocation17 + $0x20] sm:$0xff]
    %v8431 = vld [vmem:[#allocation17 + $0x28] sm:$0xff]
    %v8432 = vld [vmem:[#allocation17 + $0x30] sm:$0xff]
    %v8433 = vld [vmem:[#allocation17 + $0x38] sm:$0xff]
    %v8434 = vld [vmem:[#allocation17 + $0x40] sm:$0xff]
    %v8435 = vld [vmem:[#allocation17 + $0x48] sm:$0xff]
    %v8436 = vld [vmem:[#allocation17 + $0x50] sm:$0xff]
    %v8437 = vld [vmem:[#allocation17 + $0x58] sm:$0xff]
    %v8438 = vld [vmem:[#allocation17 + $0x60] sm:$0xff]
    %v8439 = vld [vmem:[#allocation17 + $0x68] sm:$0xff]
    %v8440 = vld [vmem:[#allocation17 + $0x70] sm:$0xff]
    %v8441 = vld [vmem:[#allocation17 + $0x78] sm:$0xff]
    %v8442 = vld [vmem:[#allocation18] sm:$0x1]
    %8443 = vmatprep.subr.mxu0 0.0
    %8444 = vmatpush1.msra.mxu0 %v8426
    %8445 = vmatprep.subr.mxu0 0.0
    %8446 = vmatpush1.msra.mxu0 %v8427
    %8447 = vmatprep.subr.mxu0 0.0
    %8448 = vmatpush1.msra.mxu0 %v8428
    %8449 = vmatprep.subr.mxu0 0.0
    %8450 = vmatpush1.msra.mxu0 %v8429
    %8451 = vmatprep.subr.mxu0 0.0
    %8452 = vmatpush1.msra.mxu0 %v8430
    %8453 = vmatprep.subr.mxu0 0.0
    %8454 = vmatpush1.msra.mxu0 %v8431
    %8455 = vmatprep.subr.mxu0 0.0
    %8456 = vmatpush1.msra.mxu0 %v8432
    %8457 = vmatprep.subr.mxu0 0.0
    %8458 = vmatpush1.msra.mxu0 %v8433
    %8459 = vmatprep.subr.mxu0 0.0
    %8460 = vmatpush1.msra.mxu0 %v8434
    %8461 = vmatprep.subr.mxu0 0.0
    %8462 = vmatpush1.msra.mxu0 %v8435
    %8463 = vmatprep.subr.mxu0 0.0
    %8464 = vmatpush1.msra.mxu0 %v8436
    %8465 = vmatprep.subr.mxu0 0.0
    %8466 = vmatpush1.msra.mxu0 %v8437
    %8467 = vmatprep.subr.mxu0 0.0
    %8468 = vmatpush1.msra.mxu0 %v8438
    %8469 = vmatprep.subr.mxu0 0.0
    %8470 = vmatpush1.msra.mxu0 %v8439
    %8471 = vmatprep.subr.mxu0 0.0
    %8472 = vmatpush1.msra.mxu0 %v8440
    %8473 = vmatprep.subr.mxu0 0.0
    %8474 = vmatpush1.msra.mxu0 %v8441
    %8475 = vmatprep.subr.mxu0 0.0
    %8476 = vmatpush1.msra.mxu0 0.0
    %8477 = vmatprep.subr.mxu0 0.0
    %8478 = vmatpush1.msra.mxu0 0.0
    %8479 = vmatprep.subr.mxu0 0.0
    %8480 = vmatpush1.msra.mxu0 0.0
    %8481 = vmatprep.subr.mxu0 0.0
    %8482 = vmatpush1.msra.mxu0 0.0
    %8483 = vmatprep.subr.mxu0 0.0
    %8484 = vmatpush1.msra.mxu0 0.0
    %8485 = vmatprep.subr.mxu0 0.0
    %8486 = vmatpush1.msra.mxu0 0.0
    %8487 = vmatprep.subr.mxu0 0.0
    %8488 = vmatpush1.msra.mxu0 0.0
    %8489 = vmatprep.subr.mxu0 0.0
    %8490 = vmatpush1.msra.mxu0 0.0
    %8491 = vmatprep.subr.mxu0 0.0
    %8492 = vmatpush1.msra.mxu0 0.0
    %8493 = vmatprep.subr.mxu0 0.0
    %8494 = vmatpush1.msra.mxu0 0.0
    %8495 = vmatprep.subr.mxu0 0.0
    %8496 = vmatpush1.msra.mxu0 0.0
    %8497 = vmatprep.subr.mxu0 0.0
    %8498 = vmatpush1.msra.mxu0 0.0
    %8499 = vmatprep.subr.mxu0 0.0
    %8500 = vmatpush1.msra.mxu0 0.0
    %8501 = vmatprep.subr.mxu0 0.0
    %8502 = vmatpush1.msra.mxu0 0.0
    %8503 = vmatprep.subr.mxu0 0.0
    %8504 = vmatpush1.msra.mxu0 0.0
    %8505 = vmatprep.subr.mxu0 0.0
    %8506 = vmatpush1.msra.mxu0 0.0
    %8507 = vmatprep.mubr.f32.mxu0 0.0
    %8508 = vmatmul.mubr.f32.gmra.mrb[0].mxu0 %v8425
    %v8509 = vpop.f32.mrb[0].mxu0
    %v8510 = vadd.f32 %v8442, %v8509
    %v8511 = vpop.f32.mrb[0].mxu0
    %8512 = vdwg.mxu0
    %8513 = vst [vmem:[#allocation20 + $0x1] sm:$0x1] %v8510
    // Predicated region
    $region94: #{simple_cnn_forward.1} parent=1 // pred_check
      _
    $region95: #{simple_cnn_forward.1} parent=1 // pred_check_branch
      %8515 = sbr.rel (0) target = $region97
    $region96: #{simple_cnn_forward.1} parent=1 // pred_region
      %s8517 = ssub.s32 32, 32
      %8518 = vsyncadd [#allocation5], %s8517
      %s8520 = sshll.u32 [#allocation20], 4
      %s8521 = int_to_ptr.vmem [resolvable:$true] %s8520
      %8523 = dma.vmem_to_hbm [thread:$0]  %s8521, 32, %s13, [#allocation5]
    $region97: #{simple_cnn_forward.1} parent=1 // pred_fallthru
      _
    // Predicated region
    $region98: #{simple_cnn_forward.1} parent=1 // pred_check
      _
    $region99: #{simple_cnn_forward.1} parent=1 // pred_check_branch
      %8525 = sbr.rel (0) target = $region101
    $region100: #{simple_cnn_forward.1} parent=1 // pred_region
      %8526 = dma.done [#allocation5], 32
    $region101: #{simple_cnn_forward.1} parent=1 // pred_fallthru
      _
    %8527 = vsyncpa [#allocation4], 1
    %8528 = vsyncpa [#allocation7], 1
    %8529 = vsyncpa [#allocation10], 1
    %8530 = vsyncpa [#allocation13], 1
    %8531 = vsyncpa [#allocation16], 1
    %8532 = vsyncpa [#allocation19], 1
    %8533 = vsyncpa [#allocation5], 1

</llo_original>
